<compile_context>
chip_gen: v7x
topology: tpu7x:2x2x1
jax: 0.10.0
libtpu: 0.0.40
codegen_flags: <defaults>
</compile_context>

<pallas_src>
import jax
import jax.numpy as jnp
from jax import lax
from jax.experimental import pallas as pl
from jax.experimental.pallas import tpu as pltpu


def _round_up(x, m):
    return (x + m - 1) // m * m


# --------------------------------------------------------------------------
# Single fused kernel: conv1..4 + tanh + alpha/A topology + channel-wise
# graph aggregation + folded eval-mode BatchNorm, one sample per grid step.
# --------------------------------------------------------------------------
def ctr_gc_kernel(x_ref, w12_ref, b12_ref, w3_ref, b3_ref, w4_ref, b4_ref,
                  at_ref, scale_ref, shift_ref, o_ref):
    # x_ref   : (T, V, C_in)     channel-last rows of one sample
    # w12_ref : (C_in, 2*R*Nh)   [W1.T | W2.T]                     (resident)
    # b12_ref : (1, 2*R*Nh)
    # w3_ref  : (C_in, Cp)       W3.T zero-padded to 128 lanes     (resident)
    # b3_ref  : (1, Cp)
    # w4_ref  : (Nh, R, C_out)   alpha * W4_head.T                 (resident)
    # b4_ref  : (Nh, 1, C_out)   alpha * b4_head
    # at_ref  : (Nh, V, V)       A transposed per head: at[a,u,v] = A[a,v,u]
    # scale   : (1, C_out)       folded eval-mode BN scale
    # shift   : (1, C_out)       folded eval-mode BN shift
    # o_ref   : (C_out, T*V)     lane-dense output slab
    T, V, C_in = x_ref.shape
    Nh, R, C_out = w4_ref.shape
    Cp = w3_ref.shape[1]
    RNh = R * Nh
    TV = T * V

    xv = x_ref[...]                                            # (T, V, C_in)

    # conv3: value features for all heads, one lane-dense MXU matmul.
    vfeat = jnp.dot(xv.reshape(TV, C_in), w3_ref[...],
                    preferred_element_type=jnp.float32) + b3_ref[...]
    vfeat = vfeat.reshape(T, V, Cp)                            # (T, V, Cp)

    # conv1 / conv2 applied to the temporal mean (1x1 conv commutes with mean_T),
    # fused into one small matmul.
    xm = jnp.mean(xv, axis=0)                                  # (V, C_in)
    qk = jnp.dot(xm, w12_ref[...],
                 preferred_element_type=jnp.float32) + b12_ref[...]   # (V, 2*R*Nh)
    q = qk[:, :RNh]                                            # (V, R*Nh)
    k = qk[:, RNh:]                                            # (V, R*Nh)

    acc = jnp.zeros((T, V, C_out), jnp.float32)
    for a in range(Nh):                                        # static unroll (heads)
        qa = q[:, a * R:(a + 1) * R]                           # (V, R)
        ka = k[:, a * R:(a + 1) * R]                           # (V, R)
        # e[u, v, r] = tanh(q[v, r] - k[u, r])   (EUP)
        e = jnp.tanh(qa[None, :, :] - ka[:, None, :])          # (V, V, R)
        # per-head conv4 (alpha pre-folded): wf[u, v, c] == weights[c, v, u]
        wf = jnp.dot(e.reshape(V * V, R), w4_ref[a],
                     preferred_element_type=jnp.float32)       # (V*V, C_out)
        wf = wf + b4_ref[a]                                    # + alpha * bias4
        wf = wf.reshape(V, V, C_out) + at_ref[a][:, :, None]   # + A^T
        vfa = vfeat[:, :, a * C_out:(a + 1) * C_out]           # (T, V, C_out)
        # channel-wise aggregation: acc[t,v,c] += sum_u vfa[t,u,c] * wf[u,v,c]
        for u in range(V):                                     # static unroll (neighbors)
            acc = acc + vfa[:, u, :][:, None, :] * wf[u][None, :, :]

    out = acc * scale_ref[...] + shift_ref[...]                # folded eval-mode BN
    # (T, V, C) -> (C, T*V): lane-dense unmasked stores; the NCHW reshape in the
    # wrapper is then a free bitcast-reshape.
    o_ref[...] = jnp.transpose(out.reshape(TV, C_out)).astype(o_ref.dtype)


# --------------------------------------------------------------------------
# Full CTR_GC forward (num_scale = 1, eval-mode BN)
# --------------------------------------------------------------------------
def ctr_gc_forward(x, params, *, eps=1e-5):
    """x: (N, C_in, T, V) float32 -> (N, C_out, T, V)."""
    N, C_in, T, V = x.shape
    w1, b1 = params["w1"], params["b1"]
    w2, b2 = params["w2"], params["b2"]
    w3, b3 = params["w3"], params["b3"]
    w4, b4 = params["w4"], params["b4"]
    A, alpha = params["A"], params["alpha"]
    gamma, beta = params["gamma"], params["beta"]
    rmean, rvar = params["running_mean"], params["running_var"]

    Nh = A.shape[0]
    RNh = w1.shape[0]
    R = RNh // Nh
    C_out = w3.shape[0] // Nh
    TV = T * V
    f32 = jnp.float32

    # Channel-last input rows (the only wrapper-side data movement; the final
    # output reshape below is free).
    x_cl = jnp.transpose(x, (0, 2, 3, 1)).astype(f32)          # (N, T, V, C_in)

    # Parameter packing / folding (tiny, done once per call).
    w12 = jnp.concatenate([w1, w2], axis=0).T.astype(f32)             # (C_in, 2*R*Nh)
    b12 = jnp.concatenate([b1, b2], axis=0)[None, :].astype(f32)      # (1, 2*R*Nh)
    Cp = _round_up(Nh * C_out, 128)
    w3p = jnp.zeros((C_in, Cp), f32).at[:, :Nh * C_out].set(w3.T.astype(f32))
    b3p = jnp.zeros((1, Cp), f32).at[:, :Nh * C_out].set(b3[None, :].astype(f32))
    w4t = (alpha * jnp.transpose(w4.reshape(Nh, C_out, R), (0, 2, 1))).astype(f32)
    b4s = (alpha * b4).reshape(Nh, 1, C_out).astype(f32)
    a_t = jnp.transpose(A, (0, 2, 1)).astype(f32)                     # at[a,u,v] = A[a,v,u]
    inv = (gamma * lax.rsqrt(rvar + eps)).astype(f32)
    scale = inv[None, :]                                              # (1, C_out)
    shift = (beta.astype(f32) - rmean.astype(f32) * inv)[None, :]     # (1, C_out)

    out_flat = pl.pallas_call(
        ctr_gc_kernel,
        out_shape=jax.ShapeDtypeStruct((N, C_out, TV), x.dtype),
        grid=(N,),
        in_specs=[
            pl.BlockSpec((None, T, V, C_in), lambda n: (n, 0, 0, 0)),
            pl.BlockSpec((C_in, 2 * RNh), lambda n: (0, 0)),          # resident
            pl.BlockSpec((1, 2 * RNh), lambda n: (0, 0)),             # resident
            pl.BlockSpec((C_in, Cp), lambda n: (0, 0)),               # resident
            pl.BlockSpec((1, Cp), lambda n: (0, 0)),                  # resident
            pl.BlockSpec((Nh, R, C_out), lambda n: (0, 0, 0)),        # resident
            pl.BlockSpec((Nh, 1, C_out), lambda n: (0, 0, 0)),        # resident
            pl.BlockSpec((Nh, V, V), lambda n: (0, 0, 0)),            # resident
            pl.BlockSpec((1, C_out), lambda n: (0, 0)),               # resident
            pl.BlockSpec((1, C_out), lambda n: (0, 0)),               # resident
        ],
        out_specs=pl.BlockSpec((None, C_out, TV), lambda n: (n, 0, 0)),
        compiler_params=pltpu.CompilerParams(
            dimension_semantics=("parallel",)),
    )(x_cl, w12, b12, w3p, b3p, w4t, b4s, a_t, scale, shift)

    return out_flat.reshape(N, C_out, T, V)


# --------------------------------------------------------------------------
# Pure-JAX reference (mirrors the PyTorch forward, eval-mode BN)
# --------------------------------------------------------------------------
def ctr_gc_reference(x, params, *, eps=1e-5):
    N, C_in, T, V = x.shape
    hp = lax.Precision.HIGHEST
    w1, b1 = params["w1"], params["b1"]
    w2, b2 = params["w2"], params["b2"]
    w3, b3 = params["w3"], params["b3"]
    w4, b4 = params["w4"], params["b4"]
    A, alpha = params["A"], params["alpha"]
    gamma, beta = params["gamma"], params["beta"]
    rmean, rvar = params["running_mean"], params["running_var"]
    Nh = A.shape[0]
    R = w1.shape[0] // Nh
    C_out = w3.shape[0] // Nh

    def conv1x1(inp, w, b):
        return jnp.einsum("nctv,oc->notv", inp, w, precision=hp) \
            + b[None, :, None, None]

    q = conv1x1(x, w1, b1).mean(axis=2)                       # (N, R*Nh, V)
    k = conv1x1(x, w2, b2).mean(axis=2)                       # (N, R*Nh, V)
    v = conv1x1(x, w3, b3).reshape(N, Nh, C_out, T, V)

    d = jnp.tanh(q[:, :, :, None] - k[:, :, None, :])         # (N, R*Nh, V, V)
    d = d.reshape(N, Nh, R, V, V)
    w4h = w4.reshape(Nh, C_out, R)
    conv4 = jnp.einsum("narvu,acr->nacvu", d, w4h, precision=hp) \
        + b4.reshape(1, Nh, C_out, 1, 1)
    weights = conv4 * alpha + A[None, :, None, :, :]
    out = jnp.einsum("nacvu,nactu->nctv", weights, v, precision=hp)

    inv = gamma / jnp.sqrt(rvar + eps)
    out = (out - rmean[None, :, None, None]) * inv[None, :, None, None] \
        + beta[None, :, None, None]
    return out


if __name__ == "__main__":
    key = jax.random.PRNGKey(0)
    N, C_in, C_out, T, V, Nh = 2, 64, 32, 20, 16, 3
    R = C_in // 8 if C_in != 3 else 8     # rel_channels, as in the module
    eps = 1e-5

    ks = jax.random.split(key, 16)

    def nrm(k, shape, s=1.0):
        return (s * jax.random.normal(k, shape)).astype(jnp.float32)

    x = nrm(ks[0], (N, C_in, T, V))
    params = {
        "w1": nrm(ks[1], (R * Nh, C_in), 1.0 / C_in ** 0.5),
        "b1": nrm(ks[2], (R * Nh,), 0.1),
        "w2": nrm(ks[3], (R * Nh, C_in), 1.0 / C_in ** 0.5),
        "b2": nrm(ks[4], (R * Nh,), 0.1),
        "w3": nrm(ks[5], (C_out * Nh, C_in), 1.0 / C_in ** 0.5),
        "b3": nrm(ks[6], (C_out * Nh,), 0.1),
        "w4": nrm(ks[7], (C_out * Nh, R), 1.0 / R ** 0.5),
        "b4": nrm(ks[8], (C_out * Nh,), 0.1),
        "A": nrm(ks[9], (Nh, V, V), 0.3),
        "alpha": jnp.array(0.5, jnp.float32),
        "gamma": (1.0 + 0.1 * jax.random.normal(ks[10], (C_out,))).astype(jnp.float32),
        "beta": nrm(ks[11], (C_out,), 0.1),
        "running_mean": nrm(ks[12], (C_out,), 0.2),
        "running_var": (0.5 + jax.random.uniform(ks[13], (C_out,))).astype(jnp.float32),
    }

    out = jax.jit(ctr_gc_forward)(x, params)
    out = jax.block_until_ready(out)

    ref = ctr_gc_reference(x, params, eps=eps)
    assert out.shape == (N, C_out, T, V), out.shape
    max_err = float(jnp.max(jnp.abs(out - ref)))
    assert jnp.allclose(out, ref, atol=1e-3, rtol=1e-3), max_err
    print("KERNEL_OK")
</pallas_src>

<mosaic_0001>
module attributes {stable_mosaic.version = 11 : i64} {
  func.func @ctr_gc_kernel(%arg0: i32, %arg1: memref<1x20x16x64xf32, #tpu.memory_space<vmem>>, %arg2: memref<64x48xf32, #tpu.memory_space<vmem>>, %arg3: memref<1x48xf32, #tpu.memory_space<vmem>>, %arg4: memref<64x128xf32, #tpu.memory_space<vmem>>, %arg5: memref<1x128xf32, #tpu.memory_space<vmem>>, %arg6: memref<3x8x32xf32, #tpu.memory_space<vmem>>, %arg7: memref<3x1x32xf32, #tpu.memory_space<vmem>>, %arg8: memref<3x16x16xf32, #tpu.memory_space<vmem>>, %arg9: memref<1x32xf32, #tpu.memory_space<vmem>>, %arg10: memref<1x32xf32, #tpu.memory_space<vmem>>, %arg11: memref<1x32x320xf32, #tpu.memory_space<vmem>>) attributes {dimension_semantics = [#tpu.dimension_semantics<parallel>], iteration_bounds = array<i64: 2>, scalar_prefetch = 0 : i64, scratch_operands = 0 : i64, tpu.core_type = #tpu.core_type<tc>, window_params = [{transform_indices = @transform_0, window_bounds = array<i64: 1, 20, 16, 64>}, {pipeline_mode = #tpu.pipeline_mode<synchronous>, transform_indices = @transform_1, window_bounds = array<i64: 64, 48>}, {pipeline_mode = #tpu.pipeline_mode<synchronous>, transform_indices = @transform_2, window_bounds = array<i64: 1, 48>}, {pipeline_mode = #tpu.pipeline_mode<synchronous>, transform_indices = @transform_3, window_bounds = array<i64: 64, 128>}, {pipeline_mode = #tpu.pipeline_mode<synchronous>, transform_indices = @transform_4, window_bounds = array<i64: 1, 128>}, {pipeline_mode = #tpu.pipeline_mode<synchronous>, transform_indices = @transform_5, window_bounds = array<i64: 3, 8, 32>}, {pipeline_mode = #tpu.pipeline_mode<synchronous>, transform_indices = @transform_6, window_bounds = array<i64: 3, 1, 32>}, {pipeline_mode = #tpu.pipeline_mode<synchronous>, transform_indices = @transform_7, window_bounds = array<i64: 3, 16, 16>}, {pipeline_mode = #tpu.pipeline_mode<synchronous>, transform_indices = @transform_8, window_bounds = array<i64: 1, 32>}, {pipeline_mode = #tpu.pipeline_mode<synchronous>, transform_indices = @transform_9, window_bounds = array<i64: 1, 32>}, {transform_indices = @transform_10, window_bounds = array<i64: 1, 32, 320>}]} {
    %c0 = arith.constant 0 : index
    %c0_0 = arith.constant 0 : index
    %c0_1 = arith.constant 0 : index
    %c0_2 = arith.constant 0 : index
    %0 = vector.load %arg1[%c0, %c0_0, %c0_1, %c0_2] : memref<1x20x16x64xf32, #tpu.memory_space<vmem>>, vector<1x20x16x64xf32>
    %1 = vector.shape_cast %0 : vector<1x20x16x64xf32> to vector<20x16x64xf32>
    %2 = vector.shape_cast %1 : vector<20x16x64xf32> to vector<320x64xf32>
    %c0_3 = arith.constant 0 : index
    %c0_4 = arith.constant 0 : index
    %3 = vector.load %arg4[%c0_3, %c0_4] : memref<64x128xf32, #tpu.memory_space<vmem>>, vector<64x128xf32>
    %cst = arith.constant dense<0.000000e+00> : vector<320x128xf32>
    %4 = tpu.matmul %2, %3, %cst {dimension_numbers = #tpu.dot_dimension_numbers<[1], [0], [0], [1], [0, 0, 1, 1], [], []>} : vector<320x64xf32>, vector<64x128xf32>, vector<320x128xf32> -> vector<320x128xf32>
    %c0_5 = arith.constant 0 : index
    %c0_6 = arith.constant 0 : index
    %5 = vector.load %arg5[%c0_5, %c0_6] : memref<1x128xf32, #tpu.memory_space<vmem>>, vector<1x128xf32>
    %6 = vector.broadcast %5 : vector<1x128xf32> to vector<320x128xf32>
    %7 = arith.addf %4, %6 : vector<320x128xf32>
    %8 = vector.shape_cast %7 : vector<320x128xf32> to vector<20x16x128xf32>
    %cst_7 = arith.constant dense<0.000000e+00> : vector<16x64xf32>
    %9 = vector.multi_reduction <add>, %1, %cst_7 [0] : vector<20x16x64xf32> to vector<16x64xf32>
    %cst_8 = arith.constant 2.000000e+01 : f32
    %10 = vector.broadcast %cst_8 : f32 to vector<16x64xf32>
    %11 = arith.divf %9, %10 : vector<16x64xf32>
    %c0_9 = arith.constant 0 : index
    %c0_10 = arith.constant 0 : index
    %12 = vector.load %arg2[%c0_9, %c0_10] : memref<64x48xf32, #tpu.memory_space<vmem>>, vector<64x48xf32>
    %cst_11 = arith.constant dense<0.000000e+00> : vector<16x48xf32>
    %13 = tpu.matmul %11, %12, %cst_11 {dimension_numbers = #tpu.dot_dimension_numbers<[1], [0], [0], [1], [0, 0, 1, 1], [], []>} : vector<16x64xf32>, vector<64x48xf32>, vector<16x48xf32> -> vector<16x48xf32>
    %c0_12 = arith.constant 0 : index
    %c0_13 = arith.constant 0 : index
    %14 = vector.load %arg3[%c0_12, %c0_13] : memref<1x48xf32, #tpu.memory_space<vmem>>, vector<1x48xf32>
    %15 = vector.broadcast %14 : vector<1x48xf32> to vector<16x48xf32>
    %16 = arith.addf %13, %15 : vector<16x48xf32>
    %17 = vector.extract_strided_slice %16 {offsets = [0, 0], sizes = [16, 24], strides = [1, 1]} : vector<16x48xf32> to vector<16x24xf32>
    %18 = vector.extract_strided_slice %16 {offsets = [0, 24], sizes = [16, 24], strides = [1, 1]} : vector<16x48xf32> to vector<16x24xf32>
    %cst_14 = arith.constant 0.000000e+00 : f32
    %19 = vector.broadcast %cst_14 : f32 to vector<20x16x32xf32>
    %20 = vector.extract_strided_slice %17 {offsets = [0, 0], sizes = [16, 8], strides = [1, 1]} : vector<16x24xf32> to vector<16x8xf32>
    %21 = vector.extract_strided_slice %18 {offsets = [0, 0], sizes = [16, 8], strides = [1, 1]} : vector<16x24xf32> to vector<16x8xf32>
    %22 = vector.shape_cast %20 : vector<16x8xf32> to vector<1x16x8xf32>
    %23 = vector.shape_cast %21 : vector<16x8xf32> to vector<16x1x8xf32>
    %24 = vector.broadcast %22 : vector<1x16x8xf32> to vector<16x16x8xf32>
    %25 = vector.broadcast %23 : vector<16x1x8xf32> to vector<16x16x8xf32>
    %26 = arith.subf %24, %25 : vector<16x16x8xf32>
    %27 = math.tanh %26 : vector<16x16x8xf32>
    %28 = vector.shape_cast %27 : vector<16x16x8xf32> to vector<256x8xf32>
    %c0_15 = arith.constant 0 : index
    %c0_16 = arith.constant 0 : index
    %c0_17 = arith.constant 0 : index
    %29 = vector.load %arg6[%c0_15, %c0_16, %c0_17] : memref<3x8x32xf32, #tpu.memory_space<vmem>>, vector<1x8x32xf32>
    %30 = vector.shape_cast %29 : vector<1x8x32xf32> to vector<8x32xf32>
    %cst_18 = arith.constant dense<0.000000e+00> : vector<256x32xf32>
    %31 = tpu.matmul %28, %30, %cst_18 {dimension_numbers = #tpu.dot_dimension_numbers<[1], [0], [0], [1], [0, 0, 1, 1], [], []>} : vector<256x8xf32>, vector<8x32xf32>, vector<256x32xf32> -> vector<256x32xf32>
    %c0_19 = arith.constant 0 : index
    %c0_20 = arith.constant 0 : index
    %c0_21 = arith.constant 0 : index
    %32 = vector.load %arg7[%c0_19, %c0_20, %c0_21] : memref<3x1x32xf32, #tpu.memory_space<vmem>>, vector<1x1x32xf32>
    %33 = vector.shape_cast %32 : vector<1x1x32xf32> to vector<1x32xf32>
    %34 = vector.broadcast %33 : vector<1x32xf32> to vector<256x32xf32>
    %35 = arith.addf %31, %34 : vector<256x32xf32>
    %36 = vector.shape_cast %35 : vector<256x32xf32> to vector<16x16x32xf32>
    %c0_22 = arith.constant 0 : index
    %c0_23 = arith.constant 0 : index
    %c0_24 = arith.constant 0 : index
    %37 = vector.load %arg8[%c0_22, %c0_23, %c0_24] : memref<3x16x16xf32, #tpu.memory_space<vmem>>, vector<1x16x16xf32>
    %38 = vector.shape_cast %37 : vector<1x16x16xf32> to vector<16x16xf32>
    %39 = vector.shape_cast %38 : vector<16x16xf32> to vector<16x16x1xf32>
    %40 = vector.broadcast %39 : vector<16x16x1xf32> to vector<16x16x32xf32>
    %41 = arith.addf %36, %40 : vector<16x16x32xf32>
    %42 = vector.extract_strided_slice %8 {offsets = [0, 0, 0], sizes = [20, 16, 32], strides = [1, 1, 1]} : vector<20x16x128xf32> to vector<20x16x32xf32>
    %43 = vector.extract_strided_slice %42 {offsets = [0, 0, 0], sizes = [20, 1, 32], strides = [1, 1, 1]} : vector<20x16x32xf32> to vector<20x1x32xf32>
    %44 = vector.shape_cast %43 : vector<20x1x32xf32> to vector<20x32xf32>
    %45 = vector.shape_cast %44 : vector<20x32xf32> to vector<20x1x32xf32>
    %46 = vector.extract_strided_slice %41 {offsets = [0, 0, 0], sizes = [1, 16, 32], strides = [1, 1, 1]} : vector<16x16x32xf32> to vector<1x16x32xf32>
    %47 = vector.shape_cast %46 : vector<1x16x32xf32> to vector<16x32xf32>
    %48 = vector.shape_cast %47 : vector<16x32xf32> to vector<1x16x32xf32>
    %49 = vector.broadcast %45 : vector<20x1x32xf32> to vector<20x16x32xf32>
    %50 = vector.broadcast %48 : vector<1x16x32xf32> to vector<20x16x32xf32>
    %51 = arith.mulf %49, %50 : vector<20x16x32xf32>
    %52 = arith.addf %19, %51 : vector<20x16x32xf32>
    %53 = vector.extract_strided_slice %42 {offsets = [0, 1, 0], sizes = [20, 1, 32], strides = [1, 1, 1]} : vector<20x16x32xf32> to vector<20x1x32xf32>
    %54 = vector.shape_cast %53 : vector<20x1x32xf32> to vector<20x32xf32>
    %55 = vector.shape_cast %54 : vector<20x32xf32> to vector<20x1x32xf32>
    %56 = vector.extract_strided_slice %41 {offsets = [1, 0, 0], sizes = [1, 16, 32], strides = [1, 1, 1]} : vector<16x16x32xf32> to vector<1x16x32xf32>
    %57 = vector.shape_cast %56 : vector<1x16x32xf32> to vector<16x32xf32>
    %58 = vector.shape_cast %57 : vector<16x32xf32> to vector<1x16x32xf32>
    %59 = vector.broadcast %55 : vector<20x1x32xf32> to vector<20x16x32xf32>
    %60 = vector.broadcast %58 : vector<1x16x32xf32> to vector<20x16x32xf32>
    %61 = arith.mulf %59, %60 : vector<20x16x32xf32>
    %62 = arith.addf %52, %61 : vector<20x16x32xf32>
    %63 = vector.extract_strided_slice %42 {offsets = [0, 2, 0], sizes = [20, 1, 32], strides = [1, 1, 1]} : vector<20x16x32xf32> to vector<20x1x32xf32>
    %64 = vector.shape_cast %63 : vector<20x1x32xf32> to vector<20x32xf32>
    %65 = vector.shape_cast %64 : vector<20x32xf32> to vector<20x1x32xf32>
    %66 = vector.extract_strided_slice %41 {offsets = [2, 0, 0], sizes = [1, 16, 32], strides = [1, 1, 1]} : vector<16x16x32xf32> to vector<1x16x32xf32>
    %67 = vector.shape_cast %66 : vector<1x16x32xf32> to vector<16x32xf32>
    %68 = vector.shape_cast %67 : vector<16x32xf32> to vector<1x16x32xf32>
    %69 = vector.broadcast %65 : vector<20x1x32xf32> to vector<20x16x32xf32>
    %70 = vector.broadcast %68 : vector<1x16x32xf32> to vector<20x16x32xf32>
    %71 = arith.mulf %69, %70 : vector<20x16x32xf32>
    %72 = arith.addf %62, %71 : vector<20x16x32xf32>
    %73 = vector.extract_strided_slice %42 {offsets = [0, 3, 0], sizes = [20, 1, 32], strides = [1, 1, 1]} : vector<20x16x32xf32> to vector<20x1x32xf32>
    %74 = vector.shape_cast %73 : vector<20x1x32xf32> to vector<20x32xf32>
    %75 = vector.shape_cast %74 : vector<20x32xf32> to vector<20x1x32xf32>
    %76 = vector.extract_strided_slice %41 {offsets = [3, 0, 0], sizes = [1, 16, 32], strides = [1, 1, 1]} : vector<16x16x32xf32> to vector<1x16x32xf32>
    %77 = vector.shape_cast %76 : vector<1x16x32xf32> to vector<16x32xf32>
    %78 = vector.shape_cast %77 : vector<16x32xf32> to vector<1x16x32xf32>
    %79 = vector.broadcast %75 : vector<20x1x32xf32> to vector<20x16x32xf32>
    %80 = vector.broadcast %78 : vector<1x16x32xf32> to vector<20x16x32xf32>
    %81 = arith.mulf %79, %80 : vector<20x16x32xf32>
    %82 = arith.addf %72, %81 : vector<20x16x32xf32>
    %83 = vector.extract_strided_slice %42 {offsets = [0, 4, 0], sizes = [20, 1, 32], strides = [1, 1, 1]} : vector<20x16x32xf32> to vector<20x1x32xf32>
    %84 = vector.shape_cast %83 : vector<20x1x32xf32> to vector<20x32xf32>
    %85 = vector.shape_cast %84 : vector<20x32xf32> to vector<20x1x32xf32>
    %86 = vector.extract_strided_slice %41 {offsets = [4, 0, 0], sizes = [1, 16, 32], strides = [1, 1, 1]} : vector<16x16x32xf32> to vector<1x16x32xf32>
    %87 = vector.shape_cast %86 : vector<1x16x32xf32> to vector<16x32xf32>
    %88 = vector.shape_cast %87 : vector<16x32xf32> to vector<1x16x32xf32>
    %89 = vector.broadcast %85 : vector<20x1x32xf32> to vector<20x16x32xf32>
    %90 = vector.broadcast %88 : vector<1x16x32xf32> to vector<20x16x32xf32>
    %91 = arith.mulf %89, %90 : vector<20x16x32xf32>
    %92 = arith.addf %82, %91 : vector<20x16x32xf32>
    %93 = vector.extract_strided_slice %42 {offsets = [0, 5, 0], sizes = [20, 1, 32], strides = [1, 1, 1]} : vector<20x16x32xf32> to vector<20x1x32xf32>
    %94 = vector.shape_cast %93 : vector<20x1x32xf32> to vector<20x32xf32>
    %95 = vector.shape_cast %94 : vector<20x32xf32> to vector<20x1x32xf32>
    %96 = vector.extract_strided_slice %41 {offsets = [5, 0, 0], sizes = [1, 16, 32], strides = [1, 1, 1]} : vector<16x16x32xf32> to vector<1x16x32xf32>
    %97 = vector.shape_cast %96 : vector<1x16x32xf32> to vector<16x32xf32>
    %98 = vector.shape_cast %97 : vector<16x32xf32> to vector<1x16x32xf32>
    %99 = vector.broadcast %95 : vector<20x1x32xf32> to vector<20x16x32xf32>
    %100 = vector.broadcast %98 : vector<1x16x32xf32> to vector<20x16x32xf32>
    %101 = arith.mulf %99, %100 : vector<20x16x32xf32>
    %102 = arith.addf %92, %101 : vector<20x16x32xf32>
    %103 = vector.extract_strided_slice %42 {offsets = [0, 6, 0], sizes = [20, 1, 32], strides = [1, 1, 1]} : vector<20x16x32xf32> to vector<20x1x32xf32>
    %104 = vector.shape_cast %103 : vector<20x1x32xf32> to vector<20x32xf32>
    %105 = vector.shape_cast %104 : vector<20x32xf32> to vector<20x1x32xf32>
    %106 = vector.extract_strided_slice %41 {offsets = [6, 0, 0], sizes = [1, 16, 32], strides = [1, 1, 1]} : vector<16x16x32xf32> to vector<1x16x32xf32>
    %107 = vector.shape_cast %106 : vector<1x16x32xf32> to vector<16x32xf32>
    %108 = vector.shape_cast %107 : vector<16x32xf32> to vector<1x16x32xf32>
    %109 = vector.broadcast %105 : vector<20x1x32xf32> to vector<20x16x32xf32>
    %110 = vector.broadcast %108 : vector<1x16x32xf32> to vector<20x16x32xf32>
    %111 = arith.mulf %109, %110 : vector<20x16x32xf32>
    %112 = arith.addf %102, %111 : vector<20x16x32xf32>
    %113 = vector.extract_strided_slice %42 {offsets = [0, 7, 0], sizes = [20, 1, 32], strides = [1, 1, 1]} : vector<20x16x32xf32> to vector<20x1x32xf32>
    %114 = vector.shape_cast %113 : vector<20x1x32xf32> to vector<20x32xf32>
    %115 = vector.shape_cast %114 : vector<20x32xf32> to vector<20x1x32xf32>
    %116 = vector.extract_strided_slice %41 {offsets = [7, 0, 0], sizes = [1, 16, 32], strides = [1, 1, 1]} : vector<16x16x32xf32> to vector<1x16x32xf32>
    %117 = vector.shape_cast %116 : vector<1x16x32xf32> to vector<16x32xf32>
    %118 = vector.shape_cast %117 : vector<16x32xf32> to vector<1x16x32xf32>
    %119 = vector.broadcast %115 : vector<20x1x32xf32> to vector<20x16x32xf32>
    %120 = vector.broadcast %118 : vector<1x16x32xf32> to vector<20x16x32xf32>
    %121 = arith.mulf %119, %120 : vector<20x16x32xf32>
    %122 = arith.addf %112, %121 : vector<20x16x32xf32>
    %123 = vector.extract_strided_slice %42 {offsets = [0, 8, 0], sizes = [20, 1, 32], strides = [1, 1, 1]} : vector<20x16x32xf32> to vector<20x1x32xf32>
    %124 = vector.shape_cast %123 : vector<20x1x32xf32> to vector<20x32xf32>
    %125 = vector.shape_cast %124 : vector<20x32xf32> to vector<20x1x32xf32>
    %126 = vector.extract_strided_slice %41 {offsets = [8, 0, 0], sizes = [1, 16, 32], strides = [1, 1, 1]} : vector<16x16x32xf32> to vector<1x16x32xf32>
    %127 = vector.shape_cast %126 : vector<1x16x32xf32> to vector<16x32xf32>
    %128 = vector.shape_cast %127 : vector<16x32xf32> to vector<1x16x32xf32>
    %129 = vector.broadcast %125 : vector<20x1x32xf32> to vector<20x16x32xf32>
    %130 = vector.broadcast %128 : vector<1x16x32xf32> to vector<20x16x32xf32>
    %131 = arith.mulf %129, %130 : vector<20x16x32xf32>
    %132 = arith.addf %122, %131 : vector<20x16x32xf32>
    %133 = vector.extract_strided_slice %42 {offsets = [0, 9, 0], sizes = [20, 1, 32], strides = [1, 1, 1]} : vector<20x16x32xf32> to vector<20x1x32xf32>
    %134 = vector.shape_cast %133 : vector<20x1x32xf32> to vector<20x32xf32>
    %135 = vector.shape_cast %134 : vector<20x32xf32> to vector<20x1x32xf32>
    %136 = vector.extract_strided_slice %41 {offsets = [9, 0, 0], sizes = [1, 16, 32], strides = [1, 1, 1]} : vector<16x16x32xf32> to vector<1x16x32xf32>
    %137 = vector.shape_cast %136 : vector<1x16x32xf32> to vector<16x32xf32>
    %138 = vector.shape_cast %137 : vector<16x32xf32> to vector<1x16x32xf32>
    %139 = vector.broadcast %135 : vector<20x1x32xf32> to vector<20x16x32xf32>
    %140 = vector.broadcast %138 : vector<1x16x32xf32> to vector<20x16x32xf32>
    %141 = arith.mulf %139, %140 : vector<20x16x32xf32>
    %142 = arith.addf %132, %141 : vector<20x16x32xf32>
    %143 = vector.extract_strided_slice %42 {offsets = [0, 10, 0], sizes = [20, 1, 32], strides = [1, 1, 1]} : vector<20x16x32xf32> to vector<20x1x32xf32>
    %144 = vector.shape_cast %143 : vector<20x1x32xf32> to vector<20x32xf32>
    %145 = vector.shape_cast %144 : vector<20x32xf32> to vector<20x1x32xf32>
    %146 = vector.extract_strided_slice %41 {offsets = [10, 0, 0], sizes = [1, 16, 32], strides = [1, 1, 1]} : vector<16x16x32xf32> to vector<1x16x32xf32>
    %147 = vector.shape_cast %146 : vector<1x16x32xf32> to vector<16x32xf32>
    %148 = vector.shape_cast %147 : vector<16x32xf32> to vector<1x16x32xf32>
    %149 = vector.broadcast %145 : vector<20x1x32xf32> to vector<20x16x32xf32>
    %150 = vector.broadcast %148 : vector<1x16x32xf32> to vector<20x16x32xf32>
    %151 = arith.mulf %149, %150 : vector<20x16x32xf32>
    %152 = arith.addf %142, %151 : vector<20x16x32xf32>
    %153 = vector.extract_strided_slice %42 {offsets = [0, 11, 0], sizes = [20, 1, 32], strides = [1, 1, 1]} : vector<20x16x32xf32> to vector<20x1x32xf32>
    %154 = vector.shape_cast %153 : vector<20x1x32xf32> to vector<20x32xf32>
    %155 = vector.shape_cast %154 : vector<20x32xf32> to vector<20x1x32xf32>
    %156 = vector.extract_strided_slice %41 {offsets = [11, 0, 0], sizes = [1, 16, 32], strides = [1, 1, 1]} : vector<16x16x32xf32> to vector<1x16x32xf32>
    %157 = vector.shape_cast %156 : vector<1x16x32xf32> to vector<16x32xf32>
    %158 = vector.shape_cast %157 : vector<16x32xf32> to vector<1x16x32xf32>
    %159 = vector.broadcast %155 : vector<20x1x32xf32> to vector<20x16x32xf32>
    %160 = vector.broadcast %158 : vector<1x16x32xf32> to vector<20x16x32xf32>
    %161 = arith.mulf %159, %160 : vector<20x16x32xf32>
    %162 = arith.addf %152, %161 : vector<20x16x32xf32>
    %163 = vector.extract_strided_slice %42 {offsets = [0, 12, 0], sizes = [20, 1, 32], strides = [1, 1, 1]} : vector<20x16x32xf32> to vector<20x1x32xf32>
    %164 = vector.shape_cast %163 : vector<20x1x32xf32> to vector<20x32xf32>
    %165 = vector.shape_cast %164 : vector<20x32xf32> to vector<20x1x32xf32>
    %166 = vector.extract_strided_slice %41 {offsets = [12, 0, 0], sizes = [1, 16, 32], strides = [1, 1, 1]} : vector<16x16x32xf32> to vector<1x16x32xf32>
    %167 = vector.shape_cast %166 : vector<1x16x32xf32> to vector<16x32xf32>
    %168 = vector.shape_cast %167 : vector<16x32xf32> to vector<1x16x32xf32>
    %169 = vector.broadcast %165 : vector<20x1x32xf32> to vector<20x16x32xf32>
    %170 = vector.broadcast %168 : vector<1x16x32xf32> to vector<20x16x32xf32>
    %171 = arith.mulf %169, %170 : vector<20x16x32xf32>
    %172 = arith.addf %162, %171 : vector<20x16x32xf32>
    %173 = vector.extract_strided_slice %42 {offsets = [0, 13, 0], sizes = [20, 1, 32], strides = [1, 1, 1]} : vector<20x16x32xf32> to vector<20x1x32xf32>
    %174 = vector.shape_cast %173 : vector<20x1x32xf32> to vector<20x32xf32>
    %175 = vector.shape_cast %174 : vector<20x32xf32> to vector<20x1x32xf32>
    %176 = vector.extract_strided_slice %41 {offsets = [13, 0, 0], sizes = [1, 16, 32], strides = [1, 1, 1]} : vector<16x16x32xf32> to vector<1x16x32xf32>
    %177 = vector.shape_cast %176 : vector<1x16x32xf32> to vector<16x32xf32>
    %178 = vector.shape_cast %177 : vector<16x32xf32> to vector<1x16x32xf32>
    %179 = vector.broadcast %175 : vector<20x1x32xf32> to vector<20x16x32xf32>
    %180 = vector.broadcast %178 : vector<1x16x32xf32> to vector<20x16x32xf32>
    %181 = arith.mulf %179, %180 : vector<20x16x32xf32>
    %182 = arith.addf %172, %181 : vector<20x16x32xf32>
    %183 = vector.extract_strided_slice %42 {offsets = [0, 14, 0], sizes = [20, 1, 32], strides = [1, 1, 1]} : vector<20x16x32xf32> to vector<20x1x32xf32>
    %184 = vector.shape_cast %183 : vector<20x1x32xf32> to vector<20x32xf32>
    %185 = vector.shape_cast %184 : vector<20x32xf32> to vector<20x1x32xf32>
    %186 = vector.extract_strided_slice %41 {offsets = [14, 0, 0], sizes = [1, 16, 32], strides = [1, 1, 1]} : vector<16x16x32xf32> to vector<1x16x32xf32>
    %187 = vector.shape_cast %186 : vector<1x16x32xf32> to vector<16x32xf32>
    %188 = vector.shape_cast %187 : vector<16x32xf32> to vector<1x16x32xf32>
    %189 = vector.broadcast %185 : vector<20x1x32xf32> to vector<20x16x32xf32>
    %190 = vector.broadcast %188 : vector<1x16x32xf32> to vector<20x16x32xf32>
    %191 = arith.mulf %189, %190 : vector<20x16x32xf32>
    %192 = arith.addf %182, %191 : vector<20x16x32xf32>
    %193 = vector.extract_strided_slice %42 {offsets = [0, 15, 0], sizes = [20, 1, 32], strides = [1, 1, 1]} : vector<20x16x32xf32> to vector<20x1x32xf32>
    %194 = vector.shape_cast %193 : vector<20x1x32xf32> to vector<20x32xf32>
    %195 = vector.shape_cast %194 : vector<20x32xf32> to vector<20x1x32xf32>
    %196 = vector.extract_strided_slice %41 {offsets = [15, 0, 0], sizes = [1, 16, 32], strides = [1, 1, 1]} : vector<16x16x32xf32> to vector<1x16x32xf32>
    %197 = vector.shape_cast %196 : vector<1x16x32xf32> to vector<16x32xf32>
    %198 = vector.shape_cast %197 : vector<16x32xf32> to vector<1x16x32xf32>
    %199 = vector.broadcast %195 : vector<20x1x32xf32> to vector<20x16x32xf32>
    %200 = vector.broadcast %198 : vector<1x16x32xf32> to vector<20x16x32xf32>
    %201 = arith.mulf %199, %200 : vector<20x16x32xf32>
    %202 = arith.addf %192, %201 : vector<20x16x32xf32>
    %203 = vector.extract_strided_slice %17 {offsets = [0, 8], sizes = [16, 8], strides = [1, 1]} : vector<16x24xf32> to vector<16x8xf32>
    %204 = vector.extract_strided_slice %18 {offsets = [0, 8], sizes = [16, 8], strides = [1, 1]} : vector<16x24xf32> to vector<16x8xf32>
    %205 = vector.shape_cast %203 : vector<16x8xf32> to vector<1x16x8xf32>
    %206 = vector.shape_cast %204 : vector<16x8xf32> to vector<16x1x8xf32>
    %207 = vector.broadcast %205 : vector<1x16x8xf32> to vector<16x16x8xf32>
    %208 = vector.broadcast %206 : vector<16x1x8xf32> to vector<16x16x8xf32>
    %209 = arith.subf %207, %208 : vector<16x16x8xf32>
    %210 = math.tanh %209 : vector<16x16x8xf32>
    %211 = vector.shape_cast %210 : vector<16x16x8xf32> to vector<256x8xf32>
    %c1 = arith.constant 1 : index
    %c0_25 = arith.constant 0 : index
    %c0_26 = arith.constant 0 : index
    %212 = vector.load %arg6[%c1, %c0_25, %c0_26] : memref<3x8x32xf32, #tpu.memory_space<vmem>>, vector<1x8x32xf32>
    %213 = vector.shape_cast %212 : vector<1x8x32xf32> to vector<8x32xf32>
    %cst_27 = arith.constant dense<0.000000e+00> : vector<256x32xf32>
    %214 = tpu.matmul %211, %213, %cst_27 {dimension_numbers = #tpu.dot_dimension_numbers<[1], [0], [0], [1], [0, 0, 1, 1], [], []>} : vector<256x8xf32>, vector<8x32xf32>, vector<256x32xf32> -> vector<256x32xf32>
    %c1_28 = arith.constant 1 : index
    %c0_29 = arith.constant 0 : index
    %c0_30 = arith.constant 0 : index
    %215 = vector.load %arg7[%c1_28, %c0_29, %c0_30] : memref<3x1x32xf32, #tpu.memory_space<vmem>>, vector<1x1x32xf32>
    %216 = vector.shape_cast %215 : vector<1x1x32xf32> to vector<1x32xf32>
    %217 = vector.broadcast %216 : vector<1x32xf32> to vector<256x32xf32>
    %218 = arith.addf %214, %217 : vector<256x32xf32>
    %219 = vector.shape_cast %218 : vector<256x32xf32> to vector<16x16x32xf32>
    %c1_31 = arith.constant 1 : index
    %c0_32 = arith.constant 0 : index
    %c0_33 = arith.constant 0 : index
    %220 = vector.load %arg8[%c1_31, %c0_32, %c0_33] : memref<3x16x16xf32, #tpu.memory_space<vmem>>, vector<1x16x16xf32>
    %221 = vector.shape_cast %220 : vector<1x16x16xf32> to vector<16x16xf32>
    %222 = vector.shape_cast %221 : vector<16x16xf32> to vector<16x16x1xf32>
    %223 = vector.broadcast %222 : vector<16x16x1xf32> to vector<16x16x32xf32>
    %224 = arith.addf %219, %223 : vector<16x16x32xf32>
    %225 = vector.extract_strided_slice %8 {offsets = [0, 0, 32], sizes = [20, 16, 32], strides = [1, 1, 1]} : vector<20x16x128xf32> to vector<20x16x32xf32>
    %226 = vector.extract_strided_slice %225 {offsets = [0, 0, 0], sizes = [20, 1, 32], strides = [1, 1, 1]} : vector<20x16x32xf32> to vector<20x1x32xf32>
    %227 = vector.shape_cast %226 : vector<20x1x32xf32> to vector<20x32xf32>
    %228 = vector.shape_cast %227 : vector<20x32xf32> to vector<20x1x32xf32>
    %229 = vector.extract_strided_slice %224 {offsets = [0, 0, 0], sizes = [1, 16, 32], strides = [1, 1, 1]} : vector<16x16x32xf32> to vector<1x16x32xf32>
    %230 = vector.shape_cast %229 : vector<1x16x32xf32> to vector<16x32xf32>
    %231 = vector.shape_cast %230 : vector<16x32xf32> to vector<1x16x32xf32>
    %232 = vector.broadcast %228 : vector<20x1x32xf32> to vector<20x16x32xf32>
    %233 = vector.broadcast %231 : vector<1x16x32xf32> to vector<20x16x32xf32>
    %234 = arith.mulf %232, %233 : vector<20x16x32xf32>
    %235 = arith.addf %202, %234 : vector<20x16x32xf32>
    %236 = vector.extract_strided_slice %225 {offsets = [0, 1, 0], sizes = [20, 1, 32], strides = [1, 1, 1]} : vector<20x16x32xf32> to vector<20x1x32xf32>
    %237 = vector.shape_cast %236 : vector<20x1x32xf32> to vector<20x32xf32>
    %238 = vector.shape_cast %237 : vector<20x32xf32> to vector<20x1x32xf32>
    %239 = vector.extract_strided_slice %224 {offsets = [1, 0, 0], sizes = [1, 16, 32], strides = [1, 1, 1]} : vector<16x16x32xf32> to vector<1x16x32xf32>
    %240 = vector.shape_cast %239 : vector<1x16x32xf32> to vector<16x32xf32>
    %241 = vector.shape_cast %240 : vector<16x32xf32> to vector<1x16x32xf32>
    %242 = vector.broadcast %238 : vector<20x1x32xf32> to vector<20x16x32xf32>
    %243 = vector.broadcast %241 : vector<1x16x32xf32> to vector<20x16x32xf32>
    %244 = arith.mulf %242, %243 : vector<20x16x32xf32>
    %245 = arith.addf %235, %244 : vector<20x16x32xf32>
    %246 = vector.extract_strided_slice %225 {offsets = [0, 2, 0], sizes = [20, 1, 32], strides = [1, 1, 1]} : vector<20x16x32xf32> to vector<20x1x32xf32>
    %247 = vector.shape_cast %246 : vector<20x1x32xf32> to vector<20x32xf32>
    %248 = vector.shape_cast %247 : vector<20x32xf32> to vector<20x1x32xf32>
    %249 = vector.extract_strided_slice %224 {offsets = [2, 0, 0], sizes = [1, 16, 32], strides = [1, 1, 1]} : vector<16x16x32xf32> to vector<1x16x32xf32>
    %250 = vector.shape_cast %249 : vector<1x16x32xf32> to vector<16x32xf32>
    %251 = vector.shape_cast %250 : vector<16x32xf32> to vector<1x16x32xf32>
    %252 = vector.broadcast %248 : vector<20x1x32xf32> to vector<20x16x32xf32>
    %253 = vector.broadcast %251 : vector<1x16x32xf32> to vector<20x16x32xf32>
    %254 = arith.mulf %252, %253 : vector<20x16x32xf32>
    %255 = arith.addf %245, %254 : vector<20x16x32xf32>
    %256 = vector.extract_strided_slice %225 {offsets = [0, 3, 0], sizes = [20, 1, 32], strides = [1, 1, 1]} : vector<20x16x32xf32> to vector<20x1x32xf32>
    %257 = vector.shape_cast %256 : vector<20x1x32xf32> to vector<20x32xf32>
    %258 = vector.shape_cast %257 : vector<20x32xf32> to vector<20x1x32xf32>
    %259 = vector.extract_strided_slice %224 {offsets = [3, 0, 0], sizes = [1, 16, 32], strides = [1, 1, 1]} : vector<16x16x32xf32> to vector<1x16x32xf32>
    %260 = vector.shape_cast %259 : vector<1x16x32xf32> to vector<16x32xf32>
    %261 = vector.shape_cast %260 : vector<16x32xf32> to vector<1x16x32xf32>
    %262 = vector.broadcast %258 : vector<20x1x32xf32> to vector<20x16x32xf32>
    %263 = vector.broadcast %261 : vector<1x16x32xf32> to vector<20x16x32xf32>
    %264 = arith.mulf %262, %263 : vector<20x16x32xf32>
    %265 = arith.addf %255, %264 : vector<20x16x32xf32>
    %266 = vector.extract_strided_slice %225 {offsets = [0, 4, 0], sizes = [20, 1, 32], strides = [1, 1, 1]} : vector<20x16x32xf32> to vector<20x1x32xf32>
    %267 = vector.shape_cast %266 : vector<20x1x32xf32> to vector<20x32xf32>
    %268 = vector.shape_cast %267 : vector<20x32xf32> to vector<20x1x32xf32>
    %269 = vector.extract_strided_slice %224 {offsets = [4, 0, 0], sizes = [1, 16, 32], strides = [1, 1, 1]} : vector<16x16x32xf32> to vector<1x16x32xf32>
    %270 = vector.shape_cast %269 : vector<1x16x32xf32> to vector<16x32xf32>
    %271 = vector.shape_cast %270 : vector<16x32xf32> to vector<1x16x32xf32>
    %272 = vector.broadcast %268 : vector<20x1x32xf32> to vector<20x16x32xf32>
    %273 = vector.broadcast %271 : vector<1x16x32xf32> to vector<20x16x32xf32>
    %274 = arith.mulf %272, %273 : vector<20x16x32xf32>
    %275 = arith.addf %265, %274 : vector<20x16x32xf32>
    %276 = vector.extract_strided_slice %225 {offsets = [0, 5, 0], sizes = [20, 1, 32], strides = [1, 1, 1]} : vector<20x16x32xf32> to vector<20x1x32xf32>
    %277 = vector.shape_cast %276 : vector<20x1x32xf32> to vector<20x32xf32>
    %278 = vector.shape_cast %277 : vector<20x32xf32> to vector<20x1x32xf32>
    %279 = vector.extract_strided_slice %224 {offsets = [5, 0, 0], sizes = [1, 16, 32], strides = [1, 1, 1]} : vector<16x16x32xf32> to vector<1x16x32xf32>
    %280 = vector.shape_cast %279 : vector<1x16x32xf32> to vector<16x32xf32>
    %281 = vector.shape_cast %280 : vector<16x32xf32> to vector<1x16x32xf32>
    %282 = vector.broadcast %278 : vector<20x1x32xf32> to vector<20x16x32xf32>
    %283 = vector.broadcast %281 : vector<1x16x32xf32> to vector<20x16x32xf32>
    %284 = arith.mulf %282, %283 : vector<20x16x32xf32>
    %285 = arith.addf %275, %284 : vector<20x16x32xf32>
    %286 = vector.extract_strided_slice %225 {offsets = [0, 6, 0], sizes = [20, 1, 32], strides = [1, 1, 1]} : vector<20x16x32xf32> to vector<20x1x32xf32>
    %287 = vector.shape_cast %286 : vector<20x1x32xf32> to vector<20x32xf32>
    %288 = vector.shape_cast %287 : vector<20x32xf32> to vector<20x1x32xf32>
    %289 = vector.extract_strided_slice %224 {offsets = [6, 0, 0], sizes = [1, 16, 32], strides = [1, 1, 1]} : vector<16x16x32xf32> to vector<1x16x32xf32>
    %290 = vector.shape_cast %289 : vector<1x16x32xf32> to vector<16x32xf32>
    %291 = vector.shape_cast %290 : vector<16x32xf32> to vector<1x16x32xf32>
    %292 = vector.broadcast %288 : vector<20x1x32xf32> to vector<20x16x32xf32>
    %293 = vector.broadcast %291 : vector<1x16x32xf32> to vector<20x16x32xf32>
    %294 = arith.mulf %292, %293 : vector<20x16x32xf32>
    %295 = arith.addf %285, %294 : vector<20x16x32xf32>
    %296 = vector.extract_strided_slice %225 {offsets = [0, 7, 0], sizes = [20, 1, 32], strides = [1, 1, 1]} : vector<20x16x32xf32> to vector<20x1x32xf32>
    %297 = vector.shape_cast %296 : vector<20x1x32xf32> to vector<20x32xf32>
    %298 = vector.shape_cast %297 : vector<20x32xf32> to vector<20x1x32xf32>
    %299 = vector.extract_strided_slice %224 {offsets = [7, 0, 0], sizes = [1, 16, 32], strides = [1, 1, 1]} : vector<16x16x32xf32> to vector<1x16x32xf32>
    %300 = vector.shape_cast %299 : vector<1x16x32xf32> to vector<16x32xf32>
    %301 = vector.shape_cast %300 : vector<16x32xf32> to vector<1x16x32xf32>
    %302 = vector.broadcast %298 : vector<20x1x32xf32> to vector<20x16x32xf32>
    %303 = vector.broadcast %301 : vector<1x16x32xf32> to vector<20x16x32xf32>
    %304 = arith.mulf %302, %303 : vector<20x16x32xf32>
    %305 = arith.addf %295, %304 : vector<20x16x32xf32>
    %306 = vector.extract_strided_slice %225 {offsets = [0, 8, 0], sizes = [20, 1, 32], strides = [1, 1, 1]} : vector<20x16x32xf32> to vector<20x1x32xf32>
    %307 = vector.shape_cast %306 : vector<20x1x32xf32> to vector<20x32xf32>
    %308 = vector.shape_cast %307 : vector<20x32xf32> to vector<20x1x32xf32>
    %309 = vector.extract_strided_slice %224 {offsets = [8, 0, 0], sizes = [1, 16, 32], strides = [1, 1, 1]} : vector<16x16x32xf32> to vector<1x16x32xf32>
    %310 = vector.shape_cast %309 : vector<1x16x32xf32> to vector<16x32xf32>
    %311 = vector.shape_cast %310 : vector<16x32xf32> to vector<1x16x32xf32>
    %312 = vector.broadcast %308 : vector<20x1x32xf32> to vector<20x16x32xf32>
    %313 = vector.broadcast %311 : vector<1x16x32xf32> to vector<20x16x32xf32>
    %314 = arith.mulf %312, %313 : vector<20x16x32xf32>
    %315 = arith.addf %305, %314 : vector<20x16x32xf32>
    %316 = vector.extract_strided_slice %225 {offsets = [0, 9, 0], sizes = [20, 1, 32], strides = [1, 1, 1]} : vector<20x16x32xf32> to vector<20x1x32xf32>
    %317 = vector.shape_cast %316 : vector<20x1x32xf32> to vector<20x32xf32>
    %318 = vector.shape_cast %317 : vector<20x32xf32> to vector<20x1x32xf32>
    %319 = vector.extract_strided_slice %224 {offsets = [9, 0, 0], sizes = [1, 16, 32], strides = [1, 1, 1]} : vector<16x16x32xf32> to vector<1x16x32xf32>
    %320 = vector.shape_cast %319 : vector<1x16x32xf32> to vector<16x32xf32>
    %321 = vector.shape_cast %320 : vector<16x32xf32> to vector<1x16x32xf32>
    %322 = vector.broadcast %318 : vector<20x1x32xf32> to vector<20x16x32xf32>
    %323 = vector.broadcast %321 : vector<1x16x32xf32> to vector<20x16x32xf32>
    %324 = arith.mulf %322, %323 : vector<20x16x32xf32>
    %325 = arith.addf %315, %324 : vector<20x16x32xf32>
    %326 = vector.extract_strided_slice %225 {offsets = [0, 10, 0], sizes = [20, 1, 32], strides = [1, 1, 1]} : vector<20x16x32xf32> to vector<20x1x32xf32>
    %327 = vector.shape_cast %326 : vector<20x1x32xf32> to vector<20x32xf32>
    %328 = vector.shape_cast %327 : vector<20x32xf32> to vector<20x1x32xf32>
    %329 = vector.extract_strided_slice %224 {offsets = [10, 0, 0], sizes = [1, 16, 32], strides = [1, 1, 1]} : vector<16x16x32xf32> to vector<1x16x32xf32>
    %330 = vector.shape_cast %329 : vector<1x16x32xf32> to vector<16x32xf32>
    %331 = vector.shape_cast %330 : vector<16x32xf32> to vector<1x16x32xf32>
    %332 = vector.broadcast %328 : vector<20x1x32xf32> to vector<20x16x32xf32>
    %333 = vector.broadcast %331 : vector<1x16x32xf32> to vector<20x16x32xf32>
    %334 = arith.mulf %332, %333 : vector<20x16x32xf32>
    %335 = arith.addf %325, %334 : vector<20x16x32xf32>
    %336 = vector.extract_strided_slice %225 {offsets = [0, 11, 0], sizes = [20, 1, 32], strides = [1, 1, 1]} : vector<20x16x32xf32> to vector<20x1x32xf32>
    %337 = vector.shape_cast %336 : vector<20x1x32xf32> to vector<20x32xf32>
    %338 = vector.shape_cast %337 : vector<20x32xf32> to vector<20x1x32xf32>
    %339 = vector.extract_strided_slice %224 {offsets = [11, 0, 0], sizes = [1, 16, 32], strides = [1, 1, 1]} : vector<16x16x32xf32> to vector<1x16x32xf32>
    %340 = vector.shape_cast %339 : vector<1x16x32xf32> to vector<16x32xf32>
    %341 = vector.shape_cast %340 : vector<16x32xf32> to vector<1x16x32xf32>
    %342 = vector.broadcast %338 : vector<20x1x32xf32> to vector<20x16x32xf32>
    %343 = vector.broadcast %341 : vector<1x16x32xf32> to vector<20x16x32xf32>
    %344 = arith.mulf %342, %343 : vector<20x16x32xf32>
    %345 = arith.addf %335, %344 : vector<20x16x32xf32>
    %346 = vector.extract_strided_slice %225 {offsets = [0, 12, 0], sizes = [20, 1, 32], strides = [1, 1, 1]} : vector<20x16x32xf32> to vector<20x1x32xf32>
    %347 = vector.shape_cast %346 : vector<20x1x32xf32> to vector<20x32xf32>
    %348 = vector.shape_cast %347 : vector<20x32xf32> to vector<20x1x32xf32>
    %349 = vector.extract_strided_slice %224 {offsets = [12, 0, 0], sizes = [1, 16, 32], strides = [1, 1, 1]} : vector<16x16x32xf32> to vector<1x16x32xf32>
    %350 = vector.shape_cast %349 : vector<1x16x32xf32> to vector<16x32xf32>
    %351 = vector.shape_cast %350 : vector<16x32xf32> to vector<1x16x32xf32>
    %352 = vector.broadcast %348 : vector<20x1x32xf32> to vector<20x16x32xf32>
    %353 = vector.broadcast %351 : vector<1x16x32xf32> to vector<20x16x32xf32>
    %354 = arith.mulf %352, %353 : vector<20x16x32xf32>
    %355 = arith.addf %345, %354 : vector<20x16x32xf32>
    %356 = vector.extract_strided_slice %225 {offsets = [0, 13, 0], sizes = [20, 1, 32], strides = [1, 1, 1]} : vector<20x16x32xf32> to vector<20x1x32xf32>
    %357 = vector.shape_cast %356 : vector<20x1x32xf32> to vector<20x32xf32>
    %358 = vector.shape_cast %357 : vector<20x32xf32> to vector<20x1x32xf32>
    %359 = vector.extract_strided_slice %224 {offsets = [13, 0, 0], sizes = [1, 16, 32], strides = [1, 1, 1]} : vector<16x16x32xf32> to vector<1x16x32xf32>
    %360 = vector.shape_cast %359 : vector<1x16x32xf32> to vector<16x32xf32>
    %361 = vector.shape_cast %360 : vector<16x32xf32> to vector<1x16x32xf32>
    %362 = vector.broadcast %358 : vector<20x1x32xf32> to vector<20x16x32xf32>
    %363 = vector.broadcast %361 : vector<1x16x32xf32> to vector<20x16x32xf32>
    %364 = arith.mulf %362, %363 : vector<20x16x32xf32>
    %365 = arith.addf %355, %364 : vector<20x16x32xf32>
    %366 = vector.extract_strided_slice %225 {offsets = [0, 14, 0], sizes = [20, 1, 32], strides = [1, 1, 1]} : vector<20x16x32xf32> to vector<20x1x32xf32>
    %367 = vector.shape_cast %366 : vector<20x1x32xf32> to vector<20x32xf32>
    %368 = vector.shape_cast %367 : vector<20x32xf32> to vector<20x1x32xf32>
    %369 = vector.extract_strided_slice %224 {offsets = [14, 0, 0], sizes = [1, 16, 32], strides = [1, 1, 1]} : vector<16x16x32xf32> to vector<1x16x32xf32>
    %370 = vector.shape_cast %369 : vector<1x16x32xf32> to vector<16x32xf32>
    %371 = vector.shape_cast %370 : vector<16x32xf32> to vector<1x16x32xf32>
    %372 = vector.broadcast %368 : vector<20x1x32xf32> to vector<20x16x32xf32>
    %373 = vector.broadcast %371 : vector<1x16x32xf32> to vector<20x16x32xf32>
    %374 = arith.mulf %372, %373 : vector<20x16x32xf32>
    %375 = arith.addf %365, %374 : vector<20x16x32xf32>
    %376 = vector.extract_strided_slice %225 {offsets = [0, 15, 0], sizes = [20, 1, 32], strides = [1, 1, 1]} : vector<20x16x32xf32> to vector<20x1x32xf32>
    %377 = vector.shape_cast %376 : vector<20x1x32xf32> to vector<20x32xf32>
    %378 = vector.shape_cast %377 : vector<20x32xf32> to vector<20x1x32xf32>
    %379 = vector.extract_strided_slice %224 {offsets = [15, 0, 0], sizes = [1, 16, 32], strides = [1, 1, 1]} : vector<16x16x32xf32> to vector<1x16x32xf32>
    %380 = vector.shape_cast %379 : vector<1x16x32xf32> to vector<16x32xf32>
    %381 = vector.shape_cast %380 : vector<16x32xf32> to vector<1x16x32xf32>
    %382 = vector.broadcast %378 : vector<20x1x32xf32> to vector<20x16x32xf32>
    %383 = vector.broadcast %381 : vector<1x16x32xf32> to vector<20x16x32xf32>
    %384 = arith.mulf %382, %383 : vector<20x16x32xf32>
    %385 = arith.addf %375, %384 : vector<20x16x32xf32>
    %386 = vector.extract_strided_slice %17 {offsets = [0, 16], sizes = [16, 8], strides = [1, 1]} : vector<16x24xf32> to vector<16x8xf32>
    %387 = vector.extract_strided_slice %18 {offsets = [0, 16], sizes = [16, 8], strides = [1, 1]} : vector<16x24xf32> to vector<16x8xf32>
    %388 = vector.shape_cast %386 : vector<16x8xf32> to vector<1x16x8xf32>
    %389 = vector.shape_cast %387 : vector<16x8xf32> to vector<16x1x8xf32>
    %390 = vector.broadcast %388 : vector<1x16x8xf32> to vector<16x16x8xf32>
    %391 = vector.broadcast %389 : vector<16x1x8xf32> to vector<16x16x8xf32>
    %392 = arith.subf %390, %391 : vector<16x16x8xf32>
    %393 = math.tanh %392 : vector<16x16x8xf32>
    %394 = vector.shape_cast %393 : vector<16x16x8xf32> to vector<256x8xf32>
    %c2 = arith.constant 2 : index
    %c0_34 = arith.constant 0 : index
    %c0_35 = arith.constant 0 : index
    %395 = vector.load %arg6[%c2, %c0_34, %c0_35] : memref<3x8x32xf32, #tpu.memory_space<vmem>>, vector<1x8x32xf32>
    %396 = vector.shape_cast %395 : vector<1x8x32xf32> to vector<8x32xf32>
    %cst_36 = arith.constant dense<0.000000e+00> : vector<256x32xf32>
    %397 = tpu.matmul %394, %396, %cst_36 {dimension_numbers = #tpu.dot_dimension_numbers<[1], [0], [0], [1], [0, 0, 1, 1], [], []>} : vector<256x8xf32>, vector<8x32xf32>, vector<256x32xf32> -> vector<256x32xf32>
    %c2_37 = arith.constant 2 : index
    %c0_38 = arith.constant 0 : index
    %c0_39 = arith.constant 0 : index
    %398 = vector.load %arg7[%c2_37, %c0_38, %c0_39] : memref<3x1x32xf32, #tpu.memory_space<vmem>>, vector<1x1x32xf32>
    %399 = vector.shape_cast %398 : vector<1x1x32xf32> to vector<1x32xf32>
    %400 = vector.broadcast %399 : vector<1x32xf32> to vector<256x32xf32>
    %401 = arith.addf %397, %400 : vector<256x32xf32>
    %402 = vector.shape_cast %401 : vector<256x32xf32> to vector<16x16x32xf32>
    %c2_40 = arith.constant 2 : index
    %c0_41 = arith.constant 0 : index
    %c0_42 = arith.constant 0 : index
    %403 = vector.load %arg8[%c2_40, %c0_41, %c0_42] : memref<3x16x16xf32, #tpu.memory_space<vmem>>, vector<1x16x16xf32>
    %404 = vector.shape_cast %403 : vector<1x16x16xf32> to vector<16x16xf32>
    %405 = vector.shape_cast %404 : vector<16x16xf32> to vector<16x16x1xf32>
    %406 = vector.broadcast %405 : vector<16x16x1xf32> to vector<16x16x32xf32>
    %407 = arith.addf %402, %406 : vector<16x16x32xf32>
    %408 = vector.extract_strided_slice %8 {offsets = [0, 0, 64], sizes = [20, 16, 32], strides = [1, 1, 1]} : vector<20x16x128xf32> to vector<20x16x32xf32>
    %409 = vector.extract_strided_slice %408 {offsets = [0, 0, 0], sizes = [20, 1, 32], strides = [1, 1, 1]} : vector<20x16x32xf32> to vector<20x1x32xf32>
    %410 = vector.shape_cast %409 : vector<20x1x32xf32> to vector<20x32xf32>
    %411 = vector.shape_cast %410 : vector<20x32xf32> to vector<20x1x32xf32>
    %412 = vector.extract_strided_slice %407 {offsets = [0, 0, 0], sizes = [1, 16, 32], strides = [1, 1, 1]} : vector<16x16x32xf32> to vector<1x16x32xf32>
    %413 = vector.shape_cast %412 : vector<1x16x32xf32> to vector<16x32xf32>
    %414 = vector.shape_cast %413 : vector<16x32xf32> to vector<1x16x32xf32>
    %415 = vector.broadcast %411 : vector<20x1x32xf32> to vector<20x16x32xf32>
    %416 = vector.broadcast %414 : vector<1x16x32xf32> to vector<20x16x32xf32>
    %417 = arith.mulf %415, %416 : vector<20x16x32xf32>
    %418 = arith.addf %385, %417 : vector<20x16x32xf32>
    %419 = vector.extract_strided_slice %408 {offsets = [0, 1, 0], sizes = [20, 1, 32], strides = [1, 1, 1]} : vector<20x16x32xf32> to vector<20x1x32xf32>
    %420 = vector.shape_cast %419 : vector<20x1x32xf32> to vector<20x32xf32>
    %421 = vector.shape_cast %420 : vector<20x32xf32> to vector<20x1x32xf32>
    %422 = vector.extract_strided_slice %407 {offsets = [1, 0, 0], sizes = [1, 16, 32], strides = [1, 1, 1]} : vector<16x16x32xf32> to vector<1x16x32xf32>
    %423 = vector.shape_cast %422 : vector<1x16x32xf32> to vector<16x32xf32>
    %424 = vector.shape_cast %423 : vector<16x32xf32> to vector<1x16x32xf32>
    %425 = vector.broadcast %421 : vector<20x1x32xf32> to vector<20x16x32xf32>
    %426 = vector.broadcast %424 : vector<1x16x32xf32> to vector<20x16x32xf32>
    %427 = arith.mulf %425, %426 : vector<20x16x32xf32>
    %428 = arith.addf %418, %427 : vector<20x16x32xf32>
    %429 = vector.extract_strided_slice %408 {offsets = [0, 2, 0], sizes = [20, 1, 32], strides = [1, 1, 1]} : vector<20x16x32xf32> to vector<20x1x32xf32>
    %430 = vector.shape_cast %429 : vector<20x1x32xf32> to vector<20x32xf32>
    %431 = vector.shape_cast %430 : vector<20x32xf32> to vector<20x1x32xf32>
    %432 = vector.extract_strided_slice %407 {offsets = [2, 0, 0], sizes = [1, 16, 32], strides = [1, 1, 1]} : vector<16x16x32xf32> to vector<1x16x32xf32>
    %433 = vector.shape_cast %432 : vector<1x16x32xf32> to vector<16x32xf32>
    %434 = vector.shape_cast %433 : vector<16x32xf32> to vector<1x16x32xf32>
    %435 = vector.broadcast %431 : vector<20x1x32xf32> to vector<20x16x32xf32>
    %436 = vector.broadcast %434 : vector<1x16x32xf32> to vector<20x16x32xf32>
    %437 = arith.mulf %435, %436 : vector<20x16x32xf32>
    %438 = arith.addf %428, %437 : vector<20x16x32xf32>
    %439 = vector.extract_strided_slice %408 {offsets = [0, 3, 0], sizes = [20, 1, 32], strides = [1, 1, 1]} : vector<20x16x32xf32> to vector<20x1x32xf32>
    %440 = vector.shape_cast %439 : vector<20x1x32xf32> to vector<20x32xf32>
    %441 = vector.shape_cast %440 : vector<20x32xf32> to vector<20x1x32xf32>
    %442 = vector.extract_strided_slice %407 {offsets = [3, 0, 0], sizes = [1, 16, 32], strides = [1, 1, 1]} : vector<16x16x32xf32> to vector<1x16x32xf32>
    %443 = vector.shape_cast %442 : vector<1x16x32xf32> to vector<16x32xf32>
    %444 = vector.shape_cast %443 : vector<16x32xf32> to vector<1x16x32xf32>
    %445 = vector.broadcast %441 : vector<20x1x32xf32> to vector<20x16x32xf32>
    %446 = vector.broadcast %444 : vector<1x16x32xf32> to vector<20x16x32xf32>
    %447 = arith.mulf %445, %446 : vector<20x16x32xf32>
    %448 = arith.addf %438, %447 : vector<20x16x32xf32>
    %449 = vector.extract_strided_slice %408 {offsets = [0, 4, 0], sizes = [20, 1, 32], strides = [1, 1, 1]} : vector<20x16x32xf32> to vector<20x1x32xf32>
    %450 = vector.shape_cast %449 : vector<20x1x32xf32> to vector<20x32xf32>
    %451 = vector.shape_cast %450 : vector<20x32xf32> to vector<20x1x32xf32>
    %452 = vector.extract_strided_slice %407 {offsets = [4, 0, 0], sizes = [1, 16, 32], strides = [1, 1, 1]} : vector<16x16x32xf32> to vector<1x16x32xf32>
    %453 = vector.shape_cast %452 : vector<1x16x32xf32> to vector<16x32xf32>
    %454 = vector.shape_cast %453 : vector<16x32xf32> to vector<1x16x32xf32>
    %455 = vector.broadcast %451 : vector<20x1x32xf32> to vector<20x16x32xf32>
    %456 = vector.broadcast %454 : vector<1x16x32xf32> to vector<20x16x32xf32>
    %457 = arith.mulf %455, %456 : vector<20x16x32xf32>
    %458 = arith.addf %448, %457 : vector<20x16x32xf32>
    %459 = vector.extract_strided_slice %408 {offsets = [0, 5, 0], sizes = [20, 1, 32], strides = [1, 1, 1]} : vector<20x16x32xf32> to vector<20x1x32xf32>
    %460 = vector.shape_cast %459 : vector<20x1x32xf32> to vector<20x32xf32>
    %461 = vector.shape_cast %460 : vector<20x32xf32> to vector<20x1x32xf32>
    %462 = vector.extract_strided_slice %407 {offsets = [5, 0, 0], sizes = [1, 16, 32], strides = [1, 1, 1]} : vector<16x16x32xf32> to vector<1x16x32xf32>
    %463 = vector.shape_cast %462 : vector<1x16x32xf32> to vector<16x32xf32>
    %464 = vector.shape_cast %463 : vector<16x32xf32> to vector<1x16x32xf32>
    %465 = vector.broadcast %461 : vector<20x1x32xf32> to vector<20x16x32xf32>
    %466 = vector.broadcast %464 : vector<1x16x32xf32> to vector<20x16x32xf32>
    %467 = arith.mulf %465, %466 : vector<20x16x32xf32>
    %468 = arith.addf %458, %467 : vector<20x16x32xf32>
    %469 = vector.extract_strided_slice %408 {offsets = [0, 6, 0], sizes = [20, 1, 32], strides = [1, 1, 1]} : vector<20x16x32xf32> to vector<20x1x32xf32>
    %470 = vector.shape_cast %469 : vector<20x1x32xf32> to vector<20x32xf32>
    %471 = vector.shape_cast %470 : vector<20x32xf32> to vector<20x1x32xf32>
    %472 = vector.extract_strided_slice %407 {offsets = [6, 0, 0], sizes = [1, 16, 32], strides = [1, 1, 1]} : vector<16x16x32xf32> to vector<1x16x32xf32>
    %473 = vector.shape_cast %472 : vector<1x16x32xf32> to vector<16x32xf32>
    %474 = vector.shape_cast %473 : vector<16x32xf32> to vector<1x16x32xf32>
    %475 = vector.broadcast %471 : vector<20x1x32xf32> to vector<20x16x32xf32>
    %476 = vector.broadcast %474 : vector<1x16x32xf32> to vector<20x16x32xf32>
    %477 = arith.mulf %475, %476 : vector<20x16x32xf32>
    %478 = arith.addf %468, %477 : vector<20x16x32xf32>
    %479 = vector.extract_strided_slice %408 {offsets = [0, 7, 0], sizes = [20, 1, 32], strides = [1, 1, 1]} : vector<20x16x32xf32> to vector<20x1x32xf32>
    %480 = vector.shape_cast %479 : vector<20x1x32xf32> to vector<20x32xf32>
    %481 = vector.shape_cast %480 : vector<20x32xf32> to vector<20x1x32xf32>
    %482 = vector.extract_strided_slice %407 {offsets = [7, 0, 0], sizes = [1, 16, 32], strides = [1, 1, 1]} : vector<16x16x32xf32> to vector<1x16x32xf32>
    %483 = vector.shape_cast %482 : vector<1x16x32xf32> to vector<16x32xf32>
    %484 = vector.shape_cast %483 : vector<16x32xf32> to vector<1x16x32xf32>
    %485 = vector.broadcast %481 : vector<20x1x32xf32> to vector<20x16x32xf32>
    %486 = vector.broadcast %484 : vector<1x16x32xf32> to vector<20x16x32xf32>
    %487 = arith.mulf %485, %486 : vector<20x16x32xf32>
    %488 = arith.addf %478, %487 : vector<20x16x32xf32>
    %489 = vector.extract_strided_slice %408 {offsets = [0, 8, 0], sizes = [20, 1, 32], strides = [1, 1, 1]} : vector<20x16x32xf32> to vector<20x1x32xf32>
    %490 = vector.shape_cast %489 : vector<20x1x32xf32> to vector<20x32xf32>
    %491 = vector.shape_cast %490 : vector<20x32xf32> to vector<20x1x32xf32>
    %492 = vector.extract_strided_slice %407 {offsets = [8, 0, 0], sizes = [1, 16, 32], strides = [1, 1, 1]} : vector<16x16x32xf32> to vector<1x16x32xf32>
    %493 = vector.shape_cast %492 : vector<1x16x32xf32> to vector<16x32xf32>
    %494 = vector.shape_cast %493 : vector<16x32xf32> to vector<1x16x32xf32>
    %495 = vector.broadcast %491 : vector<20x1x32xf32> to vector<20x16x32xf32>
    %496 = vector.broadcast %494 : vector<1x16x32xf32> to vector<20x16x32xf32>
    %497 = arith.mulf %495, %496 : vector<20x16x32xf32>
    %498 = arith.addf %488, %497 : vector<20x16x32xf32>
    %499 = vector.extract_strided_slice %408 {offsets = [0, 9, 0], sizes = [20, 1, 32], strides = [1, 1, 1]} : vector<20x16x32xf32> to vector<20x1x32xf32>
    %500 = vector.shape_cast %499 : vector<20x1x32xf32> to vector<20x32xf32>
    %501 = vector.shape_cast %500 : vector<20x32xf32> to vector<20x1x32xf32>
    %502 = vector.extract_strided_slice %407 {offsets = [9, 0, 0], sizes = [1, 16, 32], strides = [1, 1, 1]} : vector<16x16x32xf32> to vector<1x16x32xf32>
    %503 = vector.shape_cast %502 : vector<1x16x32xf32> to vector<16x32xf32>
    %504 = vector.shape_cast %503 : vector<16x32xf32> to vector<1x16x32xf32>
    %505 = vector.broadcast %501 : vector<20x1x32xf32> to vector<20x16x32xf32>
    %506 = vector.broadcast %504 : vector<1x16x32xf32> to vector<20x16x32xf32>
    %507 = arith.mulf %505, %506 : vector<20x16x32xf32>
    %508 = arith.addf %498, %507 : vector<20x16x32xf32>
    %509 = vector.extract_strided_slice %408 {offsets = [0, 10, 0], sizes = [20, 1, 32], strides = [1, 1, 1]} : vector<20x16x32xf32> to vector<20x1x32xf32>
    %510 = vector.shape_cast %509 : vector<20x1x32xf32> to vector<20x32xf32>
    %511 = vector.shape_cast %510 : vector<20x32xf32> to vector<20x1x32xf32>
    %512 = vector.extract_strided_slice %407 {offsets = [10, 0, 0], sizes = [1, 16, 32], strides = [1, 1, 1]} : vector<16x16x32xf32> to vector<1x16x32xf32>
    %513 = vector.shape_cast %512 : vector<1x16x32xf32> to vector<16x32xf32>
    %514 = vector.shape_cast %513 : vector<16x32xf32> to vector<1x16x32xf32>
    %515 = vector.broadcast %511 : vector<20x1x32xf32> to vector<20x16x32xf32>
    %516 = vector.broadcast %514 : vector<1x16x32xf32> to vector<20x16x32xf32>
    %517 = arith.mulf %515, %516 : vector<20x16x32xf32>
    %518 = arith.addf %508, %517 : vector<20x16x32xf32>
    %519 = vector.extract_strided_slice %408 {offsets = [0, 11, 0], sizes = [20, 1, 32], strides = [1, 1, 1]} : vector<20x16x32xf32> to vector<20x1x32xf32>
    %520 = vector.shape_cast %519 : vector<20x1x32xf32> to vector<20x32xf32>
    %521 = vector.shape_cast %520 : vector<20x32xf32> to vector<20x1x32xf32>
    %522 = vector.extract_strided_slice %407 {offsets = [11, 0, 0], sizes = [1, 16, 32], strides = [1, 1, 1]} : vector<16x16x32xf32> to vector<1x16x32xf32>
    %523 = vector.shape_cast %522 : vector<1x16x32xf32> to vector<16x32xf32>
    %524 = vector.shape_cast %523 : vector<16x32xf32> to vector<1x16x32xf32>
    %525 = vector.broadcast %521 : vector<20x1x32xf32> to vector<20x16x32xf32>
    %526 = vector.broadcast %524 : vector<1x16x32xf32> to vector<20x16x32xf32>
    %527 = arith.mulf %525, %526 : vector<20x16x32xf32>
    %528 = arith.addf %518, %527 : vector<20x16x32xf32>
    %529 = vector.extract_strided_slice %408 {offsets = [0, 12, 0], sizes = [20, 1, 32], strides = [1, 1, 1]} : vector<20x16x32xf32> to vector<20x1x32xf32>
    %530 = vector.shape_cast %529 : vector<20x1x32xf32> to vector<20x32xf32>
    %531 = vector.shape_cast %530 : vector<20x32xf32> to vector<20x1x32xf32>
    %532 = vector.extract_strided_slice %407 {offsets = [12, 0, 0], sizes = [1, 16, 32], strides = [1, 1, 1]} : vector<16x16x32xf32> to vector<1x16x32xf32>
    %533 = vector.shape_cast %532 : vector<1x16x32xf32> to vector<16x32xf32>
    %534 = vector.shape_cast %533 : vector<16x32xf32> to vector<1x16x32xf32>
    %535 = vector.broadcast %531 : vector<20x1x32xf32> to vector<20x16x32xf32>
    %536 = vector.broadcast %534 : vector<1x16x32xf32> to vector<20x16x32xf32>
    %537 = arith.mulf %535, %536 : vector<20x16x32xf32>
    %538 = arith.addf %528, %537 : vector<20x16x32xf32>
    %539 = vector.extract_strided_slice %408 {offsets = [0, 13, 0], sizes = [20, 1, 32], strides = [1, 1, 1]} : vector<20x16x32xf32> to vector<20x1x32xf32>
    %540 = vector.shape_cast %539 : vector<20x1x32xf32> to vector<20x32xf32>
    %541 = vector.shape_cast %540 : vector<20x32xf32> to vector<20x1x32xf32>
    %542 = vector.extract_strided_slice %407 {offsets = [13, 0, 0], sizes = [1, 16, 32], strides = [1, 1, 1]} : vector<16x16x32xf32> to vector<1x16x32xf32>
    %543 = vector.shape_cast %542 : vector<1x16x32xf32> to vector<16x32xf32>
    %544 = vector.shape_cast %543 : vector<16x32xf32> to vector<1x16x32xf32>
    %545 = vector.broadcast %541 : vector<20x1x32xf32> to vector<20x16x32xf32>
    %546 = vector.broadcast %544 : vector<1x16x32xf32> to vector<20x16x32xf32>
    %547 = arith.mulf %545, %546 : vector<20x16x32xf32>
    %548 = arith.addf %538, %547 : vector<20x16x32xf32>
    %549 = vector.extract_strided_slice %408 {offsets = [0, 14, 0], sizes = [20, 1, 32], strides = [1, 1, 1]} : vector<20x16x32xf32> to vector<20x1x32xf32>
    %550 = vector.shape_cast %549 : vector<20x1x32xf32> to vector<20x32xf32>
    %551 = vector.shape_cast %550 : vector<20x32xf32> to vector<20x1x32xf32>
    %552 = vector.extract_strided_slice %407 {offsets = [14, 0, 0], sizes = [1, 16, 32], strides = [1, 1, 1]} : vector<16x16x32xf32> to vector<1x16x32xf32>
    %553 = vector.shape_cast %552 : vector<1x16x32xf32> to vector<16x32xf32>
    %554 = vector.shape_cast %553 : vector<16x32xf32> to vector<1x16x32xf32>
    %555 = vector.broadcast %551 : vector<20x1x32xf32> to vector<20x16x32xf32>
    %556 = vector.broadcast %554 : vector<1x16x32xf32> to vector<20x16x32xf32>
    %557 = arith.mulf %555, %556 : vector<20x16x32xf32>
    %558 = arith.addf %548, %557 : vector<20x16x32xf32>
    %559 = vector.extract_strided_slice %408 {offsets = [0, 15, 0], sizes = [20, 1, 32], strides = [1, 1, 1]} : vector<20x16x32xf32> to vector<20x1x32xf32>
    %560 = vector.shape_cast %559 : vector<20x1x32xf32> to vector<20x32xf32>
    %561 = vector.shape_cast %560 : vector<20x32xf32> to vector<20x1x32xf32>
    %562 = vector.extract_strided_slice %407 {offsets = [15, 0, 0], sizes = [1, 16, 32], strides = [1, 1, 1]} : vector<16x16x32xf32> to vector<1x16x32xf32>
    %563 = vector.shape_cast %562 : vector<1x16x32xf32> to vector<16x32xf32>
    %564 = vector.shape_cast %563 : vector<16x32xf32> to vector<1x16x32xf32>
    %565 = vector.broadcast %561 : vector<20x1x32xf32> to vector<20x16x32xf32>
    %566 = vector.broadcast %564 : vector<1x16x32xf32> to vector<20x16x32xf32>
    %567 = arith.mulf %565, %566 : vector<20x16x32xf32>
    %568 = arith.addf %558, %567 : vector<20x16x32xf32>
    %c0_43 = arith.constant 0 : index
    %c0_44 = arith.constant 0 : index
    %569 = vector.load %arg9[%c0_43, %c0_44] : memref<1x32xf32, #tpu.memory_space<vmem>>, vector<1x32xf32>
    %570 = vector.shape_cast %569 : vector<1x32xf32> to vector<1x1x32xf32>
    %571 = vector.broadcast %570 : vector<1x1x32xf32> to vector<20x16x32xf32>
    %572 = arith.mulf %568, %571 : vector<20x16x32xf32>
    %c0_45 = arith.constant 0 : index
    %c0_46 = arith.constant 0 : index
    %573 = vector.load %arg10[%c0_45, %c0_46] : memref<1x32xf32, #tpu.memory_space<vmem>>, vector<1x32xf32>
    %574 = vector.shape_cast %573 : vector<1x32xf32> to vector<1x1x32xf32>
    %575 = vector.broadcast %574 : vector<1x1x32xf32> to vector<20x16x32xf32>
    %576 = arith.addf %572, %575 : vector<20x16x32xf32>
    %577 = vector.shape_cast %576 : vector<20x16x32xf32> to vector<320x32xf32>
    %578 = tpu.transpose %577, [1, 0] : vector<320x32xf32> -> vector<32x320xf32>
    %c0_47 = arith.constant 0 : index
    %c0_48 = arith.constant 0 : index
    %c0_49 = arith.constant 0 : index
    %579 = vector.load %arg11[%c0_47, %c0_48, %c0_49] : memref<1x32x320xf32, #tpu.memory_space<vmem>>, vector<1x32x320xf32>
    %580 = vector.shape_cast %579 : vector<1x32x320xf32> to vector<32x320xf32>
    %581 = vector.shape_cast %578 : vector<32x320xf32> to vector<1x32x320xf32>
    tpu.vector_store %arg11[%c0_47, %c0_48, %c0_49], %581 {strides = array<i32>} : memref<1x32x320xf32, #tpu.memory_space<vmem>>, vector<1x32x320xf32>,
    return
  }
  func.func @transform_0(%arg0: i32) -> (i32, i32, i32, i32) {
    %c0_i32 = arith.constant 0 : i32
    %c0_i32_0 = arith.constant 0 : i32
    %c0_i32_1 = arith.constant 0 : i32
    %c0_i32_2 = arith.constant 0 : i32
    return %arg0, %c0_i32, %c0_i32_0, %c0_i32_1 : i32, i32, i32, i32
  }
  func.func @transform_1(%arg0: i32) -> (i32, i32) {
    %c0_i32 = arith.constant 0 : i32
    %c0_i32_0 = arith.constant 0 : i32
    %c0_i32_1 = arith.constant 0 : i32
    return %c0_i32, %c0_i32_0 : i32, i32
  }
  func.func @transform_2(%arg0: i32) -> (i32, i32) {
    %c0_i32 = arith.constant 0 : i32
    %c0_i32_0 = arith.constant 0 : i32
    %c0_i32_1 = arith.constant 0 : i32
    return %c0_i32, %c0_i32_0 : i32, i32
  }
  func.func @transform_3(%arg0: i32) -> (i32, i32) {
    %c0_i32 = arith.constant 0 : i32
    %c0_i32_0 = arith.constant 0 : i32
    %c0_i32_1 = arith.constant 0 : i32
    return %c0_i32, %c0_i32_0 : i32, i32
  }
  func.func @transform_4(%arg0: i32) -> (i32, i32) {
    %c0_i32 = arith.constant 0 : i32
    %c0_i32_0 = arith.constant 0 : i32
    %c0_i32_1 = arith.constant 0 : i32
    return %c0_i32, %c0_i32_0 : i32, i32
  }
  func.func @transform_5(%arg0: i32) -> (i32, i32, i32) {
    %c0_i32 = arith.constant 0 : i32
    %c0_i32_0 = arith.constant 0 : i32
    %c0_i32_1 = arith.constant 0 : i32
    %c0_i32_2 = arith.constant 0 : i32
    return %c0_i32, %c0_i32_0, %c0_i32_1 : i32, i32, i32
  }
  func.func @transform_6(%arg0: i32) -> (i32, i32, i32) {
    %c0_i32 = arith.constant 0 : i32
    %c0_i32_0 = arith.constant 0 : i32
    %c0_i32_1 = arith.constant 0 : i32
    %c0_i32_2 = arith.constant 0 : i32
    return %c0_i32, %c0_i32_0, %c0_i32_1 : i32, i32, i32
  }
  func.func @transform_7(%arg0: i32) -> (i32, i32, i32) {
    %c0_i32 = arith.constant 0 : i32
    %c0_i32_0 = arith.constant 0 : i32
    %c0_i32_1 = arith.constant 0 : i32
    %c0_i32_2 = arith.constant 0 : i32
    return %c0_i32, %c0_i32_0, %c0_i32_1 : i32, i32, i32
  }
  func.func @transform_8(%arg0: i32) -> (i32, i32) {
    %c0_i32 = arith.constant 0 : i32
    %c0_i32_0 = arith.constant 0 : i32
    %c0_i32_1 = arith.constant 0 : i32
    return %c0_i32, %c0_i32_0 : i32, i32
  }
  func.func @transform_9(%arg0: i32) -> (i32, i32) {
    %c0_i32 = arith.constant 0 : i32
    %c0_i32_0 = arith.constant 0 : i32
    %c0_i32_1 = arith.constant 0 : i32
    return %c0_i32, %c0_i32_0 : i32, i32
  }
  func.func @transform_10(%arg0: i32) -> (i32, i32, i32) {
    %c0_i32 = arith.constant 0 : i32
    %c0_i32_0 = arith.constant 0 : i32
    %c0_i32_1 = arith.constant 0 : i32
    return %arg0, %c0_i32, %c0_i32_0 : i32, i32, i32
  }
}

</mosaic_0001>

<llo_original>
// kernel: ctr_gc_forward.1
$region0: #{ctr_gc_forward.1}
  #allocation0 [shape = 'u32[]', space=smem, size = 0x4, offset = 0x4, fixed_abs, tag = 'smem constant byte address 0x4 - core index']
  #allocation1 [shape = 'u32[144,128]{1,0:T(1,128)}', space=vmem, size = 0x12000, scoped, tag = 'internal scratch']
  %s0 = inlined_call_operand.vmem [shape: f32[2,20,16,64], index: 0, kind: input, shape index: {}]
  %s1 = inlined_call_operand.vmem [shape: f32[64,48], index: 1, kind: input, shape index: {}]
  %s2 = inlined_call_operand.vmem [shape: f32[1,48], index: 2, kind: input, shape index: {}]
  %s3 = inlined_call_operand.vmem [shape: f32[64,128], index: 3, kind: input, shape index: {}]
  %s4 = inlined_call_operand.vmem [shape: f32[1,128], index: 4, kind: input, shape index: {}]
  %s5 = inlined_call_operand.vmem [shape: f32[3,8,32], index: 5, kind: input, shape index: {}]
  %s6 = inlined_call_operand.vmem [shape: f32[3,1,32], index: 6, kind: input, shape index: {}]
  %s7 = inlined_call_operand.vmem [shape: f32[3,16,16], index: 7, kind: input, shape index: {}]
  %s8 = inlined_call_operand.vmem [shape: f32[1,32], index: 8, kind: input, shape index: {}]
  %s9 = inlined_call_operand.vmem [shape: f32[1,32], index: 9, kind: input, shape index: {}]
  %s10 = inlined_call_operand.vmem [shape: f32[2,32,320], index: 10, kind: output, shape index: {}]
  %s11 = sld [smem:[#allocation0]]
  $region73: #{ctr_gc_forward.1} parent=0
    _
  %s13 = ssub.s32 1, %s11
  %s14 = scalar_select 0, %s13, %s11
  loop: start=0, step=1, limit=4
  $region2: #{ctr_gc_forward.1} parent=0 // loop_pre_header
    _
  $region3: #{ctr_gc_forward.1} parent=0 // loop_header
    %s16 = sphi 0, %s20
    %p17 = scmp.ge.s32.totalorder %s16, 4
    %s26 = sphi 0, %s28
    %s29 = sphi 0, %s26
    %s30 = sphi 0, %s29
    %s46 = sphi 0, %s30
    %s50 = sphi 0, %s50
    %s52 = sphi 0, %s50
    %s53 = sphi 0, %s52
    %s67 = sphi 0, %s53
    %s71 = sphi 0, %s71
    %s73 = sphi 0, %s71
    %s74 = sphi 0, %s73
    %s88 = sphi 0, %s74
    %s92 = sphi 0, %s92
    %s94 = sphi 0, %s92
    %s95 = sphi 0, %s94
    %s109 = sphi 0, %s95
    %s113 = sphi 0, %s113
    %s115 = sphi 0, %s113
    %s116 = sphi 0, %s115
    %s130 = sphi 0, %s116
    %s134 = sphi 0, %s134
    %s136 = sphi 0, %s134
    %s137 = sphi 0, %s136
    %s151 = sphi 0, %s137
    %s155 = sphi 0, %s155
    %s157 = sphi 0, %s155
    %s158 = sphi 0, %s157
    %s172 = sphi 0, %s158
    %s176 = sphi 0, %s176
    %s178 = sphi 0, %s176
    %s179 = sphi 0, %s178
    %s193 = sphi 0, %s179
    %s197 = sphi 0, %s197
    %s199 = sphi 0, %s197
    %s200 = sphi 0, %s199
    %s214 = sphi 0, %s200
    %s218 = sphi 0, %s218
    %s220 = sphi 0, %s218
    %s221 = sphi 0, %s220
    %s235 = sphi 0, %s221
    %s241 = sphi 0, %s243
    %s244 = sphi 0, %s241
    %s245 = sphi 0, %s244
    %s261 = sphi 0, %s245
  $region4: #{ctr_gc_forward.1} parent=0 // loop_header_branch
    %19 = sbr.rel (%p17) target = $region8
  $region5: #{ctr_gc_forward.1} parent=0 // loop_body
    %s21 = ssub.s32 %s16, 1
    %s22 = ssub.s32 %s16, 2
    %s23 = sadd.s32 %s16, 1
    %s24 = ssub.s32 %s16, %s23
    %p25 = scmp.eq.s32.totalorder %s24, 0
    %s27 = sadd.s32 %s26, 1
    %s28 = scalar_select %p25, %s26, %s27
    %p31 = pneg %p25
    %p32 = scmp.eq.s32.totalorder %s16, 1
    %p33 = por %p31, %p32
    %p34 = scmp.ne.s32.totalorder %s26, %s29
    %p35 = scmp.eq.s32.totalorder %s16, 0
    %p36 = por %p34, %p35
    %p37 = scmp.ne.s32.totalorder %s26, %s29
    %p38 = scmp.eq.s32.totalorder %s21, 1
    %p39 = por %p37, %p38
    %p40 = scmp.ne.s32.totalorder %s29, %s30
    %p41 = scmp.eq.s32.totalorder %s21, 0
    %p42 = por %p40, %p41
    %p43 = scmp.ne.s32.totalorder %s29, %s30
    %p44 = scmp.eq.s32.totalorder %s22, 1
    %p45 = por %p43, %p44
    %p47 = scmp.ne.s32.totalorder %s30, %s46
    %p48 = scmp.eq.s32.totalorder %s22, 0
    %p49 = por %p47, %p48
    %s51 = sadd.s32 %s50, 1
    %p54 = scmp.eq.s32.totalorder %s16, 1
    %p55 = scmp.ne.s32.totalorder %s50, %s52
    %p56 = scmp.eq.s32.totalorder %s16, 0
    %p57 = por %p55, %p56
    %p58 = scmp.ne.s32.totalorder %s50, %s52
    %p59 = scmp.eq.s32.totalorder %s21, 1
    %p60 = por %p58, %p59
    %p61 = scmp.ne.s32.totalorder %s52, %s53
    %p62 = scmp.eq.s32.totalorder %s21, 0
    %p63 = por %p61, %p62
    %p64 = scmp.ne.s32.totalorder %s52, %s53
    %p65 = scmp.eq.s32.totalorder %s22, 1
    %p66 = por %p64, %p65
    %p68 = scmp.ne.s32.totalorder %s53, %s67
    %p69 = scmp.eq.s32.totalorder %s22, 0
    %p70 = por %p68, %p69
    %s72 = sadd.s32 %s71, 1
    %p75 = scmp.eq.s32.totalorder %s16, 1
    %p76 = scmp.ne.s32.totalorder %s71, %s73
    %p77 = scmp.eq.s32.totalorder %s16, 0
    %p78 = por %p76, %p77
    %p79 = scmp.ne.s32.totalorder %s71, %s73
    %p80 = scmp.eq.s32.totalorder %s21, 1
    %p81 = por %p79, %p80
    %p82 = scmp.ne.s32.totalorder %s73, %s74
    %p83 = scmp.eq.s32.totalorder %s21, 0
    %p84 = por %p82, %p83
    %p85 = scmp.ne.s32.totalorder %s73, %s74
    %p86 = scmp.eq.s32.totalorder %s22, 1
    %p87 = por %p85, %p86
    %p89 = scmp.ne.s32.totalorder %s74, %s88
    %p90 = scmp.eq.s32.totalorder %s22, 0
    %p91 = por %p89, %p90
    %s93 = sadd.s32 %s92, 1
    %p96 = scmp.eq.s32.totalorder %s16, 1
    %p97 = scmp.ne.s32.totalorder %s92, %s94
    %p98 = scmp.eq.s32.totalorder %s16, 0
    %p99 = por %p97, %p98
    %p100 = scmp.ne.s32.totalorder %s92, %s94
    %p101 = scmp.eq.s32.totalorder %s21, 1
    %p102 = por %p100, %p101
    %p103 = scmp.ne.s32.totalorder %s94, %s95
    %p104 = scmp.eq.s32.totalorder %s21, 0
    %p105 = por %p103, %p104
    %p106 = scmp.ne.s32.totalorder %s94, %s95
    %p107 = scmp.eq.s32.totalorder %s22, 1
    %p108 = por %p106, %p107
    %p110 = scmp.ne.s32.totalorder %s95, %s109
    %p111 = scmp.eq.s32.totalorder %s22, 0
    %p112 = por %p110, %p111
    %s114 = sadd.s32 %s113, 1
    %p117 = scmp.eq.s32.totalorder %s16, 1
    %p118 = scmp.ne.s32.totalorder %s113, %s115
    %p119 = scmp.eq.s32.totalorder %s16, 0
    %p120 = por %p118, %p119
    %p121 = scmp.ne.s32.totalorder %s113, %s115
    %p122 = scmp.eq.s32.totalorder %s21, 1
    %p123 = por %p121, %p122
    %p124 = scmp.ne.s32.totalorder %s115, %s116
    %p125 = scmp.eq.s32.totalorder %s21, 0
    %p126 = por %p124, %p125
    %p127 = scmp.ne.s32.totalorder %s115, %s116
    %p128 = scmp.eq.s32.totalorder %s22, 1
    %p129 = por %p127, %p128
    %p131 = scmp.ne.s32.totalorder %s116, %s130
    %p132 = scmp.eq.s32.totalorder %s22, 0
    %p133 = por %p131, %p132
    %s135 = sadd.s32 %s134, 1
    %p138 = scmp.eq.s32.totalorder %s16, 1
    %p139 = scmp.ne.s32.totalorder %s134, %s136
    %p140 = scmp.eq.s32.totalorder %s16, 0
    %p141 = por %p139, %p140
    %p142 = scmp.ne.s32.totalorder %s134, %s136
    %p143 = scmp.eq.s32.totalorder %s21, 1
    %p144 = por %p142, %p143
    %p145 = scmp.ne.s32.totalorder %s136, %s137
    %p146 = scmp.eq.s32.totalorder %s21, 0
    %p147 = por %p145, %p146
    %p148 = scmp.ne.s32.totalorder %s136, %s137
    %p149 = scmp.eq.s32.totalorder %s22, 1
    %p150 = por %p148, %p149
    %p152 = scmp.ne.s32.totalorder %s137, %s151
    %p153 = scmp.eq.s32.totalorder %s22, 0
    %p154 = por %p152, %p153
    %s156 = sadd.s32 %s155, 1
    %p159 = scmp.eq.s32.totalorder %s16, 1
    %p160 = scmp.ne.s32.totalorder %s155, %s157
    %p161 = scmp.eq.s32.totalorder %s16, 0
    %p162 = por %p160, %p161
    %p163 = scmp.ne.s32.totalorder %s155, %s157
    %p164 = scmp.eq.s32.totalorder %s21, 1
    %p165 = por %p163, %p164
    %p166 = scmp.ne.s32.totalorder %s157, %s158
    %p167 = scmp.eq.s32.totalorder %s21, 0
    %p168 = por %p166, %p167
    %p169 = scmp.ne.s32.totalorder %s157, %s158
    %p170 = scmp.eq.s32.totalorder %s22, 1
    %p171 = por %p169, %p170
    %p173 = scmp.ne.s32.totalorder %s158, %s172
    %p174 = scmp.eq.s32.totalorder %s22, 0
    %p175 = por %p173, %p174
    %s177 = sadd.s32 %s176, 1
    %p180 = scmp.eq.s32.totalorder %s16, 1
    %p181 = scmp.ne.s32.totalorder %s176, %s178
    %p182 = scmp.eq.s32.totalorder %s16, 0
    %p183 = por %p181, %p182
    %p184 = scmp.ne.s32.totalorder %s176, %s178
    %p185 = scmp.eq.s32.totalorder %s21, 1
    %p186 = por %p184, %p185
    %p187 = scmp.ne.s32.totalorder %s178, %s179
    %p188 = scmp.eq.s32.totalorder %s21, 0
    %p189 = por %p187, %p188
    %p190 = scmp.ne.s32.totalorder %s178, %s179
    %p191 = scmp.eq.s32.totalorder %s22, 1
    %p192 = por %p190, %p191
    %p194 = scmp.ne.s32.totalorder %s179, %s193
    %p195 = scmp.eq.s32.totalorder %s22, 0
    %p196 = por %p194, %p195
    %s198 = sadd.s32 %s197, 1
    %p201 = scmp.eq.s32.totalorder %s16, 1
    %p202 = scmp.ne.s32.totalorder %s197, %s199
    %p203 = scmp.eq.s32.totalorder %s16, 0
    %p204 = por %p202, %p203
    %p205 = scmp.ne.s32.totalorder %s197, %s199
    %p206 = scmp.eq.s32.totalorder %s21, 1
    %p207 = por %p205, %p206
    %p208 = scmp.ne.s32.totalorder %s199, %s200
    %p209 = scmp.eq.s32.totalorder %s21, 0
    %p210 = por %p208, %p209
    %p211 = scmp.ne.s32.totalorder %s199, %s200
    %p212 = scmp.eq.s32.totalorder %s22, 1
    %p213 = por %p211, %p212
    %p215 = scmp.ne.s32.totalorder %s200, %s214
    %p216 = scmp.eq.s32.totalorder %s22, 0
    %p217 = por %p215, %p216
    %s219 = sadd.s32 %s218, 1
    %p222 = scmp.eq.s32.totalorder %s16, 1
    %p223 = scmp.ne.s32.totalorder %s218, %s220
    %p224 = scmp.eq.s32.totalorder %s16, 0
    %p225 = por %p223, %p224
    %p226 = scmp.ne.s32.totalorder %s218, %s220
    %p227 = scmp.eq.s32.totalorder %s21, 1
    %p228 = por %p226, %p227
    %p229 = scmp.ne.s32.totalorder %s220, %s221
    %p230 = scmp.eq.s32.totalorder %s21, 0
    %p231 = por %p229, %p230
    %p232 = scmp.ne.s32.totalorder %s220, %s221
    %p233 = scmp.eq.s32.totalorder %s22, 1
    %p234 = por %p232, %p233
    %p236 = scmp.ne.s32.totalorder %s221, %s235
    %p237 = scmp.eq.s32.totalorder %s22, 0
    %p238 = por %p236, %p237
    %s239 = ssub.s32 %s16, %s23
    %p240 = scmp.eq.s32.totalorder %s239, 0
    %s242 = sadd.s32 %s241, 1
    %s243 = scalar_select %p240, %s241, %s242
    %p246 = pneg %p240
    %p247 = scmp.eq.s32.totalorder %s16, 1
    %p248 = por %p246, %p247
    %p249 = scmp.ne.s32.totalorder %s241, %s244
    %p250 = scmp.eq.s32.totalorder %s16, 0
    %p251 = por %p249, %p250
    %p252 = scmp.ne.s32.totalorder %s241, %s244
    %p253 = scmp.eq.s32.totalorder %s21, 1
    %p254 = por %p252, %p253
    %p255 = scmp.ne.s32.totalorder %s244, %s245
    %p256 = scmp.eq.s32.totalorder %s21, 0
    %p257 = por %p255, %p256
    %p258 = scmp.ne.s32.totalorder %s244, %s245
    %p259 = scmp.eq.s32.totalorder %s22, 1
    %p260 = por %p258, %p259
    %p262 = scmp.ne.s32.totalorder %s245, %s261
    %p263 = scmp.eq.s32.totalorder %s22, 0
    %p264 = por %p262, %p263
    %p265 = scmp.le.s32.totalorder 1, %s16
    %p266 = scmp.lt.s32.totalorder %s16, 3
    %p267 = pnand %p265, %p266
    %p268 = pneg %p267
    // Predicated region
    $region9: #{ctr_gc_forward.1} parent=5 // pred_check
      _
    $region10: #{ctr_gc_forward.1} parent=5 // pred_check_branch
      %270 = sbr.rel (%p267) target = $region12
    $region11: #{ctr_gc_forward.1} parent=5 // pred_region
      %s271 = ssub.s32 %s16, 1
      // Predicated region
      $region13: #{ctr_gc_forward.1} parent=11 // pred_check
        %p272 = pneg %p63
      $region14: #{ctr_gc_forward.1} parent=11 // pred_check_branch
        %274 = sbr.rel (%p272) target = $region16
      $region15: #{ctr_gc_forward.1} parent=11 // pred_region
        _
      $region16: #{ctr_gc_forward.1} parent=11 // pred_fallthru
        _
      // Predicated region
      $region17: #{ctr_gc_forward.1} parent=11 // pred_check
        %p275 = pneg %p84
      $region18: #{ctr_gc_forward.1} parent=11 // pred_check_branch
        %277 = sbr.rel (%p275) target = $region20
      $region19: #{ctr_gc_forward.1} parent=11 // pred_region
        _
      $region20: #{ctr_gc_forward.1} parent=11 // pred_fallthru
        _
      // Predicated region
      $region21: #{ctr_gc_forward.1} parent=11 // pred_check
        %p278 = pneg %p105
      $region22: #{ctr_gc_forward.1} parent=11 // pred_check_branch
        %280 = sbr.rel (%p278) target = $region24
      $region23: #{ctr_gc_forward.1} parent=11 // pred_region
        _
      $region24: #{ctr_gc_forward.1} parent=11 // pred_fallthru
        _
      // Predicated region
      $region25: #{ctr_gc_forward.1} parent=11 // pred_check
        %p281 = pneg %p126
      $region26: #{ctr_gc_forward.1} parent=11 // pred_check_branch
        %283 = sbr.rel (%p281) target = $region28
      $region27: #{ctr_gc_forward.1} parent=11 // pred_region
        _
      $region28: #{ctr_gc_forward.1} parent=11 // pred_fallthru
        _
      // Predicated region
      $region29: #{ctr_gc_forward.1} parent=11 // pred_check
        %p284 = pneg %p147
      $region30: #{ctr_gc_forward.1} parent=11 // pred_check_branch
        %286 = sbr.rel (%p284) target = $region32
      $region31: #{ctr_gc_forward.1} parent=11 // pred_region
        _
      $region32: #{ctr_gc_forward.1} parent=11 // pred_fallthru
        _
      // Predicated region
      $region33: #{ctr_gc_forward.1} parent=11 // pred_check
        %p287 = pneg %p168
      $region34: #{ctr_gc_forward.1} parent=11 // pred_check_branch
        %289 = sbr.rel (%p287) target = $region36
      $region35: #{ctr_gc_forward.1} parent=11 // pred_region
        _
      $region36: #{ctr_gc_forward.1} parent=11 // pred_fallthru
        _
      // Predicated region
      $region37: #{ctr_gc_forward.1} parent=11 // pred_check
        %p290 = pneg %p189
      $region38: #{ctr_gc_forward.1} parent=11 // pred_check_branch
        %292 = sbr.rel (%p290) target = $region40
      $region39: #{ctr_gc_forward.1} parent=11 // pred_region
        _
      $region40: #{ctr_gc_forward.1} parent=11 // pred_fallthru
        _
      // Predicated region
      $region41: #{ctr_gc_forward.1} parent=11 // pred_check
        %p293 = pneg %p210
      $region42: #{ctr_gc_forward.1} parent=11 // pred_check_branch
        %295 = sbr.rel (%p293) target = $region44
      $region43: #{ctr_gc_forward.1} parent=11 // pred_region
        _
      $region44: #{ctr_gc_forward.1} parent=11 // pred_fallthru
        _
      // Predicated region
      $region45: #{ctr_gc_forward.1} parent=11 // pred_check
        %p296 = pneg %p231
      $region46: #{ctr_gc_forward.1} parent=11 // pred_check_branch
        %298 = sbr.rel (%p296) target = $region48
      $region47: #{ctr_gc_forward.1} parent=11 // pred_region
        _
      $region48: #{ctr_gc_forward.1} parent=11 // pred_fallthru
        _
    $region12: #{ctr_gc_forward.1} parent=5 // pred_fallthru
      _
    %p299 = scmp.lt.s32.totalorder %s16, 2
    // Predicated region
    $region49: #{ctr_gc_forward.1} parent=5 // pred_check
      %p300 = pneg %p299
    $region50: #{ctr_gc_forward.1} parent=5 // pred_check_branch
      %302 = sbr.rel (%p300) target = $region52
    $region51: #{ctr_gc_forward.1} parent=5 // pred_region
      // Predicated region
      $region53: #{ctr_gc_forward.1} parent=51 // pred_check
        %p303 = pneg %p36
      $region54: #{ctr_gc_forward.1} parent=51 // pred_check_branch
        %305 = sbr.rel (%p303) target = $region56
      $region55: #{ctr_gc_forward.1} parent=51 // pred_region
        %p306 = scmp.lt.s32.totalorder %s16, 1
        %s307 = scalar_select %p306, %s16, 1
        %s308 = smul.addr %s307, 40
        %s309 = smul.addr %s308, 8
        %s310 = scalar_lea.vmem %s0, %s309
      $region56: #{ctr_gc_forward.1} parent=51 // pred_fallthru
        _
    $region52: #{ctr_gc_forward.1} parent=5 // pred_fallthru
      _
    %p311 = scmp.le.s32.totalorder 1, %s16
    %p312 = scmp.lt.s32.totalorder %s16, 3
    %p313 = pnand %p311, %p312
    %p314 = pneg %p313
    // Predicated region
    $region57: #{ctr_gc_forward.1} parent=5 // pred_check
      _
    $region58: #{ctr_gc_forward.1} parent=5 // pred_check_branch
      %316 = sbr.rel (%p313) target = $region60
    $region59: #{ctr_gc_forward.1} parent=5 // pred_region
      %s317 = ssub.s32 %s16, 1
      %p318 = scmp.lt.s32.totalorder %s21, 1
      %s319 = scalar_select %p318, %s21, 1
      %s320 = smul.addr %s319, 40
      %s321 = smul.addr %s320, 8
      %s322 = scalar_lea.vmem %s0, %s321
      %p323 = pneg %p42
      %p324 = pneg %p39
      %p325 = pneg %p63
      %p326 = pneg %p60
      %p327 = pneg %p84
      %p328 = pneg %p81
      %p329 = pneg %p105
      %p330 = pneg %p102
      %p331 = pneg %p126
      %p332 = pneg %p123
      %p333 = pneg %p147
      %p334 = pneg %p144
      %p335 = pneg %p168
      %p336 = pneg %p165
      %p337 = pneg %p189
      %p338 = pneg %p186
      %p339 = pneg %p210
      %p340 = pneg %p207
      %p341 = pneg %p231
      %p342 = pneg %p228
      %p343 = pneg %p257
      %p344 = pneg %p254
      %p345 = scmp.lt.s32.totalorder %s21, 1
      %s346 = scalar_select %p345, %s21, 1
      %s347 = smul.addr %s346, 12
      %s348 = smul.addr %s347, 8
      %s349 = scalar_lea.vmem %s10, %s348
      %p350 = scmp.lt.s32.totalorder %s21, 1
      %s351 = scalar_select %p350, %s21, 1
      %s352 = smul.addr %s351, 40
      %s353 = smul.addr %s352, 8
      %s354 = scalar_lea.vmem %s0, %s353
      %p355 = scmp.lt.s32.totalorder %s21, 1
      %s356 = scalar_select %p355, %s21, 1
      %s357 = smul.addr %s356, 12
      %s358 = smul.addr %s357, 8
      %s359 = scalar_lea.vmem %s10, %s358
      %v360 = vld [vmem:[%s354] sm:$0xff]
      %v361 = vld [vmem:[%s354 + $0x8] sm:$0xff]
      %v362 = vld [vmem:[%s354 + $0x10] sm:$0xff]
      %v363 = vld [vmem:[%s354 + $0x18] sm:$0xff]
      %v364 = vld [vmem:[%s354 + $0x20] sm:$0xff]
      %v365 = vld [vmem:[%s354 + $0x28] sm:$0xff]
      %v366 = vld [vmem:[%s354 + $0x30] sm:$0xff]
      %v367 = vld [vmem:[%s354 + $0x38] sm:$0xff]
      %v368 = vld [vmem:[%s354 + $0x40] sm:$0xff]
      %v369 = vld [vmem:[%s354 + $0x48] sm:$0xff]
      %v370 = vld [vmem:[%s354 + $0x50] sm:$0xff]
      %v371 = vld [vmem:[%s354 + $0x58] sm:$0xff]
      %v372 = vld [vmem:[%s354 + $0x60] sm:$0xff]
      %v373 = vld [vmem:[%s354 + $0x68] sm:$0xff]
      %v374 = vld [vmem:[%s354 + $0x70] sm:$0xff]
      %v375 = vld [vmem:[%s354 + $0x78] sm:$0xff]
      %v376 = vld [vmem:[%s354 + $0x80] sm:$0xff]
      %v377 = vld [vmem:[%s354 + $0x88] sm:$0xff]
      %v378 = vld [vmem:[%s354 + $0x90] sm:$0xff]
      %v379 = vld [vmem:[%s354 + $0x98] sm:$0xff]
      %v380 = vld [vmem:[%s354 + $0xa0] sm:$0xff]
      %v381 = vld [vmem:[%s354 + $0xa8] sm:$0xff]
      %v382 = vld [vmem:[%s354 + $0xb0] sm:$0xff]
      %v383 = vld [vmem:[%s354 + $0xb8] sm:$0xff]
      %v384 = vld [vmem:[%s354 + $0xc0] sm:$0xff]
      %v385 = vld [vmem:[%s354 + $0xc8] sm:$0xff]
      %v386 = vld [vmem:[%s354 + $0xd0] sm:$0xff]
      %v387 = vld [vmem:[%s354 + $0xd8] sm:$0xff]
      %v388 = vld [vmem:[%s354 + $0xe0] sm:$0xff]
      %v389 = vld [vmem:[%s354 + $0xe8] sm:$0xff]
      %v390 = vld [vmem:[%s354 + $0xf0] sm:$0xff]
      %v391 = vld [vmem:[%s354 + $0xf8] sm:$0xff]
      %v392 = vld [vmem:[%s354 + $0x100] sm:$0xff]
      %v393 = vld [vmem:[%s354 + $0x108] sm:$0xff]
      %v394 = vld [vmem:[%s354 + $0x110] sm:$0xff]
      %v395 = vld [vmem:[%s354 + $0x118] sm:$0xff]
      %v396 = vld [vmem:[%s354 + $0x120] sm:$0xff]
      %v397 = vld [vmem:[%s354 + $0x128] sm:$0xff]
      %v398 = vld [vmem:[%s354 + $0x130] sm:$0xff]
      %v399 = vld [vmem:[%s354 + $0x138] sm:$0xff]
      %v400 = vld [vmem:[%s3] sm:$0xff]
      %v401 = vld [vmem:[%s3 + $0x8] sm:$0xff]
      %v402 = vld [vmem:[%s3 + $0x10] sm:$0xff]
      %v403 = vld [vmem:[%s3 + $0x18] sm:$0xff]
      %v404 = vld [vmem:[%s3 + $0x20] sm:$0xff]
      %v405 = vld [vmem:[%s3 + $0x28] sm:$0xff]
      %v406 = vld [vmem:[%s3 + $0x30] sm:$0xff]
      %v407 = vld [vmem:[%s3 + $0x38] sm:$0xff]
      %v408 = vld [vmem:[%s4] sm:$0x1]
      %v410 = vlaneseq
      %v411 = vshrl.u32 %v410, 7
      %v412 = vsub.s32 0, %v411
      %v413 = vrot.slane %v408, %v412
      %vm415 = vcmask 523264
      %v417 = vsel %vm415, %v360, 0
      %v420 = vsel %vm415, %v361, 0
      %v423 = vsel %vm415, %v362, 0
      %v426 = vsel %vm415, %v363, 0
      %v429 = vsel %vm415, %v364, 0
      %v432 = vsel %vm415, %v365, 0
      %v435 = vsel %vm415, %v366, 0
      %v438 = vsel %vm415, %v367, 0
      %v441 = vsel %vm415, %v368, 0
      %v444 = vsel %vm415, %v369, 0
      %v447 = vsel %vm415, %v370, 0
      %v450 = vsel %vm415, %v371, 0
      %v453 = vsel %vm415, %v372, 0
      %v456 = vsel %vm415, %v373, 0
      %v459 = vsel %vm415, %v374, 0
      %v462 = vsel %vm415, %v375, 0
      %v465 = vsel %vm415, %v376, 0
      %v468 = vsel %vm415, %v377, 0
      %v471 = vsel %vm415, %v378, 0
      %v474 = vsel %vm415, %v379, 0
      %v477 = vsel %vm415, %v380, 0
      %v480 = vsel %vm415, %v381, 0
      %v483 = vsel %vm415, %v382, 0
      %v486 = vsel %vm415, %v383, 0
      %v489 = vsel %vm415, %v384, 0
      %v492 = vsel %vm415, %v385, 0
      %v495 = vsel %vm415, %v386, 0
      %v498 = vsel %vm415, %v387, 0
      %v501 = vsel %vm415, %v388, 0
      %v504 = vsel %vm415, %v389, 0
      %v507 = vsel %vm415, %v390, 0
      %v510 = vsel %vm415, %v391, 0
      %v513 = vsel %vm415, %v392, 0
      %v516 = vsel %vm415, %v393, 0
      %v519 = vsel %vm415, %v394, 0
      %v522 = vsel %vm415, %v395, 0
      %v525 = vsel %vm415, %v396, 0
      %v528 = vsel %vm415, %v397, 0
      %v531 = vsel %vm415, %v398, 0
      %v534 = vsel %vm415, %v399, 0
      %536 = vmatprep.subr.mxu0 0.0
      %537 = vmatpush1.msra.mxu0 %v400
      %538 = vmatprep.subr.mxu0 0.0
      %539 = vmatpush1.msra.mxu0 %v401
      %540 = vmatprep.subr.mxu0 0.0
      %541 = vmatpush1.msra.mxu0 %v402
      %542 = vmatprep.subr.mxu0 0.0
      %543 = vmatpush1.msra.mxu0 %v403
      %544 = vmatprep.subr.mxu0 0.0
      %545 = vmatpush1.msra.mxu0 %v404
      %546 = vmatprep.subr.mxu0 0.0
      %547 = vmatpush1.msra.mxu0 %v405
      %548 = vmatprep.subr.mxu0 0.0
      %549 = vmatpush1.msra.mxu0 %v406
      %550 = vmatprep.subr.mxu0 0.0
      %551 = vmatpush1.msra.mxu0 %v407
      %552 = vmatprep.subr.mxu0 0.0
      %553 = vmatpush1.msra.mxu0 0.0
      %554 = vmatprep.subr.mxu0 0.0
      %555 = vmatpush1.msra.mxu0 0.0
      %556 = vmatprep.subr.mxu0 0.0
      %557 = vmatpush1.msra.mxu0 0.0
      %558 = vmatprep.subr.mxu0 0.0
      %559 = vmatpush1.msra.mxu0 0.0
      %560 = vmatprep.subr.mxu0 0.0
      %561 = vmatpush1.msra.mxu0 0.0
      %562 = vmatprep.subr.mxu0 0.0
      %563 = vmatpush1.msra.mxu0 0.0
      %564 = vmatprep.subr.mxu0 0.0
      %565 = vmatpush1.msra.mxu0 0.0
      %566 = vmatprep.subr.mxu0 0.0
      %567 = vmatpush1.msra.mxu0 0.0
      %568 = vmatprep.subr.mxu0 0.0
      %569 = vmatpush1.msra.mxu0 0.0
      %570 = vmatprep.subr.mxu0 0.0
      %571 = vmatpush1.msra.mxu0 0.0
      %572 = vmatprep.subr.mxu0 0.0
      %573 = vmatpush1.msra.mxu0 0.0
      %574 = vmatprep.subr.mxu0 0.0
      %575 = vmatpush1.msra.mxu0 0.0
      %576 = vmatprep.subr.mxu0 0.0
      %577 = vmatpush1.msra.mxu0 0.0
      %578 = vmatprep.subr.mxu0 0.0
      %579 = vmatpush1.msra.mxu0 0.0
      %580 = vmatprep.subr.mxu0 0.0
      %581 = vmatpush1.msra.mxu0 0.0
      %582 = vmatprep.subr.mxu0 0.0
      %583 = vmatpush1.msra.mxu0 0.0
      %584 = vmatprep.subr.mxu0 0.0
      %585 = vmatpush1.msra.mxu0 0.0
      %586 = vmatprep.subr.mxu0 0.0
      %587 = vmatpush1.msra.mxu0 0.0
      %588 = vmatprep.subr.mxu0 0.0
      %589 = vmatpush1.msra.mxu0 0.0
      %590 = vmatprep.subr.mxu0 0.0
      %591 = vmatpush1.msra.mxu0 0.0
      %592 = vmatprep.subr.mxu0 0.0
      %593 = vmatpush1.msra.mxu0 0.0
      %594 = vmatprep.subr.mxu0 0.0
      %595 = vmatpush1.msra.mxu0 0.0
      %596 = vmatprep.subr.mxu0 0.0
      %597 = vmatpush1.msra.mxu0 0.0
      %598 = vmatprep.subr.mxu0 0.0
      %599 = vmatpush1.msra.mxu0 0.0
      %600 = vmatprep.mubr.f32.mxu0 0.0
      %601 = vmatmul.mubr.f32.gmra.mrb[0].mxu0 %v417
      %v602 = vpop.f32.mrb[0].mxu0
      %v603 = vadd.f32 %v413, %v602
      %v604 = vpop.f32.mrb[0].mxu0
      %605 = vmatprep.mubr.f32.mxu0 0.0
      %606 = vmatmul.mubr.f32.gmra.mrb[0].mxu0 %v420
      %v607 = vpop.f32.mrb[0].mxu0
      %v608 = vadd.f32 %v413, %v607
      %v609 = vpop.f32.mrb[0].mxu0
      %610 = vmatprep.mubr.f32.mxu0 0.0
      %611 = vmatmul.mubr.f32.gmra.mrb[0].mxu0 %v423
      %v612 = vpop.f32.mrb[0].mxu0
      %v613 = vadd.f32 %v413, %v612
      %v614 = vpop.f32.mrb[0].mxu0
      %615 = vmatprep.mubr.f32.mxu0 0.0
      %616 = vmatmul.mubr.f32.gmra.mrb[0].mxu0 %v426
      %v617 = vpop.f32.mrb[0].mxu0
      %v618 = vadd.f32 %v413, %v617
      %v619 = vpop.f32.mrb[0].mxu0
      %620 = vmatprep.mubr.f32.mxu0 0.0
      %621 = vmatmul.mubr.f32.gmra.mrb[0].mxu0 %v429
      %v622 = vpop.f32.mrb[0].mxu0
      %v623 = vadd.f32 %v413, %v622
      %v624 = vpop.f32.mrb[0].mxu0
      %625 = vmatprep.mubr.f32.mxu0 0.0
      %626 = vmatmul.mubr.f32.gmra.mrb[0].mxu0 %v432
      %v627 = vpop.f32.mrb[0].mxu0
      %v628 = vadd.f32 %v413, %v627
      %v629 = vpop.f32.mrb[0].mxu0
      %630 = vmatprep.mubr.f32.mxu0 0.0
      %631 = vmatmul.mubr.f32.gmra.mrb[0].mxu0 %v435
      %v632 = vpop.f32.mrb[0].mxu0
      %v633 = vadd.f32 %v413, %v632
      %v634 = vpop.f32.mrb[0].mxu0
      %635 = vmatprep.mubr.f32.mxu0 0.0
      %636 = vmatmul.mubr.f32.gmra.mrb[0].mxu0 %v438
      %v637 = vpop.f32.mrb[0].mxu0
      %v638 = vadd.f32 %v413, %v637
      %v639 = vpop.f32.mrb[0].mxu0
      %640 = vmatprep.mubr.f32.mxu0 0.0
      %641 = vmatmul.mubr.f32.gmra.mrb[0].mxu0 %v441
      %v642 = vpop.f32.mrb[0].mxu0
      %v643 = vadd.f32 %v413, %v642
      %v644 = vpop.f32.mrb[0].mxu0
      %645 = vmatprep.mubr.f32.mxu0 0.0
      %646 = vmatmul.mubr.f32.gmra.mrb[0].mxu0 %v444
      %v647 = vpop.f32.mrb[0].mxu0
      %v648 = vadd.f32 %v413, %v647
      %v649 = vpop.f32.mrb[0].mxu0
      %650 = vmatprep.mubr.f32.mxu0 0.0
      %651 = vmatmul.mubr.f32.gmra.mrb[0].mxu0 %v447
      %v652 = vpop.f32.mrb[0].mxu0
      %v653 = vadd.f32 %v413, %v652
      %v654 = vpop.f32.mrb[0].mxu0
      %655 = vmatprep.mubr.f32.mxu0 0.0
      %656 = vmatmul.mubr.f32.gmra.mrb[0].mxu0 %v450
      %v657 = vpop.f32.mrb[0].mxu0
      %v658 = vadd.f32 %v413, %v657
      %v659 = vpop.f32.mrb[0].mxu0
      %660 = vmatprep.mubr.f32.mxu0 0.0
      %661 = vmatmul.mubr.f32.gmra.mrb[0].mxu0 %v453
      %v662 = vpop.f32.mrb[0].mxu0
      %v663 = vadd.f32 %v413, %v662
      %v664 = vpop.f32.mrb[0].mxu0
      %665 = vmatprep.mubr.f32.mxu0 0.0
      %666 = vmatmul.mubr.f32.gmra.mrb[0].mxu0 %v456
      %v667 = vpop.f32.mrb[0].mxu0
      %v668 = vadd.f32 %v413, %v667
      %v669 = vpop.f32.mrb[0].mxu0
      %670 = vmatprep.mubr.f32.mxu0 0.0
      %671 = vmatmul.mubr.f32.gmra.mrb[0].mxu0 %v459
      %v672 = vpop.f32.mrb[0].mxu0
      %v673 = vadd.f32 %v413, %v672
      %v674 = vpop.f32.mrb[0].mxu0
      %675 = vmatprep.mubr.f32.mxu0 0.0
      %676 = vmatmul.mubr.f32.gmra.mrb[0].mxu0 %v462
      %v677 = vpop.f32.mrb[0].mxu0
      %v678 = vadd.f32 %v413, %v677
      %v679 = vpop.f32.mrb[0].mxu0
      %680 = vmatprep.mubr.f32.mxu0 0.0
      %681 = vmatmul.mubr.f32.gmra.mrb[0].mxu0 %v465
      %v682 = vpop.f32.mrb[0].mxu0
      %v683 = vadd.f32 %v413, %v682
      %v684 = vpop.f32.mrb[0].mxu0
      %685 = vmatprep.mubr.f32.mxu0 0.0
      %686 = vmatmul.mubr.f32.gmra.mrb[0].mxu0 %v468
      %v687 = vpop.f32.mrb[0].mxu0
      %v688 = vadd.f32 %v413, %v687
      %v689 = vpop.f32.mrb[0].mxu0
      %690 = vmatprep.mubr.f32.mxu0 0.0
      %691 = vmatmul.mubr.f32.gmra.mrb[0].mxu0 %v471
      %v692 = vpop.f32.mrb[0].mxu0
      %v693 = vadd.f32 %v413, %v692
      %v694 = vpop.f32.mrb[0].mxu0
      %695 = vmatprep.mubr.f32.mxu0 0.0
      %696 = vmatmul.mubr.f32.gmra.mrb[0].mxu0 %v474
      %v697 = vpop.f32.mrb[0].mxu0
      %v698 = vadd.f32 %v413, %v697
      %v699 = vpop.f32.mrb[0].mxu0
      %700 = vmatprep.mubr.f32.mxu0 0.0
      %701 = vmatmul.mubr.f32.gmra.mrb[0].mxu0 %v477
      %v702 = vpop.f32.mrb[0].mxu0
      %v703 = vadd.f32 %v413, %v702
      %v704 = vpop.f32.mrb[0].mxu0
      %705 = vmatprep.mubr.f32.mxu0 0.0
      %706 = vmatmul.mubr.f32.gmra.mrb[0].mxu0 %v480
      %v707 = vpop.f32.mrb[0].mxu0
      %v708 = vadd.f32 %v413, %v707
      %v709 = vpop.f32.mrb[0].mxu0
      %710 = vmatprep.mubr.f32.mxu0 0.0
      %711 = vmatmul.mubr.f32.gmra.mrb[0].mxu0 %v483
      %v712 = vpop.f32.mrb[0].mxu0
      %v713 = vadd.f32 %v413, %v712
      %v714 = vpop.f32.mrb[0].mxu0
      %715 = vmatprep.mubr.f32.mxu0 0.0
      %716 = vmatmul.mubr.f32.gmra.mrb[0].mxu0 %v486
      %v717 = vpop.f32.mrb[0].mxu0
      %v718 = vadd.f32 %v413, %v717
      %v719 = vpop.f32.mrb[0].mxu0
      %720 = vmatprep.mubr.f32.mxu0 0.0
      %721 = vmatmul.mubr.f32.gmra.mrb[0].mxu0 %v489
      %v722 = vpop.f32.mrb[0].mxu0
      %v723 = vadd.f32 %v413, %v722
      %v724 = vpop.f32.mrb[0].mxu0
      %725 = vmatprep.mubr.f32.mxu0 0.0
      %726 = vmatmul.mubr.f32.gmra.mrb[0].mxu0 %v492
      %v727 = vpop.f32.mrb[0].mxu0
      %v728 = vadd.f32 %v413, %v727
      %v729 = vpop.f32.mrb[0].mxu0
      %730 = vmatprep.mubr.f32.mxu0 0.0
      %731 = vmatmul.mubr.f32.gmra.mrb[0].mxu0 %v495
      %v732 = vpop.f32.mrb[0].mxu0
      %v733 = vadd.f32 %v413, %v732
      %v734 = vpop.f32.mrb[0].mxu0
      %735 = vmatprep.mubr.f32.mxu0 0.0
      %736 = vmatmul.mubr.f32.gmra.mrb[0].mxu0 %v498
      %v737 = vpop.f32.mrb[0].mxu0
      %v738 = vadd.f32 %v413, %v737
      %v739 = vpop.f32.mrb[0].mxu0
      %740 = vmatprep.mubr.f32.mxu0 0.0
      %741 = vmatmul.mubr.f32.gmra.mrb[0].mxu0 %v501
      %v742 = vpop.f32.mrb[0].mxu0
      %v743 = vadd.f32 %v413, %v742
      %v744 = vpop.f32.mrb[0].mxu0
      %745 = vmatprep.mubr.f32.mxu0 0.0
      %746 = vmatmul.mubr.f32.gmra.mrb[0].mxu0 %v504
      %v747 = vpop.f32.mrb[0].mxu0
      %v748 = vadd.f32 %v413, %v747
      %v749 = vpop.f32.mrb[0].mxu0
      %750 = vmatprep.mubr.f32.mxu0 0.0
      %751 = vmatmul.mubr.f32.gmra.mrb[0].mxu0 %v507
      %v752 = vpop.f32.mrb[0].mxu0
      %v753 = vadd.f32 %v413, %v752
      %v754 = vpop.f32.mrb[0].mxu0
      %755 = vmatprep.mubr.f32.mxu0 0.0
      %756 = vmatmul.mubr.f32.gmra.mrb[0].mxu0 %v510
      %v757 = vpop.f32.mrb[0].mxu0
      %v758 = vadd.f32 %v413, %v757
      %v759 = vpop.f32.mrb[0].mxu0
      %760 = vmatprep.mubr.f32.mxu0 0.0
      %761 = vmatmul.mubr.f32.gmra.mrb[0].mxu0 %v513
      %v762 = vpop.f32.mrb[0].mxu0
      %v763 = vadd.f32 %v413, %v762
      %v764 = vpop.f32.mrb[0].mxu0
      %765 = vmatprep.mubr.f32.mxu0 0.0
      %766 = vmatmul.mubr.f32.gmra.mrb[0].mxu0 %v516
      %v767 = vpop.f32.mrb[0].mxu0
      %v768 = vadd.f32 %v413, %v767
      %v769 = vpop.f32.mrb[0].mxu0
      %770 = vmatprep.mubr.f32.mxu0 0.0
      %771 = vmatmul.mubr.f32.gmra.mrb[0].mxu0 %v519
      %v772 = vpop.f32.mrb[0].mxu0
      %v773 = vadd.f32 %v413, %v772
      %v774 = vpop.f32.mrb[0].mxu0
      %775 = vmatprep.mubr.f32.mxu0 0.0
      %776 = vmatmul.mubr.f32.gmra.mrb[0].mxu0 %v522
      %v777 = vpop.f32.mrb[0].mxu0
      %v778 = vadd.f32 %v413, %v777
      %v779 = vpop.f32.mrb[0].mxu0
      %780 = vmatprep.mubr.f32.mxu0 0.0
      %781 = vmatmul.mubr.f32.gmra.mrb[0].mxu0 %v525
      %v782 = vpop.f32.mrb[0].mxu0
      %v783 = vadd.f32 %v413, %v782
      %v784 = vpop.f32.mrb[0].mxu0
      %785 = vmatprep.mubr.f32.mxu0 0.0
      %786 = vmatmul.mubr.f32.gmra.mrb[0].mxu0 %v528
      %v787 = vpop.f32.mrb[0].mxu0
      %v788 = vadd.f32 %v413, %v787
      %v789 = vpop.f32.mrb[0].mxu0
      %790 = vmatprep.mubr.f32.mxu0 0.0
      %791 = vmatmul.mubr.f32.gmra.mrb[0].mxu0 %v531
      %v792 = vpop.f32.mrb[0].mxu0
      %v793 = vadd.f32 %v413, %v792
      %v794 = vpop.f32.mrb[0].mxu0
      %795 = vmatprep.mubr.f32.mxu0 0.0
      %796 = vmatmul.mubr.f32.gmra.mrb[0].mxu0 %v534
      %v797 = vpop.f32.mrb[0].mxu0
      %v798 = vadd.f32 %v413, %v797
      %v799 = vpop.f32.mrb[0].mxu0
      %800 = vdwg.mxu0
      %v801 = vsel %vm415, %v360, 0.0
      %v802 = vsel %vm415, %v362, 0.0
      %v803 = vadd.f32 %v801, %v802
      %v804 = vsel %vm415, %v364, 0.0
      %v805 = vadd.f32 %v803, %v804
      %v806 = vsel %vm415, %v366, 0.0
      %v807 = vadd.f32 %v805, %v806
      %v808 = vsel %vm415, %v368, 0.0
      %v809 = vadd.f32 %v807, %v808
      %v810 = vsel %vm415, %v370, 0.0
      %v811 = vadd.f32 %v809, %v810
      %v812 = vsel %vm415, %v372, 0.0
      %v813 = vadd.f32 %v811, %v812
      %v814 = vsel %vm415, %v374, 0.0
      %v815 = vadd.f32 %v813, %v814
      %v816 = vsel %vm415, %v376, 0.0
      %v817 = vadd.f32 %v815, %v816
      %v818 = vsel %vm415, %v378, 0.0
      %v819 = vadd.f32 %v817, %v818
      %v820 = vsel %vm415, %v380, 0.0
      %v821 = vadd.f32 %v819, %v820
      %v822 = vsel %vm415, %v382, 0.0
      %v823 = vadd.f32 %v821, %v822
      %v824 = vsel %vm415, %v384, 0.0
      %v825 = vadd.f32 %v823, %v824
      %v826 = vsel %vm415, %v386, 0.0
      %v827 = vadd.f32 %v825, %v826
      %v828 = vsel %vm415, %v388, 0.0
      %v829 = vadd.f32 %v827, %v828
      %v830 = vsel %vm415, %v390, 0.0
      %v831 = vadd.f32 %v829, %v830
      %v832 = vsel %vm415, %v392, 0.0
      %v833 = vadd.f32 %v831, %v832
      %v834 = vsel %vm415, %v394, 0.0
      %v835 = vadd.f32 %v833, %v834
      %v836 = vsel %vm415, %v396, 0.0
      %v837 = vadd.f32 %v835, %v836
      %v838 = vsel %vm415, %v398, 0.0
      %v839 = vadd.f32 %v837, %v838
      %v840 = vsel %vm415, %v361, 0.0
      %v841 = vsel %vm415, %v363, 0.0
      %v842 = vadd.f32 %v840, %v841
      %v843 = vsel %vm415, %v365, 0.0
      %v844 = vadd.f32 %v842, %v843
      %v845 = vsel %vm415, %v367, 0.0
      %v846 = vadd.f32 %v844, %v845
      %v847 = vsel %vm415, %v369, 0.0
      %v848 = vadd.f32 %v846, %v847
      %v849 = vsel %vm415, %v371, 0.0
      %v850 = vadd.f32 %v848, %v849
      %v851 = vsel %vm415, %v373, 0.0
      %v852 = vadd.f32 %v850, %v851
      %v853 = vsel %vm415, %v375, 0.0
      %v854 = vadd.f32 %v852, %v853
      %v855 = vsel %vm415, %v377, 0.0
      %v856 = vadd.f32 %v854, %v855
      %v857 = vsel %vm415, %v379, 0.0
      %v858 = vadd.f32 %v856, %v857
      %v859 = vsel %vm415, %v381, 0.0
      %v860 = vadd.f32 %v858, %v859
      %v861 = vsel %vm415, %v383, 0.0
      %v862 = vadd.f32 %v860, %v861
      %v863 = vsel %vm415, %v385, 0.0
      %v864 = vadd.f32 %v862, %v863
      %v865 = vsel %vm415, %v387, 0.0
      %v866 = vadd.f32 %v864, %v865
      %v867 = vsel %vm415, %v389, 0.0
      %v868 = vadd.f32 %v866, %v867
      %v869 = vsel %vm415, %v391, 0.0
      %v870 = vadd.f32 %v868, %v869
      %v871 = vsel %vm415, %v393, 0.0
      %v872 = vadd.f32 %v870, %v871
      %v873 = vsel %vm415, %v395, 0.0
      %v874 = vadd.f32 %v872, %v873
      %v875 = vsel %vm415, %v397, 0.0
      %v876 = vadd.f32 %v874, %v875
      %v877 = vsel %vm415, %v399, 0.0
      %v878 = vadd.f32 %v876, %v877
      %v879 = vrcp.pop 20.0
      %v880 = vmul.f32 %v839, %v879
      %v881 = vmul.f32 %v878, %v879
      %v882 = vld [vmem:[%s1] sm:$0xff]
      %v883 = vld [vmem:[%s1 + $0x8] sm:$0xff]
      %v884 = vld [vmem:[%s1 + $0x10] sm:$0xff]
      %v885 = vld [vmem:[%s1 + $0x18] sm:$0xff]
      %v886 = vld [vmem:[%s1 + $0x20] sm:$0xff]
      %v887 = vld [vmem:[%s1 + $0x28] sm:$0xff]
      %v888 = vld [vmem:[%s1 + $0x30] sm:$0xff]
      %v889 = vld [vmem:[%s1 + $0x38] sm:$0xff]
      %v890 = vld [vmem:[%s2] sm:$0x1]
      %v892 = vlaneseq
      %v893 = vshrl.u32 %v892, 7
      %v894 = vsub.s32 0, %v893
      %v895 = vrot.slane %v890, %v894
      %v898 = vsel %vm415, %v880, 0
      %v901 = vsel %vm415, %v881, 0
      %903 = vmatprep.subr.mxu0 0.0
      %904 = vmatpush1.msra.mxu0 %v882
      %905 = vmatprep.subr.mxu0 0.0
      %906 = vmatpush1.msra.mxu0 %v883
      %907 = vmatprep.subr.mxu0 0.0
      %908 = vmatpush1.msra.mxu0 %v884
      %909 = vmatprep.subr.mxu0 0.0
      %910 = vmatpush1.msra.mxu0 %v885
      %911 = vmatprep.subr.mxu0 0.0
      %912 = vmatpush1.msra.mxu0 %v886
      %913 = vmatprep.subr.mxu0 0.0
      %914 = vmatpush1.msra.mxu0 %v887
      %915 = vmatprep.subr.mxu0 0.0
      %916 = vmatpush1.msra.mxu0 %v888
      %917 = vmatprep.subr.mxu0 0.0
      %918 = vmatpush1.msra.mxu0 %v889
      %919 = vmatprep.subr.mxu0 0.0
      %920 = vmatpush1.msra.mxu0 0.0
      %921 = vmatprep.subr.mxu0 0.0
      %922 = vmatpush1.msra.mxu0 0.0
      %923 = vmatprep.subr.mxu0 0.0
      %924 = vmatpush1.msra.mxu0 0.0
      %925 = vmatprep.subr.mxu0 0.0
      %926 = vmatpush1.msra.mxu0 0.0
      %927 = vmatprep.subr.mxu0 0.0
      %928 = vmatpush1.msra.mxu0 0.0
      %929 = vmatprep.subr.mxu0 0.0
      %930 = vmatpush1.msra.mxu0 0.0
      %931 = vmatprep.subr.mxu0 0.0
      %932 = vmatpush1.msra.mxu0 0.0
      %933 = vmatprep.subr.mxu0 0.0
      %934 = vmatpush1.msra.mxu0 0.0
      %935 = vmatprep.subr.mxu0 0.0
      %936 = vmatpush1.msra.mxu0 0.0
      %937 = vmatprep.subr.mxu0 0.0
      %938 = vmatpush1.msra.mxu0 0.0
      %939 = vmatprep.subr.mxu0 0.0
      %940 = vmatpush1.msra.mxu0 0.0
      %941 = vmatprep.subr.mxu0 0.0
      %942 = vmatpush1.msra.mxu0 0.0
      %943 = vmatprep.subr.mxu0 0.0
      %944 = vmatpush1.msra.mxu0 0.0
      %945 = vmatprep.subr.mxu0 0.0
      %946 = vmatpush1.msra.mxu0 0.0
      %947 = vmatprep.subr.mxu0 0.0
      %948 = vmatpush1.msra.mxu0 0.0
      %949 = vmatprep.subr.mxu0 0.0
      %950 = vmatpush1.msra.mxu0 0.0
      %951 = vmatprep.subr.mxu0 0.0
      %952 = vmatpush1.msra.mxu0 0.0
      %953 = vmatprep.subr.mxu0 0.0
      %954 = vmatpush1.msra.mxu0 0.0
      %955 = vmatprep.subr.mxu0 0.0
      %956 = vmatpush1.msra.mxu0 0.0
      %957 = vmatprep.subr.mxu0 0.0
      %958 = vmatpush1.msra.mxu0 0.0
      %959 = vmatprep.subr.mxu0 0.0
      %960 = vmatpush1.msra.mxu0 0.0
      %961 = vmatprep.subr.mxu0 0.0
      %962 = vmatpush1.msra.mxu0 0.0
      %963 = vmatprep.subr.mxu0 0.0
      %964 = vmatpush1.msra.mxu0 0.0
      %965 = vmatprep.subr.mxu0 0.0
      %966 = vmatpush1.msra.mxu0 0.0
      %967 = vmatprep.mubr.f32.mxu0 0.0
      %968 = vmatmul.mubr.f32.gmra.mrb[0].mxu0 %v898
      %v969 = vpop.f32.mrb[0].mxu0
      %v970 = vadd.f32 %v895, %v969
      %v971 = vpop.f32.mrb[0].mxu0
      %972 = vmatprep.mubr.f32.mxu0 0.0
      %973 = vmatmul.mubr.f32.gmra.mrb[0].mxu0 %v901
      %v974 = vpop.f32.mrb[0].mxu0
      %v975 = vadd.f32 %v895, %v974
      %v976 = vpop.f32.mrb[0].mxu0
      %977 = vdwg.mxu0
      %v980 = vcombine.high %v970, %v970
      %v982 = vunpack.c.l.s4 1966171168
      %v983 = vunpack.c.0.s8 %v982
      %v984 = vlaneseq
      %v985 = vshrl.u32 %v984, 7
      %v986 = vsub.s32 %v983, %v985
      %v987 = vrot.slane %v970, %v986
      %v989 = vunpack.c.l.s4 1966171168
      %v990 = vunpack.c.0.s8 %v989
      %v991 = vlaneseq
      %v992 = vshrl.u32 %v991, 7
      %v993 = vsub.s32 %v990, %v992
      %v994 = vrot.slane %v980, %v993
      %v995 = vcombine.high %v987, %v987
      %v996 = vcombine.high %v994, %v994
      %v998 = vunpack.c.l.s4 1966171168
      %v999 = vunpack.c.0.s8 %v998
      %v1000 = vlaneseq
      %v1001 = vshrl.u32 %v1000, 7
      %v1002 = vsub.s32 %v999, %v1001
      %v1003 = vrot.slane %v987, %v1002
      %v1005 = vunpack.c.l.s4 1966171168
      %v1006 = vunpack.c.0.s8 %v1005
      %v1007 = vlaneseq
      %v1008 = vshrl.u32 %v1007, 7
      %v1009 = vsub.s32 %v1006, %v1008
      %v1010 = vrot.slane %v994, %v1009
      %v1012 = vunpack.c.l.s4 1966171168
      %v1013 = vunpack.c.0.s8 %v1012
      %v1014 = vlaneseq
      %v1015 = vshrl.u32 %v1014, 7
      %v1016 = vsub.s32 %v1013, %v1015
      %v1017 = vrot.slane %v995, %v1016
      %v1019 = vunpack.c.l.s4 1966171168
      %v1020 = vunpack.c.0.s8 %v1019
      %v1021 = vlaneseq
      %v1022 = vshrl.u32 %v1021, 7
      %v1023 = vsub.s32 %v1020, %v1022
      %v1024 = vrot.slane %v996, %v1023
      %v1025 = vcombine.high %v1003, %v1003
      %v1026 = vcombine.high %v1010, %v1010
      %v1027 = vcombine.high %v1017, %v1017
      %v1028 = vcombine.high %v1024, %v1024
      %v1029 = vcombine.high %v975, %v975
      %v1031 = vunpack.c.l.s4 1966171168
      %v1032 = vunpack.c.0.s8 %v1031
      %v1033 = vlaneseq
      %v1034 = vshrl.u32 %v1033, 7
      %v1035 = vsub.s32 %v1032, %v1034
      %v1036 = vrot.slane %v975, %v1035
      %v1038 = vunpack.c.l.s4 1966171168
      %v1039 = vunpack.c.0.s8 %v1038
      %v1040 = vlaneseq
      %v1041 = vshrl.u32 %v1040, 7
      %v1042 = vsub.s32 %v1039, %v1041
      %v1043 = vrot.slane %v1029, %v1042
      %v1044 = vcombine.high %v1036, %v1036
      %v1045 = vcombine.high %v1043, %v1043
      %v1047 = vunpack.c.l.s4 1966171168
      %v1048 = vunpack.c.0.s8 %v1047
      %v1049 = vlaneseq
      %v1050 = vshrl.u32 %v1049, 7
      %v1051 = vsub.s32 %v1048, %v1050
      %v1052 = vrot.slane %v1036, %v1051
      %v1054 = vunpack.c.l.s4 1966171168
      %v1055 = vunpack.c.0.s8 %v1054
      %v1056 = vlaneseq
      %v1057 = vshrl.u32 %v1056, 7
      %v1058 = vsub.s32 %v1055, %v1057
      %v1059 = vrot.slane %v1043, %v1058
      %v1061 = vunpack.c.l.s4 1966171168
      %v1062 = vunpack.c.0.s8 %v1061
      %v1063 = vlaneseq
      %v1064 = vshrl.u32 %v1063, 7
      %v1065 = vsub.s32 %v1062, %v1064
      %v1066 = vrot.slane %v1044, %v1065
      %v1068 = vunpack.c.l.s4 1966171168
      %v1069 = vunpack.c.0.s8 %v1068
      %v1070 = vlaneseq
      %v1071 = vshrl.u32 %v1070, 7
      %v1072 = vsub.s32 %v1069, %v1071
      %v1073 = vrot.slane %v1045, %v1072
      %v1074 = vcombine.high %v1052, %v1052
      %v1075 = vcombine.high %v1059, %v1059
      %v1076 = vcombine.high %v1066, %v1066
      %v1077 = vcombine.high %v1073, %v1073
      %v1078 = vlaneseq
      %v1079 = vshrl.u32 %v1078, 7
      %v1080 = vsub.s32 0, %v1079
      %v1081 = vrot.slane %v1003, %v1080
      %v1082 = vlaneseq
      %v1083 = vshrl.u32 %v1082, 7
      %v1084 = vsub.s32 0, %v1083
      %v1085 = vrot.slane %v1017, %v1084
      %v1086 = vlaneseq
      %v1087 = vshrl.u32 %v1086, 7
      %v1088 = vsub.s32 0, %v1087
      %v1089 = vrot.slane %v1025, %v1088
      %v1090 = vlaneseq
      %v1091 = vshrl.u32 %v1090, 7
      %v1092 = vsub.s32 0, %v1091
      %v1093 = vrot.slane %v1027, %v1092
      %v1094 = vlaneseq
      %v1095 = vshrl.u32 %v1094, 7
      %v1096 = vsub.s32 0, %v1095
      %v1097 = vrot.slane %v1010, %v1096
      %v1098 = vlaneseq
      %v1099 = vshrl.u32 %v1098, 7
      %v1100 = vsub.s32 0, %v1099
      %v1101 = vrot.slane %v1024, %v1100
      %v1102 = vlaneseq
      %v1103 = vshrl.u32 %v1102, 7
      %v1104 = vsub.s32 0, %v1103
      %v1105 = vrot.slane %v1026, %v1104
      %v1106 = vlaneseq
      %v1107 = vshrl.u32 %v1106, 7
      %v1108 = vsub.s32 0, %v1107
      %v1109 = vrot.slane %v1028, %v1108
      %v1110 = vlaneseq
      %v1111 = vshrl.u32 %v1110, 7
      %v1112 = vsub.s32 0, %v1111
      %v1113 = vrot.slane %v1052, %v1112
      %v1114 = vlaneseq
      %v1115 = vshrl.u32 %v1114, 7
      %v1116 = vsub.s32 0, %v1115
      %v1117 = vrot.slane %v1066, %v1116
      %v1118 = vlaneseq
      %v1119 = vshrl.u32 %v1118, 7
      %v1120 = vsub.s32 0, %v1119
      %v1121 = vrot.slane %v1074, %v1120
      %v1122 = vlaneseq
      %v1123 = vshrl.u32 %v1122, 7
      %v1124 = vsub.s32 0, %v1123
      %v1125 = vrot.slane %v1076, %v1124
      %v1126 = vlaneseq
      %v1127 = vshrl.u32 %v1126, 7
      %v1128 = vsub.s32 0, %v1127
      %v1129 = vrot.slane %v1059, %v1128
      %v1130 = vlaneseq
      %v1131 = vshrl.u32 %v1130, 7
      %v1132 = vsub.s32 0, %v1131
      %v1133 = vrot.slane %v1073, %v1132
      %v1134 = vlaneseq
      %v1135 = vshrl.u32 %v1134, 7
      %v1136 = vsub.s32 0, %v1135
      %v1137 = vrot.slane %v1075, %v1136
      %v1138 = vlaneseq
      %v1139 = vshrl.u32 %v1138, 7
      %v1140 = vsub.s32 0, %v1139
      %v1141 = vrot.slane %v1077, %v1140
      %1142 = vrot.lane.b32.xlu0 %v1081, 104
      %v1143 = vpop.permute.xlu0 %1142
      %1144 = vrot.lane.b32.xlu0 %v1085, 104
      %v1145 = vpop.permute.xlu0 %1144
      %1146 = vrot.lane.b32.xlu0 %v1089, 104
      %v1147 = vpop.permute.xlu0 %1146
      %1148 = vrot.lane.b32.xlu0 %v1093, 104
      %v1149 = vpop.permute.xlu0 %1148
      %1150 = vrot.lane.b32.xlu0 %v1097, 104
      %v1151 = vpop.permute.xlu0 %1150
      %1152 = vrot.lane.b32.xlu0 %v1101, 104
      %v1153 = vpop.permute.xlu0 %1152
      %1154 = vrot.lane.b32.xlu0 %v1105, 104
      %v1155 = vpop.permute.xlu0 %1154
      %1156 = vrot.lane.b32.xlu0 %v1109, 104
      %v1157 = vpop.permute.xlu0 %1156
      %1158 = vrot.lane.b32.xlu0 %v1113, 104
      %v1159 = vpop.permute.xlu0 %1158
      %1160 = vrot.lane.b32.xlu0 %v1117, 104
      %v1161 = vpop.permute.xlu0 %1160
      %1162 = vrot.lane.b32.xlu0 %v1121, 104
      %v1163 = vpop.permute.xlu0 %1162
      %1164 = vrot.lane.b32.xlu0 %v1125, 104
      %v1165 = vpop.permute.xlu0 %1164
      %1166 = vrot.lane.b32.xlu0 %v1129, 104
      %v1167 = vpop.permute.xlu0 %1166
      %1168 = vrot.lane.b32.xlu0 %v1133, 104
      %v1169 = vpop.permute.xlu0 %1168
      %1170 = vrot.lane.b32.xlu0 %v1137, 104
      %v1171 = vpop.permute.xlu0 %1170
      %1172 = vrot.lane.b32.xlu0 %v1141, 104
      %v1173 = vpop.permute.xlu0 %1172
      %v1190 = vsub.f32 %v970, %v1143
      %v1191 = vsub.f32 %v975, %v1143
      %v1192 = vsub.f32 %v970, %v1145
      %v1193 = vsub.f32 %v975, %v1145
      %v1194 = vsub.f32 %v970, %v1147
      %v1195 = vsub.f32 %v975, %v1147
      %v1196 = vsub.f32 %v970, %v1149
      %v1197 = vsub.f32 %v975, %v1149
      %v1198 = vsub.f32 %v970, %v1151
      %v1199 = vsub.f32 %v975, %v1151
      %v1200 = vsub.f32 %v970, %v1153
      %v1201 = vsub.f32 %v975, %v1153
      %v1202 = vsub.f32 %v970, %v1155
      %v1203 = vsub.f32 %v975, %v1155
      %v1204 = vsub.f32 %v970, %v1157
      %v1205 = vsub.f32 %v975, %v1157
      %v1206 = vsub.f32 %v970, %v1159
      %v1207 = vsub.f32 %v975, %v1159
      %v1208 = vsub.f32 %v970, %v1161
      %v1209 = vsub.f32 %v975, %v1161
      %v1210 = vsub.f32 %v970, %v1163
      %v1211 = vsub.f32 %v975, %v1163
      %v1212 = vsub.f32 %v970, %v1165
      %v1213 = vsub.f32 %v975, %v1165
      %v1214 = vsub.f32 %v970, %v1167
      %v1215 = vsub.f32 %v975, %v1167
      %v1216 = vsub.f32 %v970, %v1169
      %v1217 = vsub.f32 %v975, %v1169
      %v1218 = vsub.f32 %v970, %v1171
      %v1219 = vsub.f32 %v975, %v1171
      %v1220 = vsub.f32 %v970, %v1173
      %v1221 = vsub.f32 %v975, %v1173
      %v1222 = vtanh.pop %v1190
      %v1223 = vtanh.pop %v1191
      %v1224 = vtanh.pop %v1192
      %v1225 = vtanh.pop %v1193
      %v1226 = vtanh.pop %v1194
      %v1227 = vtanh.pop %v1195
      %v1228 = vtanh.pop %v1196
      %v1229 = vtanh.pop %v1197
      %v1230 = vtanh.pop %v1198
      %v1231 = vtanh.pop %v1199
      %v1232 = vtanh.pop %v1200
      %v1233 = vtanh.pop %v1201
      %v1234 = vtanh.pop %v1202
      %v1235 = vtanh.pop %v1203
      %v1236 = vtanh.pop %v1204
      %v1237 = vtanh.pop %v1205
      %v1238 = vtanh.pop %v1206
      %v1239 = vtanh.pop %v1207
      %v1240 = vtanh.pop %v1208
      %v1241 = vtanh.pop %v1209
      %v1242 = vtanh.pop %v1210
      %v1243 = vtanh.pop %v1211
      %v1244 = vtanh.pop %v1212
      %v1245 = vtanh.pop %v1213
      %v1246 = vtanh.pop %v1214
      %v1247 = vtanh.pop %v1215
      %v1248 = vtanh.pop %v1216
      %v1249 = vtanh.pop %v1217
      %v1250 = vtanh.pop %v1218
      %v1251 = vtanh.pop %v1219
      %v1252 = vtanh.pop %v1220
      %v1253 = vtanh.pop %v1221
      %v1254 = vld [vmem:[%s5] sm:$0xff]
      %v1255 = vld [vmem:[%s6] sm:$0x1]
      %v1257 = vlaneseq
      %v1258 = vshrl.u32 %v1257, 7
      %v1259 = vsub.s32 0, %v1258
      %v1260 = vrot.slane %v1255, %v1259
      %vm1262 = vcmask 64512
      %v1264 = vsel %vm1262, %v1222, 0
      %v1267 = vsel %vm1262, %v1223, 0
      %v1270 = vsel %vm1262, %v1224, 0
      %v1273 = vsel %vm1262, %v1225, 0
      %v1276 = vsel %vm1262, %v1226, 0
      %v1279 = vsel %vm1262, %v1227, 0
      %v1282 = vsel %vm1262, %v1228, 0
      %v1285 = vsel %vm1262, %v1229, 0
      %v1288 = vsel %vm1262, %v1230, 0
      %v1291 = vsel %vm1262, %v1231, 0
      %v1294 = vsel %vm1262, %v1232, 0
      %v1297 = vsel %vm1262, %v1233, 0
      %v1300 = vsel %vm1262, %v1234, 0
      %v1303 = vsel %vm1262, %v1235, 0
      %v1306 = vsel %vm1262, %v1236, 0
      %v1309 = vsel %vm1262, %v1237, 0
      %v1312 = vsel %vm1262, %v1238, 0
      %v1315 = vsel %vm1262, %v1239, 0
      %v1318 = vsel %vm1262, %v1240, 0
      %v1321 = vsel %vm1262, %v1241, 0
      %v1324 = vsel %vm1262, %v1242, 0
      %v1327 = vsel %vm1262, %v1243, 0
      %v1330 = vsel %vm1262, %v1244, 0
      %v1333 = vsel %vm1262, %v1245, 0
      %v1336 = vsel %vm1262, %v1246, 0
      %v1339 = vsel %vm1262, %v1247, 0
      %v1342 = vsel %vm1262, %v1248, 0
      %v1345 = vsel %vm1262, %v1249, 0
      %v1348 = vsel %vm1262, %v1250, 0
      %v1351 = vsel %vm1262, %v1251, 0
      %v1354 = vsel %vm1262, %v1252, 0
      %v1357 = vsel %vm1262, %v1253, 0
      %1359 = vmatprep.subr.mxu0 0.0
      %1360 = vmatpush1.msra.mxu0 %v1254
      %1361 = vmatprep.subr.mxu0 0.0
      %1362 = vmatpush1.msra.mxu0 0.0
      %1363 = vmatprep.subr.mxu0 0.0
      %1364 = vmatpush1.msra.mxu0 0.0
      %1365 = vmatprep.subr.mxu0 0.0
      %1366 = vmatpush1.msra.mxu0 0.0
      %1367 = vmatprep.subr.mxu0 0.0
      %1368 = vmatpush1.msra.mxu0 0.0
      %1369 = vmatprep.subr.mxu0 0.0
      %1370 = vmatpush1.msra.mxu0 0.0
      %1371 = vmatprep.subr.mxu0 0.0
      %1372 = vmatpush1.msra.mxu0 0.0
      %1373 = vmatprep.subr.mxu0 0.0
      %1374 = vmatpush1.msra.mxu0 0.0
      %1375 = vmatprep.subr.mxu0 0.0
      %1376 = vmatpush1.msra.mxu0 0.0
      %1377 = vmatprep.subr.mxu0 0.0
      %1378 = vmatpush1.msra.mxu0 0.0
      %1379 = vmatprep.subr.mxu0 0.0
      %1380 = vmatpush1.msra.mxu0 0.0
      %1381 = vmatprep.subr.mxu0 0.0
      %1382 = vmatpush1.msra.mxu0 0.0
      %1383 = vmatprep.subr.mxu0 0.0
      %1384 = vmatpush1.msra.mxu0 0.0
      %1385 = vmatprep.subr.mxu0 0.0
      %1386 = vmatpush1.msra.mxu0 0.0
      %1387 = vmatprep.subr.mxu0 0.0
      %1388 = vmatpush1.msra.mxu0 0.0
      %1389 = vmatprep.subr.mxu0 0.0
      %1390 = vmatpush1.msra.mxu0 0.0
      %1391 = vmatprep.subr.mxu0 0.0
      %1392 = vmatpush1.msra.mxu0 0.0
      %1393 = vmatprep.subr.mxu0 0.0
      %1394 = vmatpush1.msra.mxu0 0.0
      %1395 = vmatprep.subr.mxu0 0.0
      %1396 = vmatpush1.msra.mxu0 0.0
      %1397 = vmatprep.subr.mxu0 0.0
      %1398 = vmatpush1.msra.mxu0 0.0
      %1399 = vmatprep.subr.mxu0 0.0
      %1400 = vmatpush1.msra.mxu0 0.0
      %1401 = vmatprep.subr.mxu0 0.0
      %1402 = vmatpush1.msra.mxu0 0.0
      %1403 = vmatprep.subr.mxu0 0.0
      %1404 = vmatpush1.msra.mxu0 0.0
      %1405 = vmatprep.subr.mxu0 0.0
      %1406 = vmatpush1.msra.mxu0 0.0
      %1407 = vmatprep.subr.mxu0 0.0
      %1408 = vmatpush1.msra.mxu0 0.0
      %1409 = vmatprep.subr.mxu0 0.0
      %1410 = vmatpush1.msra.mxu0 0.0
      %1411 = vmatprep.subr.mxu0 0.0
      %1412 = vmatpush1.msra.mxu0 0.0
      %1413 = vmatprep.subr.mxu0 0.0
      %1414 = vmatpush1.msra.mxu0 0.0
      %1415 = vmatprep.subr.mxu0 0.0
      %1416 = vmatpush1.msra.mxu0 0.0
      %1417 = vmatprep.subr.mxu0 0.0
      %1418 = vmatpush1.msra.mxu0 0.0
      %1419 = vmatprep.subr.mxu0 0.0
      %1420 = vmatpush1.msra.mxu0 0.0
      %1421 = vmatprep.subr.mxu0 0.0
      %1422 = vmatpush1.msra.mxu0 0.0
      %1423 = vmatprep.mubr.f32.mxu0 0.0
      %1424 = vmatmul.mubr.f32.gmra.mrb[0].mxu0 %v1264
      %v1425 = vpop.f32.mrb[0].mxu0
      %v1426 = vadd.f32 %v1260, %v1425
      %v1427 = vpop.f32.mrb[0].mxu0
      %1428 = vmatprep.mubr.f32.mxu0 0.0
      %1429 = vmatmul.mubr.f32.gmra.mrb[0].mxu0 %v1267
      %v1430 = vpop.f32.mrb[0].mxu0
      %v1431 = vadd.f32 %v1260, %v1430
      %v1432 = vpop.f32.mrb[0].mxu0
      %1433 = vmatprep.mubr.f32.mxu0 0.0
      %1434 = vmatmul.mubr.f32.gmra.mrb[0].mxu0 %v1270
      %v1435 = vpop.f32.mrb[0].mxu0
      %v1436 = vadd.f32 %v1260, %v1435
      %v1437 = vpop.f32.mrb[0].mxu0
      %1438 = vmatprep.mubr.f32.mxu0 0.0
      %1439 = vmatmul.mubr.f32.gmra.mrb[0].mxu0 %v1273
      %v1440 = vpop.f32.mrb[0].mxu0
      %v1441 = vadd.f32 %v1260, %v1440
      %v1442 = vpop.f32.mrb[0].mxu0
      %1443 = vmatprep.mubr.f32.mxu0 0.0
      %1444 = vmatmul.mubr.f32.gmra.mrb[0].mxu0 %v1276
      %v1445 = vpop.f32.mrb[0].mxu0
      %v1446 = vadd.f32 %v1260, %v1445
      %v1447 = vpop.f32.mrb[0].mxu0
      %1448 = vmatprep.mubr.f32.mxu0 0.0
      %1449 = vmatmul.mubr.f32.gmra.mrb[0].mxu0 %v1279
      %v1450 = vpop.f32.mrb[0].mxu0
      %v1451 = vadd.f32 %v1260, %v1450
      %v1452 = vpop.f32.mrb[0].mxu0
      %1453 = vmatprep.mubr.f32.mxu0 0.0
      %1454 = vmatmul.mubr.f32.gmra.mrb[0].mxu0 %v1282
      %v1455 = vpop.f32.mrb[0].mxu0
      %v1456 = vadd.f32 %v1260, %v1455
      %v1457 = vpop.f32.mrb[0].mxu0
      %1458 = vmatprep.mubr.f32.mxu0 0.0
      %1459 = vmatmul.mubr.f32.gmra.mrb[0].mxu0 %v1285
      %v1460 = vpop.f32.mrb[0].mxu0
      %v1461 = vadd.f32 %v1260, %v1460
      %v1462 = vpop.f32.mrb[0].mxu0
      %1463 = vmatprep.mubr.f32.mxu0 0.0
      %1464 = vmatmul.mubr.f32.gmra.mrb[0].mxu0 %v1288
      %v1465 = vpop.f32.mrb[0].mxu0
      %v1466 = vadd.f32 %v1260, %v1465
      %v1467 = vpop.f32.mrb[0].mxu0
      %1468 = vmatprep.mubr.f32.mxu0 0.0
      %1469 = vmatmul.mubr.f32.gmra.mrb[0].mxu0 %v1291
      %v1470 = vpop.f32.mrb[0].mxu0
      %v1471 = vadd.f32 %v1260, %v1470
      %v1472 = vpop.f32.mrb[0].mxu0
      %1473 = vmatprep.mubr.f32.mxu0 0.0
      %1474 = vmatmul.mubr.f32.gmra.mrb[0].mxu0 %v1294
      %v1475 = vpop.f32.mrb[0].mxu0
      %v1476 = vadd.f32 %v1260, %v1475
      %v1477 = vpop.f32.mrb[0].mxu0
      %1478 = vmatprep.mubr.f32.mxu0 0.0
      %1479 = vmatmul.mubr.f32.gmra.mrb[0].mxu0 %v1297
      %v1480 = vpop.f32.mrb[0].mxu0
      %v1481 = vadd.f32 %v1260, %v1480
      %v1482 = vpop.f32.mrb[0].mxu0
      %1483 = vmatprep.mubr.f32.mxu0 0.0
      %1484 = vmatmul.mubr.f32.gmra.mrb[0].mxu0 %v1300
      %v1485 = vpop.f32.mrb[0].mxu0
      %v1486 = vadd.f32 %v1260, %v1485
      %v1487 = vpop.f32.mrb[0].mxu0
      %1488 = vmatprep.mubr.f32.mxu0 0.0
      %1489 = vmatmul.mubr.f32.gmra.mrb[0].mxu0 %v1303
      %v1490 = vpop.f32.mrb[0].mxu0
      %v1491 = vadd.f32 %v1260, %v1490
      %v1492 = vpop.f32.mrb[0].mxu0
      %1493 = vmatprep.mubr.f32.mxu0 0.0
      %1494 = vmatmul.mubr.f32.gmra.mrb[0].mxu0 %v1306
      %v1495 = vpop.f32.mrb[0].mxu0
      %v1496 = vadd.f32 %v1260, %v1495
      %v1497 = vpop.f32.mrb[0].mxu0
      %1498 = vmatprep.mubr.f32.mxu0 0.0
      %1499 = vmatmul.mubr.f32.gmra.mrb[0].mxu0 %v1309
      %v1500 = vpop.f32.mrb[0].mxu0
      %v1501 = vadd.f32 %v1260, %v1500
      %v1502 = vpop.f32.mrb[0].mxu0
      %1503 = vmatprep.mubr.f32.mxu0 0.0
      %1504 = vmatmul.mubr.f32.gmra.mrb[0].mxu0 %v1312
      %v1505 = vpop.f32.mrb[0].mxu0
      %v1506 = vadd.f32 %v1260, %v1505
      %v1507 = vpop.f32.mrb[0].mxu0
      %1508 = vmatprep.mubr.f32.mxu0 0.0
      %1509 = vmatmul.mubr.f32.gmra.mrb[0].mxu0 %v1315
      %v1510 = vpop.f32.mrb[0].mxu0
      %v1511 = vadd.f32 %v1260, %v1510
      %v1512 = vpop.f32.mrb[0].mxu0
      %1513 = vmatprep.mubr.f32.mxu0 0.0
      %1514 = vmatmul.mubr.f32.gmra.mrb[0].mxu0 %v1318
      %v1515 = vpop.f32.mrb[0].mxu0
      %v1516 = vadd.f32 %v1260, %v1515
      %v1517 = vpop.f32.mrb[0].mxu0
      %1518 = vmatprep.mubr.f32.mxu0 0.0
      %1519 = vmatmul.mubr.f32.gmra.mrb[0].mxu0 %v1321
      %v1520 = vpop.f32.mrb[0].mxu0
      %v1521 = vadd.f32 %v1260, %v1520
      %v1522 = vpop.f32.mrb[0].mxu0
      %1523 = vmatprep.mubr.f32.mxu0 0.0
      %1524 = vmatmul.mubr.f32.gmra.mrb[0].mxu0 %v1324
      %v1525 = vpop.f32.mrb[0].mxu0
      %v1526 = vadd.f32 %v1260, %v1525
      %v1527 = vpop.f32.mrb[0].mxu0
      %1528 = vmatprep.mubr.f32.mxu0 0.0
      %1529 = vmatmul.mubr.f32.gmra.mrb[0].mxu0 %v1327
      %v1530 = vpop.f32.mrb[0].mxu0
      %v1531 = vadd.f32 %v1260, %v1530
      %v1532 = vpop.f32.mrb[0].mxu0
      %1533 = vmatprep.mubr.f32.mxu0 0.0
      %1534 = vmatmul.mubr.f32.gmra.mrb[0].mxu0 %v1330
      %v1535 = vpop.f32.mrb[0].mxu0
      %v1536 = vadd.f32 %v1260, %v1535
      %v1537 = vpop.f32.mrb[0].mxu0
      %1538 = vmatprep.mubr.f32.mxu0 0.0
      %1539 = vmatmul.mubr.f32.gmra.mrb[0].mxu0 %v1333
      %v1540 = vpop.f32.mrb[0].mxu0
      %v1541 = vadd.f32 %v1260, %v1540
      %v1542 = vpop.f32.mrb[0].mxu0
      %1543 = vmatprep.mubr.f32.mxu0 0.0
      %1544 = vmatmul.mubr.f32.gmra.mrb[0].mxu0 %v1336
      %v1545 = vpop.f32.mrb[0].mxu0
      %v1546 = vadd.f32 %v1260, %v1545
      %v1547 = vpop.f32.mrb[0].mxu0
      %1548 = vmatprep.mubr.f32.mxu0 0.0
      %1549 = vmatmul.mubr.f32.gmra.mrb[0].mxu0 %v1339
      %v1550 = vpop.f32.mrb[0].mxu0
      %v1551 = vadd.f32 %v1260, %v1550
      %v1552 = vpop.f32.mrb[0].mxu0
      %1553 = vmatprep.mubr.f32.mxu0 0.0
      %1554 = vmatmul.mubr.f32.gmra.mrb[0].mxu0 %v1342
      %v1555 = vpop.f32.mrb[0].mxu0
      %v1556 = vadd.f32 %v1260, %v1555
      %v1557 = vpop.f32.mrb[0].mxu0
      %1558 = vmatprep.mubr.f32.mxu0 0.0
      %1559 = vmatmul.mubr.f32.gmra.mrb[0].mxu0 %v1345
      %v1560 = vpop.f32.mrb[0].mxu0
      %v1561 = vadd.f32 %v1260, %v1560
      %v1562 = vpop.f32.mrb[0].mxu0
      %1563 = vmatprep.mubr.f32.mxu0 0.0
      %1564 = vmatmul.mubr.f32.gmra.mrb[0].mxu0 %v1348
      %v1565 = vpop.f32.mrb[0].mxu0
      %v1566 = vadd.f32 %v1260, %v1565
      %v1567 = vpop.f32.mrb[0].mxu0
      %1568 = vmatprep.mubr.f32.mxu0 0.0
      %1569 = vmatmul.mubr.f32.gmra.mrb[0].mxu0 %v1351
      %v1570 = vpop.f32.mrb[0].mxu0
      %v1571 = vadd.f32 %v1260, %v1570
      %v1572 = vpop.f32.mrb[0].mxu0
      %1573 = vmatprep.mubr.f32.mxu0 0.0
      %1574 = vmatmul.mubr.f32.gmra.mrb[0].mxu0 %v1354
      %v1575 = vpop.f32.mrb[0].mxu0
      %v1576 = vadd.f32 %v1260, %v1575
      %v1577 = vpop.f32.mrb[0].mxu0
      %1578 = vmatprep.mubr.f32.mxu0 0.0
      %1579 = vmatmul.mubr.f32.gmra.mrb[0].mxu0 %v1357
      %v1580 = vpop.f32.mrb[0].mxu0
      %v1581 = vadd.f32 %v1260, %v1580
      %v1582 = vpop.f32.mrb[0].mxu0
      %1583 = vdwg.mxu0
      %v1584 = vld [vmem:[%s7] sm:$0xff]
      %v1585 = vld [vmem:[%s7 + $0x8] sm:$0xff]
      %v1586 = vlaneseq
      %v1587 = vshrl.u32 %v1586, 7
      %v1588 = vsub.s32 0, %v1587
      %v1589 = vrot.slane %v1584, %v1588
      %1591 = vbcast.lane.b32.xlu0 %v1589, 256
      %v1592 = vpop.permute.xlu0 %1591
      %s1594 = sor.u32 256, 8
      %1595 = vbcast.lane.b32.xlu0 %v1589, %s1594
      %v1596 = vpop.permute.xlu0 %1595
      %v1597 = vlaneseq
      %v1598 = vshrl.u32 %v1597, 7
      %v1599 = vsub.s32 1, %v1598
      %v1600 = vrot.slane %v1584, %v1599
      %1602 = vbcast.lane.b32.xlu0 %v1600, 256
      %v1603 = vpop.permute.xlu0 %1602
      %s1605 = sor.u32 256, 8
      %1606 = vbcast.lane.b32.xlu0 %v1600, %s1605
      %v1607 = vpop.permute.xlu0 %1606
      %v1608 = vlaneseq
      %v1609 = vshrl.u32 %v1608, 7
      %v1610 = vsub.s32 2, %v1609
      %v1611 = vrot.slane %v1584, %v1610
      %1613 = vbcast.lane.b32.xlu0 %v1611, 256
      %v1614 = vpop.permute.xlu0 %1613
      %s1616 = sor.u32 256, 8
      %1617 = vbcast.lane.b32.xlu0 %v1611, %s1616
      %v1618 = vpop.permute.xlu0 %1617
      %v1619 = vlaneseq
      %v1620 = vshrl.u32 %v1619, 7
      %v1621 = vsub.s32 3, %v1620
      %v1622 = vrot.slane %v1584, %v1621
      %1624 = vbcast.lane.b32.xlu0 %v1622, 256
      %v1625 = vpop.permute.xlu0 %1624
      %s1627 = sor.u32 256, 8
      %1628 = vbcast.lane.b32.xlu0 %v1622, %s1627
      %v1629 = vpop.permute.xlu0 %1628
      %v1630 = vlaneseq
      %v1631 = vshrl.u32 %v1630, 7
      %v1632 = vsub.s32 4, %v1631
      %v1633 = vrot.slane %v1584, %v1632
      %1635 = vbcast.lane.b32.xlu0 %v1633, 256
      %v1636 = vpop.permute.xlu0 %1635
      %s1638 = sor.u32 256, 8
      %1639 = vbcast.lane.b32.xlu0 %v1633, %s1638
      %v1640 = vpop.permute.xlu0 %1639
      %v1641 = vlaneseq
      %v1642 = vshrl.u32 %v1641, 7
      %v1643 = vsub.s32 5, %v1642
      %v1644 = vrot.slane %v1584, %v1643
      %1646 = vbcast.lane.b32.xlu0 %v1644, 256
      %v1647 = vpop.permute.xlu0 %1646
      %s1649 = sor.u32 256, 8
      %1650 = vbcast.lane.b32.xlu0 %v1644, %s1649
      %v1651 = vpop.permute.xlu0 %1650
      %v1652 = vlaneseq
      %v1653 = vshrl.u32 %v1652, 7
      %v1654 = vsub.s32 6, %v1653
      %v1655 = vrot.slane %v1584, %v1654
      %1657 = vbcast.lane.b32.xlu0 %v1655, 256
      %v1658 = vpop.permute.xlu0 %1657
      %s1660 = sor.u32 256, 8
      %1661 = vbcast.lane.b32.xlu0 %v1655, %s1660
      %v1662 = vpop.permute.xlu0 %1661
      %v1663 = vlaneseq
      %v1664 = vshrl.u32 %v1663, 7
      %v1665 = vsub.s32 7, %v1664
      %v1666 = vrot.slane %v1584, %v1665
      %1668 = vbcast.lane.b32.xlu0 %v1666, 256
      %v1669 = vpop.permute.xlu0 %1668
      %s1671 = sor.u32 256, 8
      %1672 = vbcast.lane.b32.xlu0 %v1666, %s1671
      %v1673 = vpop.permute.xlu0 %1672
      %v1674 = vlaneseq
      %v1675 = vshrl.u32 %v1674, 7
      %v1676 = vsub.s32 0, %v1675
      %v1677 = vrot.slane %v1585, %v1676
      %1679 = vbcast.lane.b32.xlu0 %v1677, 256
      %v1680 = vpop.permute.xlu0 %1679
      %s1682 = sor.u32 256, 8
      %1683 = vbcast.lane.b32.xlu0 %v1677, %s1682
      %v1684 = vpop.permute.xlu0 %1683
      %v1685 = vlaneseq
      %v1686 = vshrl.u32 %v1685, 7
      %v1687 = vsub.s32 1, %v1686
      %v1688 = vrot.slane %v1585, %v1687
      %1690 = vbcast.lane.b32.xlu0 %v1688, 256
      %v1691 = vpop.permute.xlu0 %1690
      %s1693 = sor.u32 256, 8
      %1694 = vbcast.lane.b32.xlu0 %v1688, %s1693
      %v1695 = vpop.permute.xlu0 %1694
      %v1696 = vlaneseq
      %v1697 = vshrl.u32 %v1696, 7
      %v1698 = vsub.s32 2, %v1697
      %v1699 = vrot.slane %v1585, %v1698
      %1701 = vbcast.lane.b32.xlu0 %v1699, 256
      %v1702 = vpop.permute.xlu0 %1701
      %s1704 = sor.u32 256, 8
      %1705 = vbcast.lane.b32.xlu0 %v1699, %s1704
      %v1706 = vpop.permute.xlu0 %1705
      %v1707 = vlaneseq
      %v1708 = vshrl.u32 %v1707, 7
      %v1709 = vsub.s32 3, %v1708
      %v1710 = vrot.slane %v1585, %v1709
      %1712 = vbcast.lane.b32.xlu0 %v1710, 256
      %v1713 = vpop.permute.xlu0 %1712
      %s1715 = sor.u32 256, 8
      %1716 = vbcast.lane.b32.xlu0 %v1710, %s1715
      %v1717 = vpop.permute.xlu0 %1716
      %v1718 = vlaneseq
      %v1719 = vshrl.u32 %v1718, 7
      %v1720 = vsub.s32 4, %v1719
      %v1721 = vrot.slane %v1585, %v1720
      %1723 = vbcast.lane.b32.xlu0 %v1721, 256
      %v1724 = vpop.permute.xlu0 %1723
      %s1726 = sor.u32 256, 8
      %1727 = vbcast.lane.b32.xlu0 %v1721, %s1726
      %v1728 = vpop.permute.xlu0 %1727
      %v1729 = vlaneseq
      %v1730 = vshrl.u32 %v1729, 7
      %v1731 = vsub.s32 5, %v1730
      %v1732 = vrot.slane %v1585, %v1731
      %1734 = vbcast.lane.b32.xlu0 %v1732, 256
      %v1735 = vpop.permute.xlu0 %1734
      %s1737 = sor.u32 256, 8
      %1738 = vbcast.lane.b32.xlu0 %v1732, %s1737
      %v1739 = vpop.permute.xlu0 %1738
      %v1740 = vlaneseq
      %v1741 = vshrl.u32 %v1740, 7
      %v1742 = vsub.s32 6, %v1741
      %v1743 = vrot.slane %v1585, %v1742
      %1745 = vbcast.lane.b32.xlu0 %v1743, 256
      %v1746 = vpop.permute.xlu0 %1745
      %s1748 = sor.u32 256, 8
      %1749 = vbcast.lane.b32.xlu0 %v1743, %s1748
      %v1750 = vpop.permute.xlu0 %1749
      %v1751 = vlaneseq
      %v1752 = vshrl.u32 %v1751, 7
      %v1753 = vsub.s32 7, %v1752
      %v1754 = vrot.slane %v1585, %v1753
      %1756 = vbcast.lane.b32.xlu0 %v1754, 256
      %v1757 = vpop.permute.xlu0 %1756
      %s1759 = sor.u32 256, 8
      %1760 = vbcast.lane.b32.xlu0 %v1754, %s1759
      %v1761 = vpop.permute.xlu0 %1760
      %v1762 = vadd.f32 %v1426, %v1592
      %v1763 = vadd.f32 %v1431, %v1596
      %v1764 = vadd.f32 %v1436, %v1603
      %v1765 = vadd.f32 %v1441, %v1607
      %v1766 = vadd.f32 %v1446, %v1614
      %v1767 = vadd.f32 %v1451, %v1618
      %v1768 = vadd.f32 %v1456, %v1625
      %v1769 = vadd.f32 %v1461, %v1629
      %v1770 = vadd.f32 %v1466, %v1636
      %v1771 = vadd.f32 %v1471, %v1640
      %v1772 = vadd.f32 %v1476, %v1647
      %v1773 = vadd.f32 %v1481, %v1651
      %v1774 = vadd.f32 %v1486, %v1658
      %v1775 = vadd.f32 %v1491, %v1662
      %v1776 = vadd.f32 %v1496, %v1669
      %v1777 = vadd.f32 %v1501, %v1673
      %v1778 = vadd.f32 %v1506, %v1680
      %v1779 = vadd.f32 %v1511, %v1684
      %v1780 = vadd.f32 %v1516, %v1691
      %v1781 = vadd.f32 %v1521, %v1695
      %v1782 = vadd.f32 %v1526, %v1702
      %v1783 = vadd.f32 %v1531, %v1706
      %v1784 = vadd.f32 %v1536, %v1713
      %v1785 = vadd.f32 %v1541, %v1717
      %v1786 = vadd.f32 %v1546, %v1724
      %v1787 = vadd.f32 %v1551, %v1728
      %v1788 = vadd.f32 %v1556, %v1735
      %v1789 = vadd.f32 %v1561, %v1739
      %v1790 = vadd.f32 %v1566, %v1746
      %v1791 = vadd.f32 %v1571, %v1750
      %v1792 = vadd.f32 %v1576, %v1757
      %v1793 = vadd.f32 %v1581, %v1761
      %v1794 = vlaneseq
      %v1795 = vshrl.u32 %v1794, 7
      %v1796 = vsub.s32 0, %v1795
      %v1797 = vrot.slane %v603, %v1796
      %v1798 = vlaneseq
      %v1799 = vshrl.u32 %v1798, 7
      %v1800 = vsub.s32 0, %v1799
      %v1801 = vrot.slane %v613, %v1800
      %v1802 = vlaneseq
      %v1803 = vshrl.u32 %v1802, 7
      %v1804 = vsub.s32 0, %v1803
      %v1805 = vrot.slane %v623, %v1804
      %v1806 = vlaneseq
      %v1807 = vshrl.u32 %v1806, 7
      %v1808 = vsub.s32 0, %v1807
      %v1809 = vrot.slane %v633, %v1808
      %v1810 = vlaneseq
      %v1811 = vshrl.u32 %v1810, 7
      %v1812 = vsub.s32 0, %v1811
      %v1813 = vrot.slane %v643, %v1812
      %v1814 = vlaneseq
      %v1815 = vshrl.u32 %v1814, 7
      %v1816 = vsub.s32 0, %v1815
      %v1817 = vrot.slane %v653, %v1816
      %v1818 = vlaneseq
      %v1819 = vshrl.u32 %v1818, 7
      %v1820 = vsub.s32 0, %v1819
      %v1821 = vrot.slane %v663, %v1820
      %v1822 = vlaneseq
      %v1823 = vshrl.u32 %v1822, 7
      %v1824 = vsub.s32 0, %v1823
      %v1825 = vrot.slane %v673, %v1824
      %v1826 = vlaneseq
      %v1827 = vshrl.u32 %v1826, 7
      %v1828 = vsub.s32 0, %v1827
      %v1829 = vrot.slane %v683, %v1828
      %v1830 = vlaneseq
      %v1831 = vshrl.u32 %v1830, 7
      %v1832 = vsub.s32 0, %v1831
      %v1833 = vrot.slane %v693, %v1832
      %v1834 = vlaneseq
      %v1835 = vshrl.u32 %v1834, 7
      %v1836 = vsub.s32 0, %v1835
      %v1837 = vrot.slane %v703, %v1836
      %v1838 = vlaneseq
      %v1839 = vshrl.u32 %v1838, 7
      %v1840 = vsub.s32 0, %v1839
      %v1841 = vrot.slane %v713, %v1840
      %v1842 = vlaneseq
      %v1843 = vshrl.u32 %v1842, 7
      %v1844 = vsub.s32 0, %v1843
      %v1845 = vrot.slane %v723, %v1844
      %v1846 = vlaneseq
      %v1847 = vshrl.u32 %v1846, 7
      %v1848 = vsub.s32 0, %v1847
      %v1849 = vrot.slane %v733, %v1848
      %v1850 = vlaneseq
      %v1851 = vshrl.u32 %v1850, 7
      %v1852 = vsub.s32 0, %v1851
      %v1853 = vrot.slane %v743, %v1852
      %v1854 = vlaneseq
      %v1855 = vshrl.u32 %v1854, 7
      %v1856 = vsub.s32 0, %v1855
      %v1857 = vrot.slane %v753, %v1856
      %v1858 = vlaneseq
      %v1859 = vshrl.u32 %v1858, 7
      %v1860 = vsub.s32 0, %v1859
      %v1861 = vrot.slane %v763, %v1860
      %v1862 = vlaneseq
      %v1863 = vshrl.u32 %v1862, 7
      %v1864 = vsub.s32 0, %v1863
      %v1865 = vrot.slane %v773, %v1864
      %v1866 = vlaneseq
      %v1867 = vshrl.u32 %v1866, 7
      %v1868 = vsub.s32 0, %v1867
      %v1869 = vrot.slane %v783, %v1868
      %v1870 = vlaneseq
      %v1871 = vshrl.u32 %v1870, 7
      %v1872 = vsub.s32 0, %v1871
      %v1873 = vrot.slane %v793, %v1872
      %v1874 = vmul.f32 %v1797, %v1762
      %v1875 = vmul.f32 %v1797, %v1763
      %v1876 = vmul.f32 %v1801, %v1762
      %v1877 = vmul.f32 %v1801, %v1763
      %v1878 = vmul.f32 %v1805, %v1762
      %v1879 = vmul.f32 %v1805, %v1763
      %v1880 = vmul.f32 %v1809, %v1762
      %v1881 = vmul.f32 %v1809, %v1763
      %v1882 = vmul.f32 %v1813, %v1762
      %v1883 = vmul.f32 %v1813, %v1763
      %v1884 = vmul.f32 %v1817, %v1762
      %v1885 = vmul.f32 %v1817, %v1763
      %v1886 = vmul.f32 %v1821, %v1762
      %v1887 = vmul.f32 %v1821, %v1763
      %v1888 = vmul.f32 %v1825, %v1762
      %v1889 = vmul.f32 %v1825, %v1763
      %v1890 = vmul.f32 %v1829, %v1762
      %v1891 = vmul.f32 %v1829, %v1763
      %v1892 = vmul.f32 %v1833, %v1762
      %v1893 = vmul.f32 %v1833, %v1763
      %v1894 = vmul.f32 %v1837, %v1762
      %v1895 = vmul.f32 %v1837, %v1763
      %v1896 = vmul.f32 %v1841, %v1762
      %v1897 = vmul.f32 %v1841, %v1763
      %v1898 = vmul.f32 %v1845, %v1762
      %v1899 = vmul.f32 %v1845, %v1763
      %v1900 = vmul.f32 %v1849, %v1762
      %v1901 = vmul.f32 %v1849, %v1763
      %v1902 = vmul.f32 %v1853, %v1762
      %v1903 = vmul.f32 %v1853, %v1763
      %v1904 = vmul.f32 %v1857, %v1762
      %v1905 = vmul.f32 %v1857, %v1763
      %v1906 = vmul.f32 %v1861, %v1762
      %v1907 = vmul.f32 %v1861, %v1763
      %v1908 = vmul.f32 %v1865, %v1762
      %v1909 = vmul.f32 %v1865, %v1763
      %v1910 = vmul.f32 %v1869, %v1762
      %v1911 = vmul.f32 %v1869, %v1763
      %v1912 = vmul.f32 %v1873, %v1762
      %v1913 = vmul.f32 %v1873, %v1763
      %v1914 = vadd.f32 %v1874, 0.0
      %v1915 = vadd.f32 %v1875, 0.0
      %v1916 = vadd.f32 %v1876, 0.0
      %v1917 = vadd.f32 %v1877, 0.0
      %v1918 = vadd.f32 %v1878, 0.0
      %v1919 = vadd.f32 %v1879, 0.0
      %v1920 = vadd.f32 %v1880, 0.0
      %v1921 = vadd.f32 %v1881, 0.0
      %v1922 = vadd.f32 %v1882, 0.0
      %v1923 = vadd.f32 %v1883, 0.0
      %v1924 = vadd.f32 %v1884, 0.0
      %v1925 = vadd.f32 %v1885, 0.0
      %v1926 = vadd.f32 %v1886, 0.0
      %v1927 = vadd.f32 %v1887, 0.0
      %v1928 = vadd.f32 %v1888, 0.0
      %v1929 = vadd.f32 %v1889, 0.0
      %v1930 = vadd.f32 %v1890, 0.0
      %v1931 = vadd.f32 %v1891, 0.0
      %v1932 = vadd.f32 %v1892, 0.0
      %v1933 = vadd.f32 %v1893, 0.0
      %v1934 = vadd.f32 %v1894, 0.0
      %v1935 = vadd.f32 %v1895, 0.0
      %v1936 = vadd.f32 %v1896, 0.0
      %v1937 = vadd.f32 %v1897, 0.0
      %v1938 = vadd.f32 %v1898, 0.0
      %v1939 = vadd.f32 %v1899, 0.0
      %v1940 = vadd.f32 %v1900, 0.0
      %v1941 = vadd.f32 %v1901, 0.0
      %v1942 = vadd.f32 %v1902, 0.0
      %v1943 = vadd.f32 %v1903, 0.0
      %v1944 = vadd.f32 %v1904, 0.0
      %v1945 = vadd.f32 %v1905, 0.0
      %v1946 = vadd.f32 %v1906, 0.0
      %v1947 = vadd.f32 %v1907, 0.0
      %v1948 = vadd.f32 %v1908, 0.0
      %v1949 = vadd.f32 %v1909, 0.0
      %v1950 = vadd.f32 %v1910, 0.0
      %v1951 = vadd.f32 %v1911, 0.0
      %v1952 = vadd.f32 %v1912, 0.0
      %v1953 = vadd.f32 %v1913, 0.0
      %v1954 = vlaneseq
      %v1955 = vshrl.u32 %v1954, 7
      %v1956 = vsub.s32 1, %v1955
      %v1957 = vrot.slane %v603, %v1956
      %v1958 = vlaneseq
      %v1959 = vshrl.u32 %v1958, 7
      %v1960 = vsub.s32 1, %v1959
      %v1961 = vrot.slane %v613, %v1960
      %v1962 = vlaneseq
      %v1963 = vshrl.u32 %v1962, 7
      %v1964 = vsub.s32 1, %v1963
      %v1965 = vrot.slane %v623, %v1964
      %v1966 = vlaneseq
      %v1967 = vshrl.u32 %v1966, 7
      %v1968 = vsub.s32 1, %v1967
      %v1969 = vrot.slane %v633, %v1968
      %v1970 = vlaneseq
      %v1971 = vshrl.u32 %v1970, 7
      %v1972 = vsub.s32 1, %v1971
      %v1973 = vrot.slane %v643, %v1972
      %v1974 = vlaneseq
      %v1975 = vshrl.u32 %v1974, 7
      %v1976 = vsub.s32 1, %v1975
      %v1977 = vrot.slane %v653, %v1976
      %v1978 = vlaneseq
      %v1979 = vshrl.u32 %v1978, 7
      %v1980 = vsub.s32 1, %v1979
      %v1981 = vrot.slane %v663, %v1980
      %v1982 = vlaneseq
      %v1983 = vshrl.u32 %v1982, 7
      %v1984 = vsub.s32 1, %v1983
      %v1985 = vrot.slane %v673, %v1984
      %v1986 = vlaneseq
      %v1987 = vshrl.u32 %v1986, 7
      %v1988 = vsub.s32 1, %v1987
      %v1989 = vrot.slane %v683, %v1988
      %v1990 = vlaneseq
      %v1991 = vshrl.u32 %v1990, 7
      %v1992 = vsub.s32 1, %v1991
      %v1993 = vrot.slane %v693, %v1992
      %v1994 = vlaneseq
      %v1995 = vshrl.u32 %v1994, 7
      %v1996 = vsub.s32 1, %v1995
      %v1997 = vrot.slane %v703, %v1996
      %v1998 = vlaneseq
      %v1999 = vshrl.u32 %v1998, 7
      %v2000 = vsub.s32 1, %v1999
      %v2001 = vrot.slane %v713, %v2000
      %v2002 = vlaneseq
      %v2003 = vshrl.u32 %v2002, 7
      %v2004 = vsub.s32 1, %v2003
      %v2005 = vrot.slane %v723, %v2004
      %v2006 = vlaneseq
      %v2007 = vshrl.u32 %v2006, 7
      %v2008 = vsub.s32 1, %v2007
      %v2009 = vrot.slane %v733, %v2008
      %v2010 = vlaneseq
      %v2011 = vshrl.u32 %v2010, 7
      %v2012 = vsub.s32 1, %v2011
      %v2013 = vrot.slane %v743, %v2012
      %v2014 = vlaneseq
      %v2015 = vshrl.u32 %v2014, 7
      %v2016 = vsub.s32 1, %v2015
      %v2017 = vrot.slane %v753, %v2016
      %v2018 = vlaneseq
      %v2019 = vshrl.u32 %v2018, 7
      %v2020 = vsub.s32 1, %v2019
      %v2021 = vrot.slane %v763, %v2020
      %v2022 = vlaneseq
      %v2023 = vshrl.u32 %v2022, 7
      %v2024 = vsub.s32 1, %v2023
      %v2025 = vrot.slane %v773, %v2024
      %v2026 = vlaneseq
      %v2027 = vshrl.u32 %v2026, 7
      %v2028 = vsub.s32 1, %v2027
      %v2029 = vrot.slane %v783, %v2028
      %v2030 = vlaneseq
      %v2031 = vshrl.u32 %v2030, 7
      %v2032 = vsub.s32 1, %v2031
      %v2033 = vrot.slane %v793, %v2032
      %v2034 = vmul.f32 %v1957, %v1764
      %v2035 = vmul.f32 %v1957, %v1765
      %v2036 = vmul.f32 %v1961, %v1764
      %v2037 = vmul.f32 %v1961, %v1765
      %v2038 = vmul.f32 %v1965, %v1764
      %v2039 = vmul.f32 %v1965, %v1765
      %v2040 = vmul.f32 %v1969, %v1764
      %v2041 = vmul.f32 %v1969, %v1765
      %v2042 = vmul.f32 %v1973, %v1764
      %v2043 = vmul.f32 %v1973, %v1765
      %v2044 = vmul.f32 %v1977, %v1764
      %v2045 = vmul.f32 %v1977, %v1765
      %v2046 = vmul.f32 %v1981, %v1764
      %v2047 = vmul.f32 %v1981, %v1765
      %v2048 = vmul.f32 %v1985, %v1764
      %v2049 = vmul.f32 %v1985, %v1765
      %v2050 = vmul.f32 %v1989, %v1764
      %v2051 = vmul.f32 %v1989, %v1765
      %v2052 = vmul.f32 %v1993, %v1764
      %v2053 = vmul.f32 %v1993, %v1765
      %v2054 = vmul.f32 %v1997, %v1764
      %v2055 = vmul.f32 %v1997, %v1765
      %v2056 = vmul.f32 %v2001, %v1764
      %v2057 = vmul.f32 %v2001, %v1765
      %v2058 = vmul.f32 %v2005, %v1764
      %v2059 = vmul.f32 %v2005, %v1765
      %v2060 = vmul.f32 %v2009, %v1764
      %v2061 = vmul.f32 %v2009, %v1765
      %v2062 = vmul.f32 %v2013, %v1764
      %v2063 = vmul.f32 %v2013, %v1765
      %v2064 = vmul.f32 %v2017, %v1764
      %v2065 = vmul.f32 %v2017, %v1765
      %v2066 = vmul.f32 %v2021, %v1764
      %v2067 = vmul.f32 %v2021, %v1765
      %v2068 = vmul.f32 %v2025, %v1764
      %v2069 = vmul.f32 %v2025, %v1765
      %v2070 = vmul.f32 %v2029, %v1764
      %v2071 = vmul.f32 %v2029, %v1765
      %v2072 = vmul.f32 %v2033, %v1764
      %v2073 = vmul.f32 %v2033, %v1765
      %v2074 = vadd.f32 %v1914, %v2034
      %v2075 = vadd.f32 %v1915, %v2035
      %v2076 = vadd.f32 %v1916, %v2036
      %v2077 = vadd.f32 %v1917, %v2037
      %v2078 = vadd.f32 %v1918, %v2038
      %v2079 = vadd.f32 %v1919, %v2039
      %v2080 = vadd.f32 %v1920, %v2040
      %v2081 = vadd.f32 %v1921, %v2041
      %v2082 = vadd.f32 %v1922, %v2042
      %v2083 = vadd.f32 %v1923, %v2043
      %v2084 = vadd.f32 %v1924, %v2044
      %v2085 = vadd.f32 %v1925, %v2045
      %v2086 = vadd.f32 %v1926, %v2046
      %v2087 = vadd.f32 %v1927, %v2047
      %v2088 = vadd.f32 %v1928, %v2048
      %v2089 = vadd.f32 %v1929, %v2049
      %v2090 = vadd.f32 %v1930, %v2050
      %v2091 = vadd.f32 %v1931, %v2051
      %v2092 = vadd.f32 %v1932, %v2052
      %v2093 = vadd.f32 %v1933, %v2053
      %v2094 = vadd.f32 %v1934, %v2054
      %v2095 = vadd.f32 %v1935, %v2055
      %v2096 = vadd.f32 %v1936, %v2056
      %v2097 = vadd.f32 %v1937, %v2057
      %v2098 = vadd.f32 %v1938, %v2058
      %v2099 = vadd.f32 %v1939, %v2059
      %v2100 = vadd.f32 %v1940, %v2060
      %v2101 = vadd.f32 %v1941, %v2061
      %v2102 = vadd.f32 %v1942, %v2062
      %v2103 = vadd.f32 %v1943, %v2063
      %v2104 = vadd.f32 %v1944, %v2064
      %v2105 = vadd.f32 %v1945, %v2065
      %v2106 = vadd.f32 %v1946, %v2066
      %v2107 = vadd.f32 %v1947, %v2067
      %v2108 = vadd.f32 %v1948, %v2068
      %v2109 = vadd.f32 %v1949, %v2069
      %v2110 = vadd.f32 %v1950, %v2070
      %v2111 = vadd.f32 %v1951, %v2071
      %v2112 = vadd.f32 %v1952, %v2072
      %v2113 = vadd.f32 %v1953, %v2073
      %v2114 = vlaneseq
      %v2115 = vshrl.u32 %v2114, 7
      %v2116 = vsub.s32 2, %v2115
      %v2117 = vrot.slane %v603, %v2116
      %v2118 = vlaneseq
      %v2119 = vshrl.u32 %v2118, 7
      %v2120 = vsub.s32 2, %v2119
      %v2121 = vrot.slane %v613, %v2120
      %v2122 = vlaneseq
      %v2123 = vshrl.u32 %v2122, 7
      %v2124 = vsub.s32 2, %v2123
      %v2125 = vrot.slane %v623, %v2124
      %v2126 = vlaneseq
      %v2127 = vshrl.u32 %v2126, 7
      %v2128 = vsub.s32 2, %v2127
      %v2129 = vrot.slane %v633, %v2128
      %v2130 = vlaneseq
      %v2131 = vshrl.u32 %v2130, 7
      %v2132 = vsub.s32 2, %v2131
      %v2133 = vrot.slane %v643, %v2132
      %v2134 = vlaneseq
      %v2135 = vshrl.u32 %v2134, 7
      %v2136 = vsub.s32 2, %v2135
      %v2137 = vrot.slane %v653, %v2136
      %v2138 = vlaneseq
      %v2139 = vshrl.u32 %v2138, 7
      %v2140 = vsub.s32 2, %v2139
      %v2141 = vrot.slane %v663, %v2140
      %v2142 = vlaneseq
      %v2143 = vshrl.u32 %v2142, 7
      %v2144 = vsub.s32 2, %v2143
      %v2145 = vrot.slane %v673, %v2144
      %v2146 = vlaneseq
      %v2147 = vshrl.u32 %v2146, 7
      %v2148 = vsub.s32 2, %v2147
      %v2149 = vrot.slane %v683, %v2148
      %v2150 = vlaneseq
      %v2151 = vshrl.u32 %v2150, 7
      %v2152 = vsub.s32 2, %v2151
      %v2153 = vrot.slane %v693, %v2152
      %v2154 = vlaneseq
      %v2155 = vshrl.u32 %v2154, 7
      %v2156 = vsub.s32 2, %v2155
      %v2157 = vrot.slane %v703, %v2156
      %v2158 = vlaneseq
      %v2159 = vshrl.u32 %v2158, 7
      %v2160 = vsub.s32 2, %v2159
      %v2161 = vrot.slane %v713, %v2160
      %v2162 = vlaneseq
      %v2163 = vshrl.u32 %v2162, 7
      %v2164 = vsub.s32 2, %v2163
      %v2165 = vrot.slane %v723, %v2164
      %v2166 = vlaneseq
      %v2167 = vshrl.u32 %v2166, 7
      %v2168 = vsub.s32 2, %v2167
      %v2169 = vrot.slane %v733, %v2168
      %v2170 = vlaneseq
      %v2171 = vshrl.u32 %v2170, 7
      %v2172 = vsub.s32 2, %v2171
      %v2173 = vrot.slane %v743, %v2172
      %v2174 = vlaneseq
      %v2175 = vshrl.u32 %v2174, 7
      %v2176 = vsub.s32 2, %v2175
      %v2177 = vrot.slane %v753, %v2176
      %v2178 = vlaneseq
      %v2179 = vshrl.u32 %v2178, 7
      %v2180 = vsub.s32 2, %v2179
      %v2181 = vrot.slane %v763, %v2180
      %v2182 = vlaneseq
      %v2183 = vshrl.u32 %v2182, 7
      %v2184 = vsub.s32 2, %v2183
      %v2185 = vrot.slane %v773, %v2184
      %v2186 = vlaneseq
      %v2187 = vshrl.u32 %v2186, 7
      %v2188 = vsub.s32 2, %v2187
      %v2189 = vrot.slane %v783, %v2188
      %v2190 = vlaneseq
      %v2191 = vshrl.u32 %v2190, 7
      %v2192 = vsub.s32 2, %v2191
      %v2193 = vrot.slane %v793, %v2192
      %v2194 = vmul.f32 %v2117, %v1766
      %v2195 = vmul.f32 %v2117, %v1767
      %v2196 = vmul.f32 %v2121, %v1766
      %v2197 = vmul.f32 %v2121, %v1767
      %v2198 = vmul.f32 %v2125, %v1766
      %v2199 = vmul.f32 %v2125, %v1767
      %v2200 = vmul.f32 %v2129, %v1766
      %v2201 = vmul.f32 %v2129, %v1767
      %v2202 = vmul.f32 %v2133, %v1766
      %v2203 = vmul.f32 %v2133, %v1767
      %v2204 = vmul.f32 %v2137, %v1766
      %v2205 = vmul.f32 %v2137, %v1767
      %v2206 = vmul.f32 %v2141, %v1766
      %v2207 = vmul.f32 %v2141, %v1767
      %v2208 = vmul.f32 %v2145, %v1766
      %v2209 = vmul.f32 %v2145, %v1767
      %v2210 = vmul.f32 %v2149, %v1766
      %v2211 = vmul.f32 %v2149, %v1767
      %v2212 = vmul.f32 %v2153, %v1766
      %v2213 = vmul.f32 %v2153, %v1767
      %v2214 = vmul.f32 %v2157, %v1766
      %v2215 = vmul.f32 %v2157, %v1767
      %v2216 = vmul.f32 %v2161, %v1766
      %v2217 = vmul.f32 %v2161, %v1767
      %v2218 = vmul.f32 %v2165, %v1766
      %v2219 = vmul.f32 %v2165, %v1767
      %v2220 = vmul.f32 %v2169, %v1766
      %v2221 = vmul.f32 %v2169, %v1767
      %v2222 = vmul.f32 %v2173, %v1766
      %v2223 = vmul.f32 %v2173, %v1767
      %v2224 = vmul.f32 %v2177, %v1766
      %v2225 = vmul.f32 %v2177, %v1767
      %v2226 = vmul.f32 %v2181, %v1766
      %v2227 = vmul.f32 %v2181, %v1767
      %v2228 = vmul.f32 %v2185, %v1766
      %v2229 = vmul.f32 %v2185, %v1767
      %v2230 = vmul.f32 %v2189, %v1766
      %v2231 = vmul.f32 %v2189, %v1767
      %v2232 = vmul.f32 %v2193, %v1766
      %v2233 = vmul.f32 %v2193, %v1767
      %v2234 = vadd.f32 %v2074, %v2194
      %v2235 = vadd.f32 %v2075, %v2195
      %v2236 = vadd.f32 %v2076, %v2196
      %v2237 = vadd.f32 %v2077, %v2197
      %v2238 = vadd.f32 %v2078, %v2198
      %v2239 = vadd.f32 %v2079, %v2199
      %v2240 = vadd.f32 %v2080, %v2200
      %v2241 = vadd.f32 %v2081, %v2201
      %v2242 = vadd.f32 %v2082, %v2202
      %v2243 = vadd.f32 %v2083, %v2203
      %v2244 = vadd.f32 %v2084, %v2204
      %v2245 = vadd.f32 %v2085, %v2205
      %v2246 = vadd.f32 %v2086, %v2206
      %v2247 = vadd.f32 %v2087, %v2207
      %v2248 = vadd.f32 %v2088, %v2208
      %v2249 = vadd.f32 %v2089, %v2209
      %v2250 = vadd.f32 %v2090, %v2210
      %v2251 = vadd.f32 %v2091, %v2211
      %v2252 = vadd.f32 %v2092, %v2212
      %v2253 = vadd.f32 %v2093, %v2213
      %v2254 = vadd.f32 %v2094, %v2214
      %v2255 = vadd.f32 %v2095, %v2215
      %v2256 = vadd.f32 %v2096, %v2216
      %v2257 = vadd.f32 %v2097, %v2217
      %v2258 = vadd.f32 %v2098, %v2218
      %v2259 = vadd.f32 %v2099, %v2219
      %v2260 = vadd.f32 %v2100, %v2220
      %v2261 = vadd.f32 %v2101, %v2221
      %v2262 = vadd.f32 %v2102, %v2222
      %v2263 = vadd.f32 %v2103, %v2223
      %v2264 = vadd.f32 %v2104, %v2224
      %v2265 = vadd.f32 %v2105, %v2225
      %v2266 = vadd.f32 %v2106, %v2226
      %v2267 = vadd.f32 %v2107, %v2227
      %v2268 = vadd.f32 %v2108, %v2228
      %v2269 = vadd.f32 %v2109, %v2229
      %v2270 = vadd.f32 %v2110, %v2230
      %v2271 = vadd.f32 %v2111, %v2231
      %v2272 = vadd.f32 %v2112, %v2232
      %v2273 = vadd.f32 %v2113, %v2233
      %v2274 = vlaneseq
      %v2275 = vshrl.u32 %v2274, 7
      %v2276 = vsub.s32 3, %v2275
      %v2277 = vrot.slane %v603, %v2276
      %v2278 = vlaneseq
      %v2279 = vshrl.u32 %v2278, 7
      %v2280 = vsub.s32 3, %v2279
      %v2281 = vrot.slane %v613, %v2280
      %v2282 = vlaneseq
      %v2283 = vshrl.u32 %v2282, 7
      %v2284 = vsub.s32 3, %v2283
      %v2285 = vrot.slane %v623, %v2284
      %v2286 = vlaneseq
      %v2287 = vshrl.u32 %v2286, 7
      %v2288 = vsub.s32 3, %v2287
      %v2289 = vrot.slane %v633, %v2288
      %v2290 = vlaneseq
      %v2291 = vshrl.u32 %v2290, 7
      %v2292 = vsub.s32 3, %v2291
      %v2293 = vrot.slane %v643, %v2292
      %v2294 = vlaneseq
      %v2295 = vshrl.u32 %v2294, 7
      %v2296 = vsub.s32 3, %v2295
      %v2297 = vrot.slane %v653, %v2296
      %v2298 = vlaneseq
      %v2299 = vshrl.u32 %v2298, 7
      %v2300 = vsub.s32 3, %v2299
      %v2301 = vrot.slane %v663, %v2300
      %v2302 = vlaneseq
      %v2303 = vshrl.u32 %v2302, 7
      %v2304 = vsub.s32 3, %v2303
      %v2305 = vrot.slane %v673, %v2304
      %v2306 = vlaneseq
      %v2307 = vshrl.u32 %v2306, 7
      %v2308 = vsub.s32 3, %v2307
      %v2309 = vrot.slane %v683, %v2308
      %v2310 = vlaneseq
      %v2311 = vshrl.u32 %v2310, 7
      %v2312 = vsub.s32 3, %v2311
      %v2313 = vrot.slane %v693, %v2312
      %v2314 = vlaneseq
      %v2315 = vshrl.u32 %v2314, 7
      %v2316 = vsub.s32 3, %v2315
      %v2317 = vrot.slane %v703, %v2316
      %v2318 = vlaneseq
      %v2319 = vshrl.u32 %v2318, 7
      %v2320 = vsub.s32 3, %v2319
      %v2321 = vrot.slane %v713, %v2320
      %v2322 = vlaneseq
      %v2323 = vshrl.u32 %v2322, 7
      %v2324 = vsub.s32 3, %v2323
      %v2325 = vrot.slane %v723, %v2324
      %v2326 = vlaneseq
      %v2327 = vshrl.u32 %v2326, 7
      %v2328 = vsub.s32 3, %v2327
      %v2329 = vrot.slane %v733, %v2328
      %v2330 = vlaneseq
      %v2331 = vshrl.u32 %v2330, 7
      %v2332 = vsub.s32 3, %v2331
      %v2333 = vrot.slane %v743, %v2332
      %v2334 = vlaneseq
      %v2335 = vshrl.u32 %v2334, 7
      %v2336 = vsub.s32 3, %v2335
      %v2337 = vrot.slane %v753, %v2336
      %v2338 = vlaneseq
      %v2339 = vshrl.u32 %v2338, 7
      %v2340 = vsub.s32 3, %v2339
      %v2341 = vrot.slane %v763, %v2340
      %v2342 = vlaneseq
      %v2343 = vshrl.u32 %v2342, 7
      %v2344 = vsub.s32 3, %v2343
      %v2345 = vrot.slane %v773, %v2344
      %v2346 = vlaneseq
      %v2347 = vshrl.u32 %v2346, 7
      %v2348 = vsub.s32 3, %v2347
      %v2349 = vrot.slane %v783, %v2348
      %v2350 = vlaneseq
      %v2351 = vshrl.u32 %v2350, 7
      %v2352 = vsub.s32 3, %v2351
      %v2353 = vrot.slane %v793, %v2352
      %v2354 = vmul.f32 %v2277, %v1768
      %v2355 = vmul.f32 %v2277, %v1769
      %v2356 = vmul.f32 %v2281, %v1768
      %v2357 = vmul.f32 %v2281, %v1769
      %v2358 = vmul.f32 %v2285, %v1768
      %v2359 = vmul.f32 %v2285, %v1769
      %v2360 = vmul.f32 %v2289, %v1768
      %v2361 = vmul.f32 %v2289, %v1769
      %v2362 = vmul.f32 %v2293, %v1768
      %v2363 = vmul.f32 %v2293, %v1769
      %v2364 = vmul.f32 %v2297, %v1768
      %v2365 = vmul.f32 %v2297, %v1769
      %v2366 = vmul.f32 %v2301, %v1768
      %v2367 = vmul.f32 %v2301, %v1769
      %v2368 = vmul.f32 %v2305, %v1768
      %v2369 = vmul.f32 %v2305, %v1769
      %v2370 = vmul.f32 %v2309, %v1768
      %v2371 = vmul.f32 %v2309, %v1769
      %v2372 = vmul.f32 %v2313, %v1768
      %v2373 = vmul.f32 %v2313, %v1769
      %v2374 = vmul.f32 %v2317, %v1768
      %v2375 = vmul.f32 %v2317, %v1769
      %v2376 = vmul.f32 %v2321, %v1768
      %v2377 = vmul.f32 %v2321, %v1769
      %v2378 = vmul.f32 %v2325, %v1768
      %v2379 = vmul.f32 %v2325, %v1769
      %v2380 = vmul.f32 %v2329, %v1768
      %v2381 = vmul.f32 %v2329, %v1769
      %v2382 = vmul.f32 %v2333, %v1768
      %v2383 = vmul.f32 %v2333, %v1769
      %v2384 = vmul.f32 %v2337, %v1768
      %v2385 = vmul.f32 %v2337, %v1769
      %v2386 = vmul.f32 %v2341, %v1768
      %v2387 = vmul.f32 %v2341, %v1769
      %v2388 = vmul.f32 %v2345, %v1768
      %v2389 = vmul.f32 %v2345, %v1769
      %v2390 = vmul.f32 %v2349, %v1768
      %v2391 = vmul.f32 %v2349, %v1769
      %v2392 = vmul.f32 %v2353, %v1768
      %v2393 = vmul.f32 %v2353, %v1769
      %v2394 = vadd.f32 %v2234, %v2354
      %v2395 = vadd.f32 %v2235, %v2355
      %v2396 = vadd.f32 %v2236, %v2356
      %v2397 = vadd.f32 %v2237, %v2357
      %v2398 = vadd.f32 %v2238, %v2358
      %v2399 = vadd.f32 %v2239, %v2359
      %v2400 = vadd.f32 %v2240, %v2360
      %v2401 = vadd.f32 %v2241, %v2361
      %v2402 = vadd.f32 %v2242, %v2362
      %v2403 = vadd.f32 %v2243, %v2363
      %v2404 = vadd.f32 %v2244, %v2364
      %v2405 = vadd.f32 %v2245, %v2365
      %v2406 = vadd.f32 %v2246, %v2366
      %v2407 = vadd.f32 %v2247, %v2367
      %v2408 = vadd.f32 %v2248, %v2368
      %v2409 = vadd.f32 %v2249, %v2369
      %v2410 = vadd.f32 %v2250, %v2370
      %v2411 = vadd.f32 %v2251, %v2371
      %v2412 = vadd.f32 %v2252, %v2372
      %v2413 = vadd.f32 %v2253, %v2373
      %v2414 = vadd.f32 %v2254, %v2374
      %v2415 = vadd.f32 %v2255, %v2375
      %v2416 = vadd.f32 %v2256, %v2376
      %v2417 = vadd.f32 %v2257, %v2377
      %v2418 = vadd.f32 %v2258, %v2378
      %v2419 = vadd.f32 %v2259, %v2379
      %v2420 = vadd.f32 %v2260, %v2380
      %v2421 = vadd.f32 %v2261, %v2381
      %v2422 = vadd.f32 %v2262, %v2382
      %v2423 = vadd.f32 %v2263, %v2383
      %v2424 = vadd.f32 %v2264, %v2384
      %v2425 = vadd.f32 %v2265, %v2385
      %v2426 = vadd.f32 %v2266, %v2386
      %v2427 = vadd.f32 %v2267, %v2387
      %v2428 = vadd.f32 %v2268, %v2388
      %v2429 = vadd.f32 %v2269, %v2389
      %v2430 = vadd.f32 %v2270, %v2390
      %v2431 = vadd.f32 %v2271, %v2391
      %v2432 = vadd.f32 %v2272, %v2392
      %v2433 = vadd.f32 %v2273, %v2393
      %v2434 = vlaneseq
      %v2435 = vshrl.u32 %v2434, 7
      %v2436 = vsub.s32 4, %v2435
      %v2437 = vrot.slane %v603, %v2436
      %v2438 = vlaneseq
      %v2439 = vshrl.u32 %v2438, 7
      %v2440 = vsub.s32 4, %v2439
      %v2441 = vrot.slane %v613, %v2440
      %v2442 = vlaneseq
      %v2443 = vshrl.u32 %v2442, 7
      %v2444 = vsub.s32 4, %v2443
      %v2445 = vrot.slane %v623, %v2444
      %v2446 = vlaneseq
      %v2447 = vshrl.u32 %v2446, 7
      %v2448 = vsub.s32 4, %v2447
      %v2449 = vrot.slane %v633, %v2448
      %v2450 = vlaneseq
      %v2451 = vshrl.u32 %v2450, 7
      %v2452 = vsub.s32 4, %v2451
      %v2453 = vrot.slane %v643, %v2452
      %v2454 = vlaneseq
      %v2455 = vshrl.u32 %v2454, 7
      %v2456 = vsub.s32 4, %v2455
      %v2457 = vrot.slane %v653, %v2456
      %v2458 = vlaneseq
      %v2459 = vshrl.u32 %v2458, 7
      %v2460 = vsub.s32 4, %v2459
      %v2461 = vrot.slane %v663, %v2460
      %v2462 = vlaneseq
      %v2463 = vshrl.u32 %v2462, 7
      %v2464 = vsub.s32 4, %v2463
      %v2465 = vrot.slane %v673, %v2464
      %v2466 = vlaneseq
      %v2467 = vshrl.u32 %v2466, 7
      %v2468 = vsub.s32 4, %v2467
      %v2469 = vrot.slane %v683, %v2468
      %v2470 = vlaneseq
      %v2471 = vshrl.u32 %v2470, 7
      %v2472 = vsub.s32 4, %v2471
      %v2473 = vrot.slane %v693, %v2472
      %v2474 = vlaneseq
      %v2475 = vshrl.u32 %v2474, 7
      %v2476 = vsub.s32 4, %v2475
      %v2477 = vrot.slane %v703, %v2476
      %v2478 = vlaneseq
      %v2479 = vshrl.u32 %v2478, 7
      %v2480 = vsub.s32 4, %v2479
      %v2481 = vrot.slane %v713, %v2480
      %v2482 = vlaneseq
      %v2483 = vshrl.u32 %v2482, 7
      %v2484 = vsub.s32 4, %v2483
      %v2485 = vrot.slane %v723, %v2484
      %v2486 = vlaneseq
      %v2487 = vshrl.u32 %v2486, 7
      %v2488 = vsub.s32 4, %v2487
      %v2489 = vrot.slane %v733, %v2488
      %v2490 = vlaneseq
      %v2491 = vshrl.u32 %v2490, 7
      %v2492 = vsub.s32 4, %v2491
      %v2493 = vrot.slane %v743, %v2492
      %v2494 = vlaneseq
      %v2495 = vshrl.u32 %v2494, 7
      %v2496 = vsub.s32 4, %v2495
      %v2497 = vrot.slane %v753, %v2496
      %v2498 = vlaneseq
      %v2499 = vshrl.u32 %v2498, 7
      %v2500 = vsub.s32 4, %v2499
      %v2501 = vrot.slane %v763, %v2500
      %v2502 = vlaneseq
      %v2503 = vshrl.u32 %v2502, 7
      %v2504 = vsub.s32 4, %v2503
      %v2505 = vrot.slane %v773, %v2504
      %v2506 = vlaneseq
      %v2507 = vshrl.u32 %v2506, 7
      %v2508 = vsub.s32 4, %v2507
      %v2509 = vrot.slane %v783, %v2508
      %v2510 = vlaneseq
      %v2511 = vshrl.u32 %v2510, 7
      %v2512 = vsub.s32 4, %v2511
      %v2513 = vrot.slane %v793, %v2512
      %v2514 = vmul.f32 %v2437, %v1770
      %v2515 = vmul.f32 %v2437, %v1771
      %v2516 = vmul.f32 %v2441, %v1770
      %v2517 = vmul.f32 %v2441, %v1771
      %v2518 = vmul.f32 %v2445, %v1770
      %v2519 = vmul.f32 %v2445, %v1771
      %v2520 = vmul.f32 %v2449, %v1770
      %v2521 = vmul.f32 %v2449, %v1771
      %v2522 = vmul.f32 %v2453, %v1770
      %v2523 = vmul.f32 %v2453, %v1771
      %v2524 = vmul.f32 %v2457, %v1770
      %v2525 = vmul.f32 %v2457, %v1771
      %v2526 = vmul.f32 %v2461, %v1770
      %v2527 = vmul.f32 %v2461, %v1771
      %v2528 = vmul.f32 %v2465, %v1770
      %v2529 = vmul.f32 %v2465, %v1771
      %v2530 = vmul.f32 %v2469, %v1770
      %v2531 = vmul.f32 %v2469, %v1771
      %v2532 = vmul.f32 %v2473, %v1770
      %v2533 = vmul.f32 %v2473, %v1771
      %v2534 = vmul.f32 %v2477, %v1770
      %v2535 = vmul.f32 %v2477, %v1771
      %v2536 = vmul.f32 %v2481, %v1770
      %v2537 = vmul.f32 %v2481, %v1771
      %v2538 = vmul.f32 %v2485, %v1770
      %v2539 = vmul.f32 %v2485, %v1771
      %v2540 = vmul.f32 %v2489, %v1770
      %v2541 = vmul.f32 %v2489, %v1771
      %v2542 = vmul.f32 %v2493, %v1770
      %v2543 = vmul.f32 %v2493, %v1771
      %v2544 = vmul.f32 %v2497, %v1770
      %v2545 = vmul.f32 %v2497, %v1771
      %v2546 = vmul.f32 %v2501, %v1770
      %v2547 = vmul.f32 %v2501, %v1771
      %v2548 = vmul.f32 %v2505, %v1770
      %v2549 = vmul.f32 %v2505, %v1771
      %v2550 = vmul.f32 %v2509, %v1770
      %v2551 = vmul.f32 %v2509, %v1771
      %v2552 = vmul.f32 %v2513, %v1770
      %v2553 = vmul.f32 %v2513, %v1771
      %v2554 = vadd.f32 %v2394, %v2514
      %v2555 = vadd.f32 %v2395, %v2515
      %v2556 = vadd.f32 %v2396, %v2516
      %v2557 = vadd.f32 %v2397, %v2517
      %v2558 = vadd.f32 %v2398, %v2518
      %v2559 = vadd.f32 %v2399, %v2519
      %v2560 = vadd.f32 %v2400, %v2520
      %v2561 = vadd.f32 %v2401, %v2521
      %v2562 = vadd.f32 %v2402, %v2522
      %v2563 = vadd.f32 %v2403, %v2523
      %v2564 = vadd.f32 %v2404, %v2524
      %v2565 = vadd.f32 %v2405, %v2525
      %v2566 = vadd.f32 %v2406, %v2526
      %v2567 = vadd.f32 %v2407, %v2527
      %v2568 = vadd.f32 %v2408, %v2528
      %v2569 = vadd.f32 %v2409, %v2529
      %v2570 = vadd.f32 %v2410, %v2530
      %v2571 = vadd.f32 %v2411, %v2531
      %v2572 = vadd.f32 %v2412, %v2532
      %v2573 = vadd.f32 %v2413, %v2533
      %v2574 = vadd.f32 %v2414, %v2534
      %v2575 = vadd.f32 %v2415, %v2535
      %v2576 = vadd.f32 %v2416, %v2536
      %v2577 = vadd.f32 %v2417, %v2537
      %v2578 = vadd.f32 %v2418, %v2538
      %v2579 = vadd.f32 %v2419, %v2539
      %v2580 = vadd.f32 %v2420, %v2540
      %v2581 = vadd.f32 %v2421, %v2541
      %v2582 = vadd.f32 %v2422, %v2542
      %v2583 = vadd.f32 %v2423, %v2543
      %v2584 = vadd.f32 %v2424, %v2544
      %v2585 = vadd.f32 %v2425, %v2545
      %v2586 = vadd.f32 %v2426, %v2546
      %v2587 = vadd.f32 %v2427, %v2547
      %v2588 = vadd.f32 %v2428, %v2548
      %v2589 = vadd.f32 %v2429, %v2549
      %v2590 = vadd.f32 %v2430, %v2550
      %v2591 = vadd.f32 %v2431, %v2551
      %v2592 = vadd.f32 %v2432, %v2552
      %v2593 = vadd.f32 %v2433, %v2553
      %v2594 = vlaneseq
      %v2595 = vshrl.u32 %v2594, 7
      %v2596 = vsub.s32 5, %v2595
      %v2597 = vrot.slane %v603, %v2596
      %v2598 = vlaneseq
      %v2599 = vshrl.u32 %v2598, 7
      %v2600 = vsub.s32 5, %v2599
      %v2601 = vrot.slane %v613, %v2600
      %v2602 = vlaneseq
      %v2603 = vshrl.u32 %v2602, 7
      %v2604 = vsub.s32 5, %v2603
      %v2605 = vrot.slane %v623, %v2604
      %v2606 = vlaneseq
      %v2607 = vshrl.u32 %v2606, 7
      %v2608 = vsub.s32 5, %v2607
      %v2609 = vrot.slane %v633, %v2608
      %v2610 = vlaneseq
      %v2611 = vshrl.u32 %v2610, 7
      %v2612 = vsub.s32 5, %v2611
      %v2613 = vrot.slane %v643, %v2612
      %v2614 = vlaneseq
      %v2615 = vshrl.u32 %v2614, 7
      %v2616 = vsub.s32 5, %v2615
      %v2617 = vrot.slane %v653, %v2616
      %v2618 = vlaneseq
      %v2619 = vshrl.u32 %v2618, 7
      %v2620 = vsub.s32 5, %v2619
      %v2621 = vrot.slane %v663, %v2620
      %v2622 = vlaneseq
      %v2623 = vshrl.u32 %v2622, 7
      %v2624 = vsub.s32 5, %v2623
      %v2625 = vrot.slane %v673, %v2624
      %v2626 = vlaneseq
      %v2627 = vshrl.u32 %v2626, 7
      %v2628 = vsub.s32 5, %v2627
      %v2629 = vrot.slane %v683, %v2628
      %v2630 = vlaneseq
      %v2631 = vshrl.u32 %v2630, 7
      %v2632 = vsub.s32 5, %v2631
      %v2633 = vrot.slane %v693, %v2632
      %v2634 = vlaneseq
      %v2635 = vshrl.u32 %v2634, 7
      %v2636 = vsub.s32 5, %v2635
      %v2637 = vrot.slane %v703, %v2636
      %v2638 = vlaneseq
      %v2639 = vshrl.u32 %v2638, 7
      %v2640 = vsub.s32 5, %v2639
      %v2641 = vrot.slane %v713, %v2640
      %v2642 = vlaneseq
      %v2643 = vshrl.u32 %v2642, 7
      %v2644 = vsub.s32 5, %v2643
      %v2645 = vrot.slane %v723, %v2644
      %v2646 = vlaneseq
      %v2647 = vshrl.u32 %v2646, 7
      %v2648 = vsub.s32 5, %v2647
      %v2649 = vrot.slane %v733, %v2648
      %v2650 = vlaneseq
      %v2651 = vshrl.u32 %v2650, 7
      %v2652 = vsub.s32 5, %v2651
      %v2653 = vrot.slane %v743, %v2652
      %v2654 = vlaneseq
      %v2655 = vshrl.u32 %v2654, 7
      %v2656 = vsub.s32 5, %v2655
      %v2657 = vrot.slane %v753, %v2656
      %v2658 = vlaneseq
      %v2659 = vshrl.u32 %v2658, 7
      %v2660 = vsub.s32 5, %v2659
      %v2661 = vrot.slane %v763, %v2660
      %v2662 = vlaneseq
      %v2663 = vshrl.u32 %v2662, 7
      %v2664 = vsub.s32 5, %v2663
      %v2665 = vrot.slane %v773, %v2664
      %v2666 = vlaneseq
      %v2667 = vshrl.u32 %v2666, 7
      %v2668 = vsub.s32 5, %v2667
      %v2669 = vrot.slane %v783, %v2668
      %v2670 = vlaneseq
      %v2671 = vshrl.u32 %v2670, 7
      %v2672 = vsub.s32 5, %v2671
      %v2673 = vrot.slane %v793, %v2672
      %v2674 = vmul.f32 %v2597, %v1772
      %v2675 = vmul.f32 %v2597, %v1773
      %v2676 = vmul.f32 %v2601, %v1772
      %v2677 = vmul.f32 %v2601, %v1773
      %v2678 = vmul.f32 %v2605, %v1772
      %v2679 = vmul.f32 %v2605, %v1773
      %v2680 = vmul.f32 %v2609, %v1772
      %v2681 = vmul.f32 %v2609, %v1773
      %v2682 = vmul.f32 %v2613, %v1772
      %v2683 = vmul.f32 %v2613, %v1773
      %v2684 = vmul.f32 %v2617, %v1772
      %v2685 = vmul.f32 %v2617, %v1773
      %v2686 = vmul.f32 %v2621, %v1772
      %v2687 = vmul.f32 %v2621, %v1773
      %v2688 = vmul.f32 %v2625, %v1772
      %v2689 = vmul.f32 %v2625, %v1773
      %v2690 = vmul.f32 %v2629, %v1772
      %v2691 = vmul.f32 %v2629, %v1773
      %v2692 = vmul.f32 %v2633, %v1772
      %v2693 = vmul.f32 %v2633, %v1773
      %v2694 = vmul.f32 %v2637, %v1772
      %v2695 = vmul.f32 %v2637, %v1773
      %v2696 = vmul.f32 %v2641, %v1772
      %v2697 = vmul.f32 %v2641, %v1773
      %v2698 = vmul.f32 %v2645, %v1772
      %v2699 = vmul.f32 %v2645, %v1773
      %v2700 = vmul.f32 %v2649, %v1772
      %v2701 = vmul.f32 %v2649, %v1773
      %v2702 = vmul.f32 %v2653, %v1772
      %v2703 = vmul.f32 %v2653, %v1773
      %v2704 = vmul.f32 %v2657, %v1772
      %v2705 = vmul.f32 %v2657, %v1773
      %v2706 = vmul.f32 %v2661, %v1772
      %v2707 = vmul.f32 %v2661, %v1773
      %v2708 = vmul.f32 %v2665, %v1772
      %v2709 = vmul.f32 %v2665, %v1773
      %v2710 = vmul.f32 %v2669, %v1772
      %v2711 = vmul.f32 %v2669, %v1773
      %v2712 = vmul.f32 %v2673, %v1772
      %v2713 = vmul.f32 %v2673, %v1773
      %v2714 = vadd.f32 %v2554, %v2674
      %v2715 = vadd.f32 %v2555, %v2675
      %v2716 = vadd.f32 %v2556, %v2676
      %v2717 = vadd.f32 %v2557, %v2677
      %v2718 = vadd.f32 %v2558, %v2678
      %v2719 = vadd.f32 %v2559, %v2679
      %v2720 = vadd.f32 %v2560, %v2680
      %v2721 = vadd.f32 %v2561, %v2681
      %v2722 = vadd.f32 %v2562, %v2682
      %v2723 = vadd.f32 %v2563, %v2683
      %v2724 = vadd.f32 %v2564, %v2684
      %v2725 = vadd.f32 %v2565, %v2685
      %v2726 = vadd.f32 %v2566, %v2686
      %v2727 = vadd.f32 %v2567, %v2687
      %v2728 = vadd.f32 %v2568, %v2688
      %v2729 = vadd.f32 %v2569, %v2689
      %v2730 = vadd.f32 %v2570, %v2690
      %v2731 = vadd.f32 %v2571, %v2691
      %v2732 = vadd.f32 %v2572, %v2692
      %v2733 = vadd.f32 %v2573, %v2693
      %v2734 = vadd.f32 %v2574, %v2694
      %v2735 = vadd.f32 %v2575, %v2695
      %v2736 = vadd.f32 %v2576, %v2696
      %v2737 = vadd.f32 %v2577, %v2697
      %v2738 = vadd.f32 %v2578, %v2698
      %v2739 = vadd.f32 %v2579, %v2699
      %v2740 = vadd.f32 %v2580, %v2700
      %v2741 = vadd.f32 %v2581, %v2701
      %v2742 = vadd.f32 %v2582, %v2702
      %v2743 = vadd.f32 %v2583, %v2703
      %v2744 = vadd.f32 %v2584, %v2704
      %v2745 = vadd.f32 %v2585, %v2705
      %v2746 = vadd.f32 %v2586, %v2706
      %v2747 = vadd.f32 %v2587, %v2707
      %v2748 = vadd.f32 %v2588, %v2708
      %v2749 = vadd.f32 %v2589, %v2709
      %v2750 = vadd.f32 %v2590, %v2710
      %v2751 = vadd.f32 %v2591, %v2711
      %v2752 = vadd.f32 %v2592, %v2712
      %v2753 = vadd.f32 %v2593, %v2713
      %v2754 = vlaneseq
      %v2755 = vshrl.u32 %v2754, 7
      %v2756 = vsub.s32 6, %v2755
      %v2757 = vrot.slane %v603, %v2756
      %v2758 = vlaneseq
      %v2759 = vshrl.u32 %v2758, 7
      %v2760 = vsub.s32 6, %v2759
      %v2761 = vrot.slane %v613, %v2760
      %v2762 = vlaneseq
      %v2763 = vshrl.u32 %v2762, 7
      %v2764 = vsub.s32 6, %v2763
      %v2765 = vrot.slane %v623, %v2764
      %v2766 = vlaneseq
      %v2767 = vshrl.u32 %v2766, 7
      %v2768 = vsub.s32 6, %v2767
      %v2769 = vrot.slane %v633, %v2768
      %v2770 = vlaneseq
      %v2771 = vshrl.u32 %v2770, 7
      %v2772 = vsub.s32 6, %v2771
      %v2773 = vrot.slane %v643, %v2772
      %v2774 = vlaneseq
      %v2775 = vshrl.u32 %v2774, 7
      %v2776 = vsub.s32 6, %v2775
      %v2777 = vrot.slane %v653, %v2776
      %v2778 = vlaneseq
      %v2779 = vshrl.u32 %v2778, 7
      %v2780 = vsub.s32 6, %v2779
      %v2781 = vrot.slane %v663, %v2780
      %v2782 = vlaneseq
      %v2783 = vshrl.u32 %v2782, 7
      %v2784 = vsub.s32 6, %v2783
      %v2785 = vrot.slane %v673, %v2784
      %v2786 = vlaneseq
      %v2787 = vshrl.u32 %v2786, 7
      %v2788 = vsub.s32 6, %v2787
      %v2789 = vrot.slane %v683, %v2788
      %v2790 = vlaneseq
      %v2791 = vshrl.u32 %v2790, 7
      %v2792 = vsub.s32 6, %v2791
      %v2793 = vrot.slane %v693, %v2792
      %v2794 = vlaneseq
      %v2795 = vshrl.u32 %v2794, 7
      %v2796 = vsub.s32 6, %v2795
      %v2797 = vrot.slane %v703, %v2796
      %v2798 = vlaneseq
      %v2799 = vshrl.u32 %v2798, 7
      %v2800 = vsub.s32 6, %v2799
      %v2801 = vrot.slane %v713, %v2800
      %v2802 = vlaneseq
      %v2803 = vshrl.u32 %v2802, 7
      %v2804 = vsub.s32 6, %v2803
      %v2805 = vrot.slane %v723, %v2804
      %v2806 = vlaneseq
      %v2807 = vshrl.u32 %v2806, 7
      %v2808 = vsub.s32 6, %v2807
      %v2809 = vrot.slane %v733, %v2808
      %v2810 = vlaneseq
      %v2811 = vshrl.u32 %v2810, 7
      %v2812 = vsub.s32 6, %v2811
      %v2813 = vrot.slane %v743, %v2812
      %v2814 = vlaneseq
      %v2815 = vshrl.u32 %v2814, 7
      %v2816 = vsub.s32 6, %v2815
      %v2817 = vrot.slane %v753, %v2816
      %v2818 = vlaneseq
      %v2819 = vshrl.u32 %v2818, 7
      %v2820 = vsub.s32 6, %v2819
      %v2821 = vrot.slane %v763, %v2820
      %v2822 = vlaneseq
      %v2823 = vshrl.u32 %v2822, 7
      %v2824 = vsub.s32 6, %v2823
      %v2825 = vrot.slane %v773, %v2824
      %v2826 = vlaneseq
      %v2827 = vshrl.u32 %v2826, 7
      %v2828 = vsub.s32 6, %v2827
      %v2829 = vrot.slane %v783, %v2828
      %v2830 = vlaneseq
      %v2831 = vshrl.u32 %v2830, 7
      %v2832 = vsub.s32 6, %v2831
      %v2833 = vrot.slane %v793, %v2832
      %v2834 = vmul.f32 %v2757, %v1774
      %v2835 = vmul.f32 %v2757, %v1775
      %v2836 = vmul.f32 %v2761, %v1774
      %v2837 = vmul.f32 %v2761, %v1775
      %v2838 = vmul.f32 %v2765, %v1774
      %v2839 = vmul.f32 %v2765, %v1775
      %v2840 = vmul.f32 %v2769, %v1774
      %v2841 = vmul.f32 %v2769, %v1775
      %v2842 = vmul.f32 %v2773, %v1774
      %v2843 = vmul.f32 %v2773, %v1775
      %v2844 = vmul.f32 %v2777, %v1774
      %v2845 = vmul.f32 %v2777, %v1775
      %v2846 = vmul.f32 %v2781, %v1774
      %v2847 = vmul.f32 %v2781, %v1775
      %v2848 = vmul.f32 %v2785, %v1774
      %v2849 = vmul.f32 %v2785, %v1775
      %v2850 = vmul.f32 %v2789, %v1774
      %v2851 = vmul.f32 %v2789, %v1775
      %v2852 = vmul.f32 %v2793, %v1774
      %v2853 = vmul.f32 %v2793, %v1775
      %v2854 = vmul.f32 %v2797, %v1774
      %v2855 = vmul.f32 %v2797, %v1775
      %v2856 = vmul.f32 %v2801, %v1774
      %v2857 = vmul.f32 %v2801, %v1775
      %v2858 = vmul.f32 %v2805, %v1774
      %v2859 = vmul.f32 %v2805, %v1775
      %v2860 = vmul.f32 %v2809, %v1774
      %v2861 = vmul.f32 %v2809, %v1775
      %v2862 = vmul.f32 %v2813, %v1774
      %v2863 = vmul.f32 %v2813, %v1775
      %v2864 = vmul.f32 %v2817, %v1774
      %v2865 = vmul.f32 %v2817, %v1775
      %v2866 = vmul.f32 %v2821, %v1774
      %v2867 = vmul.f32 %v2821, %v1775
      %v2868 = vmul.f32 %v2825, %v1774
      %v2869 = vmul.f32 %v2825, %v1775
      %v2870 = vmul.f32 %v2829, %v1774
      %v2871 = vmul.f32 %v2829, %v1775
      %v2872 = vmul.f32 %v2833, %v1774
      %v2873 = vmul.f32 %v2833, %v1775
      %v2874 = vadd.f32 %v2714, %v2834
      %v2875 = vadd.f32 %v2715, %v2835
      %v2876 = vadd.f32 %v2716, %v2836
      %v2877 = vadd.f32 %v2717, %v2837
      %v2878 = vadd.f32 %v2718, %v2838
      %v2879 = vadd.f32 %v2719, %v2839
      %v2880 = vadd.f32 %v2720, %v2840
      %v2881 = vadd.f32 %v2721, %v2841
      %v2882 = vadd.f32 %v2722, %v2842
      %v2883 = vadd.f32 %v2723, %v2843
      %v2884 = vadd.f32 %v2724, %v2844
      %v2885 = vadd.f32 %v2725, %v2845
      %v2886 = vadd.f32 %v2726, %v2846
      %v2887 = vadd.f32 %v2727, %v2847
      %v2888 = vadd.f32 %v2728, %v2848
      %v2889 = vadd.f32 %v2729, %v2849
      %v2890 = vadd.f32 %v2730, %v2850
      %v2891 = vadd.f32 %v2731, %v2851
      %v2892 = vadd.f32 %v2732, %v2852
      %v2893 = vadd.f32 %v2733, %v2853
      %v2894 = vadd.f32 %v2734, %v2854
      %v2895 = vadd.f32 %v2735, %v2855
      %v2896 = vadd.f32 %v2736, %v2856
      %v2897 = vadd.f32 %v2737, %v2857
      %v2898 = vadd.f32 %v2738, %v2858
      %v2899 = vadd.f32 %v2739, %v2859
      %v2900 = vadd.f32 %v2740, %v2860
      %v2901 = vadd.f32 %v2741, %v2861
      %v2902 = vadd.f32 %v2742, %v2862
      %v2903 = vadd.f32 %v2743, %v2863
      %v2904 = vadd.f32 %v2744, %v2864
      %v2905 = vadd.f32 %v2745, %v2865
      %v2906 = vadd.f32 %v2746, %v2866
      %v2907 = vadd.f32 %v2747, %v2867
      %v2908 = vadd.f32 %v2748, %v2868
      %v2909 = vadd.f32 %v2749, %v2869
      %v2910 = vadd.f32 %v2750, %v2870
      %v2911 = vadd.f32 %v2751, %v2871
      %v2912 = vadd.f32 %v2752, %v2872
      %v2913 = vadd.f32 %v2753, %v2873
      %v2914 = vlaneseq
      %v2915 = vshrl.u32 %v2914, 7
      %v2916 = vsub.s32 7, %v2915
      %v2917 = vrot.slane %v603, %v2916
      %v2918 = vlaneseq
      %v2919 = vshrl.u32 %v2918, 7
      %v2920 = vsub.s32 7, %v2919
      %v2921 = vrot.slane %v613, %v2920
      %v2922 = vlaneseq
      %v2923 = vshrl.u32 %v2922, 7
      %v2924 = vsub.s32 7, %v2923
      %v2925 = vrot.slane %v623, %v2924
      %v2926 = vlaneseq
      %v2927 = vshrl.u32 %v2926, 7
      %v2928 = vsub.s32 7, %v2927
      %v2929 = vrot.slane %v633, %v2928
      %v2930 = vlaneseq
      %v2931 = vshrl.u32 %v2930, 7
      %v2932 = vsub.s32 7, %v2931
      %v2933 = vrot.slane %v643, %v2932
      %v2934 = vlaneseq
      %v2935 = vshrl.u32 %v2934, 7
      %v2936 = vsub.s32 7, %v2935
      %v2937 = vrot.slane %v653, %v2936
      %v2938 = vlaneseq
      %v2939 = vshrl.u32 %v2938, 7
      %v2940 = vsub.s32 7, %v2939
      %v2941 = vrot.slane %v663, %v2940
      %v2942 = vlaneseq
      %v2943 = vshrl.u32 %v2942, 7
      %v2944 = vsub.s32 7, %v2943
      %v2945 = vrot.slane %v673, %v2944
      %v2946 = vlaneseq
      %v2947 = vshrl.u32 %v2946, 7
      %v2948 = vsub.s32 7, %v2947
      %v2949 = vrot.slane %v683, %v2948
      %v2950 = vlaneseq
      %v2951 = vshrl.u32 %v2950, 7
      %v2952 = vsub.s32 7, %v2951
      %v2953 = vrot.slane %v693, %v2952
      %v2954 = vlaneseq
      %v2955 = vshrl.u32 %v2954, 7
      %v2956 = vsub.s32 7, %v2955
      %v2957 = vrot.slane %v703, %v2956
      %v2958 = vlaneseq
      %v2959 = vshrl.u32 %v2958, 7
      %v2960 = vsub.s32 7, %v2959
      %v2961 = vrot.slane %v713, %v2960
      %v2962 = vlaneseq
      %v2963 = vshrl.u32 %v2962, 7
      %v2964 = vsub.s32 7, %v2963
      %v2965 = vrot.slane %v723, %v2964
      %v2966 = vlaneseq
      %v2967 = vshrl.u32 %v2966, 7
      %v2968 = vsub.s32 7, %v2967
      %v2969 = vrot.slane %v733, %v2968
      %v2970 = vlaneseq
      %v2971 = vshrl.u32 %v2970, 7
      %v2972 = vsub.s32 7, %v2971
      %v2973 = vrot.slane %v743, %v2972
      %v2974 = vlaneseq
      %v2975 = vshrl.u32 %v2974, 7
      %v2976 = vsub.s32 7, %v2975
      %v2977 = vrot.slane %v753, %v2976
      %v2978 = vlaneseq
      %v2979 = vshrl.u32 %v2978, 7
      %v2980 = vsub.s32 7, %v2979
      %v2981 = vrot.slane %v763, %v2980
      %v2982 = vlaneseq
      %v2983 = vshrl.u32 %v2982, 7
      %v2984 = vsub.s32 7, %v2983
      %v2985 = vrot.slane %v773, %v2984
      %v2986 = vlaneseq
      %v2987 = vshrl.u32 %v2986, 7
      %v2988 = vsub.s32 7, %v2987
      %v2989 = vrot.slane %v783, %v2988
      %v2990 = vlaneseq
      %v2991 = vshrl.u32 %v2990, 7
      %v2992 = vsub.s32 7, %v2991
      %v2993 = vrot.slane %v793, %v2992
      %v2994 = vmul.f32 %v2917, %v1776
      %v2995 = vmul.f32 %v2917, %v1777
      %v2996 = vmul.f32 %v2921, %v1776
      %v2997 = vmul.f32 %v2921, %v1777
      %v2998 = vmul.f32 %v2925, %v1776
      %v2999 = vmul.f32 %v2925, %v1777
      %v3000 = vmul.f32 %v2929, %v1776
      %v3001 = vmul.f32 %v2929, %v1777
      %v3002 = vmul.f32 %v2933, %v1776
      %v3003 = vmul.f32 %v2933, %v1777
      %v3004 = vmul.f32 %v2937, %v1776
      %v3005 = vmul.f32 %v2937, %v1777
      %v3006 = vmul.f32 %v2941, %v1776
      %v3007 = vmul.f32 %v2941, %v1777
      %v3008 = vmul.f32 %v2945, %v1776
      %v3009 = vmul.f32 %v2945, %v1777
      %v3010 = vmul.f32 %v2949, %v1776
      %v3011 = vmul.f32 %v2949, %v1777
      %v3012 = vmul.f32 %v2953, %v1776
      %v3013 = vmul.f32 %v2953, %v1777
      %v3014 = vmul.f32 %v2957, %v1776
      %v3015 = vmul.f32 %v2957, %v1777
      %v3016 = vmul.f32 %v2961, %v1776
      %v3017 = vmul.f32 %v2961, %v1777
      %v3018 = vmul.f32 %v2965, %v1776
      %v3019 = vmul.f32 %v2965, %v1777
      %v3020 = vmul.f32 %v2969, %v1776
      %v3021 = vmul.f32 %v2969, %v1777
      %v3022 = vmul.f32 %v2973, %v1776
      %v3023 = vmul.f32 %v2973, %v1777
      %v3024 = vmul.f32 %v2977, %v1776
      %v3025 = vmul.f32 %v2977, %v1777
      %v3026 = vmul.f32 %v2981, %v1776
      %v3027 = vmul.f32 %v2981, %v1777
      %v3028 = vmul.f32 %v2985, %v1776
      %v3029 = vmul.f32 %v2985, %v1777
      %v3030 = vmul.f32 %v2989, %v1776
      %v3031 = vmul.f32 %v2989, %v1777
      %v3032 = vmul.f32 %v2993, %v1776
      %v3033 = vmul.f32 %v2993, %v1777
      %v3034 = vadd.f32 %v2874, %v2994
      %v3035 = vadd.f32 %v2875, %v2995
      %v3036 = vadd.f32 %v2876, %v2996
      %v3037 = vadd.f32 %v2877, %v2997
      %v3038 = vadd.f32 %v2878, %v2998
      %v3039 = vadd.f32 %v2879, %v2999
      %v3040 = vadd.f32 %v2880, %v3000
      %v3041 = vadd.f32 %v2881, %v3001
      %v3042 = vadd.f32 %v2882, %v3002
      %v3043 = vadd.f32 %v2883, %v3003
      %v3044 = vadd.f32 %v2884, %v3004
      %v3045 = vadd.f32 %v2885, %v3005
      %v3046 = vadd.f32 %v2886, %v3006
      %v3047 = vadd.f32 %v2887, %v3007
      %v3048 = vadd.f32 %v2888, %v3008
      %v3049 = vadd.f32 %v2889, %v3009
      %v3050 = vadd.f32 %v2890, %v3010
      %v3051 = vadd.f32 %v2891, %v3011
      %v3052 = vadd.f32 %v2892, %v3012
      %v3053 = vadd.f32 %v2893, %v3013
      %v3054 = vadd.f32 %v2894, %v3014
      %v3055 = vadd.f32 %v2895, %v3015
      %v3056 = vadd.f32 %v2896, %v3016
      %v3057 = vadd.f32 %v2897, %v3017
      %v3058 = vadd.f32 %v2898, %v3018
      %v3059 = vadd.f32 %v2899, %v3019
      %v3060 = vadd.f32 %v2900, %v3020
      %v3061 = vadd.f32 %v2901, %v3021
      %v3062 = vadd.f32 %v2902, %v3022
      %v3063 = vadd.f32 %v2903, %v3023
      %v3064 = vadd.f32 %v2904, %v3024
      %v3065 = vadd.f32 %v2905, %v3025
      %v3066 = vadd.f32 %v2906, %v3026
      %v3067 = vadd.f32 %v2907, %v3027
      %v3068 = vadd.f32 %v2908, %v3028
      %v3069 = vadd.f32 %v2909, %v3029
      %v3070 = vadd.f32 %v2910, %v3030
      %v3071 = vadd.f32 %v2911, %v3031
      %v3072 = vadd.f32 %v2912, %v3032
      %v3073 = vadd.f32 %v2913, %v3033
      %v3074 = vlaneseq
      %v3075 = vshrl.u32 %v3074, 7
      %v3076 = vsub.s32 0, %v3075
      %v3077 = vrot.slane %v608, %v3076
      %v3078 = vlaneseq
      %v3079 = vshrl.u32 %v3078, 7
      %v3080 = vsub.s32 0, %v3079
      %v3081 = vrot.slane %v618, %v3080
      %v3082 = vlaneseq
      %v3083 = vshrl.u32 %v3082, 7
      %v3084 = vsub.s32 0, %v3083
      %v3085 = vrot.slane %v628, %v3084
      %v3086 = vlaneseq
      %v3087 = vshrl.u32 %v3086, 7
      %v3088 = vsub.s32 0, %v3087
      %v3089 = vrot.slane %v638, %v3088
      %v3090 = vlaneseq
      %v3091 = vshrl.u32 %v3090, 7
      %v3092 = vsub.s32 0, %v3091
      %v3093 = vrot.slane %v648, %v3092
      %v3094 = vlaneseq
      %v3095 = vshrl.u32 %v3094, 7
      %v3096 = vsub.s32 0, %v3095
      %v3097 = vrot.slane %v658, %v3096
      %v3098 = vlaneseq
      %v3099 = vshrl.u32 %v3098, 7
      %v3100 = vsub.s32 0, %v3099
      %v3101 = vrot.slane %v668, %v3100
      %v3102 = vlaneseq
      %v3103 = vshrl.u32 %v3102, 7
      %v3104 = vsub.s32 0, %v3103
      %v3105 = vrot.slane %v678, %v3104
      %v3106 = vlaneseq
      %v3107 = vshrl.u32 %v3106, 7
      %v3108 = vsub.s32 0, %v3107
      %v3109 = vrot.slane %v688, %v3108
      %v3110 = vlaneseq
      %v3111 = vshrl.u32 %v3110, 7
      %v3112 = vsub.s32 0, %v3111
      %v3113 = vrot.slane %v698, %v3112
      %v3114 = vlaneseq
      %v3115 = vshrl.u32 %v3114, 7
      %v3116 = vsub.s32 0, %v3115
      %v3117 = vrot.slane %v708, %v3116
      %v3118 = vlaneseq
      %v3119 = vshrl.u32 %v3118, 7
      %v3120 = vsub.s32 0, %v3119
      %v3121 = vrot.slane %v718, %v3120
      %v3122 = vlaneseq
      %v3123 = vshrl.u32 %v3122, 7
      %v3124 = vsub.s32 0, %v3123
      %v3125 = vrot.slane %v728, %v3124
      %v3126 = vlaneseq
      %v3127 = vshrl.u32 %v3126, 7
      %v3128 = vsub.s32 0, %v3127
      %v3129 = vrot.slane %v738, %v3128
      %v3130 = vlaneseq
      %v3131 = vshrl.u32 %v3130, 7
      %v3132 = vsub.s32 0, %v3131
      %v3133 = vrot.slane %v748, %v3132
      %v3134 = vlaneseq
      %v3135 = vshrl.u32 %v3134, 7
      %v3136 = vsub.s32 0, %v3135
      %v3137 = vrot.slane %v758, %v3136
      %v3138 = vlaneseq
      %v3139 = vshrl.u32 %v3138, 7
      %v3140 = vsub.s32 0, %v3139
      %v3141 = vrot.slane %v768, %v3140
      %v3142 = vlaneseq
      %v3143 = vshrl.u32 %v3142, 7
      %v3144 = vsub.s32 0, %v3143
      %v3145 = vrot.slane %v778, %v3144
      %v3146 = vlaneseq
      %v3147 = vshrl.u32 %v3146, 7
      %v3148 = vsub.s32 0, %v3147
      %v3149 = vrot.slane %v788, %v3148
      %v3150 = vlaneseq
      %v3151 = vshrl.u32 %v3150, 7
      %v3152 = vsub.s32 0, %v3151
      %v3153 = vrot.slane %v798, %v3152
      %v3154 = vmul.f32 %v3077, %v1778
      %v3155 = vmul.f32 %v3077, %v1779
      %v3156 = vmul.f32 %v3081, %v1778
      %v3157 = vmul.f32 %v3081, %v1779
      %v3158 = vmul.f32 %v3085, %v1778
      %v3159 = vmul.f32 %v3085, %v1779
      %v3160 = vmul.f32 %v3089, %v1778
      %v3161 = vmul.f32 %v3089, %v1779
      %v3162 = vmul.f32 %v3093, %v1778
      %v3163 = vmul.f32 %v3093, %v1779
      %v3164 = vmul.f32 %v3097, %v1778
      %v3165 = vmul.f32 %v3097, %v1779
      %v3166 = vmul.f32 %v3101, %v1778
      %v3167 = vmul.f32 %v3101, %v1779
      %v3168 = vmul.f32 %v3105, %v1778
      %v3169 = vmul.f32 %v3105, %v1779
      %v3170 = vmul.f32 %v3109, %v1778
      %v3171 = vmul.f32 %v3109, %v1779
      %v3172 = vmul.f32 %v3113, %v1778
      %v3173 = vmul.f32 %v3113, %v1779
      %v3174 = vmul.f32 %v3117, %v1778
      %v3175 = vmul.f32 %v3117, %v1779
      %v3176 = vmul.f32 %v3121, %v1778
      %v3177 = vmul.f32 %v3121, %v1779
      %v3178 = vmul.f32 %v3125, %v1778
      %v3179 = vmul.f32 %v3125, %v1779
      %v3180 = vmul.f32 %v3129, %v1778
      %v3181 = vmul.f32 %v3129, %v1779
      %v3182 = vmul.f32 %v3133, %v1778
      %v3183 = vmul.f32 %v3133, %v1779
      %v3184 = vmul.f32 %v3137, %v1778
      %v3185 = vmul.f32 %v3137, %v1779
      %v3186 = vmul.f32 %v3141, %v1778
      %v3187 = vmul.f32 %v3141, %v1779
      %v3188 = vmul.f32 %v3145, %v1778
      %v3189 = vmul.f32 %v3145, %v1779
      %v3190 = vmul.f32 %v3149, %v1778
      %v3191 = vmul.f32 %v3149, %v1779
      %v3192 = vmul.f32 %v3153, %v1778
      %v3193 = vmul.f32 %v3153, %v1779
      %v3194 = vadd.f32 %v3034, %v3154
      %v3195 = vadd.f32 %v3035, %v3155
      %v3196 = vadd.f32 %v3036, %v3156
      %v3197 = vadd.f32 %v3037, %v3157
      %v3198 = vadd.f32 %v3038, %v3158
      %v3199 = vadd.f32 %v3039, %v3159
      %v3200 = vadd.f32 %v3040, %v3160
      %v3201 = vadd.f32 %v3041, %v3161
      %v3202 = vadd.f32 %v3042, %v3162
      %v3203 = vadd.f32 %v3043, %v3163
      %v3204 = vadd.f32 %v3044, %v3164
      %v3205 = vadd.f32 %v3045, %v3165
      %v3206 = vadd.f32 %v3046, %v3166
      %v3207 = vadd.f32 %v3047, %v3167
      %v3208 = vadd.f32 %v3048, %v3168
      %v3209 = vadd.f32 %v3049, %v3169
      %v3210 = vadd.f32 %v3050, %v3170
      %v3211 = vadd.f32 %v3051, %v3171
      %v3212 = vadd.f32 %v3052, %v3172
      %v3213 = vadd.f32 %v3053, %v3173
      %v3214 = vadd.f32 %v3054, %v3174
      %v3215 = vadd.f32 %v3055, %v3175
      %v3216 = vadd.f32 %v3056, %v3176
      %v3217 = vadd.f32 %v3057, %v3177
      %v3218 = vadd.f32 %v3058, %v3178
      %v3219 = vadd.f32 %v3059, %v3179
      %v3220 = vadd.f32 %v3060, %v3180
      %v3221 = vadd.f32 %v3061, %v3181
      %v3222 = vadd.f32 %v3062, %v3182
      %v3223 = vadd.f32 %v3063, %v3183
      %v3224 = vadd.f32 %v3064, %v3184
      %v3225 = vadd.f32 %v3065, %v3185
      %v3226 = vadd.f32 %v3066, %v3186
      %v3227 = vadd.f32 %v3067, %v3187
      %v3228 = vadd.f32 %v3068, %v3188
      %v3229 = vadd.f32 %v3069, %v3189
      %v3230 = vadd.f32 %v3070, %v3190
      %v3231 = vadd.f32 %v3071, %v3191
      %v3232 = vadd.f32 %v3072, %v3192
      %v3233 = vadd.f32 %v3073, %v3193
      %v3234 = vlaneseq
      %v3235 = vshrl.u32 %v3234, 7
      %v3236 = vsub.s32 1, %v3235
      %v3237 = vrot.slane %v608, %v3236
      %v3238 = vlaneseq
      %v3239 = vshrl.u32 %v3238, 7
      %v3240 = vsub.s32 1, %v3239
      %v3241 = vrot.slane %v618, %v3240
      %v3242 = vlaneseq
      %v3243 = vshrl.u32 %v3242, 7
      %v3244 = vsub.s32 1, %v3243
      %v3245 = vrot.slane %v628, %v3244
      %v3246 = vlaneseq
      %v3247 = vshrl.u32 %v3246, 7
      %v3248 = vsub.s32 1, %v3247
      %v3249 = vrot.slane %v638, %v3248
      %v3250 = vlaneseq
      %v3251 = vshrl.u32 %v3250, 7
      %v3252 = vsub.s32 1, %v3251
      %v3253 = vrot.slane %v648, %v3252
      %v3254 = vlaneseq
      %v3255 = vshrl.u32 %v3254, 7
      %v3256 = vsub.s32 1, %v3255
      %v3257 = vrot.slane %v658, %v3256
      %v3258 = vlaneseq
      %v3259 = vshrl.u32 %v3258, 7
      %v3260 = vsub.s32 1, %v3259
      %v3261 = vrot.slane %v668, %v3260
      %v3262 = vlaneseq
      %v3263 = vshrl.u32 %v3262, 7
      %v3264 = vsub.s32 1, %v3263
      %v3265 = vrot.slane %v678, %v3264
      %v3266 = vlaneseq
      %v3267 = vshrl.u32 %v3266, 7
      %v3268 = vsub.s32 1, %v3267
      %v3269 = vrot.slane %v688, %v3268
      %v3270 = vlaneseq
      %v3271 = vshrl.u32 %v3270, 7
      %v3272 = vsub.s32 1, %v3271
      %v3273 = vrot.slane %v698, %v3272
      %v3274 = vlaneseq
      %v3275 = vshrl.u32 %v3274, 7
      %v3276 = vsub.s32 1, %v3275
      %v3277 = vrot.slane %v708, %v3276
      %v3278 = vlaneseq
      %v3279 = vshrl.u32 %v3278, 7
      %v3280 = vsub.s32 1, %v3279
      %v3281 = vrot.slane %v718, %v3280
      %v3282 = vlaneseq
      %v3283 = vshrl.u32 %v3282, 7
      %v3284 = vsub.s32 1, %v3283
      %v3285 = vrot.slane %v728, %v3284
      %v3286 = vlaneseq
      %v3287 = vshrl.u32 %v3286, 7
      %v3288 = vsub.s32 1, %v3287
      %v3289 = vrot.slane %v738, %v3288
      %v3290 = vlaneseq
      %v3291 = vshrl.u32 %v3290, 7
      %v3292 = vsub.s32 1, %v3291
      %v3293 = vrot.slane %v748, %v3292
      %v3294 = vlaneseq
      %v3295 = vshrl.u32 %v3294, 7
      %v3296 = vsub.s32 1, %v3295
      %v3297 = vrot.slane %v758, %v3296
      %v3298 = vlaneseq
      %v3299 = vshrl.u32 %v3298, 7
      %v3300 = vsub.s32 1, %v3299
      %v3301 = vrot.slane %v768, %v3300
      %v3302 = vlaneseq
      %v3303 = vshrl.u32 %v3302, 7
      %v3304 = vsub.s32 1, %v3303
      %v3305 = vrot.slane %v778, %v3304
      %v3306 = vlaneseq
      %v3307 = vshrl.u32 %v3306, 7
      %v3308 = vsub.s32 1, %v3307
      %v3309 = vrot.slane %v788, %v3308
      %v3310 = vlaneseq
      %v3311 = vshrl.u32 %v3310, 7
      %v3312 = vsub.s32 1, %v3311
      %v3313 = vrot.slane %v798, %v3312
      %v3314 = vmul.f32 %v3237, %v1780
      %v3315 = vmul.f32 %v3237, %v1781
      %v3316 = vmul.f32 %v3241, %v1780
      %v3317 = vmul.f32 %v3241, %v1781
      %v3318 = vmul.f32 %v3245, %v1780
      %v3319 = vmul.f32 %v3245, %v1781
      %v3320 = vmul.f32 %v3249, %v1780
      %v3321 = vmul.f32 %v3249, %v1781
      %v3322 = vmul.f32 %v3253, %v1780
      %v3323 = vmul.f32 %v3253, %v1781
      %v3324 = vmul.f32 %v3257, %v1780
      %v3325 = vmul.f32 %v3257, %v1781
      %v3326 = vmul.f32 %v3261, %v1780
      %v3327 = vmul.f32 %v3261, %v1781
      %v3328 = vmul.f32 %v3265, %v1780
      %v3329 = vmul.f32 %v3265, %v1781
      %v3330 = vmul.f32 %v3269, %v1780
      %v3331 = vmul.f32 %v3269, %v1781
      %v3332 = vmul.f32 %v3273, %v1780
      %v3333 = vmul.f32 %v3273, %v1781
      %v3334 = vmul.f32 %v3277, %v1780
      %v3335 = vmul.f32 %v3277, %v1781
      %v3336 = vmul.f32 %v3281, %v1780
      %v3337 = vmul.f32 %v3281, %v1781
      %v3338 = vmul.f32 %v3285, %v1780
      %v3339 = vmul.f32 %v3285, %v1781
      %v3340 = vmul.f32 %v3289, %v1780
      %v3341 = vmul.f32 %v3289, %v1781
      %v3342 = vmul.f32 %v3293, %v1780
      %v3343 = vmul.f32 %v3293, %v1781
      %v3344 = vmul.f32 %v3297, %v1780
      %v3345 = vmul.f32 %v3297, %v1781
      %v3346 = vmul.f32 %v3301, %v1780
      %v3347 = vmul.f32 %v3301, %v1781
      %v3348 = vmul.f32 %v3305, %v1780
      %v3349 = vmul.f32 %v3305, %v1781
      %v3350 = vmul.f32 %v3309, %v1780
      %v3351 = vmul.f32 %v3309, %v1781
      %v3352 = vmul.f32 %v3313, %v1780
      %v3353 = vmul.f32 %v3313, %v1781
      %v3354 = vadd.f32 %v3194, %v3314
      %v3355 = vadd.f32 %v3195, %v3315
      %v3356 = vadd.f32 %v3196, %v3316
      %v3357 = vadd.f32 %v3197, %v3317
      %v3358 = vadd.f32 %v3198, %v3318
      %v3359 = vadd.f32 %v3199, %v3319
      %v3360 = vadd.f32 %v3200, %v3320
      %v3361 = vadd.f32 %v3201, %v3321
      %v3362 = vadd.f32 %v3202, %v3322
      %v3363 = vadd.f32 %v3203, %v3323
      %v3364 = vadd.f32 %v3204, %v3324
      %v3365 = vadd.f32 %v3205, %v3325
      %v3366 = vadd.f32 %v3206, %v3326
      %v3367 = vadd.f32 %v3207, %v3327
      %v3368 = vadd.f32 %v3208, %v3328
      %v3369 = vadd.f32 %v3209, %v3329
      %v3370 = vadd.f32 %v3210, %v3330
      %v3371 = vadd.f32 %v3211, %v3331
      %v3372 = vadd.f32 %v3212, %v3332
      %v3373 = vadd.f32 %v3213, %v3333
      %v3374 = vadd.f32 %v3214, %v3334
      %v3375 = vadd.f32 %v3215, %v3335
      %v3376 = vadd.f32 %v3216, %v3336
      %v3377 = vadd.f32 %v3217, %v3337
      %v3378 = vadd.f32 %v3218, %v3338
      %v3379 = vadd.f32 %v3219, %v3339
      %v3380 = vadd.f32 %v3220, %v3340
      %v3381 = vadd.f32 %v3221, %v3341
      %v3382 = vadd.f32 %v3222, %v3342
      %v3383 = vadd.f32 %v3223, %v3343
      %v3384 = vadd.f32 %v3224, %v3344
      %v3385 = vadd.f32 %v3225, %v3345
      %v3386 = vadd.f32 %v3226, %v3346
      %v3387 = vadd.f32 %v3227, %v3347
      %v3388 = vadd.f32 %v3228, %v3348
      %v3389 = vadd.f32 %v3229, %v3349
      %v3390 = vadd.f32 %v3230, %v3350
      %v3391 = vadd.f32 %v3231, %v3351
      %v3392 = vadd.f32 %v3232, %v3352
      %v3393 = vadd.f32 %v3233, %v3353
      %v3394 = vlaneseq
      %v3395 = vshrl.u32 %v3394, 7
      %v3396 = vsub.s32 2, %v3395
      %v3397 = vrot.slane %v608, %v3396
      %v3398 = vlaneseq
      %v3399 = vshrl.u32 %v3398, 7
      %v3400 = vsub.s32 2, %v3399
      %v3401 = vrot.slane %v618, %v3400
      %v3402 = vlaneseq
      %v3403 = vshrl.u32 %v3402, 7
      %v3404 = vsub.s32 2, %v3403
      %v3405 = vrot.slane %v628, %v3404
      %v3406 = vlaneseq
      %v3407 = vshrl.u32 %v3406, 7
      %v3408 = vsub.s32 2, %v3407
      %v3409 = vrot.slane %v638, %v3408
      %v3410 = vlaneseq
      %v3411 = vshrl.u32 %v3410, 7
      %v3412 = vsub.s32 2, %v3411
      %v3413 = vrot.slane %v648, %v3412
      %v3414 = vlaneseq
      %v3415 = vshrl.u32 %v3414, 7
      %v3416 = vsub.s32 2, %v3415
      %v3417 = vrot.slane %v658, %v3416
      %v3418 = vlaneseq
      %v3419 = vshrl.u32 %v3418, 7
      %v3420 = vsub.s32 2, %v3419
      %v3421 = vrot.slane %v668, %v3420
      %v3422 = vlaneseq
      %v3423 = vshrl.u32 %v3422, 7
      %v3424 = vsub.s32 2, %v3423
      %v3425 = vrot.slane %v678, %v3424
      %v3426 = vlaneseq
      %v3427 = vshrl.u32 %v3426, 7
      %v3428 = vsub.s32 2, %v3427
      %v3429 = vrot.slane %v688, %v3428
      %v3430 = vlaneseq
      %v3431 = vshrl.u32 %v3430, 7
      %v3432 = vsub.s32 2, %v3431
      %v3433 = vrot.slane %v698, %v3432
      %v3434 = vlaneseq
      %v3435 = vshrl.u32 %v3434, 7
      %v3436 = vsub.s32 2, %v3435
      %v3437 = vrot.slane %v708, %v3436
      %v3438 = vlaneseq
      %v3439 = vshrl.u32 %v3438, 7
      %v3440 = vsub.s32 2, %v3439
      %v3441 = vrot.slane %v718, %v3440
      %v3442 = vlaneseq
      %v3443 = vshrl.u32 %v3442, 7
      %v3444 = vsub.s32 2, %v3443
      %v3445 = vrot.slane %v728, %v3444
      %v3446 = vlaneseq
      %v3447 = vshrl.u32 %v3446, 7
      %v3448 = vsub.s32 2, %v3447
      %v3449 = vrot.slane %v738, %v3448
      %v3450 = vlaneseq
      %v3451 = vshrl.u32 %v3450, 7
      %v3452 = vsub.s32 2, %v3451
      %v3453 = vrot.slane %v748, %v3452
      %v3454 = vlaneseq
      %v3455 = vshrl.u32 %v3454, 7
      %v3456 = vsub.s32 2, %v3455
      %v3457 = vrot.slane %v758, %v3456
      %v3458 = vlaneseq
      %v3459 = vshrl.u32 %v3458, 7
      %v3460 = vsub.s32 2, %v3459
      %v3461 = vrot.slane %v768, %v3460
      %v3462 = vlaneseq
      %v3463 = vshrl.u32 %v3462, 7
      %v3464 = vsub.s32 2, %v3463
      %v3465 = vrot.slane %v778, %v3464
      %v3466 = vlaneseq
      %v3467 = vshrl.u32 %v3466, 7
      %v3468 = vsub.s32 2, %v3467
      %v3469 = vrot.slane %v788, %v3468
      %v3470 = vlaneseq
      %v3471 = vshrl.u32 %v3470, 7
      %v3472 = vsub.s32 2, %v3471
      %v3473 = vrot.slane %v798, %v3472
      %v3474 = vmul.f32 %v3397, %v1782
      %v3475 = vmul.f32 %v3397, %v1783
      %v3476 = vmul.f32 %v3401, %v1782
      %v3477 = vmul.f32 %v3401, %v1783
      %v3478 = vmul.f32 %v3405, %v1782
      %v3479 = vmul.f32 %v3405, %v1783
      %v3480 = vmul.f32 %v3409, %v1782
      %v3481 = vmul.f32 %v3409, %v1783
      %v3482 = vmul.f32 %v3413, %v1782
      %v3483 = vmul.f32 %v3413, %v1783
      %v3484 = vmul.f32 %v3417, %v1782
      %v3485 = vmul.f32 %v3417, %v1783
      %v3486 = vmul.f32 %v3421, %v1782
      %v3487 = vmul.f32 %v3421, %v1783
      %v3488 = vmul.f32 %v3425, %v1782
      %v3489 = vmul.f32 %v3425, %v1783
      %v3490 = vmul.f32 %v3429, %v1782
      %v3491 = vmul.f32 %v3429, %v1783
      %v3492 = vmul.f32 %v3433, %v1782
      %v3493 = vmul.f32 %v3433, %v1783
      %v3494 = vmul.f32 %v3437, %v1782
      %v3495 = vmul.f32 %v3437, %v1783
      %v3496 = vmul.f32 %v3441, %v1782
      %v3497 = vmul.f32 %v3441, %v1783
      %v3498 = vmul.f32 %v3445, %v1782
      %v3499 = vmul.f32 %v3445, %v1783
      %v3500 = vmul.f32 %v3449, %v1782
      %v3501 = vmul.f32 %v3449, %v1783
      %v3502 = vmul.f32 %v3453, %v1782
      %v3503 = vmul.f32 %v3453, %v1783
      %v3504 = vmul.f32 %v3457, %v1782
      %v3505 = vmul.f32 %v3457, %v1783
      %v3506 = vmul.f32 %v3461, %v1782
      %v3507 = vmul.f32 %v3461, %v1783
      %v3508 = vmul.f32 %v3465, %v1782
      %v3509 = vmul.f32 %v3465, %v1783
      %v3510 = vmul.f32 %v3469, %v1782
      %v3511 = vmul.f32 %v3469, %v1783
      %v3512 = vmul.f32 %v3473, %v1782
      %v3513 = vmul.f32 %v3473, %v1783
      %v3514 = vadd.f32 %v3354, %v3474
      %v3515 = vadd.f32 %v3355, %v3475
      %v3516 = vadd.f32 %v3356, %v3476
      %v3517 = vadd.f32 %v3357, %v3477
      %v3518 = vadd.f32 %v3358, %v3478
      %v3519 = vadd.f32 %v3359, %v3479
      %v3520 = vadd.f32 %v3360, %v3480
      %v3521 = vadd.f32 %v3361, %v3481
      %v3522 = vadd.f32 %v3362, %v3482
      %v3523 = vadd.f32 %v3363, %v3483
      %v3524 = vadd.f32 %v3364, %v3484
      %v3525 = vadd.f32 %v3365, %v3485
      %v3526 = vadd.f32 %v3366, %v3486
      %v3527 = vadd.f32 %v3367, %v3487
      %v3528 = vadd.f32 %v3368, %v3488
      %v3529 = vadd.f32 %v3369, %v3489
      %v3530 = vadd.f32 %v3370, %v3490
      %v3531 = vadd.f32 %v3371, %v3491
      %v3532 = vadd.f32 %v3372, %v3492
      %v3533 = vadd.f32 %v3373, %v3493
      %v3534 = vadd.f32 %v3374, %v3494
      %v3535 = vadd.f32 %v3375, %v3495
      %v3536 = vadd.f32 %v3376, %v3496
      %v3537 = vadd.f32 %v3377, %v3497
      %v3538 = vadd.f32 %v3378, %v3498
      %v3539 = vadd.f32 %v3379, %v3499
      %v3540 = vadd.f32 %v3380, %v3500
      %v3541 = vadd.f32 %v3381, %v3501
      %v3542 = vadd.f32 %v3382, %v3502
      %v3543 = vadd.f32 %v3383, %v3503
      %v3544 = vadd.f32 %v3384, %v3504
      %v3545 = vadd.f32 %v3385, %v3505
      %v3546 = vadd.f32 %v3386, %v3506
      %v3547 = vadd.f32 %v3387, %v3507
      %v3548 = vadd.f32 %v3388, %v3508
      %v3549 = vadd.f32 %v3389, %v3509
      %v3550 = vadd.f32 %v3390, %v3510
      %v3551 = vadd.f32 %v3391, %v3511
      %v3552 = vadd.f32 %v3392, %v3512
      %v3553 = vadd.f32 %v3393, %v3513
      %v3554 = vlaneseq
      %v3555 = vshrl.u32 %v3554, 7
      %v3556 = vsub.s32 3, %v3555
      %v3557 = vrot.slane %v608, %v3556
      %v3558 = vlaneseq
      %v3559 = vshrl.u32 %v3558, 7
      %v3560 = vsub.s32 3, %v3559
      %v3561 = vrot.slane %v618, %v3560
      %v3562 = vlaneseq
      %v3563 = vshrl.u32 %v3562, 7
      %v3564 = vsub.s32 3, %v3563
      %v3565 = vrot.slane %v628, %v3564
      %v3566 = vlaneseq
      %v3567 = vshrl.u32 %v3566, 7
      %v3568 = vsub.s32 3, %v3567
      %v3569 = vrot.slane %v638, %v3568
      %v3570 = vlaneseq
      %v3571 = vshrl.u32 %v3570, 7
      %v3572 = vsub.s32 3, %v3571
      %v3573 = vrot.slane %v648, %v3572
      %v3574 = vlaneseq
      %v3575 = vshrl.u32 %v3574, 7
      %v3576 = vsub.s32 3, %v3575
      %v3577 = vrot.slane %v658, %v3576
      %v3578 = vlaneseq
      %v3579 = vshrl.u32 %v3578, 7
      %v3580 = vsub.s32 3, %v3579
      %v3581 = vrot.slane %v668, %v3580
      %v3582 = vlaneseq
      %v3583 = vshrl.u32 %v3582, 7
      %v3584 = vsub.s32 3, %v3583
      %v3585 = vrot.slane %v678, %v3584
      %v3586 = vlaneseq
      %v3587 = vshrl.u32 %v3586, 7
      %v3588 = vsub.s32 3, %v3587
      %v3589 = vrot.slane %v688, %v3588
      %v3590 = vlaneseq
      %v3591 = vshrl.u32 %v3590, 7
      %v3592 = vsub.s32 3, %v3591
      %v3593 = vrot.slane %v698, %v3592
      %v3594 = vlaneseq
      %v3595 = vshrl.u32 %v3594, 7
      %v3596 = vsub.s32 3, %v3595
      %v3597 = vrot.slane %v708, %v3596
      %v3598 = vlaneseq
      %v3599 = vshrl.u32 %v3598, 7
      %v3600 = vsub.s32 3, %v3599
      %v3601 = vrot.slane %v718, %v3600
      %v3602 = vlaneseq
      %v3603 = vshrl.u32 %v3602, 7
      %v3604 = vsub.s32 3, %v3603
      %v3605 = vrot.slane %v728, %v3604
      %v3606 = vlaneseq
      %v3607 = vshrl.u32 %v3606, 7
      %v3608 = vsub.s32 3, %v3607
      %v3609 = vrot.slane %v738, %v3608
      %v3610 = vlaneseq
      %v3611 = vshrl.u32 %v3610, 7
      %v3612 = vsub.s32 3, %v3611
      %v3613 = vrot.slane %v748, %v3612
      %v3614 = vlaneseq
      %v3615 = vshrl.u32 %v3614, 7
      %v3616 = vsub.s32 3, %v3615
      %v3617 = vrot.slane %v758, %v3616
      %v3618 = vlaneseq
      %v3619 = vshrl.u32 %v3618, 7
      %v3620 = vsub.s32 3, %v3619
      %v3621 = vrot.slane %v768, %v3620
      %v3622 = vlaneseq
      %v3623 = vshrl.u32 %v3622, 7
      %v3624 = vsub.s32 3, %v3623
      %v3625 = vrot.slane %v778, %v3624
      %v3626 = vlaneseq
      %v3627 = vshrl.u32 %v3626, 7
      %v3628 = vsub.s32 3, %v3627
      %v3629 = vrot.slane %v788, %v3628
      %v3630 = vlaneseq
      %v3631 = vshrl.u32 %v3630, 7
      %v3632 = vsub.s32 3, %v3631
      %v3633 = vrot.slane %v798, %v3632
      %v3634 = vmul.f32 %v3557, %v1784
      %v3635 = vmul.f32 %v3557, %v1785
      %v3636 = vmul.f32 %v3561, %v1784
      %v3637 = vmul.f32 %v3561, %v1785
      %v3638 = vmul.f32 %v3565, %v1784
      %v3639 = vmul.f32 %v3565, %v1785
      %v3640 = vmul.f32 %v3569, %v1784
      %v3641 = vmul.f32 %v3569, %v1785
      %v3642 = vmul.f32 %v3573, %v1784
      %v3643 = vmul.f32 %v3573, %v1785
      %v3644 = vmul.f32 %v3577, %v1784
      %v3645 = vmul.f32 %v3577, %v1785
      %v3646 = vmul.f32 %v3581, %v1784
      %v3647 = vmul.f32 %v3581, %v1785
      %v3648 = vmul.f32 %v3585, %v1784
      %v3649 = vmul.f32 %v3585, %v1785
      %v3650 = vmul.f32 %v3589, %v1784
      %v3651 = vmul.f32 %v3589, %v1785
      %v3652 = vmul.f32 %v3593, %v1784
      %v3653 = vmul.f32 %v3593, %v1785
      %v3654 = vmul.f32 %v3597, %v1784
      %v3655 = vmul.f32 %v3597, %v1785
      %v3656 = vmul.f32 %v3601, %v1784
      %v3657 = vmul.f32 %v3601, %v1785
      %v3658 = vmul.f32 %v3605, %v1784
      %v3659 = vmul.f32 %v3605, %v1785
      %v3660 = vmul.f32 %v3609, %v1784
      %v3661 = vmul.f32 %v3609, %v1785
      %v3662 = vmul.f32 %v3613, %v1784
      %v3663 = vmul.f32 %v3613, %v1785
      %v3664 = vmul.f32 %v3617, %v1784
      %v3665 = vmul.f32 %v3617, %v1785
      %v3666 = vmul.f32 %v3621, %v1784
      %v3667 = vmul.f32 %v3621, %v1785
      %v3668 = vmul.f32 %v3625, %v1784
      %v3669 = vmul.f32 %v3625, %v1785
      %v3670 = vmul.f32 %v3629, %v1784
      %v3671 = vmul.f32 %v3629, %v1785
      %v3672 = vmul.f32 %v3633, %v1784
      %v3673 = vmul.f32 %v3633, %v1785
      %v3674 = vadd.f32 %v3514, %v3634
      %v3675 = vadd.f32 %v3515, %v3635
      %v3676 = vadd.f32 %v3516, %v3636
      %v3677 = vadd.f32 %v3517, %v3637
      %v3678 = vadd.f32 %v3518, %v3638
      %v3679 = vadd.f32 %v3519, %v3639
      %v3680 = vadd.f32 %v3520, %v3640
      %v3681 = vadd.f32 %v3521, %v3641
      %v3682 = vadd.f32 %v3522, %v3642
      %v3683 = vadd.f32 %v3523, %v3643
      %v3684 = vadd.f32 %v3524, %v3644
      %v3685 = vadd.f32 %v3525, %v3645
      %v3686 = vadd.f32 %v3526, %v3646
      %v3687 = vadd.f32 %v3527, %v3647
      %v3688 = vadd.f32 %v3528, %v3648
      %v3689 = vadd.f32 %v3529, %v3649
      %v3690 = vadd.f32 %v3530, %v3650
      %v3691 = vadd.f32 %v3531, %v3651
      %v3692 = vadd.f32 %v3532, %v3652
      %v3693 = vadd.f32 %v3533, %v3653
      %v3694 = vadd.f32 %v3534, %v3654
      %v3695 = vadd.f32 %v3535, %v3655
      %v3696 = vadd.f32 %v3536, %v3656
      %v3697 = vadd.f32 %v3537, %v3657
      %v3698 = vadd.f32 %v3538, %v3658
      %v3699 = vadd.f32 %v3539, %v3659
      %v3700 = vadd.f32 %v3540, %v3660
      %v3701 = vadd.f32 %v3541, %v3661
      %v3702 = vadd.f32 %v3542, %v3662
      %v3703 = vadd.f32 %v3543, %v3663
      %v3704 = vadd.f32 %v3544, %v3664
      %v3705 = vadd.f32 %v3545, %v3665
      %v3706 = vadd.f32 %v3546, %v3666
      %v3707 = vadd.f32 %v3547, %v3667
      %v3708 = vadd.f32 %v3548, %v3668
      %v3709 = vadd.f32 %v3549, %v3669
      %v3710 = vadd.f32 %v3550, %v3670
      %v3711 = vadd.f32 %v3551, %v3671
      %v3712 = vadd.f32 %v3552, %v3672
      %v3713 = vadd.f32 %v3553, %v3673
      %v3714 = vlaneseq
      %v3715 = vshrl.u32 %v3714, 7
      %v3716 = vsub.s32 4, %v3715
      %v3717 = vrot.slane %v608, %v3716
      %v3718 = vlaneseq
      %v3719 = vshrl.u32 %v3718, 7
      %v3720 = vsub.s32 4, %v3719
      %v3721 = vrot.slane %v618, %v3720
      %v3722 = vlaneseq
      %v3723 = vshrl.u32 %v3722, 7
      %v3724 = vsub.s32 4, %v3723
      %v3725 = vrot.slane %v628, %v3724
      %v3726 = vlaneseq
      %v3727 = vshrl.u32 %v3726, 7
      %v3728 = vsub.s32 4, %v3727
      %v3729 = vrot.slane %v638, %v3728
      %v3730 = vlaneseq
      %v3731 = vshrl.u32 %v3730, 7
      %v3732 = vsub.s32 4, %v3731
      %v3733 = vrot.slane %v648, %v3732
      %v3734 = vlaneseq
      %v3735 = vshrl.u32 %v3734, 7
      %v3736 = vsub.s32 4, %v3735
      %v3737 = vrot.slane %v658, %v3736
      %v3738 = vlaneseq
      %v3739 = vshrl.u32 %v3738, 7
      %v3740 = vsub.s32 4, %v3739
      %v3741 = vrot.slane %v668, %v3740
      %v3742 = vlaneseq
      %v3743 = vshrl.u32 %v3742, 7
      %v3744 = vsub.s32 4, %v3743
      %v3745 = vrot.slane %v678, %v3744
      %v3746 = vlaneseq
      %v3747 = vshrl.u32 %v3746, 7
      %v3748 = vsub.s32 4, %v3747
      %v3749 = vrot.slane %v688, %v3748
      %v3750 = vlaneseq
      %v3751 = vshrl.u32 %v3750, 7
      %v3752 = vsub.s32 4, %v3751
      %v3753 = vrot.slane %v698, %v3752
      %v3754 = vlaneseq
      %v3755 = vshrl.u32 %v3754, 7
      %v3756 = vsub.s32 4, %v3755
      %v3757 = vrot.slane %v708, %v3756
      %v3758 = vlaneseq
      %v3759 = vshrl.u32 %v3758, 7
      %v3760 = vsub.s32 4, %v3759
      %v3761 = vrot.slane %v718, %v3760
      %v3762 = vlaneseq
      %v3763 = vshrl.u32 %v3762, 7
      %v3764 = vsub.s32 4, %v3763
      %v3765 = vrot.slane %v728, %v3764
      %v3766 = vlaneseq
      %v3767 = vshrl.u32 %v3766, 7
      %v3768 = vsub.s32 4, %v3767
      %v3769 = vrot.slane %v738, %v3768
      %v3770 = vlaneseq
      %v3771 = vshrl.u32 %v3770, 7
      %v3772 = vsub.s32 4, %v3771
      %v3773 = vrot.slane %v748, %v3772
      %v3774 = vlaneseq
      %v3775 = vshrl.u32 %v3774, 7
      %v3776 = vsub.s32 4, %v3775
      %v3777 = vrot.slane %v758, %v3776
      %v3778 = vlaneseq
      %v3779 = vshrl.u32 %v3778, 7
      %v3780 = vsub.s32 4, %v3779
      %v3781 = vrot.slane %v768, %v3780
      %v3782 = vlaneseq
      %v3783 = vshrl.u32 %v3782, 7
      %v3784 = vsub.s32 4, %v3783
      %v3785 = vrot.slane %v778, %v3784
      %v3786 = vlaneseq
      %v3787 = vshrl.u32 %v3786, 7
      %v3788 = vsub.s32 4, %v3787
      %v3789 = vrot.slane %v788, %v3788
      %v3790 = vlaneseq
      %v3791 = vshrl.u32 %v3790, 7
      %v3792 = vsub.s32 4, %v3791
      %v3793 = vrot.slane %v798, %v3792
      %v3794 = vmul.f32 %v3717, %v1786
      %v3795 = vmul.f32 %v3717, %v1787
      %v3796 = vmul.f32 %v3721, %v1786
      %v3797 = vmul.f32 %v3721, %v1787
      %v3798 = vmul.f32 %v3725, %v1786
      %v3799 = vmul.f32 %v3725, %v1787
      %v3800 = vmul.f32 %v3729, %v1786
      %v3801 = vmul.f32 %v3729, %v1787
      %v3802 = vmul.f32 %v3733, %v1786
      %v3803 = vmul.f32 %v3733, %v1787
      %v3804 = vmul.f32 %v3737, %v1786
      %v3805 = vmul.f32 %v3737, %v1787
      %v3806 = vmul.f32 %v3741, %v1786
      %v3807 = vmul.f32 %v3741, %v1787
      %v3808 = vmul.f32 %v3745, %v1786
      %v3809 = vmul.f32 %v3745, %v1787
      %v3810 = vmul.f32 %v3749, %v1786
      %v3811 = vmul.f32 %v3749, %v1787
      %v3812 = vmul.f32 %v3753, %v1786
      %v3813 = vmul.f32 %v3753, %v1787
      %v3814 = vmul.f32 %v3757, %v1786
      %v3815 = vmul.f32 %v3757, %v1787
      %v3816 = vmul.f32 %v3761, %v1786
      %v3817 = vmul.f32 %v3761, %v1787
      %v3818 = vmul.f32 %v3765, %v1786
      %v3819 = vmul.f32 %v3765, %v1787
      %v3820 = vmul.f32 %v3769, %v1786
      %v3821 = vmul.f32 %v3769, %v1787
      %v3822 = vmul.f32 %v3773, %v1786
      %v3823 = vmul.f32 %v3773, %v1787
      %v3824 = vmul.f32 %v3777, %v1786
      %v3825 = vmul.f32 %v3777, %v1787
      %v3826 = vmul.f32 %v3781, %v1786
      %v3827 = vmul.f32 %v3781, %v1787
      %v3828 = vmul.f32 %v3785, %v1786
      %v3829 = vmul.f32 %v3785, %v1787
      %v3830 = vmul.f32 %v3789, %v1786
      %v3831 = vmul.f32 %v3789, %v1787
      %v3832 = vmul.f32 %v3793, %v1786
      %v3833 = vmul.f32 %v3793, %v1787
      %v3834 = vadd.f32 %v3674, %v3794
      %v3835 = vadd.f32 %v3675, %v3795
      %v3836 = vadd.f32 %v3676, %v3796
      %v3837 = vadd.f32 %v3677, %v3797
      %v3838 = vadd.f32 %v3678, %v3798
      %v3839 = vadd.f32 %v3679, %v3799
      %v3840 = vadd.f32 %v3680, %v3800
      %v3841 = vadd.f32 %v3681, %v3801
      %v3842 = vadd.f32 %v3682, %v3802
      %v3843 = vadd.f32 %v3683, %v3803
      %v3844 = vadd.f32 %v3684, %v3804
      %v3845 = vadd.f32 %v3685, %v3805
      %v3846 = vadd.f32 %v3686, %v3806
      %v3847 = vadd.f32 %v3687, %v3807
      %v3848 = vadd.f32 %v3688, %v3808
      %v3849 = vadd.f32 %v3689, %v3809
      %v3850 = vadd.f32 %v3690, %v3810
      %v3851 = vadd.f32 %v3691, %v3811
      %v3852 = vadd.f32 %v3692, %v3812
      %v3853 = vadd.f32 %v3693, %v3813
      %v3854 = vadd.f32 %v3694, %v3814
      %v3855 = vadd.f32 %v3695, %v3815
      %v3856 = vadd.f32 %v3696, %v3816
      %v3857 = vadd.f32 %v3697, %v3817
      %v3858 = vadd.f32 %v3698, %v3818
      %v3859 = vadd.f32 %v3699, %v3819
      %v3860 = vadd.f32 %v3700, %v3820
      %v3861 = vadd.f32 %v3701, %v3821
      %v3862 = vadd.f32 %v3702, %v3822
      %v3863 = vadd.f32 %v3703, %v3823
      %v3864 = vadd.f32 %v3704, %v3824
      %v3865 = vadd.f32 %v3705, %v3825
      %v3866 = vadd.f32 %v3706, %v3826
      %v3867 = vadd.f32 %v3707, %v3827
      %v3868 = vadd.f32 %v3708, %v3828
      %v3869 = vadd.f32 %v3709, %v3829
      %v3870 = vadd.f32 %v3710, %v3830
      %v3871 = vadd.f32 %v3711, %v3831
      %v3872 = vadd.f32 %v3712, %v3832
      %v3873 = vadd.f32 %v3713, %v3833
      %v3874 = vlaneseq
      %v3875 = vshrl.u32 %v3874, 7
      %v3876 = vsub.s32 5, %v3875
      %v3877 = vrot.slane %v608, %v3876
      %v3878 = vlaneseq
      %v3879 = vshrl.u32 %v3878, 7
      %v3880 = vsub.s32 5, %v3879
      %v3881 = vrot.slane %v618, %v3880
      %v3882 = vlaneseq
      %v3883 = vshrl.u32 %v3882, 7
      %v3884 = vsub.s32 5, %v3883
      %v3885 = vrot.slane %v628, %v3884
      %v3886 = vlaneseq
      %v3887 = vshrl.u32 %v3886, 7
      %v3888 = vsub.s32 5, %v3887
      %v3889 = vrot.slane %v638, %v3888
      %v3890 = vlaneseq
      %v3891 = vshrl.u32 %v3890, 7
      %v3892 = vsub.s32 5, %v3891
      %v3893 = vrot.slane %v648, %v3892
      %v3894 = vlaneseq
      %v3895 = vshrl.u32 %v3894, 7
      %v3896 = vsub.s32 5, %v3895
      %v3897 = vrot.slane %v658, %v3896
      %v3898 = vlaneseq
      %v3899 = vshrl.u32 %v3898, 7
      %v3900 = vsub.s32 5, %v3899
      %v3901 = vrot.slane %v668, %v3900
      %v3902 = vlaneseq
      %v3903 = vshrl.u32 %v3902, 7
      %v3904 = vsub.s32 5, %v3903
      %v3905 = vrot.slane %v678, %v3904
      %v3906 = vlaneseq
      %v3907 = vshrl.u32 %v3906, 7
      %v3908 = vsub.s32 5, %v3907
      %v3909 = vrot.slane %v688, %v3908
      %v3910 = vlaneseq
      %v3911 = vshrl.u32 %v3910, 7
      %v3912 = vsub.s32 5, %v3911
      %v3913 = vrot.slane %v698, %v3912
      %v3914 = vlaneseq
      %v3915 = vshrl.u32 %v3914, 7
      %v3916 = vsub.s32 5, %v3915
      %v3917 = vrot.slane %v708, %v3916
      %v3918 = vlaneseq
      %v3919 = vshrl.u32 %v3918, 7
      %v3920 = vsub.s32 5, %v3919
      %v3921 = vrot.slane %v718, %v3920
      %v3922 = vlaneseq
      %v3923 = vshrl.u32 %v3922, 7
      %v3924 = vsub.s32 5, %v3923
      %v3925 = vrot.slane %v728, %v3924
      %v3926 = vlaneseq
      %v3927 = vshrl.u32 %v3926, 7
      %v3928 = vsub.s32 5, %v3927
      %v3929 = vrot.slane %v738, %v3928
      %v3930 = vlaneseq
      %v3931 = vshrl.u32 %v3930, 7
      %v3932 = vsub.s32 5, %v3931
      %v3933 = vrot.slane %v748, %v3932
      %v3934 = vlaneseq
      %v3935 = vshrl.u32 %v3934, 7
      %v3936 = vsub.s32 5, %v3935
      %v3937 = vrot.slane %v758, %v3936
      %v3938 = vlaneseq
      %v3939 = vshrl.u32 %v3938, 7
      %v3940 = vsub.s32 5, %v3939
      %v3941 = vrot.slane %v768, %v3940
      %v3942 = vlaneseq
      %v3943 = vshrl.u32 %v3942, 7
      %v3944 = vsub.s32 5, %v3943
      %v3945 = vrot.slane %v778, %v3944
      %v3946 = vlaneseq
      %v3947 = vshrl.u32 %v3946, 7
      %v3948 = vsub.s32 5, %v3947
      %v3949 = vrot.slane %v788, %v3948
      %v3950 = vlaneseq
      %v3951 = vshrl.u32 %v3950, 7
      %v3952 = vsub.s32 5, %v3951
      %v3953 = vrot.slane %v798, %v3952
      %v3954 = vmul.f32 %v3877, %v1788
      %v3955 = vmul.f32 %v3877, %v1789
      %v3956 = vmul.f32 %v3881, %v1788
      %v3957 = vmul.f32 %v3881, %v1789
      %v3958 = vmul.f32 %v3885, %v1788
      %v3959 = vmul.f32 %v3885, %v1789
      %v3960 = vmul.f32 %v3889, %v1788
      %v3961 = vmul.f32 %v3889, %v1789
      %v3962 = vmul.f32 %v3893, %v1788
      %v3963 = vmul.f32 %v3893, %v1789
      %v3964 = vmul.f32 %v3897, %v1788
      %v3965 = vmul.f32 %v3897, %v1789
      %v3966 = vmul.f32 %v3901, %v1788
      %v3967 = vmul.f32 %v3901, %v1789
      %v3968 = vmul.f32 %v3905, %v1788
      %v3969 = vmul.f32 %v3905, %v1789
      %v3970 = vmul.f32 %v3909, %v1788
      %v3971 = vmul.f32 %v3909, %v1789
      %v3972 = vmul.f32 %v3913, %v1788
      %v3973 = vmul.f32 %v3913, %v1789
      %v3974 = vmul.f32 %v3917, %v1788
      %v3975 = vmul.f32 %v3917, %v1789
      %v3976 = vmul.f32 %v3921, %v1788
      %v3977 = vmul.f32 %v3921, %v1789
      %v3978 = vmul.f32 %v3925, %v1788
      %v3979 = vmul.f32 %v3925, %v1789
      %v3980 = vmul.f32 %v3929, %v1788
      %v3981 = vmul.f32 %v3929, %v1789
      %v3982 = vmul.f32 %v3933, %v1788
      %v3983 = vmul.f32 %v3933, %v1789
      %v3984 = vmul.f32 %v3937, %v1788
      %v3985 = vmul.f32 %v3937, %v1789
      %v3986 = vmul.f32 %v3941, %v1788
      %v3987 = vmul.f32 %v3941, %v1789
      %v3988 = vmul.f32 %v3945, %v1788
      %v3989 = vmul.f32 %v3945, %v1789
      %v3990 = vmul.f32 %v3949, %v1788
      %v3991 = vmul.f32 %v3949, %v1789
      %v3992 = vmul.f32 %v3953, %v1788
      %v3993 = vmul.f32 %v3953, %v1789
      %v3994 = vadd.f32 %v3834, %v3954
      %v3995 = vadd.f32 %v3835, %v3955
      %v3996 = vadd.f32 %v3836, %v3956
      %v3997 = vadd.f32 %v3837, %v3957
      %v3998 = vadd.f32 %v3838, %v3958
      %v3999 = vadd.f32 %v3839, %v3959
      %v4000 = vadd.f32 %v3840, %v3960
      %v4001 = vadd.f32 %v3841, %v3961
      %v4002 = vadd.f32 %v3842, %v3962
      %v4003 = vadd.f32 %v3843, %v3963
      %v4004 = vadd.f32 %v3844, %v3964
      %v4005 = vadd.f32 %v3845, %v3965
      %v4006 = vadd.f32 %v3846, %v3966
      %v4007 = vadd.f32 %v3847, %v3967
      %v4008 = vadd.f32 %v3848, %v3968
      %v4009 = vadd.f32 %v3849, %v3969
      %v4010 = vadd.f32 %v3850, %v3970
      %v4011 = vadd.f32 %v3851, %v3971
      %v4012 = vadd.f32 %v3852, %v3972
      %v4013 = vadd.f32 %v3853, %v3973
      %v4014 = vadd.f32 %v3854, %v3974
      %v4015 = vadd.f32 %v3855, %v3975
      %v4016 = vadd.f32 %v3856, %v3976
      %v4017 = vadd.f32 %v3857, %v3977
      %v4018 = vadd.f32 %v3858, %v3978
      %v4019 = vadd.f32 %v3859, %v3979
      %v4020 = vadd.f32 %v3860, %v3980
      %v4021 = vadd.f32 %v3861, %v3981
      %v4022 = vadd.f32 %v3862, %v3982
      %v4023 = vadd.f32 %v3863, %v3983
      %v4024 = vadd.f32 %v3864, %v3984
      %v4025 = vadd.f32 %v3865, %v3985
      %v4026 = vadd.f32 %v3866, %v3986
      %v4027 = vadd.f32 %v3867, %v3987
      %v4028 = vadd.f32 %v3868, %v3988
      %v4029 = vadd.f32 %v3869, %v3989
      %v4030 = vadd.f32 %v3870, %v3990
      %v4031 = vadd.f32 %v3871, %v3991
      %v4032 = vadd.f32 %v3872, %v3992
      %v4033 = vadd.f32 %v3873, %v3993
      %v4034 = vlaneseq
      %v4035 = vshrl.u32 %v4034, 7
      %v4036 = vsub.s32 6, %v4035
      %v4037 = vrot.slane %v608, %v4036
      %v4038 = vlaneseq
      %v4039 = vshrl.u32 %v4038, 7
      %v4040 = vsub.s32 6, %v4039
      %v4041 = vrot.slane %v618, %v4040
      %v4042 = vlaneseq
      %v4043 = vshrl.u32 %v4042, 7
      %v4044 = vsub.s32 6, %v4043
      %v4045 = vrot.slane %v628, %v4044
      %v4046 = vlaneseq
      %v4047 = vshrl.u32 %v4046, 7
      %v4048 = vsub.s32 6, %v4047
      %v4049 = vrot.slane %v638, %v4048
      %v4050 = vlaneseq
      %v4051 = vshrl.u32 %v4050, 7
      %v4052 = vsub.s32 6, %v4051
      %v4053 = vrot.slane %v648, %v4052
      %v4054 = vlaneseq
      %v4055 = vshrl.u32 %v4054, 7
      %v4056 = vsub.s32 6, %v4055
      %v4057 = vrot.slane %v658, %v4056
      %v4058 = vlaneseq
      %v4059 = vshrl.u32 %v4058, 7
      %v4060 = vsub.s32 6, %v4059
      %v4061 = vrot.slane %v668, %v4060
      %v4062 = vlaneseq
      %v4063 = vshrl.u32 %v4062, 7
      %v4064 = vsub.s32 6, %v4063
      %v4065 = vrot.slane %v678, %v4064
      %v4066 = vlaneseq
      %v4067 = vshrl.u32 %v4066, 7
      %v4068 = vsub.s32 6, %v4067
      %v4069 = vrot.slane %v688, %v4068
      %v4070 = vlaneseq
      %v4071 = vshrl.u32 %v4070, 7
      %v4072 = vsub.s32 6, %v4071
      %v4073 = vrot.slane %v698, %v4072
      %v4074 = vlaneseq
      %v4075 = vshrl.u32 %v4074, 7
      %v4076 = vsub.s32 6, %v4075
      %v4077 = vrot.slane %v708, %v4076
      %v4078 = vlaneseq
      %v4079 = vshrl.u32 %v4078, 7
      %v4080 = vsub.s32 6, %v4079
      %v4081 = vrot.slane %v718, %v4080
      %v4082 = vlaneseq
      %v4083 = vshrl.u32 %v4082, 7
      %v4084 = vsub.s32 6, %v4083
      %v4085 = vrot.slane %v728, %v4084
      %v4086 = vlaneseq
      %v4087 = vshrl.u32 %v4086, 7
      %v4088 = vsub.s32 6, %v4087
      %v4089 = vrot.slane %v738, %v4088
      %v4090 = vlaneseq
      %v4091 = vshrl.u32 %v4090, 7
      %v4092 = vsub.s32 6, %v4091
      %v4093 = vrot.slane %v748, %v4092
      %v4094 = vlaneseq
      %v4095 = vshrl.u32 %v4094, 7
      %v4096 = vsub.s32 6, %v4095
      %v4097 = vrot.slane %v758, %v4096
      %v4098 = vlaneseq
      %v4099 = vshrl.u32 %v4098, 7
      %v4100 = vsub.s32 6, %v4099
      %v4101 = vrot.slane %v768, %v4100
      %v4102 = vlaneseq
      %v4103 = vshrl.u32 %v4102, 7
      %v4104 = vsub.s32 6, %v4103
      %v4105 = vrot.slane %v778, %v4104
      %v4106 = vlaneseq
      %v4107 = vshrl.u32 %v4106, 7
      %v4108 = vsub.s32 6, %v4107
      %v4109 = vrot.slane %v788, %v4108
      %v4110 = vlaneseq
      %v4111 = vshrl.u32 %v4110, 7
      %v4112 = vsub.s32 6, %v4111
      %v4113 = vrot.slane %v798, %v4112
      %v4114 = vmul.f32 %v4037, %v1790
      %v4115 = vmul.f32 %v4037, %v1791
      %v4116 = vmul.f32 %v4041, %v1790
      %v4117 = vmul.f32 %v4041, %v1791
      %v4118 = vmul.f32 %v4045, %v1790
      %v4119 = vmul.f32 %v4045, %v1791
      %v4120 = vmul.f32 %v4049, %v1790
      %v4121 = vmul.f32 %v4049, %v1791
      %v4122 = vmul.f32 %v4053, %v1790
      %v4123 = vmul.f32 %v4053, %v1791
      %v4124 = vmul.f32 %v4057, %v1790
      %v4125 = vmul.f32 %v4057, %v1791
      %v4126 = vmul.f32 %v4061, %v1790
      %v4127 = vmul.f32 %v4061, %v1791
      %v4128 = vmul.f32 %v4065, %v1790
      %v4129 = vmul.f32 %v4065, %v1791
      %v4130 = vmul.f32 %v4069, %v1790
      %v4131 = vmul.f32 %v4069, %v1791
      %v4132 = vmul.f32 %v4073, %v1790
      %v4133 = vmul.f32 %v4073, %v1791
      %v4134 = vmul.f32 %v4077, %v1790
      %v4135 = vmul.f32 %v4077, %v1791
      %v4136 = vmul.f32 %v4081, %v1790
      %v4137 = vmul.f32 %v4081, %v1791
      %v4138 = vmul.f32 %v4085, %v1790
      %v4139 = vmul.f32 %v4085, %v1791
      %v4140 = vmul.f32 %v4089, %v1790
      %v4141 = vmul.f32 %v4089, %v1791
      %v4142 = vmul.f32 %v4093, %v1790
      %v4143 = vmul.f32 %v4093, %v1791
      %v4144 = vmul.f32 %v4097, %v1790
      %v4145 = vmul.f32 %v4097, %v1791
      %v4146 = vmul.f32 %v4101, %v1790
      %v4147 = vmul.f32 %v4101, %v1791
      %v4148 = vmul.f32 %v4105, %v1790
      %v4149 = vmul.f32 %v4105, %v1791
      %v4150 = vmul.f32 %v4109, %v1790
      %v4151 = vmul.f32 %v4109, %v1791
      %v4152 = vmul.f32 %v4113, %v1790
      %v4153 = vmul.f32 %v4113, %v1791
      %v4154 = vadd.f32 %v3994, %v4114
      %v4155 = vadd.f32 %v3995, %v4115
      %v4156 = vadd.f32 %v3996, %v4116
      %v4157 = vadd.f32 %v3997, %v4117
      %v4158 = vadd.f32 %v3998, %v4118
      %v4159 = vadd.f32 %v3999, %v4119
      %v4160 = vadd.f32 %v4000, %v4120
      %v4161 = vadd.f32 %v4001, %v4121
      %v4162 = vadd.f32 %v4002, %v4122
      %v4163 = vadd.f32 %v4003, %v4123
      %v4164 = vadd.f32 %v4004, %v4124
      %v4165 = vadd.f32 %v4005, %v4125
      %v4166 = vadd.f32 %v4006, %v4126
      %v4167 = vadd.f32 %v4007, %v4127
      %v4168 = vadd.f32 %v4008, %v4128
      %v4169 = vadd.f32 %v4009, %v4129
      %v4170 = vadd.f32 %v4010, %v4130
      %v4171 = vadd.f32 %v4011, %v4131
      %v4172 = vadd.f32 %v4012, %v4132
      %v4173 = vadd.f32 %v4013, %v4133
      %v4174 = vadd.f32 %v4014, %v4134
      %v4175 = vadd.f32 %v4015, %v4135
      %v4176 = vadd.f32 %v4016, %v4136
      %v4177 = vadd.f32 %v4017, %v4137
      %v4178 = vadd.f32 %v4018, %v4138
      %v4179 = vadd.f32 %v4019, %v4139
      %v4180 = vadd.f32 %v4020, %v4140
      %v4181 = vadd.f32 %v4021, %v4141
      %v4182 = vadd.f32 %v4022, %v4142
      %v4183 = vadd.f32 %v4023, %v4143
      %v4184 = vadd.f32 %v4024, %v4144
      %v4185 = vadd.f32 %v4025, %v4145
      %v4186 = vadd.f32 %v4026, %v4146
      %v4187 = vadd.f32 %v4027, %v4147
      %v4188 = vadd.f32 %v4028, %v4148
      %v4189 = vadd.f32 %v4029, %v4149
      %v4190 = vadd.f32 %v4030, %v4150
      %v4191 = vadd.f32 %v4031, %v4151
      %v4192 = vadd.f32 %v4032, %v4152
      %v4193 = vadd.f32 %v4033, %v4153
      %v4194 = vlaneseq
      %v4195 = vshrl.u32 %v4194, 7
      %v4196 = vsub.s32 7, %v4195
      %v4197 = vrot.slane %v608, %v4196
      %v4198 = vlaneseq
      %v4199 = vshrl.u32 %v4198, 7
      %v4200 = vsub.s32 7, %v4199
      %v4201 = vrot.slane %v618, %v4200
      %v4202 = vlaneseq
      %v4203 = vshrl.u32 %v4202, 7
      %v4204 = vsub.s32 7, %v4203
      %v4205 = vrot.slane %v628, %v4204
      %v4206 = vlaneseq
      %v4207 = vshrl.u32 %v4206, 7
      %v4208 = vsub.s32 7, %v4207
      %v4209 = vrot.slane %v638, %v4208
      %v4210 = vlaneseq
      %v4211 = vshrl.u32 %v4210, 7
      %v4212 = vsub.s32 7, %v4211
      %v4213 = vrot.slane %v648, %v4212
      %v4214 = vlaneseq
      %v4215 = vshrl.u32 %v4214, 7
      %v4216 = vsub.s32 7, %v4215
      %v4217 = vrot.slane %v658, %v4216
      %v4218 = vlaneseq
      %v4219 = vshrl.u32 %v4218, 7
      %v4220 = vsub.s32 7, %v4219
      %v4221 = vrot.slane %v668, %v4220
      %v4222 = vlaneseq
      %v4223 = vshrl.u32 %v4222, 7
      %v4224 = vsub.s32 7, %v4223
      %v4225 = vrot.slane %v678, %v4224
      %v4226 = vlaneseq
      %v4227 = vshrl.u32 %v4226, 7
      %v4228 = vsub.s32 7, %v4227
      %v4229 = vrot.slane %v688, %v4228
      %v4230 = vlaneseq
      %v4231 = vshrl.u32 %v4230, 7
      %v4232 = vsub.s32 7, %v4231
      %v4233 = vrot.slane %v698, %v4232
      %v4234 = vlaneseq
      %v4235 = vshrl.u32 %v4234, 7
      %v4236 = vsub.s32 7, %v4235
      %v4237 = vrot.slane %v708, %v4236
      %v4238 = vlaneseq
      %v4239 = vshrl.u32 %v4238, 7
      %v4240 = vsub.s32 7, %v4239
      %v4241 = vrot.slane %v718, %v4240
      %v4242 = vlaneseq
      %v4243 = vshrl.u32 %v4242, 7
      %v4244 = vsub.s32 7, %v4243
      %v4245 = vrot.slane %v728, %v4244
      %v4246 = vlaneseq
      %v4247 = vshrl.u32 %v4246, 7
      %v4248 = vsub.s32 7, %v4247
      %v4249 = vrot.slane %v738, %v4248
      %v4250 = vlaneseq
      %v4251 = vshrl.u32 %v4250, 7
      %v4252 = vsub.s32 7, %v4251
      %v4253 = vrot.slane %v748, %v4252
      %v4254 = vlaneseq
      %v4255 = vshrl.u32 %v4254, 7
      %v4256 = vsub.s32 7, %v4255
      %v4257 = vrot.slane %v758, %v4256
      %v4258 = vlaneseq
      %v4259 = vshrl.u32 %v4258, 7
      %v4260 = vsub.s32 7, %v4259
      %v4261 = vrot.slane %v768, %v4260
      %v4262 = vlaneseq
      %v4263 = vshrl.u32 %v4262, 7
      %v4264 = vsub.s32 7, %v4263
      %v4265 = vrot.slane %v778, %v4264
      %v4266 = vlaneseq
      %v4267 = vshrl.u32 %v4266, 7
      %v4268 = vsub.s32 7, %v4267
      %v4269 = vrot.slane %v788, %v4268
      %v4270 = vlaneseq
      %v4271 = vshrl.u32 %v4270, 7
      %v4272 = vsub.s32 7, %v4271
      %v4273 = vrot.slane %v798, %v4272
      %v4274 = vmul.f32 %v4197, %v1792
      %v4275 = vmul.f32 %v4197, %v1793
      %v4276 = vmul.f32 %v4201, %v1792
      %v4277 = vmul.f32 %v4201, %v1793
      %v4278 = vmul.f32 %v4205, %v1792
      %v4279 = vmul.f32 %v4205, %v1793
      %v4280 = vmul.f32 %v4209, %v1792
      %v4281 = vmul.f32 %v4209, %v1793
      %v4282 = vmul.f32 %v4213, %v1792
      %v4283 = vmul.f32 %v4213, %v1793
      %v4284 = vmul.f32 %v4217, %v1792
      %v4285 = vmul.f32 %v4217, %v1793
      %v4286 = vmul.f32 %v4221, %v1792
      %v4287 = vmul.f32 %v4221, %v1793
      %v4288 = vmul.f32 %v4225, %v1792
      %v4289 = vmul.f32 %v4225, %v1793
      %v4290 = vmul.f32 %v4229, %v1792
      %v4291 = vmul.f32 %v4229, %v1793
      %v4292 = vmul.f32 %v4233, %v1792
      %v4293 = vmul.f32 %v4233, %v1793
      %v4294 = vmul.f32 %v4237, %v1792
      %v4295 = vmul.f32 %v4237, %v1793
      %v4296 = vmul.f32 %v4241, %v1792
      %v4297 = vmul.f32 %v4241, %v1793
      %v4298 = vmul.f32 %v4245, %v1792
      %v4299 = vmul.f32 %v4245, %v1793
      %v4300 = vmul.f32 %v4249, %v1792
      %v4301 = vmul.f32 %v4249, %v1793
      %v4302 = vmul.f32 %v4253, %v1792
      %v4303 = vmul.f32 %v4253, %v1793
      %v4304 = vmul.f32 %v4257, %v1792
      %v4305 = vmul.f32 %v4257, %v1793
      %v4306 = vmul.f32 %v4261, %v1792
      %v4307 = vmul.f32 %v4261, %v1793
      %v4308 = vmul.f32 %v4265, %v1792
      %v4309 = vmul.f32 %v4265, %v1793
      %v4310 = vmul.f32 %v4269, %v1792
      %v4311 = vmul.f32 %v4269, %v1793
      %v4312 = vmul.f32 %v4273, %v1792
      %v4313 = vmul.f32 %v4273, %v1793
      %v4314 = vadd.f32 %v4154, %v4274
      %v4315 = vadd.f32 %v4155, %v4275
      %v4316 = vadd.f32 %v4156, %v4276
      %v4317 = vadd.f32 %v4157, %v4277
      %v4318 = vadd.f32 %v4158, %v4278
      %v4319 = vadd.f32 %v4159, %v4279
      %v4320 = vadd.f32 %v4160, %v4280
      %v4321 = vadd.f32 %v4161, %v4281
      %v4322 = vadd.f32 %v4162, %v4282
      %v4323 = vadd.f32 %v4163, %v4283
      %v4324 = vadd.f32 %v4164, %v4284
      %v4325 = vadd.f32 %v4165, %v4285
      %v4326 = vadd.f32 %v4166, %v4286
      %v4327 = vadd.f32 %v4167, %v4287
      %v4328 = vadd.f32 %v4168, %v4288
      %v4329 = vadd.f32 %v4169, %v4289
      %v4330 = vadd.f32 %v4170, %v4290
      %v4331 = vadd.f32 %v4171, %v4291
      %v4332 = vadd.f32 %v4172, %v4292
      %v4333 = vadd.f32 %v4173, %v4293
      %v4334 = vadd.f32 %v4174, %v4294
      %v4335 = vadd.f32 %v4175, %v4295
      %v4336 = vadd.f32 %v4176, %v4296
      %v4337 = vadd.f32 %v4177, %v4297
      %v4338 = vadd.f32 %v4178, %v4298
      %v4339 = vadd.f32 %v4179, %v4299
      %v4340 = vadd.f32 %v4180, %v4300
      %v4341 = vadd.f32 %v4181, %v4301
      %v4342 = vadd.f32 %v4182, %v4302
      %v4343 = vadd.f32 %v4183, %v4303
      %v4344 = vadd.f32 %v4184, %v4304
      %v4345 = vadd.f32 %v4185, %v4305
      %v4346 = vadd.f32 %v4186, %v4306
      %v4347 = vadd.f32 %v4187, %v4307
      %v4348 = vadd.f32 %v4188, %v4308
      %v4349 = vadd.f32 %v4189, %v4309
      %v4350 = vadd.f32 %v4190, %v4310
      %v4351 = vadd.f32 %v4191, %v4311
      %v4352 = vadd.f32 %v4192, %v4312
      %v4353 = vadd.f32 %v4193, %v4313
      %s4354 = scalar_lea.vmem %s5, 8
      %v4355 = vld [vmem:[%s4354] sm:$0xff]
      %s4356 = scalar_lea.vmem %s6, 1
      %v4357 = vld [vmem:[%s4356] sm:$0x1]
      %v4359 = vlaneseq
      %v4360 = vshrl.u32 %v4359, 7
      %v4361 = vsub.s32 0, %v4360
      %v4362 = vrot.slane %v4357, %v4361
      %4364 = vrot.lane.b32.xlu0 %v1222, 120
      %v4365 = vpop.permute.xlu0 %4364
      %4366 = vrot.lane.b32.xlu0 %v1223, 120
      %v4367 = vpop.permute.xlu0 %4366
      %4368 = vrot.lane.b32.xlu0 %v1224, 120
      %v4369 = vpop.permute.xlu0 %4368
      %4370 = vrot.lane.b32.xlu0 %v1225, 120
      %v4371 = vpop.permute.xlu0 %4370
      %4372 = vrot.lane.b32.xlu0 %v1226, 120
      %v4373 = vpop.permute.xlu0 %4372
      %4374 = vrot.lane.b32.xlu0 %v1227, 120
      %v4375 = vpop.permute.xlu0 %4374
      %4376 = vrot.lane.b32.xlu0 %v1228, 120
      %v4377 = vpop.permute.xlu0 %4376
      %4378 = vrot.lane.b32.xlu0 %v1229, 120
      %v4379 = vpop.permute.xlu0 %4378
      %4380 = vrot.lane.b32.xlu0 %v1230, 120
      %v4381 = vpop.permute.xlu0 %4380
      %4382 = vrot.lane.b32.xlu0 %v1231, 120
      %v4383 = vpop.permute.xlu0 %4382
      %4384 = vrot.lane.b32.xlu0 %v1232, 120
      %v4385 = vpop.permute.xlu0 %4384
      %4386 = vrot.lane.b32.xlu0 %v1233, 120
      %v4387 = vpop.permute.xlu0 %4386
      %4388 = vrot.lane.b32.xlu0 %v1234, 120
      %v4389 = vpop.permute.xlu0 %4388
      %4390 = vrot.lane.b32.xlu0 %v1235, 120
      %v4391 = vpop.permute.xlu0 %4390
      %4392 = vrot.lane.b32.xlu0 %v1236, 120
      %v4393 = vpop.permute.xlu0 %4392
      %4394 = vrot.lane.b32.xlu0 %v1237, 120
      %v4395 = vpop.permute.xlu0 %4394
      %4396 = vrot.lane.b32.xlu0 %v1238, 120
      %v4397 = vpop.permute.xlu0 %4396
      %4398 = vrot.lane.b32.xlu0 %v1239, 120
      %v4399 = vpop.permute.xlu0 %4398
      %4400 = vrot.lane.b32.xlu0 %v1240, 120
      %v4401 = vpop.permute.xlu0 %4400
      %4402 = vrot.lane.b32.xlu0 %v1241, 120
      %v4403 = vpop.permute.xlu0 %4402
      %4404 = vrot.lane.b32.xlu0 %v1242, 120
      %v4405 = vpop.permute.xlu0 %4404
      %4406 = vrot.lane.b32.xlu0 %v1243, 120
      %v4407 = vpop.permute.xlu0 %4406
      %4408 = vrot.lane.b32.xlu0 %v1244, 120
      %v4409 = vpop.permute.xlu0 %4408
      %4410 = vrot.lane.b32.xlu0 %v1245, 120
      %v4411 = vpop.permute.xlu0 %4410
      %4412 = vrot.lane.b32.xlu0 %v1246, 120
      %v4413 = vpop.permute.xlu0 %4412
      %4414 = vrot.lane.b32.xlu0 %v1247, 120
      %v4415 = vpop.permute.xlu0 %4414
      %4416 = vrot.lane.b32.xlu0 %v1248, 120
      %v4417 = vpop.permute.xlu0 %4416
      %4418 = vrot.lane.b32.xlu0 %v1249, 120
      %v4419 = vpop.permute.xlu0 %4418
      %4420 = vrot.lane.b32.xlu0 %v1250, 120
      %v4421 = vpop.permute.xlu0 %4420
      %4422 = vrot.lane.b32.xlu0 %v1251, 120
      %v4423 = vpop.permute.xlu0 %4422
      %4424 = vrot.lane.b32.xlu0 %v1252, 120
      %v4425 = vpop.permute.xlu0 %4424
      %4426 = vrot.lane.b32.xlu0 %v1253, 120
      %v4427 = vpop.permute.xlu0 %4426
      %v4428 = vsel %vm1262, %v4365, 0
      %v4430 = vsel %vm1262, %v4367, 0
      %v4432 = vsel %vm1262, %v4369, 0
      %v4434 = vsel %vm1262, %v4371, 0
      %v4436 = vsel %vm1262, %v4373, 0
      %v4438 = vsel %vm1262, %v4375, 0
      %v4440 = vsel %vm1262, %v4377, 0
      %v4442 = vsel %vm1262, %v4379, 0
      %v4444 = vsel %vm1262, %v4381, 0
      %v4446 = vsel %vm1262, %v4383, 0
      %v4448 = vsel %vm1262, %v4385, 0
      %v4450 = vsel %vm1262, %v4387, 0
      %v4452 = vsel %vm1262, %v4389, 0
      %v4454 = vsel %vm1262, %v4391, 0
      %v4456 = vsel %vm1262, %v4393, 0
      %v4458 = vsel %vm1262, %v4395, 0
      %v4460 = vsel %vm1262, %v4397, 0
      %v4462 = vsel %vm1262, %v4399, 0
      %v4464 = vsel %vm1262, %v4401, 0
      %v4466 = vsel %vm1262, %v4403, 0
      %v4468 = vsel %vm1262, %v4405, 0
      %v4470 = vsel %vm1262, %v4407, 0
      %v4472 = vsel %vm1262, %v4409, 0
      %v4474 = vsel %vm1262, %v4411, 0
      %v4476 = vsel %vm1262, %v4413, 0
      %v4478 = vsel %vm1262, %v4415, 0
      %v4480 = vsel %vm1262, %v4417, 0
      %v4482 = vsel %vm1262, %v4419, 0
      %v4484 = vsel %vm1262, %v4421, 0
      %v4486 = vsel %vm1262, %v4423, 0
      %v4488 = vsel %vm1262, %v4425, 0
      %v4490 = vsel %vm1262, %v4427, 0
      %4492 = vmatprep.subr.mxu0 0.0
      %4493 = vmatpush1.msra.mxu0 %v4355
      %4494 = vmatprep.subr.mxu0 0.0
      %4495 = vmatpush1.msra.mxu0 0.0
      %4496 = vmatprep.subr.mxu0 0.0
      %4497 = vmatpush1.msra.mxu0 0.0
      %4498 = vmatprep.subr.mxu0 0.0
      %4499 = vmatpush1.msra.mxu0 0.0
      %4500 = vmatprep.subr.mxu0 0.0
      %4501 = vmatpush1.msra.mxu0 0.0
      %4502 = vmatprep.subr.mxu0 0.0
      %4503 = vmatpush1.msra.mxu0 0.0
      %4504 = vmatprep.subr.mxu0 0.0
      %4505 = vmatpush1.msra.mxu0 0.0
      %4506 = vmatprep.subr.mxu0 0.0
      %4507 = vmatpush1.msra.mxu0 0.0
      %4508 = vmatprep.subr.mxu0 0.0
      %4509 = vmatpush1.msra.mxu0 0.0
      %4510 = vmatprep.subr.mxu0 0.0
      %4511 = vmatpush1.msra.mxu0 0.0
      %4512 = vmatprep.subr.mxu0 0.0
      %4513 = vmatpush1.msra.mxu0 0.0
      %4514 = vmatprep.subr.mxu0 0.0
      %4515 = vmatpush1.msra.mxu0 0.0
      %4516 = vmatprep.subr.mxu0 0.0
      %4517 = vmatpush1.msra.mxu0 0.0
      %4518 = vmatprep.subr.mxu0 0.0
      %4519 = vmatpush1.msra.mxu0 0.0
      %4520 = vmatprep.subr.mxu0 0.0
      %4521 = vmatpush1.msra.mxu0 0.0
      %4522 = vmatprep.subr.mxu0 0.0
      %4523 = vmatpush1.msra.mxu0 0.0
      %4524 = vmatprep.subr.mxu0 0.0
      %4525 = vmatpush1.msra.mxu0 0.0
      %4526 = vmatprep.subr.mxu0 0.0
      %4527 = vmatpush1.msra.mxu0 0.0
      %4528 = vmatprep.subr.mxu0 0.0
      %4529 = vmatpush1.msra.mxu0 0.0
      %4530 = vmatprep.subr.mxu0 0.0
      %4531 = vmatpush1.msra.mxu0 0.0
      %4532 = vmatprep.subr.mxu0 0.0
      %4533 = vmatpush1.msra.mxu0 0.0
      %4534 = vmatprep.subr.mxu0 0.0
      %4535 = vmatpush1.msra.mxu0 0.0
      %4536 = vmatprep.subr.mxu0 0.0
      %4537 = vmatpush1.msra.mxu0 0.0
      %4538 = vmatprep.subr.mxu0 0.0
      %4539 = vmatpush1.msra.mxu0 0.0
      %4540 = vmatprep.subr.mxu0 0.0
      %4541 = vmatpush1.msra.mxu0 0.0
      %4542 = vmatprep.subr.mxu0 0.0
      %4543 = vmatpush1.msra.mxu0 0.0
      %4544 = vmatprep.subr.mxu0 0.0
      %4545 = vmatpush1.msra.mxu0 0.0
      %4546 = vmatprep.subr.mxu0 0.0
      %4547 = vmatpush1.msra.mxu0 0.0
      %4548 = vmatprep.subr.mxu0 0.0
      %4549 = vmatpush1.msra.mxu0 0.0
      %4550 = vmatprep.subr.mxu0 0.0
      %4551 = vmatpush1.msra.mxu0 0.0
      %4552 = vmatprep.subr.mxu0 0.0
      %4553 = vmatpush1.msra.mxu0 0.0
      %4554 = vmatprep.subr.mxu0 0.0
      %4555 = vmatpush1.msra.mxu0 0.0
      %4556 = vmatprep.mubr.f32.mxu0 0.0
      %4557 = vmatmul.mubr.f32.gmra.mrb[0].mxu0 %v4428
      %v4558 = vpop.f32.mrb[0].mxu0
      %v4559 = vadd.f32 %v4362, %v4558
      %v4560 = vpop.f32.mrb[0].mxu0
      %4561 = vmatprep.mubr.f32.mxu0 0.0
      %4562 = vmatmul.mubr.f32.gmra.mrb[0].mxu0 %v4430
      %v4563 = vpop.f32.mrb[0].mxu0
      %v4564 = vadd.f32 %v4362, %v4563
      %v4565 = vpop.f32.mrb[0].mxu0
      %4566 = vmatprep.mubr.f32.mxu0 0.0
      %4567 = vmatmul.mubr.f32.gmra.mrb[0].mxu0 %v4432
      %v4568 = vpop.f32.mrb[0].mxu0
      %v4569 = vadd.f32 %v4362, %v4568
      %v4570 = vpop.f32.mrb[0].mxu0
      %4571 = vmatprep.mubr.f32.mxu0 0.0
      %4572 = vmatmul.mubr.f32.gmra.mrb[0].mxu0 %v4434
      %v4573 = vpop.f32.mrb[0].mxu0
      %v4574 = vadd.f32 %v4362, %v4573
      %v4575 = vpop.f32.mrb[0].mxu0
      %4576 = vmatprep.mubr.f32.mxu0 0.0
      %4577 = vmatmul.mubr.f32.gmra.mrb[0].mxu0 %v4436
      %v4578 = vpop.f32.mrb[0].mxu0
      %v4579 = vadd.f32 %v4362, %v4578
      %v4580 = vpop.f32.mrb[0].mxu0
      %4581 = vmatprep.mubr.f32.mxu0 0.0
      %4582 = vmatmul.mubr.f32.gmra.mrb[0].mxu0 %v4438
      %v4583 = vpop.f32.mrb[0].mxu0
      %v4584 = vadd.f32 %v4362, %v4583
      %v4585 = vpop.f32.mrb[0].mxu0
      %4586 = vmatprep.mubr.f32.mxu0 0.0
      %4587 = vmatmul.mubr.f32.gmra.mrb[0].mxu0 %v4440
      %v4588 = vpop.f32.mrb[0].mxu0
      %v4589 = vadd.f32 %v4362, %v4588
      %v4590 = vpop.f32.mrb[0].mxu0
      %4591 = vmatprep.mubr.f32.mxu0 0.0
      %4592 = vmatmul.mubr.f32.gmra.mrb[0].mxu0 %v4442
      %v4593 = vpop.f32.mrb[0].mxu0
      %v4594 = vadd.f32 %v4362, %v4593
      %v4595 = vpop.f32.mrb[0].mxu0
      %4596 = vmatprep.mubr.f32.mxu0 0.0
      %4597 = vmatmul.mubr.f32.gmra.mrb[0].mxu0 %v4444
      %v4598 = vpop.f32.mrb[0].mxu0
      %v4599 = vadd.f32 %v4362, %v4598
      %v4600 = vpop.f32.mrb[0].mxu0
      %4601 = vmatprep.mubr.f32.mxu0 0.0
      %4602 = vmatmul.mubr.f32.gmra.mrb[0].mxu0 %v4446
      %v4603 = vpop.f32.mrb[0].mxu0
      %v4604 = vadd.f32 %v4362, %v4603
      %v4605 = vpop.f32.mrb[0].mxu0
      %4606 = vmatprep.mubr.f32.mxu0 0.0
      %4607 = vmatmul.mubr.f32.gmra.mrb[0].mxu0 %v4448
      %v4608 = vpop.f32.mrb[0].mxu0
      %v4609 = vadd.f32 %v4362, %v4608
      %v4610 = vpop.f32.mrb[0].mxu0
      %4611 = vmatprep.mubr.f32.mxu0 0.0
      %4612 = vmatmul.mubr.f32.gmra.mrb[0].mxu0 %v4450
      %v4613 = vpop.f32.mrb[0].mxu0
      %v4614 = vadd.f32 %v4362, %v4613
      %v4615 = vpop.f32.mrb[0].mxu0
      %4616 = vmatprep.mubr.f32.mxu0 0.0
      %4617 = vmatmul.mubr.f32.gmra.mrb[0].mxu0 %v4452
      %v4618 = vpop.f32.mrb[0].mxu0
      %v4619 = vadd.f32 %v4362, %v4618
      %v4620 = vpop.f32.mrb[0].mxu0
      %4621 = vmatprep.mubr.f32.mxu0 0.0
      %4622 = vmatmul.mubr.f32.gmra.mrb[0].mxu0 %v4454
      %v4623 = vpop.f32.mrb[0].mxu0
      %v4624 = vadd.f32 %v4362, %v4623
      %v4625 = vpop.f32.mrb[0].mxu0
      %4626 = vmatprep.mubr.f32.mxu0 0.0
      %4627 = vmatmul.mubr.f32.gmra.mrb[0].mxu0 %v4456
      %v4628 = vpop.f32.mrb[0].mxu0
      %v4629 = vadd.f32 %v4362, %v4628
      %v4630 = vpop.f32.mrb[0].mxu0
      %4631 = vmatprep.mubr.f32.mxu0 0.0
      %4632 = vmatmul.mubr.f32.gmra.mrb[0].mxu0 %v4458
      %v4633 = vpop.f32.mrb[0].mxu0
      %v4634 = vadd.f32 %v4362, %v4633
      %v4635 = vpop.f32.mrb[0].mxu0
      %4636 = vmatprep.mubr.f32.mxu0 0.0
      %4637 = vmatmul.mubr.f32.gmra.mrb[0].mxu0 %v4460
      %v4638 = vpop.f32.mrb[0].mxu0
      %v4639 = vadd.f32 %v4362, %v4638
      %v4640 = vpop.f32.mrb[0].mxu0
      %4641 = vmatprep.mubr.f32.mxu0 0.0
      %4642 = vmatmul.mubr.f32.gmra.mrb[0].mxu0 %v4462
      %v4643 = vpop.f32.mrb[0].mxu0
      %v4644 = vadd.f32 %v4362, %v4643
      %v4645 = vpop.f32.mrb[0].mxu0
      %4646 = vmatprep.mubr.f32.mxu0 0.0
      %4647 = vmatmul.mubr.f32.gmra.mrb[0].mxu0 %v4464
      %v4648 = vpop.f32.mrb[0].mxu0
      %v4649 = vadd.f32 %v4362, %v4648
      %v4650 = vpop.f32.mrb[0].mxu0
      %4651 = vmatprep.mubr.f32.mxu0 0.0
      %4652 = vmatmul.mubr.f32.gmra.mrb[0].mxu0 %v4466
      %v4653 = vpop.f32.mrb[0].mxu0
      %v4654 = vadd.f32 %v4362, %v4653
      %v4655 = vpop.f32.mrb[0].mxu0
      %4656 = vmatprep.mubr.f32.mxu0 0.0
      %4657 = vmatmul.mubr.f32.gmra.mrb[0].mxu0 %v4468
      %v4658 = vpop.f32.mrb[0].mxu0
      %v4659 = vadd.f32 %v4362, %v4658
      %v4660 = vpop.f32.mrb[0].mxu0
      %4661 = vmatprep.mubr.f32.mxu0 0.0
      %4662 = vmatmul.mubr.f32.gmra.mrb[0].mxu0 %v4470
      %v4663 = vpop.f32.mrb[0].mxu0
      %v4664 = vadd.f32 %v4362, %v4663
      %v4665 = vpop.f32.mrb[0].mxu0
      %4666 = vmatprep.mubr.f32.mxu0 0.0
      %4667 = vmatmul.mubr.f32.gmra.mrb[0].mxu0 %v4472
      %v4668 = vpop.f32.mrb[0].mxu0
      %v4669 = vadd.f32 %v4362, %v4668
      %v4670 = vpop.f32.mrb[0].mxu0
      %4671 = vmatprep.mubr.f32.mxu0 0.0
      %4672 = vmatmul.mubr.f32.gmra.mrb[0].mxu0 %v4474
      %v4673 = vpop.f32.mrb[0].mxu0
      %v4674 = vadd.f32 %v4362, %v4673
      %v4675 = vpop.f32.mrb[0].mxu0
      %4676 = vmatprep.mubr.f32.mxu0 0.0
      %4677 = vmatmul.mubr.f32.gmra.mrb[0].mxu0 %v4476
      %v4678 = vpop.f32.mrb[0].mxu0
      %v4679 = vadd.f32 %v4362, %v4678
      %v4680 = vpop.f32.mrb[0].mxu0
      %4681 = vmatprep.mubr.f32.mxu0 0.0
      %4682 = vmatmul.mubr.f32.gmra.mrb[0].mxu0 %v4478
      %v4683 = vpop.f32.mrb[0].mxu0
      %v4684 = vadd.f32 %v4362, %v4683
      %v4685 = vpop.f32.mrb[0].mxu0
      %4686 = vmatprep.mubr.f32.mxu0 0.0
      %4687 = vmatmul.mubr.f32.gmra.mrb[0].mxu0 %v4480
      %v4688 = vpop.f32.mrb[0].mxu0
      %v4689 = vadd.f32 %v4362, %v4688
      %v4690 = vpop.f32.mrb[0].mxu0
      %4691 = vmatprep.mubr.f32.mxu0 0.0
      %4692 = vmatmul.mubr.f32.gmra.mrb[0].mxu0 %v4482
      %v4693 = vpop.f32.mrb[0].mxu0
      %v4694 = vadd.f32 %v4362, %v4693
      %v4695 = vpop.f32.mrb[0].mxu0
      %4696 = vmatprep.mubr.f32.mxu0 0.0
      %4697 = vmatmul.mubr.f32.gmra.mrb[0].mxu0 %v4484
      %v4698 = vpop.f32.mrb[0].mxu0
      %v4699 = vadd.f32 %v4362, %v4698
      %v4700 = vpop.f32.mrb[0].mxu0
      %4701 = vmatprep.mubr.f32.mxu0 0.0
      %4702 = vmatmul.mubr.f32.gmra.mrb[0].mxu0 %v4486
      %v4703 = vpop.f32.mrb[0].mxu0
      %v4704 = vadd.f32 %v4362, %v4703
      %v4705 = vpop.f32.mrb[0].mxu0
      %4706 = vmatprep.mubr.f32.mxu0 0.0
      %4707 = vmatmul.mubr.f32.gmra.mrb[0].mxu0 %v4488
      %v4708 = vpop.f32.mrb[0].mxu0
      %v4709 = vadd.f32 %v4362, %v4708
      %v4710 = vpop.f32.mrb[0].mxu0
      %4711 = vmatprep.mubr.f32.mxu0 0.0
      %4712 = vmatmul.mubr.f32.gmra.mrb[0].mxu0 %v4490
      %v4713 = vpop.f32.mrb[0].mxu0
      %v4714 = vadd.f32 %v4362, %v4713
      %v4715 = vpop.f32.mrb[0].mxu0
      %4716 = vdwg.mxu0
      %s4717 = scalar_lea.vmem %s7, 16
      %v4718 = vld [vmem:[%s4717] sm:$0xff]
      %v4719 = vld [vmem:[%s4717 + $0x8] sm:$0xff]
      %v4720 = vlaneseq
      %v4721 = vshrl.u32 %v4720, 7
      %v4722 = vsub.s32 0, %v4721
      %v4723 = vrot.slane %v4718, %v4722
      %4725 = vbcast.lane.b32.xlu0 %v4723, 256
      %v4726 = vpop.permute.xlu0 %4725
      %s4728 = sor.u32 256, 8
      %4729 = vbcast.lane.b32.xlu0 %v4723, %s4728
      %v4730 = vpop.permute.xlu0 %4729
      %v4731 = vlaneseq
      %v4732 = vshrl.u32 %v4731, 7
      %v4733 = vsub.s32 1, %v4732
      %v4734 = vrot.slane %v4718, %v4733
      %4736 = vbcast.lane.b32.xlu0 %v4734, 256
      %v4737 = vpop.permute.xlu0 %4736
      %s4739 = sor.u32 256, 8
      %4740 = vbcast.lane.b32.xlu0 %v4734, %s4739
      %v4741 = vpop.permute.xlu0 %4740
      %v4742 = vlaneseq
      %v4743 = vshrl.u32 %v4742, 7
      %v4744 = vsub.s32 2, %v4743
      %v4745 = vrot.slane %v4718, %v4744
      %4747 = vbcast.lane.b32.xlu0 %v4745, 256
      %v4748 = vpop.permute.xlu0 %4747
      %s4750 = sor.u32 256, 8
      %4751 = vbcast.lane.b32.xlu0 %v4745, %s4750
      %v4752 = vpop.permute.xlu0 %4751
      %v4753 = vlaneseq
      %v4754 = vshrl.u32 %v4753, 7
      %v4755 = vsub.s32 3, %v4754
      %v4756 = vrot.slane %v4718, %v4755
      %4758 = vbcast.lane.b32.xlu0 %v4756, 256
      %v4759 = vpop.permute.xlu0 %4758
      %s4761 = sor.u32 256, 8
      %4762 = vbcast.lane.b32.xlu0 %v4756, %s4761
      %v4763 = vpop.permute.xlu0 %4762
      %v4764 = vlaneseq
      %v4765 = vshrl.u32 %v4764, 7
      %v4766 = vsub.s32 4, %v4765
      %v4767 = vrot.slane %v4718, %v4766
      %4769 = vbcast.lane.b32.xlu0 %v4767, 256
      %v4770 = vpop.permute.xlu0 %4769
      %s4772 = sor.u32 256, 8
      %4773 = vbcast.lane.b32.xlu0 %v4767, %s4772
      %v4774 = vpop.permute.xlu0 %4773
      %v4775 = vlaneseq
      %v4776 = vshrl.u32 %v4775, 7
      %v4777 = vsub.s32 5, %v4776
      %v4778 = vrot.slane %v4718, %v4777
      %4780 = vbcast.lane.b32.xlu0 %v4778, 256
      %v4781 = vpop.permute.xlu0 %4780
      %s4783 = sor.u32 256, 8
      %4784 = vbcast.lane.b32.xlu0 %v4778, %s4783
      %v4785 = vpop.permute.xlu0 %4784
      %v4786 = vlaneseq
      %v4787 = vshrl.u32 %v4786, 7
      %v4788 = vsub.s32 6, %v4787
      %v4789 = vrot.slane %v4718, %v4788
      %4791 = vbcast.lane.b32.xlu0 %v4789, 256
      %v4792 = vpop.permute.xlu0 %4791
      %s4794 = sor.u32 256, 8
      %4795 = vbcast.lane.b32.xlu0 %v4789, %s4794
      %v4796 = vpop.permute.xlu0 %4795
      %v4797 = vlaneseq
      %v4798 = vshrl.u32 %v4797, 7
      %v4799 = vsub.s32 7, %v4798
      %v4800 = vrot.slane %v4718, %v4799
      %4802 = vbcast.lane.b32.xlu0 %v4800, 256
      %v4803 = vpop.permute.xlu0 %4802
      %s4805 = sor.u32 256, 8
      %4806 = vbcast.lane.b32.xlu0 %v4800, %s4805
      %v4807 = vpop.permute.xlu0 %4806
      %v4808 = vlaneseq
      %v4809 = vshrl.u32 %v4808, 7
      %v4810 = vsub.s32 0, %v4809
      %v4811 = vrot.slane %v4719, %v4810
      %4813 = vbcast.lane.b32.xlu0 %v4811, 256
      %v4814 = vpop.permute.xlu0 %4813
      %s4816 = sor.u32 256, 8
      %4817 = vbcast.lane.b32.xlu0 %v4811, %s4816
      %v4818 = vpop.permute.xlu0 %4817
      %v4819 = vlaneseq
      %v4820 = vshrl.u32 %v4819, 7
      %v4821 = vsub.s32 1, %v4820
      %v4822 = vrot.slane %v4719, %v4821
      %4824 = vbcast.lane.b32.xlu0 %v4822, 256
      %v4825 = vpop.permute.xlu0 %4824
      %s4827 = sor.u32 256, 8
      %4828 = vbcast.lane.b32.xlu0 %v4822, %s4827
      %v4829 = vpop.permute.xlu0 %4828
      %v4830 = vlaneseq
      %v4831 = vshrl.u32 %v4830, 7
      %v4832 = vsub.s32 2, %v4831
      %v4833 = vrot.slane %v4719, %v4832
      %4835 = vbcast.lane.b32.xlu0 %v4833, 256
      %v4836 = vpop.permute.xlu0 %4835
      %s4838 = sor.u32 256, 8
      %4839 = vbcast.lane.b32.xlu0 %v4833, %s4838
      %v4840 = vpop.permute.xlu0 %4839
      %v4841 = vlaneseq
      %v4842 = vshrl.u32 %v4841, 7
      %v4843 = vsub.s32 3, %v4842
      %v4844 = vrot.slane %v4719, %v4843
      %4846 = vbcast.lane.b32.xlu0 %v4844, 256
      %v4847 = vpop.permute.xlu0 %4846
      %s4849 = sor.u32 256, 8
      %4850 = vbcast.lane.b32.xlu0 %v4844, %s4849
      %v4851 = vpop.permute.xlu0 %4850
      %v4852 = vlaneseq
      %v4853 = vshrl.u32 %v4852, 7
      %v4854 = vsub.s32 4, %v4853
      %v4855 = vrot.slane %v4719, %v4854
      %4857 = vbcast.lane.b32.xlu0 %v4855, 256
      %v4858 = vpop.permute.xlu0 %4857
      %s4860 = sor.u32 256, 8
      %4861 = vbcast.lane.b32.xlu0 %v4855, %s4860
      %v4862 = vpop.permute.xlu0 %4861
      %v4863 = vlaneseq
      %v4864 = vshrl.u32 %v4863, 7
      %v4865 = vsub.s32 5, %v4864
      %v4866 = vrot.slane %v4719, %v4865
      %4868 = vbcast.lane.b32.xlu0 %v4866, 256
      %v4869 = vpop.permute.xlu0 %4868
      %s4871 = sor.u32 256, 8
      %4872 = vbcast.lane.b32.xlu0 %v4866, %s4871
      %v4873 = vpop.permute.xlu0 %4872
      %v4874 = vlaneseq
      %v4875 = vshrl.u32 %v4874, 7
      %v4876 = vsub.s32 6, %v4875
      %v4877 = vrot.slane %v4719, %v4876
      %4879 = vbcast.lane.b32.xlu0 %v4877, 256
      %v4880 = vpop.permute.xlu0 %4879
      %s4882 = sor.u32 256, 8
      %4883 = vbcast.lane.b32.xlu0 %v4877, %s4882
      %v4884 = vpop.permute.xlu0 %4883
      %v4885 = vlaneseq
      %v4886 = vshrl.u32 %v4885, 7
      %v4887 = vsub.s32 7, %v4886
      %v4888 = vrot.slane %v4719, %v4887
      %4890 = vbcast.lane.b32.xlu0 %v4888, 256
      %v4891 = vpop.permute.xlu0 %4890
      %s4893 = sor.u32 256, 8
      %4894 = vbcast.lane.b32.xlu0 %v4888, %s4893
      %v4895 = vpop.permute.xlu0 %4894
      %v4896 = vadd.f32 %v4559, %v4726
      %v4897 = vadd.f32 %v4564, %v4730
      %v4898 = vadd.f32 %v4569, %v4737
      %v4899 = vadd.f32 %v4574, %v4741
      %v4900 = vadd.f32 %v4579, %v4748
      %v4901 = vadd.f32 %v4584, %v4752
      %v4902 = vadd.f32 %v4589, %v4759
      %v4903 = vadd.f32 %v4594, %v4763
      %v4904 = vadd.f32 %v4599, %v4770
      %v4905 = vadd.f32 %v4604, %v4774
      %v4906 = vadd.f32 %v4609, %v4781
      %v4907 = vadd.f32 %v4614, %v4785
      %v4908 = vadd.f32 %v4619, %v4792
      %v4909 = vadd.f32 %v4624, %v4796
      %v4910 = vadd.f32 %v4629, %v4803
      %v4911 = vadd.f32 %v4634, %v4807
      %v4912 = vadd.f32 %v4639, %v4814
      %v4913 = vadd.f32 %v4644, %v4818
      %v4914 = vadd.f32 %v4649, %v4825
      %v4915 = vadd.f32 %v4654, %v4829
      %v4916 = vadd.f32 %v4659, %v4836
      %v4917 = vadd.f32 %v4664, %v4840
      %v4918 = vadd.f32 %v4669, %v4847
      %v4919 = vadd.f32 %v4674, %v4851
      %v4920 = vadd.f32 %v4679, %v4858
      %v4921 = vadd.f32 %v4684, %v4862
      %v4922 = vadd.f32 %v4689, %v4869
      %v4923 = vadd.f32 %v4694, %v4873
      %v4924 = vadd.f32 %v4699, %v4880
      %v4925 = vadd.f32 %v4704, %v4884
      %v4926 = vadd.f32 %v4709, %v4891
      %v4927 = vadd.f32 %v4714, %v4895
      %4930 = vrot.lane.b32.xlu0 %v4896, 32
      %v4931 = vpop.permute.xlu0 %4930
      %4932 = vrot.lane.b32.xlu0 %v4897, 32
      %v4933 = vpop.permute.xlu0 %4932
      %v4936 = vmul.f32 %v1797, %v4931
      %v4937 = vmul.f32 %v1797, %v4933
      %v4938 = vmul.f32 %v1801, %v4931
      %v4939 = vmul.f32 %v1801, %v4933
      %v4940 = vmul.f32 %v1805, %v4931
      %v4941 = vmul.f32 %v1805, %v4933
      %v4942 = vmul.f32 %v1809, %v4931
      %v4943 = vmul.f32 %v1809, %v4933
      %v4944 = vmul.f32 %v1813, %v4931
      %v4945 = vmul.f32 %v1813, %v4933
      %v4946 = vmul.f32 %v1817, %v4931
      %v4947 = vmul.f32 %v1817, %v4933
      %v4948 = vmul.f32 %v1821, %v4931
      %v4949 = vmul.f32 %v1821, %v4933
      %v4950 = vmul.f32 %v1825, %v4931
      %v4951 = vmul.f32 %v1825, %v4933
      %v4952 = vmul.f32 %v1829, %v4931
      %v4953 = vmul.f32 %v1829, %v4933
      %v4954 = vmul.f32 %v1833, %v4931
      %v4955 = vmul.f32 %v1833, %v4933
      %v4956 = vmul.f32 %v1837, %v4931
      %v4957 = vmul.f32 %v1837, %v4933
      %v4958 = vmul.f32 %v1841, %v4931
      %v4959 = vmul.f32 %v1841, %v4933
      %v4960 = vmul.f32 %v1845, %v4931
      %v4961 = vmul.f32 %v1845, %v4933
      %v4962 = vmul.f32 %v1849, %v4931
      %v4963 = vmul.f32 %v1849, %v4933
      %v4964 = vmul.f32 %v1853, %v4931
      %v4965 = vmul.f32 %v1853, %v4933
      %v4966 = vmul.f32 %v1857, %v4931
      %v4967 = vmul.f32 %v1857, %v4933
      %v4968 = vmul.f32 %v1861, %v4931
      %v4969 = vmul.f32 %v1861, %v4933
      %v4970 = vmul.f32 %v1865, %v4931
      %v4971 = vmul.f32 %v1865, %v4933
      %v4972 = vmul.f32 %v1869, %v4931
      %v4973 = vmul.f32 %v1869, %v4933
      %v4974 = vmul.f32 %v1873, %v4931
      %v4975 = vmul.f32 %v1873, %v4933
      %5016 = vrot.lane.b32.xlu0 %v4936, 96
      %v5017 = vpop.permute.xlu0 %5016
      %5018 = vrot.lane.b32.xlu0 %v4937, 96
      %v5019 = vpop.permute.xlu0 %5018
      %5020 = vrot.lane.b32.xlu0 %v4938, 96
      %v5021 = vpop.permute.xlu0 %5020
      %5022 = vrot.lane.b32.xlu0 %v4939, 96
      %v5023 = vpop.permute.xlu0 %5022
      %5024 = vrot.lane.b32.xlu0 %v4940, 96
      %v5025 = vpop.permute.xlu0 %5024
      %5026 = vrot.lane.b32.xlu0 %v4941, 96
      %v5027 = vpop.permute.xlu0 %5026
      %5028 = vrot.lane.b32.xlu0 %v4942, 96
      %v5029 = vpop.permute.xlu0 %5028
      %5030 = vrot.lane.b32.xlu0 %v4943, 96
      %v5031 = vpop.permute.xlu0 %5030
      %5032 = vrot.lane.b32.xlu0 %v4944, 96
      %v5033 = vpop.permute.xlu0 %5032
      %5034 = vrot.lane.b32.xlu0 %v4945, 96
      %v5035 = vpop.permute.xlu0 %5034
      %5036 = vrot.lane.b32.xlu0 %v4946, 96
      %v5037 = vpop.permute.xlu0 %5036
      %5038 = vrot.lane.b32.xlu0 %v4947, 96
      %v5039 = vpop.permute.xlu0 %5038
      %5040 = vrot.lane.b32.xlu0 %v4948, 96
      %v5041 = vpop.permute.xlu0 %5040
      %5042 = vrot.lane.b32.xlu0 %v4949, 96
      %v5043 = vpop.permute.xlu0 %5042
      %5044 = vrot.lane.b32.xlu0 %v4950, 96
      %v5045 = vpop.permute.xlu0 %5044
      %5046 = vrot.lane.b32.xlu0 %v4951, 96
      %v5047 = vpop.permute.xlu0 %5046
      %5048 = vrot.lane.b32.xlu0 %v4952, 96
      %v5049 = vpop.permute.xlu0 %5048
      %5050 = vrot.lane.b32.xlu0 %v4953, 96
      %v5051 = vpop.permute.xlu0 %5050
      %5052 = vrot.lane.b32.xlu0 %v4954, 96
      %v5053 = vpop.permute.xlu0 %5052
      %5054 = vrot.lane.b32.xlu0 %v4955, 96
      %v5055 = vpop.permute.xlu0 %5054
      %5056 = vrot.lane.b32.xlu0 %v4956, 96
      %v5057 = vpop.permute.xlu0 %5056
      %5058 = vrot.lane.b32.xlu0 %v4957, 96
      %v5059 = vpop.permute.xlu0 %5058
      %5060 = vrot.lane.b32.xlu0 %v4958, 96
      %v5061 = vpop.permute.xlu0 %5060
      %5062 = vrot.lane.b32.xlu0 %v4959, 96
      %v5063 = vpop.permute.xlu0 %5062
      %5064 = vrot.lane.b32.xlu0 %v4960, 96
      %v5065 = vpop.permute.xlu0 %5064
      %5066 = vrot.lane.b32.xlu0 %v4961, 96
      %v5067 = vpop.permute.xlu0 %5066
      %5068 = vrot.lane.b32.xlu0 %v4962, 96
      %v5069 = vpop.permute.xlu0 %5068
      %5070 = vrot.lane.b32.xlu0 %v4963, 96
      %v5071 = vpop.permute.xlu0 %5070
      %5072 = vrot.lane.b32.xlu0 %v4964, 96
      %v5073 = vpop.permute.xlu0 %5072
      %5074 = vrot.lane.b32.xlu0 %v4965, 96
      %v5075 = vpop.permute.xlu0 %5074
      %5076 = vrot.lane.b32.xlu0 %v4966, 96
      %v5077 = vpop.permute.xlu0 %5076
      %5078 = vrot.lane.b32.xlu0 %v4967, 96
      %v5079 = vpop.permute.xlu0 %5078
      %5080 = vrot.lane.b32.xlu0 %v4968, 96
      %v5081 = vpop.permute.xlu0 %5080
      %5082 = vrot.lane.b32.xlu0 %v4969, 96
      %v5083 = vpop.permute.xlu0 %5082
      %5084 = vrot.lane.b32.xlu0 %v4970, 96
      %v5085 = vpop.permute.xlu0 %5084
      %5086 = vrot.lane.b32.xlu0 %v4971, 96
      %v5087 = vpop.permute.xlu0 %5086
      %5088 = vrot.lane.b32.xlu0 %v4972, 96
      %v5089 = vpop.permute.xlu0 %5088
      %5090 = vrot.lane.b32.xlu0 %v4973, 96
      %v5091 = vpop.permute.xlu0 %5090
      %5092 = vrot.lane.b32.xlu0 %v4974, 96
      %v5093 = vpop.permute.xlu0 %5092
      %5094 = vrot.lane.b32.xlu0 %v4975, 96
      %v5095 = vpop.permute.xlu0 %5094
      %v5136 = vadd.f32 %v4314, %v5017
      %v5137 = vadd.f32 %v4315, %v5019
      %v5138 = vadd.f32 %v4316, %v5021
      %v5139 = vadd.f32 %v4317, %v5023
      %v5140 = vadd.f32 %v4318, %v5025
      %v5141 = vadd.f32 %v4319, %v5027
      %v5142 = vadd.f32 %v4320, %v5029
      %v5143 = vadd.f32 %v4321, %v5031
      %v5144 = vadd.f32 %v4322, %v5033
      %v5145 = vadd.f32 %v4323, %v5035
      %v5146 = vadd.f32 %v4324, %v5037
      %v5147 = vadd.f32 %v4325, %v5039
      %v5148 = vadd.f32 %v4326, %v5041
      %v5149 = vadd.f32 %v4327, %v5043
      %v5150 = vadd.f32 %v4328, %v5045
      %v5151 = vadd.f32 %v4329, %v5047
      %v5152 = vadd.f32 %v4330, %v5049
      %v5153 = vadd.f32 %v4331, %v5051
      %v5154 = vadd.f32 %v4332, %v5053
      %v5155 = vadd.f32 %v4333, %v5055
      %v5156 = vadd.f32 %v4334, %v5057
      %v5157 = vadd.f32 %v4335, %v5059
      %v5158 = vadd.f32 %v4336, %v5061
      %v5159 = vadd.f32 %v4337, %v5063
      %v5160 = vadd.f32 %v4338, %v5065
      %v5161 = vadd.f32 %v4339, %v5067
      %v5162 = vadd.f32 %v4340, %v5069
      %v5163 = vadd.f32 %v4341, %v5071
      %v5164 = vadd.f32 %v4342, %v5073
      %v5165 = vadd.f32 %v4343, %v5075
      %v5166 = vadd.f32 %v4344, %v5077
      %v5167 = vadd.f32 %v4345, %v5079
      %v5168 = vadd.f32 %v4346, %v5081
      %v5169 = vadd.f32 %v4347, %v5083
      %v5170 = vadd.f32 %v4348, %v5085
      %v5171 = vadd.f32 %v4349, %v5087
      %v5172 = vadd.f32 %v4350, %v5089
      %v5173 = vadd.f32 %v4351, %v5091
      %v5174 = vadd.f32 %v4352, %v5093
      %v5175 = vadd.f32 %v4353, %v5095
      %5178 = vrot.lane.b32.xlu0 %v4898, 32
      %v5179 = vpop.permute.xlu0 %5178
      %5180 = vrot.lane.b32.xlu0 %v4899, 32
      %v5181 = vpop.permute.xlu0 %5180
      %v5184 = vmul.f32 %v1957, %v5179
      %v5185 = vmul.f32 %v1957, %v5181
      %v5186 = vmul.f32 %v1961, %v5179
      %v5187 = vmul.f32 %v1961, %v5181
      %v5188 = vmul.f32 %v1965, %v5179
      %v5189 = vmul.f32 %v1965, %v5181
      %v5190 = vmul.f32 %v1969, %v5179
      %v5191 = vmul.f32 %v1969, %v5181
      %v5192 = vmul.f32 %v1973, %v5179
      %v5193 = vmul.f32 %v1973, %v5181
      %v5194 = vmul.f32 %v1977, %v5179
      %v5195 = vmul.f32 %v1977, %v5181
      %v5196 = vmul.f32 %v1981, %v5179
      %v5197 = vmul.f32 %v1981, %v5181
      %v5198 = vmul.f32 %v1985, %v5179
      %v5199 = vmul.f32 %v1985, %v5181
      %v5200 = vmul.f32 %v1989, %v5179
      %v5201 = vmul.f32 %v1989, %v5181
      %v5202 = vmul.f32 %v1993, %v5179
      %v5203 = vmul.f32 %v1993, %v5181
      %v5204 = vmul.f32 %v1997, %v5179
      %v5205 = vmul.f32 %v1997, %v5181
      %v5206 = vmul.f32 %v2001, %v5179
      %v5207 = vmul.f32 %v2001, %v5181
      %v5208 = vmul.f32 %v2005, %v5179
      %v5209 = vmul.f32 %v2005, %v5181
      %v5210 = vmul.f32 %v2009, %v5179
      %v5211 = vmul.f32 %v2009, %v5181
      %v5212 = vmul.f32 %v2013, %v5179
      %v5213 = vmul.f32 %v2013, %v5181
      %v5214 = vmul.f32 %v2017, %v5179
      %v5215 = vmul.f32 %v2017, %v5181
      %v5216 = vmul.f32 %v2021, %v5179
      %v5217 = vmul.f32 %v2021, %v5181
      %v5218 = vmul.f32 %v2025, %v5179
      %v5219 = vmul.f32 %v2025, %v5181
      %v5220 = vmul.f32 %v2029, %v5179
      %v5221 = vmul.f32 %v2029, %v5181
      %v5222 = vmul.f32 %v2033, %v5179
      %v5223 = vmul.f32 %v2033, %v5181
      %5264 = vrot.lane.b32.xlu0 %v5184, 96
      %v5265 = vpop.permute.xlu0 %5264
      %5266 = vrot.lane.b32.xlu0 %v5185, 96
      %v5267 = vpop.permute.xlu0 %5266
      %5268 = vrot.lane.b32.xlu0 %v5186, 96
      %v5269 = vpop.permute.xlu0 %5268
      %5270 = vrot.lane.b32.xlu0 %v5187, 96
      %v5271 = vpop.permute.xlu0 %5270
      %5272 = vrot.lane.b32.xlu0 %v5188, 96
      %v5273 = vpop.permute.xlu0 %5272
      %5274 = vrot.lane.b32.xlu0 %v5189, 96
      %v5275 = vpop.permute.xlu0 %5274
      %5276 = vrot.lane.b32.xlu0 %v5190, 96
      %v5277 = vpop.permute.xlu0 %5276
      %5278 = vrot.lane.b32.xlu0 %v5191, 96
      %v5279 = vpop.permute.xlu0 %5278
      %5280 = vrot.lane.b32.xlu0 %v5192, 96
      %v5281 = vpop.permute.xlu0 %5280
      %5282 = vrot.lane.b32.xlu0 %v5193, 96
      %v5283 = vpop.permute.xlu0 %5282
      %5284 = vrot.lane.b32.xlu0 %v5194, 96
      %v5285 = vpop.permute.xlu0 %5284
      %5286 = vrot.lane.b32.xlu0 %v5195, 96
      %v5287 = vpop.permute.xlu0 %5286
      %5288 = vrot.lane.b32.xlu0 %v5196, 96
      %v5289 = vpop.permute.xlu0 %5288
      %5290 = vrot.lane.b32.xlu0 %v5197, 96
      %v5291 = vpop.permute.xlu0 %5290
      %5292 = vrot.lane.b32.xlu0 %v5198, 96
      %v5293 = vpop.permute.xlu0 %5292
      %5294 = vrot.lane.b32.xlu0 %v5199, 96
      %v5295 = vpop.permute.xlu0 %5294
      %5296 = vrot.lane.b32.xlu0 %v5200, 96
      %v5297 = vpop.permute.xlu0 %5296
      %5298 = vrot.lane.b32.xlu0 %v5201, 96
      %v5299 = vpop.permute.xlu0 %5298
      %5300 = vrot.lane.b32.xlu0 %v5202, 96
      %v5301 = vpop.permute.xlu0 %5300
      %5302 = vrot.lane.b32.xlu0 %v5203, 96
      %v5303 = vpop.permute.xlu0 %5302
      %5304 = vrot.lane.b32.xlu0 %v5204, 96
      %v5305 = vpop.permute.xlu0 %5304
      %5306 = vrot.lane.b32.xlu0 %v5205, 96
      %v5307 = vpop.permute.xlu0 %5306
      %5308 = vrot.lane.b32.xlu0 %v5206, 96
      %v5309 = vpop.permute.xlu0 %5308
      %5310 = vrot.lane.b32.xlu0 %v5207, 96
      %v5311 = vpop.permute.xlu0 %5310
      %5312 = vrot.lane.b32.xlu0 %v5208, 96
      %v5313 = vpop.permute.xlu0 %5312
      %5314 = vrot.lane.b32.xlu0 %v5209, 96
      %v5315 = vpop.permute.xlu0 %5314
      %5316 = vrot.lane.b32.xlu0 %v5210, 96
      %v5317 = vpop.permute.xlu0 %5316
      %5318 = vrot.lane.b32.xlu0 %v5211, 96
      %v5319 = vpop.permute.xlu0 %5318
      %5320 = vrot.lane.b32.xlu0 %v5212, 96
      %v5321 = vpop.permute.xlu0 %5320
      %5322 = vrot.lane.b32.xlu0 %v5213, 96
      %v5323 = vpop.permute.xlu0 %5322
      %5324 = vrot.lane.b32.xlu0 %v5214, 96
      %v5325 = vpop.permute.xlu0 %5324
      %5326 = vrot.lane.b32.xlu0 %v5215, 96
      %v5327 = vpop.permute.xlu0 %5326
      %5328 = vrot.lane.b32.xlu0 %v5216, 96
      %v5329 = vpop.permute.xlu0 %5328
      %5330 = vrot.lane.b32.xlu0 %v5217, 96
      %v5331 = vpop.permute.xlu0 %5330
      %5332 = vrot.lane.b32.xlu0 %v5218, 96
      %v5333 = vpop.permute.xlu0 %5332
      %5334 = vrot.lane.b32.xlu0 %v5219, 96
      %v5335 = vpop.permute.xlu0 %5334
      %5336 = vrot.lane.b32.xlu0 %v5220, 96
      %v5337 = vpop.permute.xlu0 %5336
      %5338 = vrot.lane.b32.xlu0 %v5221, 96
      %v5339 = vpop.permute.xlu0 %5338
      %5340 = vrot.lane.b32.xlu0 %v5222, 96
      %v5341 = vpop.permute.xlu0 %5340
      %5342 = vrot.lane.b32.xlu0 %v5223, 96
      %v5343 = vpop.permute.xlu0 %5342
      %v5384 = vadd.f32 %v5136, %v5265
      %v5385 = vadd.f32 %v5137, %v5267
      %v5386 = vadd.f32 %v5138, %v5269
      %v5387 = vadd.f32 %v5139, %v5271
      %v5388 = vadd.f32 %v5140, %v5273
      %v5389 = vadd.f32 %v5141, %v5275
      %v5390 = vadd.f32 %v5142, %v5277
      %v5391 = vadd.f32 %v5143, %v5279
      %v5392 = vadd.f32 %v5144, %v5281
      %v5393 = vadd.f32 %v5145, %v5283
      %v5394 = vadd.f32 %v5146, %v5285
      %v5395 = vadd.f32 %v5147, %v5287
      %v5396 = vadd.f32 %v5148, %v5289
      %v5397 = vadd.f32 %v5149, %v5291
      %v5398 = vadd.f32 %v5150, %v5293
      %v5399 = vadd.f32 %v5151, %v5295
      %v5400 = vadd.f32 %v5152, %v5297
      %v5401 = vadd.f32 %v5153, %v5299
      %v5402 = vadd.f32 %v5154, %v5301
      %v5403 = vadd.f32 %v5155, %v5303
      %v5404 = vadd.f32 %v5156, %v5305
      %v5405 = vadd.f32 %v5157, %v5307
      %v5406 = vadd.f32 %v5158, %v5309
      %v5407 = vadd.f32 %v5159, %v5311
      %v5408 = vadd.f32 %v5160, %v5313
      %v5409 = vadd.f32 %v5161, %v5315
      %v5410 = vadd.f32 %v5162, %v5317
      %v5411 = vadd.f32 %v5163, %v5319
      %v5412 = vadd.f32 %v5164, %v5321
      %v5413 = vadd.f32 %v5165, %v5323
      %v5414 = vadd.f32 %v5166, %v5325
      %v5415 = vadd.f32 %v5167, %v5327
      %v5416 = vadd.f32 %v5168, %v5329
      %v5417 = vadd.f32 %v5169, %v5331
      %v5418 = vadd.f32 %v5170, %v5333
      %v5419 = vadd.f32 %v5171, %v5335
      %v5420 = vadd.f32 %v5172, %v5337
      %v5421 = vadd.f32 %v5173, %v5339
      %v5422 = vadd.f32 %v5174, %v5341
      %v5423 = vadd.f32 %v5175, %v5343
      %5426 = vrot.lane.b32.xlu0 %v4900, 32
      %v5427 = vpop.permute.xlu0 %5426
      %5428 = vrot.lane.b32.xlu0 %v4901, 32
      %v5429 = vpop.permute.xlu0 %5428
      %v5432 = vmul.f32 %v2117, %v5427
      %v5433 = vmul.f32 %v2117, %v5429
      %v5434 = vmul.f32 %v2121, %v5427
      %v5435 = vmul.f32 %v2121, %v5429
      %v5436 = vmul.f32 %v2125, %v5427
      %v5437 = vmul.f32 %v2125, %v5429
      %v5438 = vmul.f32 %v2129, %v5427
      %v5439 = vmul.f32 %v2129, %v5429
      %v5440 = vmul.f32 %v2133, %v5427
      %v5441 = vmul.f32 %v2133, %v5429
      %v5442 = vmul.f32 %v2137, %v5427
      %v5443 = vmul.f32 %v2137, %v5429
      %v5444 = vmul.f32 %v2141, %v5427
      %v5445 = vmul.f32 %v2141, %v5429
      %v5446 = vmul.f32 %v2145, %v5427
      %v5447 = vmul.f32 %v2145, %v5429
      %v5448 = vmul.f32 %v2149, %v5427
      %v5449 = vmul.f32 %v2149, %v5429
      %v5450 = vmul.f32 %v2153, %v5427
      %v5451 = vmul.f32 %v2153, %v5429
      %v5452 = vmul.f32 %v2157, %v5427
      %v5453 = vmul.f32 %v2157, %v5429
      %v5454 = vmul.f32 %v2161, %v5427
      %v5455 = vmul.f32 %v2161, %v5429
      %v5456 = vmul.f32 %v2165, %v5427
      %v5457 = vmul.f32 %v2165, %v5429
      %v5458 = vmul.f32 %v2169, %v5427
      %v5459 = vmul.f32 %v2169, %v5429
      %v5460 = vmul.f32 %v2173, %v5427
      %v5461 = vmul.f32 %v2173, %v5429
      %v5462 = vmul.f32 %v2177, %v5427
      %v5463 = vmul.f32 %v2177, %v5429
      %v5464 = vmul.f32 %v2181, %v5427
      %v5465 = vmul.f32 %v2181, %v5429
      %v5466 = vmul.f32 %v2185, %v5427
      %v5467 = vmul.f32 %v2185, %v5429
      %v5468 = vmul.f32 %v2189, %v5427
      %v5469 = vmul.f32 %v2189, %v5429
      %v5470 = vmul.f32 %v2193, %v5427
      %v5471 = vmul.f32 %v2193, %v5429
      %5512 = vrot.lane.b32.xlu0 %v5432, 96
      %v5513 = vpop.permute.xlu0 %5512
      %5514 = vrot.lane.b32.xlu0 %v5433, 96
      %v5515 = vpop.permute.xlu0 %5514
      %5516 = vrot.lane.b32.xlu0 %v5434, 96
      %v5517 = vpop.permute.xlu0 %5516
      %5518 = vrot.lane.b32.xlu0 %v5435, 96
      %v5519 = vpop.permute.xlu0 %5518
      %5520 = vrot.lane.b32.xlu0 %v5436, 96
      %v5521 = vpop.permute.xlu0 %5520
      %5522 = vrot.lane.b32.xlu0 %v5437, 96
      %v5523 = vpop.permute.xlu0 %5522
      %5524 = vrot.lane.b32.xlu0 %v5438, 96
      %v5525 = vpop.permute.xlu0 %5524
      %5526 = vrot.lane.b32.xlu0 %v5439, 96
      %v5527 = vpop.permute.xlu0 %5526
      %5528 = vrot.lane.b32.xlu0 %v5440, 96
      %v5529 = vpop.permute.xlu0 %5528
      %5530 = vrot.lane.b32.xlu0 %v5441, 96
      %v5531 = vpop.permute.xlu0 %5530
      %5532 = vrot.lane.b32.xlu0 %v5442, 96
      %v5533 = vpop.permute.xlu0 %5532
      %5534 = vrot.lane.b32.xlu0 %v5443, 96
      %v5535 = vpop.permute.xlu0 %5534
      %5536 = vrot.lane.b32.xlu0 %v5444, 96
      %v5537 = vpop.permute.xlu0 %5536
      %5538 = vrot.lane.b32.xlu0 %v5445, 96
      %v5539 = vpop.permute.xlu0 %5538
      %5540 = vrot.lane.b32.xlu0 %v5446, 96
      %v5541 = vpop.permute.xlu0 %5540
      %5542 = vrot.lane.b32.xlu0 %v5447, 96
      %v5543 = vpop.permute.xlu0 %5542
      %5544 = vrot.lane.b32.xlu0 %v5448, 96
      %v5545 = vpop.permute.xlu0 %5544
      %5546 = vrot.lane.b32.xlu0 %v5449, 96
      %v5547 = vpop.permute.xlu0 %5546
      %5548 = vrot.lane.b32.xlu0 %v5450, 96
      %v5549 = vpop.permute.xlu0 %5548
      %5550 = vrot.lane.b32.xlu0 %v5451, 96
      %v5551 = vpop.permute.xlu0 %5550
      %5552 = vrot.lane.b32.xlu0 %v5452, 96
      %v5553 = vpop.permute.xlu0 %5552
      %5554 = vrot.lane.b32.xlu0 %v5453, 96
      %v5555 = vpop.permute.xlu0 %5554
      %5556 = vrot.lane.b32.xlu0 %v5454, 96
      %v5557 = vpop.permute.xlu0 %5556
      %5558 = vrot.lane.b32.xlu0 %v5455, 96
      %v5559 = vpop.permute.xlu0 %5558
      %5560 = vrot.lane.b32.xlu0 %v5456, 96
      %v5561 = vpop.permute.xlu0 %5560
      %5562 = vrot.lane.b32.xlu0 %v5457, 96
      %v5563 = vpop.permute.xlu0 %5562
      %5564 = vrot.lane.b32.xlu0 %v5458, 96
      %v5565 = vpop.permute.xlu0 %5564
      %5566 = vrot.lane.b32.xlu0 %v5459, 96
      %v5567 = vpop.permute.xlu0 %5566
      %5568 = vrot.lane.b32.xlu0 %v5460, 96
      %v5569 = vpop.permute.xlu0 %5568
      %5570 = vrot.lane.b32.xlu0 %v5461, 96
      %v5571 = vpop.permute.xlu0 %5570
      %5572 = vrot.lane.b32.xlu0 %v5462, 96
      %v5573 = vpop.permute.xlu0 %5572
      %5574 = vrot.lane.b32.xlu0 %v5463, 96
      %v5575 = vpop.permute.xlu0 %5574
      %5576 = vrot.lane.b32.xlu0 %v5464, 96
      %v5577 = vpop.permute.xlu0 %5576
      %5578 = vrot.lane.b32.xlu0 %v5465, 96
      %v5579 = vpop.permute.xlu0 %5578
      %5580 = vrot.lane.b32.xlu0 %v5466, 96
      %v5581 = vpop.permute.xlu0 %5580
      %5582 = vrot.lane.b32.xlu0 %v5467, 96
      %v5583 = vpop.permute.xlu0 %5582
      %5584 = vrot.lane.b32.xlu0 %v5468, 96
      %v5585 = vpop.permute.xlu0 %5584
      %5586 = vrot.lane.b32.xlu0 %v5469, 96
      %v5587 = vpop.permute.xlu0 %5586
      %5588 = vrot.lane.b32.xlu0 %v5470, 96
      %v5589 = vpop.permute.xlu0 %5588
      %5590 = vrot.lane.b32.xlu0 %v5471, 96
      %v5591 = vpop.permute.xlu0 %5590
      %v5632 = vadd.f32 %v5384, %v5513
      %v5633 = vadd.f32 %v5385, %v5515
      %v5634 = vadd.f32 %v5386, %v5517
      %v5635 = vadd.f32 %v5387, %v5519
      %v5636 = vadd.f32 %v5388, %v5521
      %v5637 = vadd.f32 %v5389, %v5523
      %v5638 = vadd.f32 %v5390, %v5525
      %v5639 = vadd.f32 %v5391, %v5527
      %v5640 = vadd.f32 %v5392, %v5529
      %v5641 = vadd.f32 %v5393, %v5531
      %v5642 = vadd.f32 %v5394, %v5533
      %v5643 = vadd.f32 %v5395, %v5535
      %v5644 = vadd.f32 %v5396, %v5537
      %v5645 = vadd.f32 %v5397, %v5539
      %v5646 = vadd.f32 %v5398, %v5541
      %v5647 = vadd.f32 %v5399, %v5543
      %v5648 = vadd.f32 %v5400, %v5545
      %v5649 = vadd.f32 %v5401, %v5547
      %v5650 = vadd.f32 %v5402, %v5549
      %v5651 = vadd.f32 %v5403, %v5551
      %v5652 = vadd.f32 %v5404, %v5553
      %v5653 = vadd.f32 %v5405, %v5555
      %v5654 = vadd.f32 %v5406, %v5557
      %v5655 = vadd.f32 %v5407, %v5559
      %v5656 = vadd.f32 %v5408, %v5561
      %v5657 = vadd.f32 %v5409, %v5563
      %v5658 = vadd.f32 %v5410, %v5565
      %v5659 = vadd.f32 %v5411, %v5567
      %v5660 = vadd.f32 %v5412, %v5569
      %v5661 = vadd.f32 %v5413, %v5571
      %v5662 = vadd.f32 %v5414, %v5573
      %v5663 = vadd.f32 %v5415, %v5575
      %v5664 = vadd.f32 %v5416, %v5577
      %v5665 = vadd.f32 %v5417, %v5579
      %v5666 = vadd.f32 %v5418, %v5581
      %v5667 = vadd.f32 %v5419, %v5583
      %v5668 = vadd.f32 %v5420, %v5585
      %v5669 = vadd.f32 %v5421, %v5587
      %v5670 = vadd.f32 %v5422, %v5589
      %v5671 = vadd.f32 %v5423, %v5591
      %5674 = vrot.lane.b32.xlu0 %v4902, 32
      %v5675 = vpop.permute.xlu0 %5674
      %5676 = vrot.lane.b32.xlu0 %v4903, 32
      %v5677 = vpop.permute.xlu0 %5676
      %v5680 = vmul.f32 %v2277, %v5675
      %v5681 = vmul.f32 %v2277, %v5677
      %v5682 = vmul.f32 %v2281, %v5675
      %v5683 = vmul.f32 %v2281, %v5677
      %v5684 = vmul.f32 %v2285, %v5675
      %v5685 = vmul.f32 %v2285, %v5677
      %v5686 = vmul.f32 %v2289, %v5675
      %v5687 = vmul.f32 %v2289, %v5677
      %v5688 = vmul.f32 %v2293, %v5675
      %v5689 = vmul.f32 %v2293, %v5677
      %v5690 = vmul.f32 %v2297, %v5675
      %v5691 = vmul.f32 %v2297, %v5677
      %v5692 = vmul.f32 %v2301, %v5675
      %v5693 = vmul.f32 %v2301, %v5677
      %v5694 = vmul.f32 %v2305, %v5675
      %v5695 = vmul.f32 %v2305, %v5677
      %v5696 = vmul.f32 %v2309, %v5675
      %v5697 = vmul.f32 %v2309, %v5677
      %v5698 = vmul.f32 %v2313, %v5675
      %v5699 = vmul.f32 %v2313, %v5677
      %v5700 = vmul.f32 %v2317, %v5675
      %v5701 = vmul.f32 %v2317, %v5677
      %v5702 = vmul.f32 %v2321, %v5675
      %v5703 = vmul.f32 %v2321, %v5677
      %v5704 = vmul.f32 %v2325, %v5675
      %v5705 = vmul.f32 %v2325, %v5677
      %v5706 = vmul.f32 %v2329, %v5675
      %v5707 = vmul.f32 %v2329, %v5677
      %v5708 = vmul.f32 %v2333, %v5675
      %v5709 = vmul.f32 %v2333, %v5677
      %v5710 = vmul.f32 %v2337, %v5675
      %v5711 = vmul.f32 %v2337, %v5677
      %v5712 = vmul.f32 %v2341, %v5675
      %v5713 = vmul.f32 %v2341, %v5677
      %v5714 = vmul.f32 %v2345, %v5675
      %v5715 = vmul.f32 %v2345, %v5677
      %v5716 = vmul.f32 %v2349, %v5675
      %v5717 = vmul.f32 %v2349, %v5677
      %v5718 = vmul.f32 %v2353, %v5675
      %v5719 = vmul.f32 %v2353, %v5677
      %5760 = vrot.lane.b32.xlu0 %v5680, 96
      %v5761 = vpop.permute.xlu0 %5760
      %5762 = vrot.lane.b32.xlu0 %v5681, 96
      %v5763 = vpop.permute.xlu0 %5762
      %5764 = vrot.lane.b32.xlu0 %v5682, 96
      %v5765 = vpop.permute.xlu0 %5764
      %5766 = vrot.lane.b32.xlu0 %v5683, 96
      %v5767 = vpop.permute.xlu0 %5766
      %5768 = vrot.lane.b32.xlu0 %v5684, 96
      %v5769 = vpop.permute.xlu0 %5768
      %5770 = vrot.lane.b32.xlu0 %v5685, 96
      %v5771 = vpop.permute.xlu0 %5770
      %5772 = vrot.lane.b32.xlu0 %v5686, 96
      %v5773 = vpop.permute.xlu0 %5772
      %5774 = vrot.lane.b32.xlu0 %v5687, 96
      %v5775 = vpop.permute.xlu0 %5774
      %5776 = vrot.lane.b32.xlu0 %v5688, 96
      %v5777 = vpop.permute.xlu0 %5776
      %5778 = vrot.lane.b32.xlu0 %v5689, 96
      %v5779 = vpop.permute.xlu0 %5778
      %5780 = vrot.lane.b32.xlu0 %v5690, 96
      %v5781 = vpop.permute.xlu0 %5780
      %5782 = vrot.lane.b32.xlu0 %v5691, 96
      %v5783 = vpop.permute.xlu0 %5782
      %5784 = vrot.lane.b32.xlu0 %v5692, 96
      %v5785 = vpop.permute.xlu0 %5784
      %5786 = vrot.lane.b32.xlu0 %v5693, 96
      %v5787 = vpop.permute.xlu0 %5786
      %5788 = vrot.lane.b32.xlu0 %v5694, 96
      %v5789 = vpop.permute.xlu0 %5788
      %5790 = vrot.lane.b32.xlu0 %v5695, 96
      %v5791 = vpop.permute.xlu0 %5790
      %5792 = vrot.lane.b32.xlu0 %v5696, 96
      %v5793 = vpop.permute.xlu0 %5792
      %5794 = vrot.lane.b32.xlu0 %v5697, 96
      %v5795 = vpop.permute.xlu0 %5794
      %5796 = vrot.lane.b32.xlu0 %v5698, 96
      %v5797 = vpop.permute.xlu0 %5796
      %5798 = vrot.lane.b32.xlu0 %v5699, 96
      %v5799 = vpop.permute.xlu0 %5798
      %5800 = vrot.lane.b32.xlu0 %v5700, 96
      %v5801 = vpop.permute.xlu0 %5800
      %5802 = vrot.lane.b32.xlu0 %v5701, 96
      %v5803 = vpop.permute.xlu0 %5802
      %5804 = vrot.lane.b32.xlu0 %v5702, 96
      %v5805 = vpop.permute.xlu0 %5804
      %5806 = vrot.lane.b32.xlu0 %v5703, 96
      %v5807 = vpop.permute.xlu0 %5806
      %5808 = vrot.lane.b32.xlu0 %v5704, 96
      %v5809 = vpop.permute.xlu0 %5808
      %5810 = vrot.lane.b32.xlu0 %v5705, 96
      %v5811 = vpop.permute.xlu0 %5810
      %5812 = vrot.lane.b32.xlu0 %v5706, 96
      %v5813 = vpop.permute.xlu0 %5812
      %5814 = vrot.lane.b32.xlu0 %v5707, 96
      %v5815 = vpop.permute.xlu0 %5814
      %5816 = vrot.lane.b32.xlu0 %v5708, 96
      %v5817 = vpop.permute.xlu0 %5816
      %5818 = vrot.lane.b32.xlu0 %v5709, 96
      %v5819 = vpop.permute.xlu0 %5818
      %5820 = vrot.lane.b32.xlu0 %v5710, 96
      %v5821 = vpop.permute.xlu0 %5820
      %5822 = vrot.lane.b32.xlu0 %v5711, 96
      %v5823 = vpop.permute.xlu0 %5822
      %5824 = vrot.lane.b32.xlu0 %v5712, 96
      %v5825 = vpop.permute.xlu0 %5824
      %5826 = vrot.lane.b32.xlu0 %v5713, 96
      %v5827 = vpop.permute.xlu0 %5826
      %5828 = vrot.lane.b32.xlu0 %v5714, 96
      %v5829 = vpop.permute.xlu0 %5828
      %5830 = vrot.lane.b32.xlu0 %v5715, 96
      %v5831 = vpop.permute.xlu0 %5830
      %5832 = vrot.lane.b32.xlu0 %v5716, 96
      %v5833 = vpop.permute.xlu0 %5832
      %5834 = vrot.lane.b32.xlu0 %v5717, 96
      %v5835 = vpop.permute.xlu0 %5834
      %5836 = vrot.lane.b32.xlu0 %v5718, 96
      %v5837 = vpop.permute.xlu0 %5836
      %5838 = vrot.lane.b32.xlu0 %v5719, 96
      %v5839 = vpop.permute.xlu0 %5838
      %v5880 = vadd.f32 %v5632, %v5761
      %v5881 = vadd.f32 %v5633, %v5763
      %v5882 = vadd.f32 %v5634, %v5765
      %v5883 = vadd.f32 %v5635, %v5767
      %v5884 = vadd.f32 %v5636, %v5769
      %v5885 = vadd.f32 %v5637, %v5771
      %v5886 = vadd.f32 %v5638, %v5773
      %v5887 = vadd.f32 %v5639, %v5775
      %v5888 = vadd.f32 %v5640, %v5777
      %v5889 = vadd.f32 %v5641, %v5779
      %v5890 = vadd.f32 %v5642, %v5781
      %v5891 = vadd.f32 %v5643, %v5783
      %v5892 = vadd.f32 %v5644, %v5785
      %v5893 = vadd.f32 %v5645, %v5787
      %v5894 = vadd.f32 %v5646, %v5789
      %v5895 = vadd.f32 %v5647, %v5791
      %v5896 = vadd.f32 %v5648, %v5793
      %v5897 = vadd.f32 %v5649, %v5795
      %v5898 = vadd.f32 %v5650, %v5797
      %v5899 = vadd.f32 %v5651, %v5799
      %v5900 = vadd.f32 %v5652, %v5801
      %v5901 = vadd.f32 %v5653, %v5803
      %v5902 = vadd.f32 %v5654, %v5805
      %v5903 = vadd.f32 %v5655, %v5807
      %v5904 = vadd.f32 %v5656, %v5809
      %v5905 = vadd.f32 %v5657, %v5811
      %v5906 = vadd.f32 %v5658, %v5813
      %v5907 = vadd.f32 %v5659, %v5815
      %v5908 = vadd.f32 %v5660, %v5817
      %v5909 = vadd.f32 %v5661, %v5819
      %v5910 = vadd.f32 %v5662, %v5821
      %v5911 = vadd.f32 %v5663, %v5823
      %v5912 = vadd.f32 %v5664, %v5825
      %v5913 = vadd.f32 %v5665, %v5827
      %v5914 = vadd.f32 %v5666, %v5829
      %v5915 = vadd.f32 %v5667, %v5831
      %v5916 = vadd.f32 %v5668, %v5833
      %v5917 = vadd.f32 %v5669, %v5835
      %v5918 = vadd.f32 %v5670, %v5837
      %v5919 = vadd.f32 %v5671, %v5839
      %5922 = vrot.lane.b32.xlu0 %v4904, 32
      %v5923 = vpop.permute.xlu0 %5922
      %5924 = vrot.lane.b32.xlu0 %v4905, 32
      %v5925 = vpop.permute.xlu0 %5924
      %v5928 = vmul.f32 %v2437, %v5923
      %v5929 = vmul.f32 %v2437, %v5925
      %v5930 = vmul.f32 %v2441, %v5923
      %v5931 = vmul.f32 %v2441, %v5925
      %v5932 = vmul.f32 %v2445, %v5923
      %v5933 = vmul.f32 %v2445, %v5925
      %v5934 = vmul.f32 %v2449, %v5923
      %v5935 = vmul.f32 %v2449, %v5925
      %v5936 = vmul.f32 %v2453, %v5923
      %v5937 = vmul.f32 %v2453, %v5925
      %v5938 = vmul.f32 %v2457, %v5923
      %v5939 = vmul.f32 %v2457, %v5925
      %v5940 = vmul.f32 %v2461, %v5923
      %v5941 = vmul.f32 %v2461, %v5925
      %v5942 = vmul.f32 %v2465, %v5923
      %v5943 = vmul.f32 %v2465, %v5925
      %v5944 = vmul.f32 %v2469, %v5923
      %v5945 = vmul.f32 %v2469, %v5925
      %v5946 = vmul.f32 %v2473, %v5923
      %v5947 = vmul.f32 %v2473, %v5925
      %v5948 = vmul.f32 %v2477, %v5923
      %v5949 = vmul.f32 %v2477, %v5925
      %v5950 = vmul.f32 %v2481, %v5923
      %v5951 = vmul.f32 %v2481, %v5925
      %v5952 = vmul.f32 %v2485, %v5923
      %v5953 = vmul.f32 %v2485, %v5925
      %v5954 = vmul.f32 %v2489, %v5923
      %v5955 = vmul.f32 %v2489, %v5925
      %v5956 = vmul.f32 %v2493, %v5923
      %v5957 = vmul.f32 %v2493, %v5925
      %v5958 = vmul.f32 %v2497, %v5923
      %v5959 = vmul.f32 %v2497, %v5925
      %v5960 = vmul.f32 %v2501, %v5923
      %v5961 = vmul.f32 %v2501, %v5925
      %v5962 = vmul.f32 %v2505, %v5923
      %v5963 = vmul.f32 %v2505, %v5925
      %v5964 = vmul.f32 %v2509, %v5923
      %v5965 = vmul.f32 %v2509, %v5925
      %v5966 = vmul.f32 %v2513, %v5923
      %v5967 = vmul.f32 %v2513, %v5925
      %6008 = vrot.lane.b32.xlu0 %v5928, 96
      %v6009 = vpop.permute.xlu0 %6008
      %6010 = vrot.lane.b32.xlu0 %v5929, 96
      %v6011 = vpop.permute.xlu0 %6010
      %6012 = vrot.lane.b32.xlu0 %v5930, 96
      %v6013 = vpop.permute.xlu0 %6012
      %6014 = vrot.lane.b32.xlu0 %v5931, 96
      %v6015 = vpop.permute.xlu0 %6014
      %6016 = vrot.lane.b32.xlu0 %v5932, 96
      %v6017 = vpop.permute.xlu0 %6016
      %6018 = vrot.lane.b32.xlu0 %v5933, 96
      %v6019 = vpop.permute.xlu0 %6018
      %6020 = vrot.lane.b32.xlu0 %v5934, 96
      %v6021 = vpop.permute.xlu0 %6020
      %6022 = vrot.lane.b32.xlu0 %v5935, 96
      %v6023 = vpop.permute.xlu0 %6022
      %6024 = vrot.lane.b32.xlu0 %v5936, 96
      %v6025 = vpop.permute.xlu0 %6024
      %6026 = vrot.lane.b32.xlu0 %v5937, 96
      %v6027 = vpop.permute.xlu0 %6026
      %6028 = vrot.lane.b32.xlu0 %v5938, 96
      %v6029 = vpop.permute.xlu0 %6028
      %6030 = vrot.lane.b32.xlu0 %v5939, 96
      %v6031 = vpop.permute.xlu0 %6030
      %6032 = vrot.lane.b32.xlu0 %v5940, 96
      %v6033 = vpop.permute.xlu0 %6032
      %6034 = vrot.lane.b32.xlu0 %v5941, 96
      %v6035 = vpop.permute.xlu0 %6034
      %6036 = vrot.lane.b32.xlu0 %v5942, 96
      %v6037 = vpop.permute.xlu0 %6036
      %6038 = vrot.lane.b32.xlu0 %v5943, 96
      %v6039 = vpop.permute.xlu0 %6038
      %6040 = vrot.lane.b32.xlu0 %v5944, 96
      %v6041 = vpop.permute.xlu0 %6040
      %6042 = vrot.lane.b32.xlu0 %v5945, 96
      %v6043 = vpop.permute.xlu0 %6042
      %6044 = vrot.lane.b32.xlu0 %v5946, 96
      %v6045 = vpop.permute.xlu0 %6044
      %6046 = vrot.lane.b32.xlu0 %v5947, 96
      %v6047 = vpop.permute.xlu0 %6046
      %6048 = vrot.lane.b32.xlu0 %v5948, 96
      %v6049 = vpop.permute.xlu0 %6048
      %6050 = vrot.lane.b32.xlu0 %v5949, 96
      %v6051 = vpop.permute.xlu0 %6050
      %6052 = vrot.lane.b32.xlu0 %v5950, 96
      %v6053 = vpop.permute.xlu0 %6052
      %6054 = vrot.lane.b32.xlu0 %v5951, 96
      %v6055 = vpop.permute.xlu0 %6054
      %6056 = vrot.lane.b32.xlu0 %v5952, 96
      %v6057 = vpop.permute.xlu0 %6056
      %6058 = vrot.lane.b32.xlu0 %v5953, 96
      %v6059 = vpop.permute.xlu0 %6058
      %6060 = vrot.lane.b32.xlu0 %v5954, 96
      %v6061 = vpop.permute.xlu0 %6060
      %6062 = vrot.lane.b32.xlu0 %v5955, 96
      %v6063 = vpop.permute.xlu0 %6062
      %6064 = vrot.lane.b32.xlu0 %v5956, 96
      %v6065 = vpop.permute.xlu0 %6064
      %6066 = vrot.lane.b32.xlu0 %v5957, 96
      %v6067 = vpop.permute.xlu0 %6066
      %6068 = vrot.lane.b32.xlu0 %v5958, 96
      %v6069 = vpop.permute.xlu0 %6068
      %6070 = vrot.lane.b32.xlu0 %v5959, 96
      %v6071 = vpop.permute.xlu0 %6070
      %6072 = vrot.lane.b32.xlu0 %v5960, 96
      %v6073 = vpop.permute.xlu0 %6072
      %6074 = vrot.lane.b32.xlu0 %v5961, 96
      %v6075 = vpop.permute.xlu0 %6074
      %6076 = vrot.lane.b32.xlu0 %v5962, 96
      %v6077 = vpop.permute.xlu0 %6076
      %6078 = vrot.lane.b32.xlu0 %v5963, 96
      %v6079 = vpop.permute.xlu0 %6078
      %6080 = vrot.lane.b32.xlu0 %v5964, 96
      %v6081 = vpop.permute.xlu0 %6080
      %6082 = vrot.lane.b32.xlu0 %v5965, 96
      %v6083 = vpop.permute.xlu0 %6082
      %6084 = vrot.lane.b32.xlu0 %v5966, 96
      %v6085 = vpop.permute.xlu0 %6084
      %6086 = vrot.lane.b32.xlu0 %v5967, 96
      %v6087 = vpop.permute.xlu0 %6086
      %v6128 = vadd.f32 %v5880, %v6009
      %v6129 = vadd.f32 %v5881, %v6011
      %v6130 = vadd.f32 %v5882, %v6013
      %v6131 = vadd.f32 %v5883, %v6015
      %v6132 = vadd.f32 %v5884, %v6017
      %v6133 = vadd.f32 %v5885, %v6019
      %v6134 = vadd.f32 %v5886, %v6021
      %v6135 = vadd.f32 %v5887, %v6023
      %v6136 = vadd.f32 %v5888, %v6025
      %v6137 = vadd.f32 %v5889, %v6027
      %v6138 = vadd.f32 %v5890, %v6029
      %v6139 = vadd.f32 %v5891, %v6031
      %v6140 = vadd.f32 %v5892, %v6033
      %v6141 = vadd.f32 %v5893, %v6035
      %v6142 = vadd.f32 %v5894, %v6037
      %v6143 = vadd.f32 %v5895, %v6039
      %v6144 = vadd.f32 %v5896, %v6041
      %v6145 = vadd.f32 %v5897, %v6043
      %v6146 = vadd.f32 %v5898, %v6045
      %v6147 = vadd.f32 %v5899, %v6047
      %v6148 = vadd.f32 %v5900, %v6049
      %v6149 = vadd.f32 %v5901, %v6051
      %v6150 = vadd.f32 %v5902, %v6053
      %v6151 = vadd.f32 %v5903, %v6055
      %v6152 = vadd.f32 %v5904, %v6057
      %v6153 = vadd.f32 %v5905, %v6059
      %v6154 = vadd.f32 %v5906, %v6061
      %v6155 = vadd.f32 %v5907, %v6063
      %v6156 = vadd.f32 %v5908, %v6065
      %v6157 = vadd.f32 %v5909, %v6067
      %v6158 = vadd.f32 %v5910, %v6069
      %v6159 = vadd.f32 %v5911, %v6071
      %v6160 = vadd.f32 %v5912, %v6073
      %v6161 = vadd.f32 %v5913, %v6075
      %v6162 = vadd.f32 %v5914, %v6077
      %v6163 = vadd.f32 %v5915, %v6079
      %v6164 = vadd.f32 %v5916, %v6081
      %v6165 = vadd.f32 %v5917, %v6083
      %v6166 = vadd.f32 %v5918, %v6085
      %v6167 = vadd.f32 %v5919, %v6087
      %6170 = vrot.lane.b32.xlu0 %v4906, 32
      %v6171 = vpop.permute.xlu0 %6170
      %6172 = vrot.lane.b32.xlu0 %v4907, 32
      %v6173 = vpop.permute.xlu0 %6172
      %v6176 = vmul.f32 %v2597, %v6171
      %v6177 = vmul.f32 %v2597, %v6173
      %v6178 = vmul.f32 %v2601, %v6171
      %v6179 = vmul.f32 %v2601, %v6173
      %v6180 = vmul.f32 %v2605, %v6171
      %v6181 = vmul.f32 %v2605, %v6173
      %v6182 = vmul.f32 %v2609, %v6171
      %v6183 = vmul.f32 %v2609, %v6173
      %v6184 = vmul.f32 %v2613, %v6171
      %v6185 = vmul.f32 %v2613, %v6173
      %v6186 = vmul.f32 %v2617, %v6171
      %v6187 = vmul.f32 %v2617, %v6173
      %v6188 = vmul.f32 %v2621, %v6171
      %v6189 = vmul.f32 %v2621, %v6173
      %v6190 = vmul.f32 %v2625, %v6171
      %v6191 = vmul.f32 %v2625, %v6173
      %v6192 = vmul.f32 %v2629, %v6171
      %v6193 = vmul.f32 %v2629, %v6173
      %v6194 = vmul.f32 %v2633, %v6171
      %v6195 = vmul.f32 %v2633, %v6173
      %v6196 = vmul.f32 %v2637, %v6171
      %v6197 = vmul.f32 %v2637, %v6173
      %v6198 = vmul.f32 %v2641, %v6171
      %v6199 = vmul.f32 %v2641, %v6173
      %v6200 = vmul.f32 %v2645, %v6171
      %v6201 = vmul.f32 %v2645, %v6173
      %v6202 = vmul.f32 %v2649, %v6171
      %v6203 = vmul.f32 %v2649, %v6173
      %v6204 = vmul.f32 %v2653, %v6171
      %v6205 = vmul.f32 %v2653, %v6173
      %v6206 = vmul.f32 %v2657, %v6171
      %v6207 = vmul.f32 %v2657, %v6173
      %v6208 = vmul.f32 %v2661, %v6171
      %v6209 = vmul.f32 %v2661, %v6173
      %v6210 = vmul.f32 %v2665, %v6171
      %v6211 = vmul.f32 %v2665, %v6173
      %v6212 = vmul.f32 %v2669, %v6171
      %v6213 = vmul.f32 %v2669, %v6173
      %v6214 = vmul.f32 %v2673, %v6171
      %v6215 = vmul.f32 %v2673, %v6173
      %6256 = vrot.lane.b32.xlu0 %v6176, 96
      %v6257 = vpop.permute.xlu0 %6256
      %6258 = vrot.lane.b32.xlu0 %v6177, 96
      %v6259 = vpop.permute.xlu0 %6258
      %6260 = vrot.lane.b32.xlu0 %v6178, 96
      %v6261 = vpop.permute.xlu0 %6260
      %6262 = vrot.lane.b32.xlu0 %v6179, 96
      %v6263 = vpop.permute.xlu0 %6262
      %6264 = vrot.lane.b32.xlu0 %v6180, 96
      %v6265 = vpop.permute.xlu0 %6264
      %6266 = vrot.lane.b32.xlu0 %v6181, 96
      %v6267 = vpop.permute.xlu0 %6266
      %6268 = vrot.lane.b32.xlu0 %v6182, 96
      %v6269 = vpop.permute.xlu0 %6268
      %6270 = vrot.lane.b32.xlu0 %v6183, 96
      %v6271 = vpop.permute.xlu0 %6270
      %6272 = vrot.lane.b32.xlu0 %v6184, 96
      %v6273 = vpop.permute.xlu0 %6272
      %6274 = vrot.lane.b32.xlu0 %v6185, 96
      %v6275 = vpop.permute.xlu0 %6274
      %6276 = vrot.lane.b32.xlu0 %v6186, 96
      %v6277 = vpop.permute.xlu0 %6276
      %6278 = vrot.lane.b32.xlu0 %v6187, 96
      %v6279 = vpop.permute.xlu0 %6278
      %6280 = vrot.lane.b32.xlu0 %v6188, 96
      %v6281 = vpop.permute.xlu0 %6280
      %6282 = vrot.lane.b32.xlu0 %v6189, 96
      %v6283 = vpop.permute.xlu0 %6282
      %6284 = vrot.lane.b32.xlu0 %v6190, 96
      %v6285 = vpop.permute.xlu0 %6284
      %6286 = vrot.lane.b32.xlu0 %v6191, 96
      %v6287 = vpop.permute.xlu0 %6286
      %6288 = vrot.lane.b32.xlu0 %v6192, 96
      %v6289 = vpop.permute.xlu0 %6288
      %6290 = vrot.lane.b32.xlu0 %v6193, 96
      %v6291 = vpop.permute.xlu0 %6290
      %6292 = vrot.lane.b32.xlu0 %v6194, 96
      %v6293 = vpop.permute.xlu0 %6292
      %6294 = vrot.lane.b32.xlu0 %v6195, 96
      %v6295 = vpop.permute.xlu0 %6294
      %6296 = vrot.lane.b32.xlu0 %v6196, 96
      %v6297 = vpop.permute.xlu0 %6296
      %6298 = vrot.lane.b32.xlu0 %v6197, 96
      %v6299 = vpop.permute.xlu0 %6298
      %6300 = vrot.lane.b32.xlu0 %v6198, 96
      %v6301 = vpop.permute.xlu0 %6300
      %6302 = vrot.lane.b32.xlu0 %v6199, 96
      %v6303 = vpop.permute.xlu0 %6302
      %6304 = vrot.lane.b32.xlu0 %v6200, 96
      %v6305 = vpop.permute.xlu0 %6304
      %6306 = vrot.lane.b32.xlu0 %v6201, 96
      %v6307 = vpop.permute.xlu0 %6306
      %6308 = vrot.lane.b32.xlu0 %v6202, 96
      %v6309 = vpop.permute.xlu0 %6308
      %6310 = vrot.lane.b32.xlu0 %v6203, 96
      %v6311 = vpop.permute.xlu0 %6310
      %6312 = vrot.lane.b32.xlu0 %v6204, 96
      %v6313 = vpop.permute.xlu0 %6312
      %6314 = vrot.lane.b32.xlu0 %v6205, 96
      %v6315 = vpop.permute.xlu0 %6314
      %6316 = vrot.lane.b32.xlu0 %v6206, 96
      %v6317 = vpop.permute.xlu0 %6316
      %6318 = vrot.lane.b32.xlu0 %v6207, 96
      %v6319 = vpop.permute.xlu0 %6318
      %6320 = vrot.lane.b32.xlu0 %v6208, 96
      %v6321 = vpop.permute.xlu0 %6320
      %6322 = vrot.lane.b32.xlu0 %v6209, 96
      %v6323 = vpop.permute.xlu0 %6322
      %6324 = vrot.lane.b32.xlu0 %v6210, 96
      %v6325 = vpop.permute.xlu0 %6324
      %6326 = vrot.lane.b32.xlu0 %v6211, 96
      %v6327 = vpop.permute.xlu0 %6326
      %6328 = vrot.lane.b32.xlu0 %v6212, 96
      %v6329 = vpop.permute.xlu0 %6328
      %6330 = vrot.lane.b32.xlu0 %v6213, 96
      %v6331 = vpop.permute.xlu0 %6330
      %6332 = vrot.lane.b32.xlu0 %v6214, 96
      %v6333 = vpop.permute.xlu0 %6332
      %6334 = vrot.lane.b32.xlu0 %v6215, 96
      %v6335 = vpop.permute.xlu0 %6334
      %v6376 = vadd.f32 %v6128, %v6257
      %v6377 = vadd.f32 %v6129, %v6259
      %v6378 = vadd.f32 %v6130, %v6261
      %v6379 = vadd.f32 %v6131, %v6263
      %v6380 = vadd.f32 %v6132, %v6265
      %v6381 = vadd.f32 %v6133, %v6267
      %v6382 = vadd.f32 %v6134, %v6269
      %v6383 = vadd.f32 %v6135, %v6271
      %v6384 = vadd.f32 %v6136, %v6273
      %v6385 = vadd.f32 %v6137, %v6275
      %v6386 = vadd.f32 %v6138, %v6277
      %v6387 = vadd.f32 %v6139, %v6279
      %v6388 = vadd.f32 %v6140, %v6281
      %v6389 = vadd.f32 %v6141, %v6283
      %v6390 = vadd.f32 %v6142, %v6285
      %v6391 = vadd.f32 %v6143, %v6287
      %v6392 = vadd.f32 %v6144, %v6289
      %v6393 = vadd.f32 %v6145, %v6291
      %v6394 = vadd.f32 %v6146, %v6293
      %v6395 = vadd.f32 %v6147, %v6295
      %v6396 = vadd.f32 %v6148, %v6297
      %v6397 = vadd.f32 %v6149, %v6299
      %v6398 = vadd.f32 %v6150, %v6301
      %v6399 = vadd.f32 %v6151, %v6303
      %v6400 = vadd.f32 %v6152, %v6305
      %v6401 = vadd.f32 %v6153, %v6307
      %v6402 = vadd.f32 %v6154, %v6309
      %v6403 = vadd.f32 %v6155, %v6311
      %v6404 = vadd.f32 %v6156, %v6313
      %v6405 = vadd.f32 %v6157, %v6315
      %v6406 = vadd.f32 %v6158, %v6317
      %v6407 = vadd.f32 %v6159, %v6319
      %v6408 = vadd.f32 %v6160, %v6321
      %v6409 = vadd.f32 %v6161, %v6323
      %v6410 = vadd.f32 %v6162, %v6325
      %v6411 = vadd.f32 %v6163, %v6327
      %v6412 = vadd.f32 %v6164, %v6329
      %v6413 = vadd.f32 %v6165, %v6331
      %v6414 = vadd.f32 %v6166, %v6333
      %v6415 = vadd.f32 %v6167, %v6335
      %6418 = vrot.lane.b32.xlu0 %v4908, 32
      %v6419 = vpop.permute.xlu0 %6418
      %6420 = vrot.lane.b32.xlu0 %v4909, 32
      %v6421 = vpop.permute.xlu0 %6420
      %v6424 = vmul.f32 %v2757, %v6419
      %v6425 = vmul.f32 %v2757, %v6421
      %v6426 = vmul.f32 %v2761, %v6419
      %v6427 = vmul.f32 %v2761, %v6421
      %v6428 = vmul.f32 %v2765, %v6419
      %v6429 = vmul.f32 %v2765, %v6421
      %v6430 = vmul.f32 %v2769, %v6419
      %v6431 = vmul.f32 %v2769, %v6421
      %v6432 = vmul.f32 %v2773, %v6419
      %v6433 = vmul.f32 %v2773, %v6421
      %v6434 = vmul.f32 %v2777, %v6419
      %v6435 = vmul.f32 %v2777, %v6421
      %v6436 = vmul.f32 %v2781, %v6419
      %v6437 = vmul.f32 %v2781, %v6421
      %v6438 = vmul.f32 %v2785, %v6419
      %v6439 = vmul.f32 %v2785, %v6421
      %v6440 = vmul.f32 %v2789, %v6419
      %v6441 = vmul.f32 %v2789, %v6421
      %v6442 = vmul.f32 %v2793, %v6419
      %v6443 = vmul.f32 %v2793, %v6421
      %v6444 = vmul.f32 %v2797, %v6419
      %v6445 = vmul.f32 %v2797, %v6421
      %v6446 = vmul.f32 %v2801, %v6419
      %v6447 = vmul.f32 %v2801, %v6421
      %v6448 = vmul.f32 %v2805, %v6419
      %v6449 = vmul.f32 %v2805, %v6421
      %v6450 = vmul.f32 %v2809, %v6419
      %v6451 = vmul.f32 %v2809, %v6421
      %v6452 = vmul.f32 %v2813, %v6419
      %v6453 = vmul.f32 %v2813, %v6421
      %v6454 = vmul.f32 %v2817, %v6419
      %v6455 = vmul.f32 %v2817, %v6421
      %v6456 = vmul.f32 %v2821, %v6419
      %v6457 = vmul.f32 %v2821, %v6421
      %v6458 = vmul.f32 %v2825, %v6419
      %v6459 = vmul.f32 %v2825, %v6421
      %v6460 = vmul.f32 %v2829, %v6419
      %v6461 = vmul.f32 %v2829, %v6421
      %v6462 = vmul.f32 %v2833, %v6419
      %v6463 = vmul.f32 %v2833, %v6421
      %6504 = vrot.lane.b32.xlu0 %v6424, 96
      %v6505 = vpop.permute.xlu0 %6504
      %6506 = vrot.lane.b32.xlu0 %v6425, 96
      %v6507 = vpop.permute.xlu0 %6506
      %6508 = vrot.lane.b32.xlu0 %v6426, 96
      %v6509 = vpop.permute.xlu0 %6508
      %6510 = vrot.lane.b32.xlu0 %v6427, 96
      %v6511 = vpop.permute.xlu0 %6510
      %6512 = vrot.lane.b32.xlu0 %v6428, 96
      %v6513 = vpop.permute.xlu0 %6512
      %6514 = vrot.lane.b32.xlu0 %v6429, 96
      %v6515 = vpop.permute.xlu0 %6514
      %6516 = vrot.lane.b32.xlu0 %v6430, 96
      %v6517 = vpop.permute.xlu0 %6516
      %6518 = vrot.lane.b32.xlu0 %v6431, 96
      %v6519 = vpop.permute.xlu0 %6518
      %6520 = vrot.lane.b32.xlu0 %v6432, 96
      %v6521 = vpop.permute.xlu0 %6520
      %6522 = vrot.lane.b32.xlu0 %v6433, 96
      %v6523 = vpop.permute.xlu0 %6522
      %6524 = vrot.lane.b32.xlu0 %v6434, 96
      %v6525 = vpop.permute.xlu0 %6524
      %6526 = vrot.lane.b32.xlu0 %v6435, 96
      %v6527 = vpop.permute.xlu0 %6526
      %6528 = vrot.lane.b32.xlu0 %v6436, 96
      %v6529 = vpop.permute.xlu0 %6528
      %6530 = vrot.lane.b32.xlu0 %v6437, 96
      %v6531 = vpop.permute.xlu0 %6530
      %6532 = vrot.lane.b32.xlu0 %v6438, 96
      %v6533 = vpop.permute.xlu0 %6532
      %6534 = vrot.lane.b32.xlu0 %v6439, 96
      %v6535 = vpop.permute.xlu0 %6534
      %6536 = vrot.lane.b32.xlu0 %v6440, 96
      %v6537 = vpop.permute.xlu0 %6536
      %6538 = vrot.lane.b32.xlu0 %v6441, 96
      %v6539 = vpop.permute.xlu0 %6538
      %6540 = vrot.lane.b32.xlu0 %v6442, 96
      %v6541 = vpop.permute.xlu0 %6540
      %6542 = vrot.lane.b32.xlu0 %v6443, 96
      %v6543 = vpop.permute.xlu0 %6542
      %6544 = vrot.lane.b32.xlu0 %v6444, 96
      %v6545 = vpop.permute.xlu0 %6544
      %6546 = vrot.lane.b32.xlu0 %v6445, 96
      %v6547 = vpop.permute.xlu0 %6546
      %6548 = vrot.lane.b32.xlu0 %v6446, 96
      %v6549 = vpop.permute.xlu0 %6548
      %6550 = vrot.lane.b32.xlu0 %v6447, 96
      %v6551 = vpop.permute.xlu0 %6550
      %6552 = vrot.lane.b32.xlu0 %v6448, 96
      %v6553 = vpop.permute.xlu0 %6552
      %6554 = vrot.lane.b32.xlu0 %v6449, 96
      %v6555 = vpop.permute.xlu0 %6554
      %6556 = vrot.lane.b32.xlu0 %v6450, 96
      %v6557 = vpop.permute.xlu0 %6556
      %6558 = vrot.lane.b32.xlu0 %v6451, 96
      %v6559 = vpop.permute.xlu0 %6558
      %6560 = vrot.lane.b32.xlu0 %v6452, 96
      %v6561 = vpop.permute.xlu0 %6560
      %6562 = vrot.lane.b32.xlu0 %v6453, 96
      %v6563 = vpop.permute.xlu0 %6562
      %6564 = vrot.lane.b32.xlu0 %v6454, 96
      %v6565 = vpop.permute.xlu0 %6564
      %6566 = vrot.lane.b32.xlu0 %v6455, 96
      %v6567 = vpop.permute.xlu0 %6566
      %6568 = vrot.lane.b32.xlu0 %v6456, 96
      %v6569 = vpop.permute.xlu0 %6568
      %6570 = vrot.lane.b32.xlu0 %v6457, 96
      %v6571 = vpop.permute.xlu0 %6570
      %6572 = vrot.lane.b32.xlu0 %v6458, 96
      %v6573 = vpop.permute.xlu0 %6572
      %6574 = vrot.lane.b32.xlu0 %v6459, 96
      %v6575 = vpop.permute.xlu0 %6574
      %6576 = vrot.lane.b32.xlu0 %v6460, 96
      %v6577 = vpop.permute.xlu0 %6576
      %6578 = vrot.lane.b32.xlu0 %v6461, 96
      %v6579 = vpop.permute.xlu0 %6578
      %6580 = vrot.lane.b32.xlu0 %v6462, 96
      %v6581 = vpop.permute.xlu0 %6580
      %6582 = vrot.lane.b32.xlu0 %v6463, 96
      %v6583 = vpop.permute.xlu0 %6582
      %v6624 = vadd.f32 %v6376, %v6505
      %v6625 = vadd.f32 %v6377, %v6507
      %v6626 = vadd.f32 %v6378, %v6509
      %v6627 = vadd.f32 %v6379, %v6511
      %v6628 = vadd.f32 %v6380, %v6513
      %v6629 = vadd.f32 %v6381, %v6515
      %v6630 = vadd.f32 %v6382, %v6517
      %v6631 = vadd.f32 %v6383, %v6519
      %v6632 = vadd.f32 %v6384, %v6521
      %v6633 = vadd.f32 %v6385, %v6523
      %v6634 = vadd.f32 %v6386, %v6525
      %v6635 = vadd.f32 %v6387, %v6527
      %v6636 = vadd.f32 %v6388, %v6529
      %v6637 = vadd.f32 %v6389, %v6531
      %v6638 = vadd.f32 %v6390, %v6533
      %v6639 = vadd.f32 %v6391, %v6535
      %v6640 = vadd.f32 %v6392, %v6537
      %v6641 = vadd.f32 %v6393, %v6539
      %v6642 = vadd.f32 %v6394, %v6541
      %v6643 = vadd.f32 %v6395, %v6543
      %v6644 = vadd.f32 %v6396, %v6545
      %v6645 = vadd.f32 %v6397, %v6547
      %v6646 = vadd.f32 %v6398, %v6549
      %v6647 = vadd.f32 %v6399, %v6551
      %v6648 = vadd.f32 %v6400, %v6553
      %v6649 = vadd.f32 %v6401, %v6555
      %v6650 = vadd.f32 %v6402, %v6557
      %v6651 = vadd.f32 %v6403, %v6559
      %v6652 = vadd.f32 %v6404, %v6561
      %v6653 = vadd.f32 %v6405, %v6563
      %v6654 = vadd.f32 %v6406, %v6565
      %v6655 = vadd.f32 %v6407, %v6567
      %v6656 = vadd.f32 %v6408, %v6569
      %v6657 = vadd.f32 %v6409, %v6571
      %v6658 = vadd.f32 %v6410, %v6573
      %v6659 = vadd.f32 %v6411, %v6575
      %v6660 = vadd.f32 %v6412, %v6577
      %v6661 = vadd.f32 %v6413, %v6579
      %v6662 = vadd.f32 %v6414, %v6581
      %v6663 = vadd.f32 %v6415, %v6583
      %6666 = vrot.lane.b32.xlu0 %v4910, 32
      %v6667 = vpop.permute.xlu0 %6666
      %6668 = vrot.lane.b32.xlu0 %v4911, 32
      %v6669 = vpop.permute.xlu0 %6668
      %v6672 = vmul.f32 %v2917, %v6667
      %v6673 = vmul.f32 %v2917, %v6669
      %v6674 = vmul.f32 %v2921, %v6667
      %v6675 = vmul.f32 %v2921, %v6669
      %v6676 = vmul.f32 %v2925, %v6667
      %v6677 = vmul.f32 %v2925, %v6669
      %v6678 = vmul.f32 %v2929, %v6667
      %v6679 = vmul.f32 %v2929, %v6669
      %v6680 = vmul.f32 %v2933, %v6667
      %v6681 = vmul.f32 %v2933, %v6669
      %v6682 = vmul.f32 %v2937, %v6667
      %v6683 = vmul.f32 %v2937, %v6669
      %v6684 = vmul.f32 %v2941, %v6667
      %v6685 = vmul.f32 %v2941, %v6669
      %v6686 = vmul.f32 %v2945, %v6667
      %v6687 = vmul.f32 %v2945, %v6669
      %v6688 = vmul.f32 %v2949, %v6667
      %v6689 = vmul.f32 %v2949, %v6669
      %v6690 = vmul.f32 %v2953, %v6667
      %v6691 = vmul.f32 %v2953, %v6669
      %v6692 = vmul.f32 %v2957, %v6667
      %v6693 = vmul.f32 %v2957, %v6669
      %v6694 = vmul.f32 %v2961, %v6667
      %v6695 = vmul.f32 %v2961, %v6669
      %v6696 = vmul.f32 %v2965, %v6667
      %v6697 = vmul.f32 %v2965, %v6669
      %v6698 = vmul.f32 %v2969, %v6667
      %v6699 = vmul.f32 %v2969, %v6669
      %v6700 = vmul.f32 %v2973, %v6667
      %v6701 = vmul.f32 %v2973, %v6669
      %v6702 = vmul.f32 %v2977, %v6667
      %v6703 = vmul.f32 %v2977, %v6669
      %v6704 = vmul.f32 %v2981, %v6667
      %v6705 = vmul.f32 %v2981, %v6669
      %v6706 = vmul.f32 %v2985, %v6667
      %v6707 = vmul.f32 %v2985, %v6669
      %v6708 = vmul.f32 %v2989, %v6667
      %v6709 = vmul.f32 %v2989, %v6669
      %v6710 = vmul.f32 %v2993, %v6667
      %v6711 = vmul.f32 %v2993, %v6669
      %6752 = vrot.lane.b32.xlu0 %v6672, 96
      %v6753 = vpop.permute.xlu0 %6752
      %6754 = vrot.lane.b32.xlu0 %v6673, 96
      %v6755 = vpop.permute.xlu0 %6754
      %6756 = vrot.lane.b32.xlu0 %v6674, 96
      %v6757 = vpop.permute.xlu0 %6756
      %6758 = vrot.lane.b32.xlu0 %v6675, 96
      %v6759 = vpop.permute.xlu0 %6758
      %6760 = vrot.lane.b32.xlu0 %v6676, 96
      %v6761 = vpop.permute.xlu0 %6760
      %6762 = vrot.lane.b32.xlu0 %v6677, 96
      %v6763 = vpop.permute.xlu0 %6762
      %6764 = vrot.lane.b32.xlu0 %v6678, 96
      %v6765 = vpop.permute.xlu0 %6764
      %6766 = vrot.lane.b32.xlu0 %v6679, 96
      %v6767 = vpop.permute.xlu0 %6766
      %6768 = vrot.lane.b32.xlu0 %v6680, 96
      %v6769 = vpop.permute.xlu0 %6768
      %6770 = vrot.lane.b32.xlu0 %v6681, 96
      %v6771 = vpop.permute.xlu0 %6770
      %6772 = vrot.lane.b32.xlu0 %v6682, 96
      %v6773 = vpop.permute.xlu0 %6772
      %6774 = vrot.lane.b32.xlu0 %v6683, 96
      %v6775 = vpop.permute.xlu0 %6774
      %6776 = vrot.lane.b32.xlu0 %v6684, 96
      %v6777 = vpop.permute.xlu0 %6776
      %6778 = vrot.lane.b32.xlu0 %v6685, 96
      %v6779 = vpop.permute.xlu0 %6778
      %6780 = vrot.lane.b32.xlu0 %v6686, 96
      %v6781 = vpop.permute.xlu0 %6780
      %6782 = vrot.lane.b32.xlu0 %v6687, 96
      %v6783 = vpop.permute.xlu0 %6782
      %6784 = vrot.lane.b32.xlu0 %v6688, 96
      %v6785 = vpop.permute.xlu0 %6784
      %6786 = vrot.lane.b32.xlu0 %v6689, 96
      %v6787 = vpop.permute.xlu0 %6786
      %6788 = vrot.lane.b32.xlu0 %v6690, 96
      %v6789 = vpop.permute.xlu0 %6788
      %6790 = vrot.lane.b32.xlu0 %v6691, 96
      %v6791 = vpop.permute.xlu0 %6790
      %6792 = vrot.lane.b32.xlu0 %v6692, 96
      %v6793 = vpop.permute.xlu0 %6792
      %6794 = vrot.lane.b32.xlu0 %v6693, 96
      %v6795 = vpop.permute.xlu0 %6794
      %6796 = vrot.lane.b32.xlu0 %v6694, 96
      %v6797 = vpop.permute.xlu0 %6796
      %6798 = vrot.lane.b32.xlu0 %v6695, 96
      %v6799 = vpop.permute.xlu0 %6798
      %6800 = vrot.lane.b32.xlu0 %v6696, 96
      %v6801 = vpop.permute.xlu0 %6800
      %6802 = vrot.lane.b32.xlu0 %v6697, 96
      %v6803 = vpop.permute.xlu0 %6802
      %6804 = vrot.lane.b32.xlu0 %v6698, 96
      %v6805 = vpop.permute.xlu0 %6804
      %6806 = vrot.lane.b32.xlu0 %v6699, 96
      %v6807 = vpop.permute.xlu0 %6806
      %6808 = vrot.lane.b32.xlu0 %v6700, 96
      %v6809 = vpop.permute.xlu0 %6808
      %6810 = vrot.lane.b32.xlu0 %v6701, 96
      %v6811 = vpop.permute.xlu0 %6810
      %6812 = vrot.lane.b32.xlu0 %v6702, 96
      %v6813 = vpop.permute.xlu0 %6812
      %6814 = vrot.lane.b32.xlu0 %v6703, 96
      %v6815 = vpop.permute.xlu0 %6814
      %6816 = vrot.lane.b32.xlu0 %v6704, 96
      %v6817 = vpop.permute.xlu0 %6816
      %6818 = vrot.lane.b32.xlu0 %v6705, 96
      %v6819 = vpop.permute.xlu0 %6818
      %6820 = vrot.lane.b32.xlu0 %v6706, 96
      %v6821 = vpop.permute.xlu0 %6820
      %6822 = vrot.lane.b32.xlu0 %v6707, 96
      %v6823 = vpop.permute.xlu0 %6822
      %6824 = vrot.lane.b32.xlu0 %v6708, 96
      %v6825 = vpop.permute.xlu0 %6824
      %6826 = vrot.lane.b32.xlu0 %v6709, 96
      %v6827 = vpop.permute.xlu0 %6826
      %6828 = vrot.lane.b32.xlu0 %v6710, 96
      %v6829 = vpop.permute.xlu0 %6828
      %6830 = vrot.lane.b32.xlu0 %v6711, 96
      %v6831 = vpop.permute.xlu0 %6830
      %v6872 = vadd.f32 %v6624, %v6753
      %v6873 = vadd.f32 %v6625, %v6755
      %v6874 = vadd.f32 %v6626, %v6757
      %v6875 = vadd.f32 %v6627, %v6759
      %v6876 = vadd.f32 %v6628, %v6761
      %v6877 = vadd.f32 %v6629, %v6763
      %v6878 = vadd.f32 %v6630, %v6765
      %v6879 = vadd.f32 %v6631, %v6767
      %v6880 = vadd.f32 %v6632, %v6769
      %v6881 = vadd.f32 %v6633, %v6771
      %v6882 = vadd.f32 %v6634, %v6773
      %v6883 = vadd.f32 %v6635, %v6775
      %v6884 = vadd.f32 %v6636, %v6777
      %v6885 = vadd.f32 %v6637, %v6779
      %v6886 = vadd.f32 %v6638, %v6781
      %v6887 = vadd.f32 %v6639, %v6783
      %v6888 = vadd.f32 %v6640, %v6785
      %v6889 = vadd.f32 %v6641, %v6787
      %v6890 = vadd.f32 %v6642, %v6789
      %v6891 = vadd.f32 %v6643, %v6791
      %v6892 = vadd.f32 %v6644, %v6793
      %v6893 = vadd.f32 %v6645, %v6795
      %v6894 = vadd.f32 %v6646, %v6797
      %v6895 = vadd.f32 %v6647, %v6799
      %v6896 = vadd.f32 %v6648, %v6801
      %v6897 = vadd.f32 %v6649, %v6803
      %v6898 = vadd.f32 %v6650, %v6805
      %v6899 = vadd.f32 %v6651, %v6807
      %v6900 = vadd.f32 %v6652, %v6809
      %v6901 = vadd.f32 %v6653, %v6811
      %v6902 = vadd.f32 %v6654, %v6813
      %v6903 = vadd.f32 %v6655, %v6815
      %v6904 = vadd.f32 %v6656, %v6817
      %v6905 = vadd.f32 %v6657, %v6819
      %v6906 = vadd.f32 %v6658, %v6821
      %v6907 = vadd.f32 %v6659, %v6823
      %v6908 = vadd.f32 %v6660, %v6825
      %v6909 = vadd.f32 %v6661, %v6827
      %v6910 = vadd.f32 %v6662, %v6829
      %v6911 = vadd.f32 %v6663, %v6831
      %6914 = vrot.lane.b32.xlu0 %v4912, 32
      %v6915 = vpop.permute.xlu0 %6914
      %6916 = vrot.lane.b32.xlu0 %v4913, 32
      %v6917 = vpop.permute.xlu0 %6916
      %v6920 = vmul.f32 %v3077, %v6915
      %v6921 = vmul.f32 %v3077, %v6917
      %v6922 = vmul.f32 %v3081, %v6915
      %v6923 = vmul.f32 %v3081, %v6917
      %v6924 = vmul.f32 %v3085, %v6915
      %v6925 = vmul.f32 %v3085, %v6917
      %v6926 = vmul.f32 %v3089, %v6915
      %v6927 = vmul.f32 %v3089, %v6917
      %v6928 = vmul.f32 %v3093, %v6915
      %v6929 = vmul.f32 %v3093, %v6917
      %v6930 = vmul.f32 %v3097, %v6915
      %v6931 = vmul.f32 %v3097, %v6917
      %v6932 = vmul.f32 %v3101, %v6915
      %v6933 = vmul.f32 %v3101, %v6917
      %v6934 = vmul.f32 %v3105, %v6915
      %v6935 = vmul.f32 %v3105, %v6917
      %v6936 = vmul.f32 %v3109, %v6915
      %v6937 = vmul.f32 %v3109, %v6917
      %v6938 = vmul.f32 %v3113, %v6915
      %v6939 = vmul.f32 %v3113, %v6917
      %v6940 = vmul.f32 %v3117, %v6915
      %v6941 = vmul.f32 %v3117, %v6917
      %v6942 = vmul.f32 %v3121, %v6915
      %v6943 = vmul.f32 %v3121, %v6917
      %v6944 = vmul.f32 %v3125, %v6915
      %v6945 = vmul.f32 %v3125, %v6917
      %v6946 = vmul.f32 %v3129, %v6915
      %v6947 = vmul.f32 %v3129, %v6917
      %v6948 = vmul.f32 %v3133, %v6915
      %v6949 = vmul.f32 %v3133, %v6917
      %v6950 = vmul.f32 %v3137, %v6915
      %v6951 = vmul.f32 %v3137, %v6917
      %v6952 = vmul.f32 %v3141, %v6915
      %v6953 = vmul.f32 %v3141, %v6917
      %v6954 = vmul.f32 %v3145, %v6915
      %v6955 = vmul.f32 %v3145, %v6917
      %v6956 = vmul.f32 %v3149, %v6915
      %v6957 = vmul.f32 %v3149, %v6917
      %v6958 = vmul.f32 %v3153, %v6915
      %v6959 = vmul.f32 %v3153, %v6917
      %7000 = vrot.lane.b32.xlu0 %v6920, 96
      %v7001 = vpop.permute.xlu0 %7000
      %7002 = vrot.lane.b32.xlu0 %v6921, 96
      %v7003 = vpop.permute.xlu0 %7002
      %7004 = vrot.lane.b32.xlu0 %v6922, 96
      %v7005 = vpop.permute.xlu0 %7004
      %7006 = vrot.lane.b32.xlu0 %v6923, 96
      %v7007 = vpop.permute.xlu0 %7006
      %7008 = vrot.lane.b32.xlu0 %v6924, 96
      %v7009 = vpop.permute.xlu0 %7008
      %7010 = vrot.lane.b32.xlu0 %v6925, 96
      %v7011 = vpop.permute.xlu0 %7010
      %7012 = vrot.lane.b32.xlu0 %v6926, 96
      %v7013 = vpop.permute.xlu0 %7012
      %7014 = vrot.lane.b32.xlu0 %v6927, 96
      %v7015 = vpop.permute.xlu0 %7014
      %7016 = vrot.lane.b32.xlu0 %v6928, 96
      %v7017 = vpop.permute.xlu0 %7016
      %7018 = vrot.lane.b32.xlu0 %v6929, 96
      %v7019 = vpop.permute.xlu0 %7018
      %7020 = vrot.lane.b32.xlu0 %v6930, 96
      %v7021 = vpop.permute.xlu0 %7020
      %7022 = vrot.lane.b32.xlu0 %v6931, 96
      %v7023 = vpop.permute.xlu0 %7022
      %7024 = vrot.lane.b32.xlu0 %v6932, 96
      %v7025 = vpop.permute.xlu0 %7024
      %7026 = vrot.lane.b32.xlu0 %v6933, 96
      %v7027 = vpop.permute.xlu0 %7026
      %7028 = vrot.lane.b32.xlu0 %v6934, 96
      %v7029 = vpop.permute.xlu0 %7028
      %7030 = vrot.lane.b32.xlu0 %v6935, 96
      %v7031 = vpop.permute.xlu0 %7030
      %7032 = vrot.lane.b32.xlu0 %v6936, 96
      %v7033 = vpop.permute.xlu0 %7032
      %7034 = vrot.lane.b32.xlu0 %v6937, 96
      %v7035 = vpop.permute.xlu0 %7034
      %7036 = vrot.lane.b32.xlu0 %v6938, 96
      %v7037 = vpop.permute.xlu0 %7036
      %7038 = vrot.lane.b32.xlu0 %v6939, 96
      %v7039 = vpop.permute.xlu0 %7038
      %7040 = vrot.lane.b32.xlu0 %v6940, 96
      %v7041 = vpop.permute.xlu0 %7040
      %7042 = vrot.lane.b32.xlu0 %v6941, 96
      %v7043 = vpop.permute.xlu0 %7042
      %7044 = vrot.lane.b32.xlu0 %v6942, 96
      %v7045 = vpop.permute.xlu0 %7044
      %7046 = vrot.lane.b32.xlu0 %v6943, 96
      %v7047 = vpop.permute.xlu0 %7046
      %7048 = vrot.lane.b32.xlu0 %v6944, 96
      %v7049 = vpop.permute.xlu0 %7048
      %7050 = vrot.lane.b32.xlu0 %v6945, 96
      %v7051 = vpop.permute.xlu0 %7050
      %7052 = vrot.lane.b32.xlu0 %v6946, 96
      %v7053 = vpop.permute.xlu0 %7052
      %7054 = vrot.lane.b32.xlu0 %v6947, 96
      %v7055 = vpop.permute.xlu0 %7054
      %7056 = vrot.lane.b32.xlu0 %v6948, 96
      %v7057 = vpop.permute.xlu0 %7056
      %7058 = vrot.lane.b32.xlu0 %v6949, 96
      %v7059 = vpop.permute.xlu0 %7058
      %7060 = vrot.lane.b32.xlu0 %v6950, 96
      %v7061 = vpop.permute.xlu0 %7060
      %7062 = vrot.lane.b32.xlu0 %v6951, 96
      %v7063 = vpop.permute.xlu0 %7062
      %7064 = vrot.lane.b32.xlu0 %v6952, 96
      %v7065 = vpop.permute.xlu0 %7064
      %7066 = vrot.lane.b32.xlu0 %v6953, 96
      %v7067 = vpop.permute.xlu0 %7066
      %7068 = vrot.lane.b32.xlu0 %v6954, 96
      %v7069 = vpop.permute.xlu0 %7068
      %7070 = vrot.lane.b32.xlu0 %v6955, 96
      %v7071 = vpop.permute.xlu0 %7070
      %7072 = vrot.lane.b32.xlu0 %v6956, 96
      %v7073 = vpop.permute.xlu0 %7072
      %7074 = vrot.lane.b32.xlu0 %v6957, 96
      %v7075 = vpop.permute.xlu0 %7074
      %7076 = vrot.lane.b32.xlu0 %v6958, 96
      %v7077 = vpop.permute.xlu0 %7076
      %7078 = vrot.lane.b32.xlu0 %v6959, 96
      %v7079 = vpop.permute.xlu0 %7078
      %v7120 = vadd.f32 %v6872, %v7001
      %v7121 = vadd.f32 %v6873, %v7003
      %v7122 = vadd.f32 %v6874, %v7005
      %v7123 = vadd.f32 %v6875, %v7007
      %v7124 = vadd.f32 %v6876, %v7009
      %v7125 = vadd.f32 %v6877, %v7011
      %v7126 = vadd.f32 %v6878, %v7013
      %v7127 = vadd.f32 %v6879, %v7015
      %v7128 = vadd.f32 %v6880, %v7017
      %v7129 = vadd.f32 %v6881, %v7019
      %v7130 = vadd.f32 %v6882, %v7021
      %v7131 = vadd.f32 %v6883, %v7023
      %v7132 = vadd.f32 %v6884, %v7025
      %v7133 = vadd.f32 %v6885, %v7027
      %v7134 = vadd.f32 %v6886, %v7029
      %v7135 = vadd.f32 %v6887, %v7031
      %v7136 = vadd.f32 %v6888, %v7033
      %v7137 = vadd.f32 %v6889, %v7035
      %v7138 = vadd.f32 %v6890, %v7037
      %v7139 = vadd.f32 %v6891, %v7039
      %v7140 = vadd.f32 %v6892, %v7041
      %v7141 = vadd.f32 %v6893, %v7043
      %v7142 = vadd.f32 %v6894, %v7045
      %v7143 = vadd.f32 %v6895, %v7047
      %v7144 = vadd.f32 %v6896, %v7049
      %v7145 = vadd.f32 %v6897, %v7051
      %v7146 = vadd.f32 %v6898, %v7053
      %v7147 = vadd.f32 %v6899, %v7055
      %v7148 = vadd.f32 %v6900, %v7057
      %v7149 = vadd.f32 %v6901, %v7059
      %v7150 = vadd.f32 %v6902, %v7061
      %v7151 = vadd.f32 %v6903, %v7063
      %v7152 = vadd.f32 %v6904, %v7065
      %v7153 = vadd.f32 %v6905, %v7067
      %v7154 = vadd.f32 %v6906, %v7069
      %v7155 = vadd.f32 %v6907, %v7071
      %v7156 = vadd.f32 %v6908, %v7073
      %v7157 = vadd.f32 %v6909, %v7075
      %v7158 = vadd.f32 %v6910, %v7077
      %v7159 = vadd.f32 %v6911, %v7079
      %7162 = vrot.lane.b32.xlu0 %v4914, 32
      %v7163 = vpop.permute.xlu0 %7162
      %7164 = vrot.lane.b32.xlu0 %v4915, 32
      %v7165 = vpop.permute.xlu0 %7164
      %v7168 = vmul.f32 %v3237, %v7163
      %v7169 = vmul.f32 %v3237, %v7165
      %v7170 = vmul.f32 %v3241, %v7163
      %v7171 = vmul.f32 %v3241, %v7165
      %v7172 = vmul.f32 %v3245, %v7163
      %v7173 = vmul.f32 %v3245, %v7165
      %v7174 = vmul.f32 %v3249, %v7163
      %v7175 = vmul.f32 %v3249, %v7165
      %v7176 = vmul.f32 %v3253, %v7163
      %v7177 = vmul.f32 %v3253, %v7165
      %v7178 = vmul.f32 %v3257, %v7163
      %v7179 = vmul.f32 %v3257, %v7165
      %v7180 = vmul.f32 %v3261, %v7163
      %v7181 = vmul.f32 %v3261, %v7165
      %v7182 = vmul.f32 %v3265, %v7163
      %v7183 = vmul.f32 %v3265, %v7165
      %v7184 = vmul.f32 %v3269, %v7163
      %v7185 = vmul.f32 %v3269, %v7165
      %v7186 = vmul.f32 %v3273, %v7163
      %v7187 = vmul.f32 %v3273, %v7165
      %v7188 = vmul.f32 %v3277, %v7163
      %v7189 = vmul.f32 %v3277, %v7165
      %v7190 = vmul.f32 %v3281, %v7163
      %v7191 = vmul.f32 %v3281, %v7165
      %v7192 = vmul.f32 %v3285, %v7163
      %v7193 = vmul.f32 %v3285, %v7165
      %v7194 = vmul.f32 %v3289, %v7163
      %v7195 = vmul.f32 %v3289, %v7165
      %v7196 = vmul.f32 %v3293, %v7163
      %v7197 = vmul.f32 %v3293, %v7165
      %v7198 = vmul.f32 %v3297, %v7163
      %v7199 = vmul.f32 %v3297, %v7165
      %v7200 = vmul.f32 %v3301, %v7163
      %v7201 = vmul.f32 %v3301, %v7165
      %v7202 = vmul.f32 %v3305, %v7163
      %v7203 = vmul.f32 %v3305, %v7165
      %v7204 = vmul.f32 %v3309, %v7163
      %v7205 = vmul.f32 %v3309, %v7165
      %v7206 = vmul.f32 %v3313, %v7163
      %v7207 = vmul.f32 %v3313, %v7165
      %7248 = vrot.lane.b32.xlu0 %v7168, 96
      %v7249 = vpop.permute.xlu0 %7248
      %7250 = vrot.lane.b32.xlu0 %v7169, 96
      %v7251 = vpop.permute.xlu0 %7250
      %7252 = vrot.lane.b32.xlu0 %v7170, 96
      %v7253 = vpop.permute.xlu0 %7252
      %7254 = vrot.lane.b32.xlu0 %v7171, 96
      %v7255 = vpop.permute.xlu0 %7254
      %7256 = vrot.lane.b32.xlu0 %v7172, 96
      %v7257 = vpop.permute.xlu0 %7256
      %7258 = vrot.lane.b32.xlu0 %v7173, 96
      %v7259 = vpop.permute.xlu0 %7258
      %7260 = vrot.lane.b32.xlu0 %v7174, 96
      %v7261 = vpop.permute.xlu0 %7260
      %7262 = vrot.lane.b32.xlu0 %v7175, 96
      %v7263 = vpop.permute.xlu0 %7262
      %7264 = vrot.lane.b32.xlu0 %v7176, 96
      %v7265 = vpop.permute.xlu0 %7264
      %7266 = vrot.lane.b32.xlu0 %v7177, 96
      %v7267 = vpop.permute.xlu0 %7266
      %7268 = vrot.lane.b32.xlu0 %v7178, 96
      %v7269 = vpop.permute.xlu0 %7268
      %7270 = vrot.lane.b32.xlu0 %v7179, 96
      %v7271 = vpop.permute.xlu0 %7270
      %7272 = vrot.lane.b32.xlu0 %v7180, 96
      %v7273 = vpop.permute.xlu0 %7272
      %7274 = vrot.lane.b32.xlu0 %v7181, 96
      %v7275 = vpop.permute.xlu0 %7274
      %7276 = vrot.lane.b32.xlu0 %v7182, 96
      %v7277 = vpop.permute.xlu0 %7276
      %7278 = vrot.lane.b32.xlu0 %v7183, 96
      %v7279 = vpop.permute.xlu0 %7278
      %7280 = vrot.lane.b32.xlu0 %v7184, 96
      %v7281 = vpop.permute.xlu0 %7280
      %7282 = vrot.lane.b32.xlu0 %v7185, 96
      %v7283 = vpop.permute.xlu0 %7282
      %7284 = vrot.lane.b32.xlu0 %v7186, 96
      %v7285 = vpop.permute.xlu0 %7284
      %7286 = vrot.lane.b32.xlu0 %v7187, 96
      %v7287 = vpop.permute.xlu0 %7286
      %7288 = vrot.lane.b32.xlu0 %v7188, 96
      %v7289 = vpop.permute.xlu0 %7288
      %7290 = vrot.lane.b32.xlu0 %v7189, 96
      %v7291 = vpop.permute.xlu0 %7290
      %7292 = vrot.lane.b32.xlu0 %v7190, 96
      %v7293 = vpop.permute.xlu0 %7292
      %7294 = vrot.lane.b32.xlu0 %v7191, 96
      %v7295 = vpop.permute.xlu0 %7294
      %7296 = vrot.lane.b32.xlu0 %v7192, 96
      %v7297 = vpop.permute.xlu0 %7296
      %7298 = vrot.lane.b32.xlu0 %v7193, 96
      %v7299 = vpop.permute.xlu0 %7298
      %7300 = vrot.lane.b32.xlu0 %v7194, 96
      %v7301 = vpop.permute.xlu0 %7300
      %7302 = vrot.lane.b32.xlu0 %v7195, 96
      %v7303 = vpop.permute.xlu0 %7302
      %7304 = vrot.lane.b32.xlu0 %v7196, 96
      %v7305 = vpop.permute.xlu0 %7304
      %7306 = vrot.lane.b32.xlu0 %v7197, 96
      %v7307 = vpop.permute.xlu0 %7306
      %7308 = vrot.lane.b32.xlu0 %v7198, 96
      %v7309 = vpop.permute.xlu0 %7308
      %7310 = vrot.lane.b32.xlu0 %v7199, 96
      %v7311 = vpop.permute.xlu0 %7310
      %7312 = vrot.lane.b32.xlu0 %v7200, 96
      %v7313 = vpop.permute.xlu0 %7312
      %7314 = vrot.lane.b32.xlu0 %v7201, 96
      %v7315 = vpop.permute.xlu0 %7314
      %7316 = vrot.lane.b32.xlu0 %v7202, 96
      %v7317 = vpop.permute.xlu0 %7316
      %7318 = vrot.lane.b32.xlu0 %v7203, 96
      %v7319 = vpop.permute.xlu0 %7318
      %7320 = vrot.lane.b32.xlu0 %v7204, 96
      %v7321 = vpop.permute.xlu0 %7320
      %7322 = vrot.lane.b32.xlu0 %v7205, 96
      %v7323 = vpop.permute.xlu0 %7322
      %7324 = vrot.lane.b32.xlu0 %v7206, 96
      %v7325 = vpop.permute.xlu0 %7324
      %7326 = vrot.lane.b32.xlu0 %v7207, 96
      %v7327 = vpop.permute.xlu0 %7326
      %v7368 = vadd.f32 %v7120, %v7249
      %v7369 = vadd.f32 %v7121, %v7251
      %v7370 = vadd.f32 %v7122, %v7253
      %v7371 = vadd.f32 %v7123, %v7255
      %v7372 = vadd.f32 %v7124, %v7257
      %v7373 = vadd.f32 %v7125, %v7259
      %v7374 = vadd.f32 %v7126, %v7261
      %v7375 = vadd.f32 %v7127, %v7263
      %v7376 = vadd.f32 %v7128, %v7265
      %v7377 = vadd.f32 %v7129, %v7267
      %v7378 = vadd.f32 %v7130, %v7269
      %v7379 = vadd.f32 %v7131, %v7271
      %v7380 = vadd.f32 %v7132, %v7273
      %v7381 = vadd.f32 %v7133, %v7275
      %v7382 = vadd.f32 %v7134, %v7277
      %v7383 = vadd.f32 %v7135, %v7279
      %v7384 = vadd.f32 %v7136, %v7281
      %v7385 = vadd.f32 %v7137, %v7283
      %v7386 = vadd.f32 %v7138, %v7285
      %v7387 = vadd.f32 %v7139, %v7287
      %v7388 = vadd.f32 %v7140, %v7289
      %v7389 = vadd.f32 %v7141, %v7291
      %v7390 = vadd.f32 %v7142, %v7293
      %v7391 = vadd.f32 %v7143, %v7295
      %v7392 = vadd.f32 %v7144, %v7297
      %v7393 = vadd.f32 %v7145, %v7299
      %v7394 = vadd.f32 %v7146, %v7301
      %v7395 = vadd.f32 %v7147, %v7303
      %v7396 = vadd.f32 %v7148, %v7305
      %v7397 = vadd.f32 %v7149, %v7307
      %v7398 = vadd.f32 %v7150, %v7309
      %v7399 = vadd.f32 %v7151, %v7311
      %v7400 = vadd.f32 %v7152, %v7313
      %v7401 = vadd.f32 %v7153, %v7315
      %v7402 = vadd.f32 %v7154, %v7317
      %v7403 = vadd.f32 %v7155, %v7319
      %v7404 = vadd.f32 %v7156, %v7321
      %v7405 = vadd.f32 %v7157, %v7323
      %v7406 = vadd.f32 %v7158, %v7325
      %v7407 = vadd.f32 %v7159, %v7327
      %7410 = vrot.lane.b32.xlu0 %v4916, 32
      %v7411 = vpop.permute.xlu0 %7410
      %7412 = vrot.lane.b32.xlu0 %v4917, 32
      %v7413 = vpop.permute.xlu0 %7412
      %v7416 = vmul.f32 %v3397, %v7411
      %v7417 = vmul.f32 %v3397, %v7413
      %v7418 = vmul.f32 %v3401, %v7411
      %v7419 = vmul.f32 %v3401, %v7413
      %v7420 = vmul.f32 %v3405, %v7411
      %v7421 = vmul.f32 %v3405, %v7413
      %v7422 = vmul.f32 %v3409, %v7411
      %v7423 = vmul.f32 %v3409, %v7413
      %v7424 = vmul.f32 %v3413, %v7411
      %v7425 = vmul.f32 %v3413, %v7413
      %v7426 = vmul.f32 %v3417, %v7411
      %v7427 = vmul.f32 %v3417, %v7413
      %v7428 = vmul.f32 %v3421, %v7411
      %v7429 = vmul.f32 %v3421, %v7413
      %v7430 = vmul.f32 %v3425, %v7411
      %v7431 = vmul.f32 %v3425, %v7413
      %v7432 = vmul.f32 %v3429, %v7411
      %v7433 = vmul.f32 %v3429, %v7413
      %v7434 = vmul.f32 %v3433, %v7411
      %v7435 = vmul.f32 %v3433, %v7413
      %v7436 = vmul.f32 %v3437, %v7411
      %v7437 = vmul.f32 %v3437, %v7413
      %v7438 = vmul.f32 %v3441, %v7411
      %v7439 = vmul.f32 %v3441, %v7413
      %v7440 = vmul.f32 %v3445, %v7411
      %v7441 = vmul.f32 %v3445, %v7413
      %v7442 = vmul.f32 %v3449, %v7411
      %v7443 = vmul.f32 %v3449, %v7413
      %v7444 = vmul.f32 %v3453, %v7411
      %v7445 = vmul.f32 %v3453, %v7413
      %v7446 = vmul.f32 %v3457, %v7411
      %v7447 = vmul.f32 %v3457, %v7413
      %v7448 = vmul.f32 %v3461, %v7411
      %v7449 = vmul.f32 %v3461, %v7413
      %v7450 = vmul.f32 %v3465, %v7411
      %v7451 = vmul.f32 %v3465, %v7413
      %v7452 = vmul.f32 %v3469, %v7411
      %v7453 = vmul.f32 %v3469, %v7413
      %v7454 = vmul.f32 %v3473, %v7411
      %v7455 = vmul.f32 %v3473, %v7413
      %7496 = vrot.lane.b32.xlu0 %v7416, 96
      %v7497 = vpop.permute.xlu0 %7496
      %7498 = vrot.lane.b32.xlu0 %v7417, 96
      %v7499 = vpop.permute.xlu0 %7498
      %7500 = vrot.lane.b32.xlu0 %v7418, 96
      %v7501 = vpop.permute.xlu0 %7500
      %7502 = vrot.lane.b32.xlu0 %v7419, 96
      %v7503 = vpop.permute.xlu0 %7502
      %7504 = vrot.lane.b32.xlu0 %v7420, 96
      %v7505 = vpop.permute.xlu0 %7504
      %7506 = vrot.lane.b32.xlu0 %v7421, 96
      %v7507 = vpop.permute.xlu0 %7506
      %7508 = vrot.lane.b32.xlu0 %v7422, 96
      %v7509 = vpop.permute.xlu0 %7508
      %7510 = vrot.lane.b32.xlu0 %v7423, 96
      %v7511 = vpop.permute.xlu0 %7510
      %7512 = vrot.lane.b32.xlu0 %v7424, 96
      %v7513 = vpop.permute.xlu0 %7512
      %7514 = vrot.lane.b32.xlu0 %v7425, 96
      %v7515 = vpop.permute.xlu0 %7514
      %7516 = vrot.lane.b32.xlu0 %v7426, 96
      %v7517 = vpop.permute.xlu0 %7516
      %7518 = vrot.lane.b32.xlu0 %v7427, 96
      %v7519 = vpop.permute.xlu0 %7518
      %7520 = vrot.lane.b32.xlu0 %v7428, 96
      %v7521 = vpop.permute.xlu0 %7520
      %7522 = vrot.lane.b32.xlu0 %v7429, 96
      %v7523 = vpop.permute.xlu0 %7522
      %7524 = vrot.lane.b32.xlu0 %v7430, 96
      %v7525 = vpop.permute.xlu0 %7524
      %7526 = vrot.lane.b32.xlu0 %v7431, 96
      %v7527 = vpop.permute.xlu0 %7526
      %7528 = vrot.lane.b32.xlu0 %v7432, 96
      %v7529 = vpop.permute.xlu0 %7528
      %7530 = vrot.lane.b32.xlu0 %v7433, 96
      %v7531 = vpop.permute.xlu0 %7530
      %7532 = vrot.lane.b32.xlu0 %v7434, 96
      %v7533 = vpop.permute.xlu0 %7532
      %7534 = vrot.lane.b32.xlu0 %v7435, 96
      %v7535 = vpop.permute.xlu0 %7534
      %7536 = vrot.lane.b32.xlu0 %v7436, 96
      %v7537 = vpop.permute.xlu0 %7536
      %7538 = vrot.lane.b32.xlu0 %v7437, 96
      %v7539 = vpop.permute.xlu0 %7538
      %7540 = vrot.lane.b32.xlu0 %v7438, 96
      %v7541 = vpop.permute.xlu0 %7540
      %7542 = vrot.lane.b32.xlu0 %v7439, 96
      %v7543 = vpop.permute.xlu0 %7542
      %7544 = vrot.lane.b32.xlu0 %v7440, 96
      %v7545 = vpop.permute.xlu0 %7544
      %7546 = vrot.lane.b32.xlu0 %v7441, 96
      %v7547 = vpop.permute.xlu0 %7546
      %7548 = vrot.lane.b32.xlu0 %v7442, 96
      %v7549 = vpop.permute.xlu0 %7548
      %7550 = vrot.lane.b32.xlu0 %v7443, 96
      %v7551 = vpop.permute.xlu0 %7550
      %7552 = vrot.lane.b32.xlu0 %v7444, 96
      %v7553 = vpop.permute.xlu0 %7552
      %7554 = vrot.lane.b32.xlu0 %v7445, 96
      %v7555 = vpop.permute.xlu0 %7554
      %7556 = vrot.lane.b32.xlu0 %v7446, 96
      %v7557 = vpop.permute.xlu0 %7556
      %7558 = vrot.lane.b32.xlu0 %v7447, 96
      %v7559 = vpop.permute.xlu0 %7558
      %7560 = vrot.lane.b32.xlu0 %v7448, 96
      %v7561 = vpop.permute.xlu0 %7560
      %7562 = vrot.lane.b32.xlu0 %v7449, 96
      %v7563 = vpop.permute.xlu0 %7562
      %7564 = vrot.lane.b32.xlu0 %v7450, 96
      %v7565 = vpop.permute.xlu0 %7564
      %7566 = vrot.lane.b32.xlu0 %v7451, 96
      %v7567 = vpop.permute.xlu0 %7566
      %7568 = vrot.lane.b32.xlu0 %v7452, 96
      %v7569 = vpop.permute.xlu0 %7568
      %7570 = vrot.lane.b32.xlu0 %v7453, 96
      %v7571 = vpop.permute.xlu0 %7570
      %7572 = vrot.lane.b32.xlu0 %v7454, 96
      %v7573 = vpop.permute.xlu0 %7572
      %7574 = vrot.lane.b32.xlu0 %v7455, 96
      %v7575 = vpop.permute.xlu0 %7574
      %v7616 = vadd.f32 %v7368, %v7497
      %v7617 = vadd.f32 %v7369, %v7499
      %v7618 = vadd.f32 %v7370, %v7501
      %v7619 = vadd.f32 %v7371, %v7503
      %v7620 = vadd.f32 %v7372, %v7505
      %v7621 = vadd.f32 %v7373, %v7507
      %v7622 = vadd.f32 %v7374, %v7509
      %v7623 = vadd.f32 %v7375, %v7511
      %v7624 = vadd.f32 %v7376, %v7513
      %v7625 = vadd.f32 %v7377, %v7515
      %v7626 = vadd.f32 %v7378, %v7517
      %v7627 = vadd.f32 %v7379, %v7519
      %v7628 = vadd.f32 %v7380, %v7521
      %v7629 = vadd.f32 %v7381, %v7523
      %v7630 = vadd.f32 %v7382, %v7525
      %v7631 = vadd.f32 %v7383, %v7527
      %v7632 = vadd.f32 %v7384, %v7529
      %v7633 = vadd.f32 %v7385, %v7531
      %v7634 = vadd.f32 %v7386, %v7533
      %v7635 = vadd.f32 %v7387, %v7535
      %v7636 = vadd.f32 %v7388, %v7537
      %v7637 = vadd.f32 %v7389, %v7539
      %v7638 = vadd.f32 %v7390, %v7541
      %v7639 = vadd.f32 %v7391, %v7543
      %v7640 = vadd.f32 %v7392, %v7545
      %v7641 = vadd.f32 %v7393, %v7547
      %v7642 = vadd.f32 %v7394, %v7549
      %v7643 = vadd.f32 %v7395, %v7551
      %v7644 = vadd.f32 %v7396, %v7553
      %v7645 = vadd.f32 %v7397, %v7555
      %v7646 = vadd.f32 %v7398, %v7557
      %v7647 = vadd.f32 %v7399, %v7559
      %v7648 = vadd.f32 %v7400, %v7561
      %v7649 = vadd.f32 %v7401, %v7563
      %v7650 = vadd.f32 %v7402, %v7565
      %v7651 = vadd.f32 %v7403, %v7567
      %v7652 = vadd.f32 %v7404, %v7569
      %v7653 = vadd.f32 %v7405, %v7571
      %v7654 = vadd.f32 %v7406, %v7573
      %v7655 = vadd.f32 %v7407, %v7575
      %7658 = vrot.lane.b32.xlu0 %v4918, 32
      %v7659 = vpop.permute.xlu0 %7658
      %7660 = vrot.lane.b32.xlu0 %v4919, 32
      %v7661 = vpop.permute.xlu0 %7660
      %v7664 = vmul.f32 %v3557, %v7659
      %v7665 = vmul.f32 %v3557, %v7661
      %v7666 = vmul.f32 %v3561, %v7659
      %v7667 = vmul.f32 %v3561, %v7661
      %v7668 = vmul.f32 %v3565, %v7659
      %v7669 = vmul.f32 %v3565, %v7661
      %v7670 = vmul.f32 %v3569, %v7659
      %v7671 = vmul.f32 %v3569, %v7661
      %v7672 = vmul.f32 %v3573, %v7659
      %v7673 = vmul.f32 %v3573, %v7661
      %v7674 = vmul.f32 %v3577, %v7659
      %v7675 = vmul.f32 %v3577, %v7661
      %v7676 = vmul.f32 %v3581, %v7659
      %v7677 = vmul.f32 %v3581, %v7661
      %v7678 = vmul.f32 %v3585, %v7659
      %v7679 = vmul.f32 %v3585, %v7661
      %v7680 = vmul.f32 %v3589, %v7659
      %v7681 = vmul.f32 %v3589, %v7661
      %v7682 = vmul.f32 %v3593, %v7659
      %v7683 = vmul.f32 %v3593, %v7661
      %v7684 = vmul.f32 %v3597, %v7659
      %v7685 = vmul.f32 %v3597, %v7661
      %v7686 = vmul.f32 %v3601, %v7659
      %v7687 = vmul.f32 %v3601, %v7661
      %v7688 = vmul.f32 %v3605, %v7659
      %v7689 = vmul.f32 %v3605, %v7661
      %v7690 = vmul.f32 %v3609, %v7659
      %v7691 = vmul.f32 %v3609, %v7661
      %v7692 = vmul.f32 %v3613, %v7659
      %v7693 = vmul.f32 %v3613, %v7661
      %v7694 = vmul.f32 %v3617, %v7659
      %v7695 = vmul.f32 %v3617, %v7661
      %v7696 = vmul.f32 %v3621, %v7659
      %v7697 = vmul.f32 %v3621, %v7661
      %v7698 = vmul.f32 %v3625, %v7659
      %v7699 = vmul.f32 %v3625, %v7661
      %v7700 = vmul.f32 %v3629, %v7659
      %v7701 = vmul.f32 %v3629, %v7661
      %v7702 = vmul.f32 %v3633, %v7659
      %v7703 = vmul.f32 %v3633, %v7661
      %7744 = vrot.lane.b32.xlu0 %v7664, 96
      %v7745 = vpop.permute.xlu0 %7744
      %7746 = vrot.lane.b32.xlu0 %v7665, 96
      %v7747 = vpop.permute.xlu0 %7746
      %7748 = vrot.lane.b32.xlu0 %v7666, 96
      %v7749 = vpop.permute.xlu0 %7748
      %7750 = vrot.lane.b32.xlu0 %v7667, 96
      %v7751 = vpop.permute.xlu0 %7750
      %7752 = vrot.lane.b32.xlu0 %v7668, 96
      %v7753 = vpop.permute.xlu0 %7752
      %7754 = vrot.lane.b32.xlu0 %v7669, 96
      %v7755 = vpop.permute.xlu0 %7754
      %7756 = vrot.lane.b32.xlu0 %v7670, 96
      %v7757 = vpop.permute.xlu0 %7756
      %7758 = vrot.lane.b32.xlu0 %v7671, 96
      %v7759 = vpop.permute.xlu0 %7758
      %7760 = vrot.lane.b32.xlu0 %v7672, 96
      %v7761 = vpop.permute.xlu0 %7760
      %7762 = vrot.lane.b32.xlu0 %v7673, 96
      %v7763 = vpop.permute.xlu0 %7762
      %7764 = vrot.lane.b32.xlu0 %v7674, 96
      %v7765 = vpop.permute.xlu0 %7764
      %7766 = vrot.lane.b32.xlu0 %v7675, 96
      %v7767 = vpop.permute.xlu0 %7766
      %7768 = vrot.lane.b32.xlu0 %v7676, 96
      %v7769 = vpop.permute.xlu0 %7768
      %7770 = vrot.lane.b32.xlu0 %v7677, 96
      %v7771 = vpop.permute.xlu0 %7770
      %7772 = vrot.lane.b32.xlu0 %v7678, 96
      %v7773 = vpop.permute.xlu0 %7772
      %7774 = vrot.lane.b32.xlu0 %v7679, 96
      %v7775 = vpop.permute.xlu0 %7774
      %7776 = vrot.lane.b32.xlu0 %v7680, 96
      %v7777 = vpop.permute.xlu0 %7776
      %7778 = vrot.lane.b32.xlu0 %v7681, 96
      %v7779 = vpop.permute.xlu0 %7778
      %7780 = vrot.lane.b32.xlu0 %v7682, 96
      %v7781 = vpop.permute.xlu0 %7780
      %7782 = vrot.lane.b32.xlu0 %v7683, 96
      %v7783 = vpop.permute.xlu0 %7782
      %7784 = vrot.lane.b32.xlu0 %v7684, 96
      %v7785 = vpop.permute.xlu0 %7784
      %7786 = vrot.lane.b32.xlu0 %v7685, 96
      %v7787 = vpop.permute.xlu0 %7786
      %7788 = vrot.lane.b32.xlu0 %v7686, 96
      %v7789 = vpop.permute.xlu0 %7788
      %7790 = vrot.lane.b32.xlu0 %v7687, 96
      %v7791 = vpop.permute.xlu0 %7790
      %7792 = vrot.lane.b32.xlu0 %v7688, 96
      %v7793 = vpop.permute.xlu0 %7792
      %7794 = vrot.lane.b32.xlu0 %v7689, 96
      %v7795 = vpop.permute.xlu0 %7794
      %7796 = vrot.lane.b32.xlu0 %v7690, 96
      %v7797 = vpop.permute.xlu0 %7796
      %7798 = vrot.lane.b32.xlu0 %v7691, 96
      %v7799 = vpop.permute.xlu0 %7798
      %7800 = vrot.lane.b32.xlu0 %v7692, 96
      %v7801 = vpop.permute.xlu0 %7800
      %7802 = vrot.lane.b32.xlu0 %v7693, 96
      %v7803 = vpop.permute.xlu0 %7802
      %7804 = vrot.lane.b32.xlu0 %v7694, 96
      %v7805 = vpop.permute.xlu0 %7804
      %7806 = vrot.lane.b32.xlu0 %v7695, 96
      %v7807 = vpop.permute.xlu0 %7806
      %7808 = vrot.lane.b32.xlu0 %v7696, 96
      %v7809 = vpop.permute.xlu0 %7808
      %7810 = vrot.lane.b32.xlu0 %v7697, 96
      %v7811 = vpop.permute.xlu0 %7810
      %7812 = vrot.lane.b32.xlu0 %v7698, 96
      %v7813 = vpop.permute.xlu0 %7812
      %7814 = vrot.lane.b32.xlu0 %v7699, 96
      %v7815 = vpop.permute.xlu0 %7814
      %7816 = vrot.lane.b32.xlu0 %v7700, 96
      %v7817 = vpop.permute.xlu0 %7816
      %7818 = vrot.lane.b32.xlu0 %v7701, 96
      %v7819 = vpop.permute.xlu0 %7818
      %7820 = vrot.lane.b32.xlu0 %v7702, 96
      %v7821 = vpop.permute.xlu0 %7820
      %7822 = vrot.lane.b32.xlu0 %v7703, 96
      %v7823 = vpop.permute.xlu0 %7822
      %v7864 = vadd.f32 %v7616, %v7745
      %v7865 = vadd.f32 %v7617, %v7747
      %v7866 = vadd.f32 %v7618, %v7749
      %v7867 = vadd.f32 %v7619, %v7751
      %v7868 = vadd.f32 %v7620, %v7753
      %v7869 = vadd.f32 %v7621, %v7755
      %v7870 = vadd.f32 %v7622, %v7757
      %v7871 = vadd.f32 %v7623, %v7759
      %v7872 = vadd.f32 %v7624, %v7761
      %v7873 = vadd.f32 %v7625, %v7763
      %v7874 = vadd.f32 %v7626, %v7765
      %v7875 = vadd.f32 %v7627, %v7767
      %v7876 = vadd.f32 %v7628, %v7769
      %v7877 = vadd.f32 %v7629, %v7771
      %v7878 = vadd.f32 %v7630, %v7773
      %v7879 = vadd.f32 %v7631, %v7775
      %v7880 = vadd.f32 %v7632, %v7777
      %v7881 = vadd.f32 %v7633, %v7779
      %v7882 = vadd.f32 %v7634, %v7781
      %v7883 = vadd.f32 %v7635, %v7783
      %v7884 = vadd.f32 %v7636, %v7785
      %v7885 = vadd.f32 %v7637, %v7787
      %v7886 = vadd.f32 %v7638, %v7789
      %v7887 = vadd.f32 %v7639, %v7791
      %v7888 = vadd.f32 %v7640, %v7793
      %v7889 = vadd.f32 %v7641, %v7795
      %v7890 = vadd.f32 %v7642, %v7797
      %v7891 = vadd.f32 %v7643, %v7799
      %v7892 = vadd.f32 %v7644, %v7801
      %v7893 = vadd.f32 %v7645, %v7803
      %v7894 = vadd.f32 %v7646, %v7805
      %v7895 = vadd.f32 %v7647, %v7807
      %v7896 = vadd.f32 %v7648, %v7809
      %v7897 = vadd.f32 %v7649, %v7811
      %v7898 = vadd.f32 %v7650, %v7813
      %v7899 = vadd.f32 %v7651, %v7815
      %v7900 = vadd.f32 %v7652, %v7817
      %v7901 = vadd.f32 %v7653, %v7819
      %v7902 = vadd.f32 %v7654, %v7821
      %v7903 = vadd.f32 %v7655, %v7823
      %7906 = vrot.lane.b32.xlu0 %v4920, 32
      %v7907 = vpop.permute.xlu0 %7906
      %7908 = vrot.lane.b32.xlu0 %v4921, 32
      %v7909 = vpop.permute.xlu0 %7908
      %v7912 = vmul.f32 %v3717, %v7907
      %v7913 = vmul.f32 %v3717, %v7909
      %v7914 = vmul.f32 %v3721, %v7907
      %v7915 = vmul.f32 %v3721, %v7909
      %v7916 = vmul.f32 %v3725, %v7907
      %v7917 = vmul.f32 %v3725, %v7909
      %v7918 = vmul.f32 %v3729, %v7907
      %v7919 = vmul.f32 %v3729, %v7909
      %v7920 = vmul.f32 %v3733, %v7907
      %v7921 = vmul.f32 %v3733, %v7909
      %v7922 = vmul.f32 %v3737, %v7907
      %v7923 = vmul.f32 %v3737, %v7909
      %v7924 = vmul.f32 %v3741, %v7907
      %v7925 = vmul.f32 %v3741, %v7909
      %v7926 = vmul.f32 %v3745, %v7907
      %v7927 = vmul.f32 %v3745, %v7909
      %v7928 = vmul.f32 %v3749, %v7907
      %v7929 = vmul.f32 %v3749, %v7909
      %v7930 = vmul.f32 %v3753, %v7907
      %v7931 = vmul.f32 %v3753, %v7909
      %v7932 = vmul.f32 %v3757, %v7907
      %v7933 = vmul.f32 %v3757, %v7909
      %v7934 = vmul.f32 %v3761, %v7907
      %v7935 = vmul.f32 %v3761, %v7909
      %v7936 = vmul.f32 %v3765, %v7907
      %v7937 = vmul.f32 %v3765, %v7909
      %v7938 = vmul.f32 %v3769, %v7907
      %v7939 = vmul.f32 %v3769, %v7909
      %v7940 = vmul.f32 %v3773, %v7907
      %v7941 = vmul.f32 %v3773, %v7909
      %v7942 = vmul.f32 %v3777, %v7907
      %v7943 = vmul.f32 %v3777, %v7909
      %v7944 = vmul.f32 %v3781, %v7907
      %v7945 = vmul.f32 %v3781, %v7909
      %v7946 = vmul.f32 %v3785, %v7907
      %v7947 = vmul.f32 %v3785, %v7909
      %v7948 = vmul.f32 %v3789, %v7907
      %v7949 = vmul.f32 %v3789, %v7909
      %v7950 = vmul.f32 %v3793, %v7907
      %v7951 = vmul.f32 %v3793, %v7909
      %7992 = vrot.lane.b32.xlu0 %v7912, 96
      %v7993 = vpop.permute.xlu0 %7992
      %7994 = vrot.lane.b32.xlu0 %v7913, 96
      %v7995 = vpop.permute.xlu0 %7994
      %7996 = vrot.lane.b32.xlu0 %v7914, 96
      %v7997 = vpop.permute.xlu0 %7996
      %7998 = vrot.lane.b32.xlu0 %v7915, 96
      %v7999 = vpop.permute.xlu0 %7998
      %8000 = vrot.lane.b32.xlu0 %v7916, 96
      %v8001 = vpop.permute.xlu0 %8000
      %8002 = vrot.lane.b32.xlu0 %v7917, 96
      %v8003 = vpop.permute.xlu0 %8002
      %8004 = vrot.lane.b32.xlu0 %v7918, 96
      %v8005 = vpop.permute.xlu0 %8004
      %8006 = vrot.lane.b32.xlu0 %v7919, 96
      %v8007 = vpop.permute.xlu0 %8006
      %8008 = vrot.lane.b32.xlu0 %v7920, 96
      %v8009 = vpop.permute.xlu0 %8008
      %8010 = vrot.lane.b32.xlu0 %v7921, 96
      %v8011 = vpop.permute.xlu0 %8010
      %8012 = vrot.lane.b32.xlu0 %v7922, 96
      %v8013 = vpop.permute.xlu0 %8012
      %8014 = vrot.lane.b32.xlu0 %v7923, 96
      %v8015 = vpop.permute.xlu0 %8014
      %8016 = vrot.lane.b32.xlu0 %v7924, 96
      %v8017 = vpop.permute.xlu0 %8016
      %8018 = vrot.lane.b32.xlu0 %v7925, 96
      %v8019 = vpop.permute.xlu0 %8018
      %8020 = vrot.lane.b32.xlu0 %v7926, 96
      %v8021 = vpop.permute.xlu0 %8020
      %8022 = vrot.lane.b32.xlu0 %v7927, 96
      %v8023 = vpop.permute.xlu0 %8022
      %8024 = vrot.lane.b32.xlu0 %v7928, 96
      %v8025 = vpop.permute.xlu0 %8024
      %8026 = vrot.lane.b32.xlu0 %v7929, 96
      %v8027 = vpop.permute.xlu0 %8026
      %8028 = vrot.lane.b32.xlu0 %v7930, 96
      %v8029 = vpop.permute.xlu0 %8028
      %8030 = vrot.lane.b32.xlu0 %v7931, 96
      %v8031 = vpop.permute.xlu0 %8030
      %8032 = vrot.lane.b32.xlu0 %v7932, 96
      %v8033 = vpop.permute.xlu0 %8032
      %8034 = vrot.lane.b32.xlu0 %v7933, 96
      %v8035 = vpop.permute.xlu0 %8034
      %8036 = vrot.lane.b32.xlu0 %v7934, 96
      %v8037 = vpop.permute.xlu0 %8036
      %8038 = vrot.lane.b32.xlu0 %v7935, 96
      %v8039 = vpop.permute.xlu0 %8038
      %8040 = vrot.lane.b32.xlu0 %v7936, 96
      %v8041 = vpop.permute.xlu0 %8040
      %8042 = vrot.lane.b32.xlu0 %v7937, 96
      %v8043 = vpop.permute.xlu0 %8042
      %8044 = vrot.lane.b32.xlu0 %v7938, 96
      %v8045 = vpop.permute.xlu0 %8044
      %8046 = vrot.lane.b32.xlu0 %v7939, 96
      %v8047 = vpop.permute.xlu0 %8046
      %8048 = vrot.lane.b32.xlu0 %v7940, 96
      %v8049 = vpop.permute.xlu0 %8048
      %8050 = vrot.lane.b32.xlu0 %v7941, 96
      %v8051 = vpop.permute.xlu0 %8050
      %8052 = vrot.lane.b32.xlu0 %v7942, 96
      %v8053 = vpop.permute.xlu0 %8052
      %8054 = vrot.lane.b32.xlu0 %v7943, 96
      %v8055 = vpop.permute.xlu0 %8054
      %8056 = vrot.lane.b32.xlu0 %v7944, 96
      %v8057 = vpop.permute.xlu0 %8056
      %8058 = vrot.lane.b32.xlu0 %v7945, 96
      %v8059 = vpop.permute.xlu0 %8058
      %8060 = vrot.lane.b32.xlu0 %v7946, 96
      %v8061 = vpop.permute.xlu0 %8060
      %8062 = vrot.lane.b32.xlu0 %v7947, 96
      %v8063 = vpop.permute.xlu0 %8062
      %8064 = vrot.lane.b32.xlu0 %v7948, 96
      %v8065 = vpop.permute.xlu0 %8064
      %8066 = vrot.lane.b32.xlu0 %v7949, 96
      %v8067 = vpop.permute.xlu0 %8066
      %8068 = vrot.lane.b32.xlu0 %v7950, 96
      %v8069 = vpop.permute.xlu0 %8068
      %8070 = vrot.lane.b32.xlu0 %v7951, 96
      %v8071 = vpop.permute.xlu0 %8070
      %v8112 = vadd.f32 %v7864, %v7993
      %v8113 = vadd.f32 %v7865, %v7995
      %v8114 = vadd.f32 %v7866, %v7997
      %v8115 = vadd.f32 %v7867, %v7999
      %v8116 = vadd.f32 %v7868, %v8001
      %v8117 = vadd.f32 %v7869, %v8003
      %v8118 = vadd.f32 %v7870, %v8005
      %v8119 = vadd.f32 %v7871, %v8007
      %v8120 = vadd.f32 %v7872, %v8009
      %v8121 = vadd.f32 %v7873, %v8011
      %v8122 = vadd.f32 %v7874, %v8013
      %v8123 = vadd.f32 %v7875, %v8015
      %v8124 = vadd.f32 %v7876, %v8017
      %v8125 = vadd.f32 %v7877, %v8019
      %v8126 = vadd.f32 %v7878, %v8021
      %v8127 = vadd.f32 %v7879, %v8023
      %v8128 = vadd.f32 %v7880, %v8025
      %v8129 = vadd.f32 %v7881, %v8027
      %v8130 = vadd.f32 %v7882, %v8029
      %v8131 = vadd.f32 %v7883, %v8031
      %v8132 = vadd.f32 %v7884, %v8033
      %v8133 = vadd.f32 %v7885, %v8035
      %v8134 = vadd.f32 %v7886, %v8037
      %v8135 = vadd.f32 %v7887, %v8039
      %v8136 = vadd.f32 %v7888, %v8041
      %v8137 = vadd.f32 %v7889, %v8043
      %v8138 = vadd.f32 %v7890, %v8045
      %v8139 = vadd.f32 %v7891, %v8047
      %v8140 = vadd.f32 %v7892, %v8049
      %v8141 = vadd.f32 %v7893, %v8051
      %v8142 = vadd.f32 %v7894, %v8053
      %v8143 = vadd.f32 %v7895, %v8055
      %v8144 = vadd.f32 %v7896, %v8057
      %v8145 = vadd.f32 %v7897, %v8059
      %v8146 = vadd.f32 %v7898, %v8061
      %v8147 = vadd.f32 %v7899, %v8063
      %v8148 = vadd.f32 %v7900, %v8065
      %v8149 = vadd.f32 %v7901, %v8067
      %v8150 = vadd.f32 %v7902, %v8069
      %v8151 = vadd.f32 %v7903, %v8071
      %8154 = vrot.lane.b32.xlu0 %v4922, 32
      %v8155 = vpop.permute.xlu0 %8154
      %8156 = vrot.lane.b32.xlu0 %v4923, 32
      %v8157 = vpop.permute.xlu0 %8156
      %v8160 = vmul.f32 %v3877, %v8155
      %v8161 = vmul.f32 %v3877, %v8157
      %v8162 = vmul.f32 %v3881, %v8155
      %v8163 = vmul.f32 %v3881, %v8157
      %v8164 = vmul.f32 %v3885, %v8155
      %v8165 = vmul.f32 %v3885, %v8157
      %v8166 = vmul.f32 %v3889, %v8155
      %v8167 = vmul.f32 %v3889, %v8157
      %v8168 = vmul.f32 %v3893, %v8155
      %v8169 = vmul.f32 %v3893, %v8157
      %v8170 = vmul.f32 %v3897, %v8155
      %v8171 = vmul.f32 %v3897, %v8157
      %v8172 = vmul.f32 %v3901, %v8155
      %v8173 = vmul.f32 %v3901, %v8157
      %v8174 = vmul.f32 %v3905, %v8155
      %v8175 = vmul.f32 %v3905, %v8157
      %v8176 = vmul.f32 %v3909, %v8155
      %v8177 = vmul.f32 %v3909, %v8157
      %v8178 = vmul.f32 %v3913, %v8155
      %v8179 = vmul.f32 %v3913, %v8157
      %v8180 = vmul.f32 %v3917, %v8155
      %v8181 = vmul.f32 %v3917, %v8157
      %v8182 = vmul.f32 %v3921, %v8155
      %v8183 = vmul.f32 %v3921, %v8157
      %v8184 = vmul.f32 %v3925, %v8155
      %v8185 = vmul.f32 %v3925, %v8157
      %v8186 = vmul.f32 %v3929, %v8155
      %v8187 = vmul.f32 %v3929, %v8157
      %v8188 = vmul.f32 %v3933, %v8155
      %v8189 = vmul.f32 %v3933, %v8157
      %v8190 = vmul.f32 %v3937, %v8155
      %v8191 = vmul.f32 %v3937, %v8157
      %v8192 = vmul.f32 %v3941, %v8155
      %v8193 = vmul.f32 %v3941, %v8157
      %v8194 = vmul.f32 %v3945, %v8155
      %v8195 = vmul.f32 %v3945, %v8157
      %v8196 = vmul.f32 %v3949, %v8155
      %v8197 = vmul.f32 %v3949, %v8157
      %v8198 = vmul.f32 %v3953, %v8155
      %v8199 = vmul.f32 %v3953, %v8157
      %8240 = vrot.lane.b32.xlu0 %v8160, 96
      %v8241 = vpop.permute.xlu0 %8240
      %8242 = vrot.lane.b32.xlu0 %v8161, 96
      %v8243 = vpop.permute.xlu0 %8242
      %8244 = vrot.lane.b32.xlu0 %v8162, 96
      %v8245 = vpop.permute.xlu0 %8244
      %8246 = vrot.lane.b32.xlu0 %v8163, 96
      %v8247 = vpop.permute.xlu0 %8246
      %8248 = vrot.lane.b32.xlu0 %v8164, 96
      %v8249 = vpop.permute.xlu0 %8248
      %8250 = vrot.lane.b32.xlu0 %v8165, 96
      %v8251 = vpop.permute.xlu0 %8250
      %8252 = vrot.lane.b32.xlu0 %v8166, 96
      %v8253 = vpop.permute.xlu0 %8252
      %8254 = vrot.lane.b32.xlu0 %v8167, 96
      %v8255 = vpop.permute.xlu0 %8254
      %8256 = vrot.lane.b32.xlu0 %v8168, 96
      %v8257 = vpop.permute.xlu0 %8256
      %8258 = vrot.lane.b32.xlu0 %v8169, 96
      %v8259 = vpop.permute.xlu0 %8258
      %8260 = vrot.lane.b32.xlu0 %v8170, 96
      %v8261 = vpop.permute.xlu0 %8260
      %8262 = vrot.lane.b32.xlu0 %v8171, 96
      %v8263 = vpop.permute.xlu0 %8262
      %8264 = vrot.lane.b32.xlu0 %v8172, 96
      %v8265 = vpop.permute.xlu0 %8264
      %8266 = vrot.lane.b32.xlu0 %v8173, 96
      %v8267 = vpop.permute.xlu0 %8266
      %8268 = vrot.lane.b32.xlu0 %v8174, 96
      %v8269 = vpop.permute.xlu0 %8268
      %8270 = vrot.lane.b32.xlu0 %v8175, 96
      %v8271 = vpop.permute.xlu0 %8270
      %8272 = vrot.lane.b32.xlu0 %v8176, 96
      %v8273 = vpop.permute.xlu0 %8272
      %8274 = vrot.lane.b32.xlu0 %v8177, 96
      %v8275 = vpop.permute.xlu0 %8274
      %8276 = vrot.lane.b32.xlu0 %v8178, 96
      %v8277 = vpop.permute.xlu0 %8276
      %8278 = vrot.lane.b32.xlu0 %v8179, 96
      %v8279 = vpop.permute.xlu0 %8278
      %8280 = vrot.lane.b32.xlu0 %v8180, 96
      %v8281 = vpop.permute.xlu0 %8280
      %8282 = vrot.lane.b32.xlu0 %v8181, 96
      %v8283 = vpop.permute.xlu0 %8282
      %8284 = vrot.lane.b32.xlu0 %v8182, 96
      %v8285 = vpop.permute.xlu0 %8284
      %8286 = vrot.lane.b32.xlu0 %v8183, 96
      %v8287 = vpop.permute.xlu0 %8286
      %8288 = vrot.lane.b32.xlu0 %v8184, 96
      %v8289 = vpop.permute.xlu0 %8288
      %8290 = vrot.lane.b32.xlu0 %v8185, 96
      %v8291 = vpop.permute.xlu0 %8290
      %8292 = vrot.lane.b32.xlu0 %v8186, 96
      %v8293 = vpop.permute.xlu0 %8292
      %8294 = vrot.lane.b32.xlu0 %v8187, 96
      %v8295 = vpop.permute.xlu0 %8294
      %8296 = vrot.lane.b32.xlu0 %v8188, 96
      %v8297 = vpop.permute.xlu0 %8296
      %8298 = vrot.lane.b32.xlu0 %v8189, 96
      %v8299 = vpop.permute.xlu0 %8298
      %8300 = vrot.lane.b32.xlu0 %v8190, 96
      %v8301 = vpop.permute.xlu0 %8300
      %8302 = vrot.lane.b32.xlu0 %v8191, 96
      %v8303 = vpop.permute.xlu0 %8302
      %8304 = vrot.lane.b32.xlu0 %v8192, 96
      %v8305 = vpop.permute.xlu0 %8304
      %8306 = vrot.lane.b32.xlu0 %v8193, 96
      %v8307 = vpop.permute.xlu0 %8306
      %8308 = vrot.lane.b32.xlu0 %v8194, 96
      %v8309 = vpop.permute.xlu0 %8308
      %8310 = vrot.lane.b32.xlu0 %v8195, 96
      %v8311 = vpop.permute.xlu0 %8310
      %8312 = vrot.lane.b32.xlu0 %v8196, 96
      %v8313 = vpop.permute.xlu0 %8312
      %8314 = vrot.lane.b32.xlu0 %v8197, 96
      %v8315 = vpop.permute.xlu0 %8314
      %8316 = vrot.lane.b32.xlu0 %v8198, 96
      %v8317 = vpop.permute.xlu0 %8316
      %8318 = vrot.lane.b32.xlu0 %v8199, 96
      %v8319 = vpop.permute.xlu0 %8318
      %v8360 = vadd.f32 %v8112, %v8241
      %v8361 = vadd.f32 %v8113, %v8243
      %v8362 = vadd.f32 %v8114, %v8245
      %v8363 = vadd.f32 %v8115, %v8247
      %v8364 = vadd.f32 %v8116, %v8249
      %v8365 = vadd.f32 %v8117, %v8251
      %v8366 = vadd.f32 %v8118, %v8253
      %v8367 = vadd.f32 %v8119, %v8255
      %v8368 = vadd.f32 %v8120, %v8257
      %v8369 = vadd.f32 %v8121, %v8259
      %v8370 = vadd.f32 %v8122, %v8261
      %v8371 = vadd.f32 %v8123, %v8263
      %v8372 = vadd.f32 %v8124, %v8265
      %v8373 = vadd.f32 %v8125, %v8267
      %v8374 = vadd.f32 %v8126, %v8269
      %v8375 = vadd.f32 %v8127, %v8271
      %v8376 = vadd.f32 %v8128, %v8273
      %v8377 = vadd.f32 %v8129, %v8275
      %v8378 = vadd.f32 %v8130, %v8277
      %v8379 = vadd.f32 %v8131, %v8279
      %v8380 = vadd.f32 %v8132, %v8281
      %v8381 = vadd.f32 %v8133, %v8283
      %v8382 = vadd.f32 %v8134, %v8285
      %v8383 = vadd.f32 %v8135, %v8287
      %v8384 = vadd.f32 %v8136, %v8289
      %v8385 = vadd.f32 %v8137, %v8291
      %v8386 = vadd.f32 %v8138, %v8293
      %v8387 = vadd.f32 %v8139, %v8295
      %v8388 = vadd.f32 %v8140, %v8297
      %v8389 = vadd.f32 %v8141, %v8299
      %v8390 = vadd.f32 %v8142, %v8301
      %v8391 = vadd.f32 %v8143, %v8303
      %v8392 = vadd.f32 %v8144, %v8305
      %v8393 = vadd.f32 %v8145, %v8307
      %v8394 = vadd.f32 %v8146, %v8309
      %v8395 = vadd.f32 %v8147, %v8311
      %v8396 = vadd.f32 %v8148, %v8313
      %v8397 = vadd.f32 %v8149, %v8315
      %v8398 = vadd.f32 %v8150, %v8317
      %v8399 = vadd.f32 %v8151, %v8319
      %8402 = vrot.lane.b32.xlu0 %v4924, 32
      %v8403 = vpop.permute.xlu0 %8402
      %8404 = vrot.lane.b32.xlu0 %v4925, 32
      %v8405 = vpop.permute.xlu0 %8404
      %v8408 = vmul.f32 %v4037, %v8403
      %v8409 = vmul.f32 %v4037, %v8405
      %v8410 = vmul.f32 %v4041, %v8403
      %v8411 = vmul.f32 %v4041, %v8405
      %v8412 = vmul.f32 %v4045, %v8403
      %v8413 = vmul.f32 %v4045, %v8405
      %v8414 = vmul.f32 %v4049, %v8403
      %v8415 = vmul.f32 %v4049, %v8405
      %v8416 = vmul.f32 %v4053, %v8403
      %v8417 = vmul.f32 %v4053, %v8405
      %v8418 = vmul.f32 %v4057, %v8403
      %v8419 = vmul.f32 %v4057, %v8405
      %v8420 = vmul.f32 %v4061, %v8403
      %v8421 = vmul.f32 %v4061, %v8405
      %v8422 = vmul.f32 %v4065, %v8403
      %v8423 = vmul.f32 %v4065, %v8405
      %v8424 = vmul.f32 %v4069, %v8403
      %v8425 = vmul.f32 %v4069, %v8405
      %v8426 = vmul.f32 %v4073, %v8403
      %v8427 = vmul.f32 %v4073, %v8405
      %v8428 = vmul.f32 %v4077, %v8403
      %v8429 = vmul.f32 %v4077, %v8405
      %v8430 = vmul.f32 %v4081, %v8403
      %v8431 = vmul.f32 %v4081, %v8405
      %v8432 = vmul.f32 %v4085, %v8403
      %v8433 = vmul.f32 %v4085, %v8405
      %v8434 = vmul.f32 %v4089, %v8403
      %v8435 = vmul.f32 %v4089, %v8405
      %v8436 = vmul.f32 %v4093, %v8403
      %v8437 = vmul.f32 %v4093, %v8405
      %v8438 = vmul.f32 %v4097, %v8403
      %v8439 = vmul.f32 %v4097, %v8405
      %v8440 = vmul.f32 %v4101, %v8403
      %v8441 = vmul.f32 %v4101, %v8405
      %v8442 = vmul.f32 %v4105, %v8403
      %v8443 = vmul.f32 %v4105, %v8405
      %v8444 = vmul.f32 %v4109, %v8403
      %v8445 = vmul.f32 %v4109, %v8405
      %v8446 = vmul.f32 %v4113, %v8403
      %v8447 = vmul.f32 %v4113, %v8405
      %8488 = vrot.lane.b32.xlu0 %v8408, 96
      %v8489 = vpop.permute.xlu0 %8488
      %8490 = vrot.lane.b32.xlu0 %v8409, 96
      %v8491 = vpop.permute.xlu0 %8490
      %8492 = vrot.lane.b32.xlu0 %v8410, 96
      %v8493 = vpop.permute.xlu0 %8492
      %8494 = vrot.lane.b32.xlu0 %v8411, 96
      %v8495 = vpop.permute.xlu0 %8494
      %8496 = vrot.lane.b32.xlu0 %v8412, 96
      %v8497 = vpop.permute.xlu0 %8496
      %8498 = vrot.lane.b32.xlu0 %v8413, 96
      %v8499 = vpop.permute.xlu0 %8498
      %8500 = vrot.lane.b32.xlu0 %v8414, 96
      %v8501 = vpop.permute.xlu0 %8500
      %8502 = vrot.lane.b32.xlu0 %v8415, 96
      %v8503 = vpop.permute.xlu0 %8502
      %8504 = vrot.lane.b32.xlu0 %v8416, 96
      %v8505 = vpop.permute.xlu0 %8504
      %8506 = vrot.lane.b32.xlu0 %v8417, 96
      %v8507 = vpop.permute.xlu0 %8506
      %8508 = vrot.lane.b32.xlu0 %v8418, 96
      %v8509 = vpop.permute.xlu0 %8508
      %8510 = vrot.lane.b32.xlu0 %v8419, 96
      %v8511 = vpop.permute.xlu0 %8510
      %8512 = vrot.lane.b32.xlu0 %v8420, 96
      %v8513 = vpop.permute.xlu0 %8512
      %8514 = vrot.lane.b32.xlu0 %v8421, 96
      %v8515 = vpop.permute.xlu0 %8514
      %8516 = vrot.lane.b32.xlu0 %v8422, 96
      %v8517 = vpop.permute.xlu0 %8516
      %8518 = vrot.lane.b32.xlu0 %v8423, 96
      %v8519 = vpop.permute.xlu0 %8518
      %8520 = vrot.lane.b32.xlu0 %v8424, 96
      %v8521 = vpop.permute.xlu0 %8520
      %8522 = vrot.lane.b32.xlu0 %v8425, 96
      %v8523 = vpop.permute.xlu0 %8522
      %8524 = vrot.lane.b32.xlu0 %v8426, 96
      %v8525 = vpop.permute.xlu0 %8524
      %8526 = vrot.lane.b32.xlu0 %v8427, 96
      %v8527 = vpop.permute.xlu0 %8526
      %8528 = vrot.lane.b32.xlu0 %v8428, 96
      %v8529 = vpop.permute.xlu0 %8528
      %8530 = vrot.lane.b32.xlu0 %v8429, 96
      %v8531 = vpop.permute.xlu0 %8530
      %8532 = vrot.lane.b32.xlu0 %v8430, 96
      %v8533 = vpop.permute.xlu0 %8532
      %8534 = vrot.lane.b32.xlu0 %v8431, 96
      %v8535 = vpop.permute.xlu0 %8534
      %8536 = vrot.lane.b32.xlu0 %v8432, 96
      %v8537 = vpop.permute.xlu0 %8536
      %8538 = vrot.lane.b32.xlu0 %v8433, 96
      %v8539 = vpop.permute.xlu0 %8538
      %8540 = vrot.lane.b32.xlu0 %v8434, 96
      %v8541 = vpop.permute.xlu0 %8540
      %8542 = vrot.lane.b32.xlu0 %v8435, 96
      %v8543 = vpop.permute.xlu0 %8542
      %8544 = vrot.lane.b32.xlu0 %v8436, 96
      %v8545 = vpop.permute.xlu0 %8544
      %8546 = vrot.lane.b32.xlu0 %v8437, 96
      %v8547 = vpop.permute.xlu0 %8546
      %8548 = vrot.lane.b32.xlu0 %v8438, 96
      %v8549 = vpop.permute.xlu0 %8548
      %8550 = vrot.lane.b32.xlu0 %v8439, 96
      %v8551 = vpop.permute.xlu0 %8550
      %8552 = vrot.lane.b32.xlu0 %v8440, 96
      %v8553 = vpop.permute.xlu0 %8552
      %8554 = vrot.lane.b32.xlu0 %v8441, 96
      %v8555 = vpop.permute.xlu0 %8554
      %8556 = vrot.lane.b32.xlu0 %v8442, 96
      %v8557 = vpop.permute.xlu0 %8556
      %8558 = vrot.lane.b32.xlu0 %v8443, 96
      %v8559 = vpop.permute.xlu0 %8558
      %8560 = vrot.lane.b32.xlu0 %v8444, 96
      %v8561 = vpop.permute.xlu0 %8560
      %8562 = vrot.lane.b32.xlu0 %v8445, 96
      %v8563 = vpop.permute.xlu0 %8562
      %8564 = vrot.lane.b32.xlu0 %v8446, 96
      %v8565 = vpop.permute.xlu0 %8564
      %8566 = vrot.lane.b32.xlu0 %v8447, 96
      %v8567 = vpop.permute.xlu0 %8566
      %v8608 = vadd.f32 %v8360, %v8489
      %v8609 = vadd.f32 %v8361, %v8491
      %v8610 = vadd.f32 %v8362, %v8493
      %v8611 = vadd.f32 %v8363, %v8495
      %v8612 = vadd.f32 %v8364, %v8497
      %v8613 = vadd.f32 %v8365, %v8499
      %v8614 = vadd.f32 %v8366, %v8501
      %v8615 = vadd.f32 %v8367, %v8503
      %v8616 = vadd.f32 %v8368, %v8505
      %v8617 = vadd.f32 %v8369, %v8507
      %v8618 = vadd.f32 %v8370, %v8509
      %v8619 = vadd.f32 %v8371, %v8511
      %v8620 = vadd.f32 %v8372, %v8513
      %v8621 = vadd.f32 %v8373, %v8515
      %v8622 = vadd.f32 %v8374, %v8517
      %v8623 = vadd.f32 %v8375, %v8519
      %v8624 = vadd.f32 %v8376, %v8521
      %v8625 = vadd.f32 %v8377, %v8523
      %v8626 = vadd.f32 %v8378, %v8525
      %v8627 = vadd.f32 %v8379, %v8527
      %v8628 = vadd.f32 %v8380, %v8529
      %v8629 = vadd.f32 %v8381, %v8531
      %v8630 = vadd.f32 %v8382, %v8533
      %v8631 = vadd.f32 %v8383, %v8535
      %v8632 = vadd.f32 %v8384, %v8537
      %v8633 = vadd.f32 %v8385, %v8539
      %v8634 = vadd.f32 %v8386, %v8541
      %v8635 = vadd.f32 %v8387, %v8543
      %v8636 = vadd.f32 %v8388, %v8545
      %v8637 = vadd.f32 %v8389, %v8547
      %v8638 = vadd.f32 %v8390, %v8549
      %v8639 = vadd.f32 %v8391, %v8551
      %v8640 = vadd.f32 %v8392, %v8553
      %v8641 = vadd.f32 %v8393, %v8555
      %v8642 = vadd.f32 %v8394, %v8557
      %v8643 = vadd.f32 %v8395, %v8559
      %v8644 = vadd.f32 %v8396, %v8561
      %v8645 = vadd.f32 %v8397, %v8563
      %v8646 = vadd.f32 %v8398, %v8565
      %v8647 = vadd.f32 %v8399, %v8567
      %8650 = vrot.lane.b32.xlu0 %v4926, 32
      %v8651 = vpop.permute.xlu0 %8650
      %8652 = vrot.lane.b32.xlu0 %v4927, 32
      %v8653 = vpop.permute.xlu0 %8652
      %v8656 = vmul.f32 %v4197, %v8651
      %v8657 = vmul.f32 %v4197, %v8653
      %v8658 = vmul.f32 %v4201, %v8651
      %v8659 = vmul.f32 %v4201, %v8653
      %v8660 = vmul.f32 %v4205, %v8651
      %v8661 = vmul.f32 %v4205, %v8653
      %v8662 = vmul.f32 %v4209, %v8651
      %v8663 = vmul.f32 %v4209, %v8653
      %v8664 = vmul.f32 %v4213, %v8651
      %v8665 = vmul.f32 %v4213, %v8653
      %v8666 = vmul.f32 %v4217, %v8651
      %v8667 = vmul.f32 %v4217, %v8653
      %v8668 = vmul.f32 %v4221, %v8651
      %v8669 = vmul.f32 %v4221, %v8653
      %v8670 = vmul.f32 %v4225, %v8651
      %v8671 = vmul.f32 %v4225, %v8653
      %v8672 = vmul.f32 %v4229, %v8651
      %v8673 = vmul.f32 %v4229, %v8653
      %v8674 = vmul.f32 %v4233, %v8651
      %v8675 = vmul.f32 %v4233, %v8653
      %v8676 = vmul.f32 %v4237, %v8651
      %v8677 = vmul.f32 %v4237, %v8653
      %v8678 = vmul.f32 %v4241, %v8651
      %v8679 = vmul.f32 %v4241, %v8653
      %v8680 = vmul.f32 %v4245, %v8651
      %v8681 = vmul.f32 %v4245, %v8653
      %v8682 = vmul.f32 %v4249, %v8651
      %v8683 = vmul.f32 %v4249, %v8653
      %v8684 = vmul.f32 %v4253, %v8651
      %v8685 = vmul.f32 %v4253, %v8653
      %v8686 = vmul.f32 %v4257, %v8651
      %v8687 = vmul.f32 %v4257, %v8653
      %v8688 = vmul.f32 %v4261, %v8651
      %v8689 = vmul.f32 %v4261, %v8653
      %v8690 = vmul.f32 %v4265, %v8651
      %v8691 = vmul.f32 %v4265, %v8653
      %v8692 = vmul.f32 %v4269, %v8651
      %v8693 = vmul.f32 %v4269, %v8653
      %v8694 = vmul.f32 %v4273, %v8651
      %v8695 = vmul.f32 %v4273, %v8653
      %8736 = vrot.lane.b32.xlu0 %v8656, 96
      %v8737 = vpop.permute.xlu0 %8736
      %8738 = vrot.lane.b32.xlu0 %v8657, 96
      %v8739 = vpop.permute.xlu0 %8738
      %8740 = vrot.lane.b32.xlu0 %v8658, 96
      %v8741 = vpop.permute.xlu0 %8740
      %8742 = vrot.lane.b32.xlu0 %v8659, 96
      %v8743 = vpop.permute.xlu0 %8742
      %8744 = vrot.lane.b32.xlu0 %v8660, 96
      %v8745 = vpop.permute.xlu0 %8744
      %8746 = vrot.lane.b32.xlu0 %v8661, 96
      %v8747 = vpop.permute.xlu0 %8746
      %8748 = vrot.lane.b32.xlu0 %v8662, 96
      %v8749 = vpop.permute.xlu0 %8748
      %8750 = vrot.lane.b32.xlu0 %v8663, 96
      %v8751 = vpop.permute.xlu0 %8750
      %8752 = vrot.lane.b32.xlu0 %v8664, 96
      %v8753 = vpop.permute.xlu0 %8752
      %8754 = vrot.lane.b32.xlu0 %v8665, 96
      %v8755 = vpop.permute.xlu0 %8754
      %8756 = vrot.lane.b32.xlu0 %v8666, 96
      %v8757 = vpop.permute.xlu0 %8756
      %8758 = vrot.lane.b32.xlu0 %v8667, 96
      %v8759 = vpop.permute.xlu0 %8758
      %8760 = vrot.lane.b32.xlu0 %v8668, 96
      %v8761 = vpop.permute.xlu0 %8760
      %8762 = vrot.lane.b32.xlu0 %v8669, 96
      %v8763 = vpop.permute.xlu0 %8762
      %8764 = vrot.lane.b32.xlu0 %v8670, 96
      %v8765 = vpop.permute.xlu0 %8764
      %8766 = vrot.lane.b32.xlu0 %v8671, 96
      %v8767 = vpop.permute.xlu0 %8766
      %8768 = vrot.lane.b32.xlu0 %v8672, 96
      %v8769 = vpop.permute.xlu0 %8768
      %8770 = vrot.lane.b32.xlu0 %v8673, 96
      %v8771 = vpop.permute.xlu0 %8770
      %8772 = vrot.lane.b32.xlu0 %v8674, 96
      %v8773 = vpop.permute.xlu0 %8772
      %8774 = vrot.lane.b32.xlu0 %v8675, 96
      %v8775 = vpop.permute.xlu0 %8774
      %8776 = vrot.lane.b32.xlu0 %v8676, 96
      %v8777 = vpop.permute.xlu0 %8776
      %8778 = vrot.lane.b32.xlu0 %v8677, 96
      %v8779 = vpop.permute.xlu0 %8778
      %8780 = vrot.lane.b32.xlu0 %v8678, 96
      %v8781 = vpop.permute.xlu0 %8780
      %8782 = vrot.lane.b32.xlu0 %v8679, 96
      %v8783 = vpop.permute.xlu0 %8782
      %8784 = vrot.lane.b32.xlu0 %v8680, 96
      %v8785 = vpop.permute.xlu0 %8784
      %8786 = vrot.lane.b32.xlu0 %v8681, 96
      %v8787 = vpop.permute.xlu0 %8786
      %8788 = vrot.lane.b32.xlu0 %v8682, 96
      %v8789 = vpop.permute.xlu0 %8788
      %8790 = vrot.lane.b32.xlu0 %v8683, 96
      %v8791 = vpop.permute.xlu0 %8790
      %8792 = vrot.lane.b32.xlu0 %v8684, 96
      %v8793 = vpop.permute.xlu0 %8792
      %8794 = vrot.lane.b32.xlu0 %v8685, 96
      %v8795 = vpop.permute.xlu0 %8794
      %8796 = vrot.lane.b32.xlu0 %v8686, 96
      %v8797 = vpop.permute.xlu0 %8796
      %8798 = vrot.lane.b32.xlu0 %v8687, 96
      %v8799 = vpop.permute.xlu0 %8798
      %8800 = vrot.lane.b32.xlu0 %v8688, 96
      %v8801 = vpop.permute.xlu0 %8800
      %8802 = vrot.lane.b32.xlu0 %v8689, 96
      %v8803 = vpop.permute.xlu0 %8802
      %8804 = vrot.lane.b32.xlu0 %v8690, 96
      %v8805 = vpop.permute.xlu0 %8804
      %8806 = vrot.lane.b32.xlu0 %v8691, 96
      %v8807 = vpop.permute.xlu0 %8806
      %8808 = vrot.lane.b32.xlu0 %v8692, 96
      %v8809 = vpop.permute.xlu0 %8808
      %8810 = vrot.lane.b32.xlu0 %v8693, 96
      %v8811 = vpop.permute.xlu0 %8810
      %8812 = vrot.lane.b32.xlu0 %v8694, 96
      %v8813 = vpop.permute.xlu0 %8812
      %8814 = vrot.lane.b32.xlu0 %v8695, 96
      %v8815 = vpop.permute.xlu0 %8814
      %v8856 = vadd.f32 %v8608, %v8737
      %v8857 = vadd.f32 %v8609, %v8739
      %v8858 = vadd.f32 %v8610, %v8741
      %v8859 = vadd.f32 %v8611, %v8743
      %v8860 = vadd.f32 %v8612, %v8745
      %v8861 = vadd.f32 %v8613, %v8747
      %v8862 = vadd.f32 %v8614, %v8749
      %v8863 = vadd.f32 %v8615, %v8751
      %v8864 = vadd.f32 %v8616, %v8753
      %v8865 = vadd.f32 %v8617, %v8755
      %v8866 = vadd.f32 %v8618, %v8757
      %v8867 = vadd.f32 %v8619, %v8759
      %v8868 = vadd.f32 %v8620, %v8761
      %v8869 = vadd.f32 %v8621, %v8763
      %v8870 = vadd.f32 %v8622, %v8765
      %v8871 = vadd.f32 %v8623, %v8767
      %v8872 = vadd.f32 %v8624, %v8769
      %v8873 = vadd.f32 %v8625, %v8771
      %v8874 = vadd.f32 %v8626, %v8773
      %v8875 = vadd.f32 %v8627, %v8775
      %v8876 = vadd.f32 %v8628, %v8777
      %v8877 = vadd.f32 %v8629, %v8779
      %v8878 = vadd.f32 %v8630, %v8781
      %v8879 = vadd.f32 %v8631, %v8783
      %v8880 = vadd.f32 %v8632, %v8785
      %v8881 = vadd.f32 %v8633, %v8787
      %v8882 = vadd.f32 %v8634, %v8789
      %v8883 = vadd.f32 %v8635, %v8791
      %v8884 = vadd.f32 %v8636, %v8793
      %v8885 = vadd.f32 %v8637, %v8795
      %v8886 = vadd.f32 %v8638, %v8797
      %v8887 = vadd.f32 %v8639, %v8799
      %v8888 = vadd.f32 %v8640, %v8801
      %v8889 = vadd.f32 %v8641, %v8803
      %v8890 = vadd.f32 %v8642, %v8805
      %v8891 = vadd.f32 %v8643, %v8807
      %v8892 = vadd.f32 %v8644, %v8809
      %v8893 = vadd.f32 %v8645, %v8811
      %v8894 = vadd.f32 %v8646, %v8813
      %v8895 = vadd.f32 %v8647, %v8815
      %s8896 = scalar_lea.vmem %s5, 16
      %v8897 = vld [vmem:[%s8896] sm:$0xff]
      %s8898 = scalar_lea.vmem %s6, 2
      %v8899 = vld [vmem:[%s8898] sm:$0x1]
      %v8901 = vlaneseq
      %v8902 = vshrl.u32 %v8901, 7
      %v8903 = vsub.s32 0, %v8902
      %v8904 = vrot.slane %v8899, %v8903
      %8906 = vrot.lane.b32.xlu0 %v1222, 112
      %v8907 = vpop.permute.xlu0 %8906
      %8908 = vrot.lane.b32.xlu0 %v1223, 112
      %v8909 = vpop.permute.xlu0 %8908
      %8910 = vrot.lane.b32.xlu0 %v1224, 112
      %v8911 = vpop.permute.xlu0 %8910
      %8912 = vrot.lane.b32.xlu0 %v1225, 112
      %v8913 = vpop.permute.xlu0 %8912
      %8914 = vrot.lane.b32.xlu0 %v1226, 112
      %v8915 = vpop.permute.xlu0 %8914
      %8916 = vrot.lane.b32.xlu0 %v1227, 112
      %v8917 = vpop.permute.xlu0 %8916
      %8918 = vrot.lane.b32.xlu0 %v1228, 112
      %v8919 = vpop.permute.xlu0 %8918
      %8920 = vrot.lane.b32.xlu0 %v1229, 112
      %v8921 = vpop.permute.xlu0 %8920
      %8922 = vrot.lane.b32.xlu0 %v1230, 112
      %v8923 = vpop.permute.xlu0 %8922
      %8924 = vrot.lane.b32.xlu0 %v1231, 112
      %v8925 = vpop.permute.xlu0 %8924
      %8926 = vrot.lane.b32.xlu0 %v1232, 112
      %v8927 = vpop.permute.xlu0 %8926
      %8928 = vrot.lane.b32.xlu0 %v1233, 112
      %v8929 = vpop.permute.xlu0 %8928
      %8930 = vrot.lane.b32.xlu0 %v1234, 112
      %v8931 = vpop.permute.xlu0 %8930
      %8932 = vrot.lane.b32.xlu0 %v1235, 112
      %v8933 = vpop.permute.xlu0 %8932
      %8934 = vrot.lane.b32.xlu0 %v1236, 112
      %v8935 = vpop.permute.xlu0 %8934
      %8936 = vrot.lane.b32.xlu0 %v1237, 112
      %v8937 = vpop.permute.xlu0 %8936
      %8938 = vrot.lane.b32.xlu0 %v1238, 112
      %v8939 = vpop.permute.xlu0 %8938
      %8940 = vrot.lane.b32.xlu0 %v1239, 112
      %v8941 = vpop.permute.xlu0 %8940
      %8942 = vrot.lane.b32.xlu0 %v1240, 112
      %v8943 = vpop.permute.xlu0 %8942
      %8944 = vrot.lane.b32.xlu0 %v1241, 112
      %v8945 = vpop.permute.xlu0 %8944
      %8946 = vrot.lane.b32.xlu0 %v1242, 112
      %v8947 = vpop.permute.xlu0 %8946
      %8948 = vrot.lane.b32.xlu0 %v1243, 112
      %v8949 = vpop.permute.xlu0 %8948
      %8950 = vrot.lane.b32.xlu0 %v1244, 112
      %v8951 = vpop.permute.xlu0 %8950
      %8952 = vrot.lane.b32.xlu0 %v1245, 112
      %v8953 = vpop.permute.xlu0 %8952
      %8954 = vrot.lane.b32.xlu0 %v1246, 112
      %v8955 = vpop.permute.xlu0 %8954
      %8956 = vrot.lane.b32.xlu0 %v1247, 112
      %v8957 = vpop.permute.xlu0 %8956
      %8958 = vrot.lane.b32.xlu0 %v1248, 112
      %v8959 = vpop.permute.xlu0 %8958
      %8960 = vrot.lane.b32.xlu0 %v1249, 112
      %v8961 = vpop.permute.xlu0 %8960
      %8962 = vrot.lane.b32.xlu0 %v1250, 112
      %v8963 = vpop.permute.xlu0 %8962
      %8964 = vrot.lane.b32.xlu0 %v1251, 112
      %v8965 = vpop.permute.xlu0 %8964
      %8966 = vrot.lane.b32.xlu0 %v1252, 112
      %v8967 = vpop.permute.xlu0 %8966
      %8968 = vrot.lane.b32.xlu0 %v1253, 112
      %v8969 = vpop.permute.xlu0 %8968
      %v8970 = vsel %vm1262, %v8907, 0
      %v8972 = vsel %vm1262, %v8909, 0
      %v8974 = vsel %vm1262, %v8911, 0
      %v8976 = vsel %vm1262, %v8913, 0
      %v8978 = vsel %vm1262, %v8915, 0
      %v8980 = vsel %vm1262, %v8917, 0
      %v8982 = vsel %vm1262, %v8919, 0
      %v8984 = vsel %vm1262, %v8921, 0
      %v8986 = vsel %vm1262, %v8923, 0
      %v8988 = vsel %vm1262, %v8925, 0
      %v8990 = vsel %vm1262, %v8927, 0
      %v8992 = vsel %vm1262, %v8929, 0
      %v8994 = vsel %vm1262, %v8931, 0
      %v8996 = vsel %vm1262, %v8933, 0
      %v8998 = vsel %vm1262, %v8935, 0
      %v9000 = vsel %vm1262, %v8937, 0
      %v9002 = vsel %vm1262, %v8939, 0
      %v9004 = vsel %vm1262, %v8941, 0
      %v9006 = vsel %vm1262, %v8943, 0
      %v9008 = vsel %vm1262, %v8945, 0
      %v9010 = vsel %vm1262, %v8947, 0
      %v9012 = vsel %vm1262, %v8949, 0
      %v9014 = vsel %vm1262, %v8951, 0
      %v9016 = vsel %vm1262, %v8953, 0
      %v9018 = vsel %vm1262, %v8955, 0
      %v9020 = vsel %vm1262, %v8957, 0
      %v9022 = vsel %vm1262, %v8959, 0
      %v9024 = vsel %vm1262, %v8961, 0
      %v9026 = vsel %vm1262, %v8963, 0
      %v9028 = vsel %vm1262, %v8965, 0
      %v9030 = vsel %vm1262, %v8967, 0
      %v9032 = vsel %vm1262, %v8969, 0
      %9034 = vmatprep.subr.mxu0 0.0
      %9035 = vmatpush1.msra.mxu0 %v8897
      %9036 = vmatprep.subr.mxu0 0.0
      %9037 = vmatpush1.msra.mxu0 0.0
      %9038 = vmatprep.subr.mxu0 0.0
      %9039 = vmatpush1.msra.mxu0 0.0
      %9040 = vmatprep.subr.mxu0 0.0
      %9041 = vmatpush1.msra.mxu0 0.0
      %9042 = vmatprep.subr.mxu0 0.0
      %9043 = vmatpush1.msra.mxu0 0.0
      %9044 = vmatprep.subr.mxu0 0.0
      %9045 = vmatpush1.msra.mxu0 0.0
      %9046 = vmatprep.subr.mxu0 0.0
      %9047 = vmatpush1.msra.mxu0 0.0
      %9048 = vmatprep.subr.mxu0 0.0
      %9049 = vmatpush1.msra.mxu0 0.0
      %9050 = vmatprep.subr.mxu0 0.0
      %9051 = vmatpush1.msra.mxu0 0.0
      %9052 = vmatprep.subr.mxu0 0.0
      %9053 = vmatpush1.msra.mxu0 0.0
      %9054 = vmatprep.subr.mxu0 0.0
      %9055 = vmatpush1.msra.mxu0 0.0
      %9056 = vmatprep.subr.mxu0 0.0
      %9057 = vmatpush1.msra.mxu0 0.0
      %9058 = vmatprep.subr.mxu0 0.0
      %9059 = vmatpush1.msra.mxu0 0.0
      %9060 = vmatprep.subr.mxu0 0.0
      %9061 = vmatpush1.msra.mxu0 0.0
      %9062 = vmatprep.subr.mxu0 0.0
      %9063 = vmatpush1.msra.mxu0 0.0
      %9064 = vmatprep.subr.mxu0 0.0
      %9065 = vmatpush1.msra.mxu0 0.0
      %9066 = vmatprep.subr.mxu0 0.0
      %9067 = vmatpush1.msra.mxu0 0.0
      %9068 = vmatprep.subr.mxu0 0.0
      %9069 = vmatpush1.msra.mxu0 0.0
      %9070 = vmatprep.subr.mxu0 0.0
      %9071 = vmatpush1.msra.mxu0 0.0
      %9072 = vmatprep.subr.mxu0 0.0
      %9073 = vmatpush1.msra.mxu0 0.0
      %9074 = vmatprep.subr.mxu0 0.0
      %9075 = vmatpush1.msra.mxu0 0.0
      %9076 = vmatprep.subr.mxu0 0.0
      %9077 = vmatpush1.msra.mxu0 0.0
      %9078 = vmatprep.subr.mxu0 0.0
      %9079 = vmatpush1.msra.mxu0 0.0
      %9080 = vmatprep.subr.mxu0 0.0
      %9081 = vmatpush1.msra.mxu0 0.0
      %9082 = vmatprep.subr.mxu0 0.0
      %9083 = vmatpush1.msra.mxu0 0.0
      %9084 = vmatprep.subr.mxu0 0.0
      %9085 = vmatpush1.msra.mxu0 0.0
      %9086 = vmatprep.subr.mxu0 0.0
      %9087 = vmatpush1.msra.mxu0 0.0
      %9088 = vmatprep.subr.mxu0 0.0
      %9089 = vmatpush1.msra.mxu0 0.0
      %9090 = vmatprep.subr.mxu0 0.0
      %9091 = vmatpush1.msra.mxu0 0.0
      %9092 = vmatprep.subr.mxu0 0.0
      %9093 = vmatpush1.msra.mxu0 0.0
      %9094 = vmatprep.subr.mxu0 0.0
      %9095 = vmatpush1.msra.mxu0 0.0
      %9096 = vmatprep.subr.mxu0 0.0
      %9097 = vmatpush1.msra.mxu0 0.0
      %9098 = vmatprep.mubr.f32.mxu0 0.0
      %9099 = vmatmul.mubr.f32.gmra.mrb[0].mxu0 %v8970
      %v9100 = vpop.f32.mrb[0].mxu0
      %v9101 = vadd.f32 %v8904, %v9100
      %v9102 = vpop.f32.mrb[0].mxu0
      %9103 = vmatprep.mubr.f32.mxu0 0.0
      %9104 = vmatmul.mubr.f32.gmra.mrb[0].mxu0 %v8972
      %v9105 = vpop.f32.mrb[0].mxu0
      %v9106 = vadd.f32 %v8904, %v9105
      %v9107 = vpop.f32.mrb[0].mxu0
      %9108 = vmatprep.mubr.f32.mxu0 0.0
      %9109 = vmatmul.mubr.f32.gmra.mrb[0].mxu0 %v8974
      %v9110 = vpop.f32.mrb[0].mxu0
      %v9111 = vadd.f32 %v8904, %v9110
      %v9112 = vpop.f32.mrb[0].mxu0
      %9113 = vmatprep.mubr.f32.mxu0 0.0
      %9114 = vmatmul.mubr.f32.gmra.mrb[0].mxu0 %v8976
      %v9115 = vpop.f32.mrb[0].mxu0
      %v9116 = vadd.f32 %v8904, %v9115
      %v9117 = vpop.f32.mrb[0].mxu0
      %9118 = vmatprep.mubr.f32.mxu0 0.0
      %9119 = vmatmul.mubr.f32.gmra.mrb[0].mxu0 %v8978
      %v9120 = vpop.f32.mrb[0].mxu0
      %v9121 = vadd.f32 %v8904, %v9120
      %v9122 = vpop.f32.mrb[0].mxu0
      %9123 = vmatprep.mubr.f32.mxu0 0.0
      %9124 = vmatmul.mubr.f32.gmra.mrb[0].mxu0 %v8980
      %v9125 = vpop.f32.mrb[0].mxu0
      %v9126 = vadd.f32 %v8904, %v9125
      %v9127 = vpop.f32.mrb[0].mxu0
      %9128 = vmatprep.mubr.f32.mxu0 0.0
      %9129 = vmatmul.mubr.f32.gmra.mrb[0].mxu0 %v8982
      %v9130 = vpop.f32.mrb[0].mxu0
      %v9131 = vadd.f32 %v8904, %v9130
      %v9132 = vpop.f32.mrb[0].mxu0
      %9133 = vmatprep.mubr.f32.mxu0 0.0
      %9134 = vmatmul.mubr.f32.gmra.mrb[0].mxu0 %v8984
      %v9135 = vpop.f32.mrb[0].mxu0
      %v9136 = vadd.f32 %v8904, %v9135
      %v9137 = vpop.f32.mrb[0].mxu0
      %9138 = vmatprep.mubr.f32.mxu0 0.0
      %9139 = vmatmul.mubr.f32.gmra.mrb[0].mxu0 %v8986
      %v9140 = vpop.f32.mrb[0].mxu0
      %v9141 = vadd.f32 %v8904, %v9140
      %v9142 = vpop.f32.mrb[0].mxu0
      %9143 = vmatprep.mubr.f32.mxu0 0.0
      %9144 = vmatmul.mubr.f32.gmra.mrb[0].mxu0 %v8988
      %v9145 = vpop.f32.mrb[0].mxu0
      %v9146 = vadd.f32 %v8904, %v9145
      %v9147 = vpop.f32.mrb[0].mxu0
      %9148 = vmatprep.mubr.f32.mxu0 0.0
      %9149 = vmatmul.mubr.f32.gmra.mrb[0].mxu0 %v8990
      %v9150 = vpop.f32.mrb[0].mxu0
      %v9151 = vadd.f32 %v8904, %v9150
      %v9152 = vpop.f32.mrb[0].mxu0
      %9153 = vmatprep.mubr.f32.mxu0 0.0
      %9154 = vmatmul.mubr.f32.gmra.mrb[0].mxu0 %v8992
      %v9155 = vpop.f32.mrb[0].mxu0
      %v9156 = vadd.f32 %v8904, %v9155
      %v9157 = vpop.f32.mrb[0].mxu0
      %9158 = vmatprep.mubr.f32.mxu0 0.0
      %9159 = vmatmul.mubr.f32.gmra.mrb[0].mxu0 %v8994
      %v9160 = vpop.f32.mrb[0].mxu0
      %v9161 = vadd.f32 %v8904, %v9160
      %v9162 = vpop.f32.mrb[0].mxu0
      %9163 = vmatprep.mubr.f32.mxu0 0.0
      %9164 = vmatmul.mubr.f32.gmra.mrb[0].mxu0 %v8996
      %v9165 = vpop.f32.mrb[0].mxu0
      %v9166 = vadd.f32 %v8904, %v9165
      %v9167 = vpop.f32.mrb[0].mxu0
      %9168 = vmatprep.mubr.f32.mxu0 0.0
      %9169 = vmatmul.mubr.f32.gmra.mrb[0].mxu0 %v8998
      %v9170 = vpop.f32.mrb[0].mxu0
      %v9171 = vadd.f32 %v8904, %v9170
      %v9172 = vpop.f32.mrb[0].mxu0
      %9173 = vmatprep.mubr.f32.mxu0 0.0
      %9174 = vmatmul.mubr.f32.gmra.mrb[0].mxu0 %v9000
      %v9175 = vpop.f32.mrb[0].mxu0
      %v9176 = vadd.f32 %v8904, %v9175
      %v9177 = vpop.f32.mrb[0].mxu0
      %9178 = vmatprep.mubr.f32.mxu0 0.0
      %9179 = vmatmul.mubr.f32.gmra.mrb[0].mxu0 %v9002
      %v9180 = vpop.f32.mrb[0].mxu0
      %v9181 = vadd.f32 %v8904, %v9180
      %v9182 = vpop.f32.mrb[0].mxu0
      %9183 = vmatprep.mubr.f32.mxu0 0.0
      %9184 = vmatmul.mubr.f32.gmra.mrb[0].mxu0 %v9004
      %v9185 = vpop.f32.mrb[0].mxu0
      %v9186 = vadd.f32 %v8904, %v9185
      %v9187 = vpop.f32.mrb[0].mxu0
      %9188 = vmatprep.mubr.f32.mxu0 0.0
      %9189 = vmatmul.mubr.f32.gmra.mrb[0].mxu0 %v9006
      %v9190 = vpop.f32.mrb[0].mxu0
      %v9191 = vadd.f32 %v8904, %v9190
      %v9192 = vpop.f32.mrb[0].mxu0
      %9193 = vmatprep.mubr.f32.mxu0 0.0
      %9194 = vmatmul.mubr.f32.gmra.mrb[0].mxu0 %v9008
      %v9195 = vpop.f32.mrb[0].mxu0
      %v9196 = vadd.f32 %v8904, %v9195
      %v9197 = vpop.f32.mrb[0].mxu0
      %9198 = vmatprep.mubr.f32.mxu0 0.0
      %9199 = vmatmul.mubr.f32.gmra.mrb[0].mxu0 %v9010
      %v9200 = vpop.f32.mrb[0].mxu0
      %v9201 = vadd.f32 %v8904, %v9200
      %v9202 = vpop.f32.mrb[0].mxu0
      %9203 = vmatprep.mubr.f32.mxu0 0.0
      %9204 = vmatmul.mubr.f32.gmra.mrb[0].mxu0 %v9012
      %v9205 = vpop.f32.mrb[0].mxu0
      %v9206 = vadd.f32 %v8904, %v9205
      %v9207 = vpop.f32.mrb[0].mxu0
      %9208 = vmatprep.mubr.f32.mxu0 0.0
      %9209 = vmatmul.mubr.f32.gmra.mrb[0].mxu0 %v9014
      %v9210 = vpop.f32.mrb[0].mxu0
      %v9211 = vadd.f32 %v8904, %v9210
      %v9212 = vpop.f32.mrb[0].mxu0
      %9213 = vmatprep.mubr.f32.mxu0 0.0
      %9214 = vmatmul.mubr.f32.gmra.mrb[0].mxu0 %v9016
      %v9215 = vpop.f32.mrb[0].mxu0
      %v9216 = vadd.f32 %v8904, %v9215
      %v9217 = vpop.f32.mrb[0].mxu0
      %9218 = vmatprep.mubr.f32.mxu0 0.0
      %9219 = vmatmul.mubr.f32.gmra.mrb[0].mxu0 %v9018
      %v9220 = vpop.f32.mrb[0].mxu0
      %v9221 = vadd.f32 %v8904, %v9220
      %v9222 = vpop.f32.mrb[0].mxu0
      %9223 = vmatprep.mubr.f32.mxu0 0.0
      %9224 = vmatmul.mubr.f32.gmra.mrb[0].mxu0 %v9020
      %v9225 = vpop.f32.mrb[0].mxu0
      %v9226 = vadd.f32 %v8904, %v9225
      %v9227 = vpop.f32.mrb[0].mxu0
      %9228 = vmatprep.mubr.f32.mxu0 0.0
      %9229 = vmatmul.mubr.f32.gmra.mrb[0].mxu0 %v9022
      %v9230 = vpop.f32.mrb[0].mxu0
      %v9231 = vadd.f32 %v8904, %v9230
      %v9232 = vpop.f32.mrb[0].mxu0
      %9233 = vmatprep.mubr.f32.mxu0 0.0
      %9234 = vmatmul.mubr.f32.gmra.mrb[0].mxu0 %v9024
      %v9235 = vpop.f32.mrb[0].mxu0
      %v9236 = vadd.f32 %v8904, %v9235
      %v9237 = vpop.f32.mrb[0].mxu0
      %9238 = vmatprep.mubr.f32.mxu0 0.0
      %9239 = vmatmul.mubr.f32.gmra.mrb[0].mxu0 %v9026
      %v9240 = vpop.f32.mrb[0].mxu0
      %v9241 = vadd.f32 %v8904, %v9240
      %v9242 = vpop.f32.mrb[0].mxu0
      %9243 = vmatprep.mubr.f32.mxu0 0.0
      %9244 = vmatmul.mubr.f32.gmra.mrb[0].mxu0 %v9028
      %v9245 = vpop.f32.mrb[0].mxu0
      %v9246 = vadd.f32 %v8904, %v9245
      %v9247 = vpop.f32.mrb[0].mxu0
      %9248 = vmatprep.mubr.f32.mxu0 0.0
      %9249 = vmatmul.mubr.f32.gmra.mrb[0].mxu0 %v9030
      %v9250 = vpop.f32.mrb[0].mxu0
      %v9251 = vadd.f32 %v8904, %v9250
      %v9252 = vpop.f32.mrb[0].mxu0
      %9253 = vmatprep.mubr.f32.mxu0 0.0
      %9254 = vmatmul.mubr.f32.gmra.mrb[0].mxu0 %v9032
      %v9255 = vpop.f32.mrb[0].mxu0
      %v9256 = vadd.f32 %v8904, %v9255
      %v9257 = vpop.f32.mrb[0].mxu0
      %9258 = vdwg.mxu0
      %s9259 = scalar_lea.vmem %s7, 32
      %v9260 = vld [vmem:[%s9259] sm:$0xff]
      %v9261 = vld [vmem:[%s9259 + $0x8] sm:$0xff]
      %v9262 = vlaneseq
      %v9263 = vshrl.u32 %v9262, 7
      %v9264 = vsub.s32 0, %v9263
      %v9265 = vrot.slane %v9260, %v9264
      %9267 = vbcast.lane.b32.xlu0 %v9265, 256
      %v9268 = vpop.permute.xlu0 %9267
      %s9270 = sor.u32 256, 8
      %9271 = vbcast.lane.b32.xlu0 %v9265, %s9270
      %v9272 = vpop.permute.xlu0 %9271
      %v9273 = vlaneseq
      %v9274 = vshrl.u32 %v9273, 7
      %v9275 = vsub.s32 1, %v9274
      %v9276 = vrot.slane %v9260, %v9275
      %9278 = vbcast.lane.b32.xlu0 %v9276, 256
      %v9279 = vpop.permute.xlu0 %9278
      %s9281 = sor.u32 256, 8
      %9282 = vbcast.lane.b32.xlu0 %v9276, %s9281
      %v9283 = vpop.permute.xlu0 %9282
      %v9284 = vlaneseq
      %v9285 = vshrl.u32 %v9284, 7
      %v9286 = vsub.s32 2, %v9285
      %v9287 = vrot.slane %v9260, %v9286
      %9289 = vbcast.lane.b32.xlu0 %v9287, 256
      %v9290 = vpop.permute.xlu0 %9289
      %s9292 = sor.u32 256, 8
      %9293 = vbcast.lane.b32.xlu0 %v9287, %s9292
      %v9294 = vpop.permute.xlu0 %9293
      %v9295 = vlaneseq
      %v9296 = vshrl.u32 %v9295, 7
      %v9297 = vsub.s32 3, %v9296
      %v9298 = vrot.slane %v9260, %v9297
      %9300 = vbcast.lane.b32.xlu0 %v9298, 256
      %v9301 = vpop.permute.xlu0 %9300
      %s9303 = sor.u32 256, 8
      %9304 = vbcast.lane.b32.xlu0 %v9298, %s9303
      %v9305 = vpop.permute.xlu0 %9304
      %v9306 = vlaneseq
      %v9307 = vshrl.u32 %v9306, 7
      %v9308 = vsub.s32 4, %v9307
      %v9309 = vrot.slane %v9260, %v9308
      %9311 = vbcast.lane.b32.xlu0 %v9309, 256
      %v9312 = vpop.permute.xlu0 %9311
      %s9314 = sor.u32 256, 8
      %9315 = vbcast.lane.b32.xlu0 %v9309, %s9314
      %v9316 = vpop.permute.xlu0 %9315
      %v9317 = vlaneseq
      %v9318 = vshrl.u32 %v9317, 7
      %v9319 = vsub.s32 5, %v9318
      %v9320 = vrot.slane %v9260, %v9319
      %9322 = vbcast.lane.b32.xlu0 %v9320, 256
      %v9323 = vpop.permute.xlu0 %9322
      %s9325 = sor.u32 256, 8
      %9326 = vbcast.lane.b32.xlu0 %v9320, %s9325
      %v9327 = vpop.permute.xlu0 %9326
      %v9328 = vlaneseq
      %v9329 = vshrl.u32 %v9328, 7
      %v9330 = vsub.s32 6, %v9329
      %v9331 = vrot.slane %v9260, %v9330
      %9333 = vbcast.lane.b32.xlu0 %v9331, 256
      %v9334 = vpop.permute.xlu0 %9333
      %s9336 = sor.u32 256, 8
      %9337 = vbcast.lane.b32.xlu0 %v9331, %s9336
      %v9338 = vpop.permute.xlu0 %9337
      %v9339 = vlaneseq
      %v9340 = vshrl.u32 %v9339, 7
      %v9341 = vsub.s32 7, %v9340
      %v9342 = vrot.slane %v9260, %v9341
      %9344 = vbcast.lane.b32.xlu0 %v9342, 256
      %v9345 = vpop.permute.xlu0 %9344
      %s9347 = sor.u32 256, 8
      %9348 = vbcast.lane.b32.xlu0 %v9342, %s9347
      %v9349 = vpop.permute.xlu0 %9348
      %v9350 = vlaneseq
      %v9351 = vshrl.u32 %v9350, 7
      %v9352 = vsub.s32 0, %v9351
      %v9353 = vrot.slane %v9261, %v9352
      %9355 = vbcast.lane.b32.xlu0 %v9353, 256
      %v9356 = vpop.permute.xlu0 %9355
      %s9358 = sor.u32 256, 8
      %9359 = vbcast.lane.b32.xlu0 %v9353, %s9358
      %v9360 = vpop.permute.xlu0 %9359
      %v9361 = vlaneseq
      %v9362 = vshrl.u32 %v9361, 7
      %v9363 = vsub.s32 1, %v9362
      %v9364 = vrot.slane %v9261, %v9363
      %9366 = vbcast.lane.b32.xlu0 %v9364, 256
      %v9367 = vpop.permute.xlu0 %9366
      %s9369 = sor.u32 256, 8
      %9370 = vbcast.lane.b32.xlu0 %v9364, %s9369
      %v9371 = vpop.permute.xlu0 %9370
      %v9372 = vlaneseq
      %v9373 = vshrl.u32 %v9372, 7
      %v9374 = vsub.s32 2, %v9373
      %v9375 = vrot.slane %v9261, %v9374
      %9377 = vbcast.lane.b32.xlu0 %v9375, 256
      %v9378 = vpop.permute.xlu0 %9377
      %s9380 = sor.u32 256, 8
      %9381 = vbcast.lane.b32.xlu0 %v9375, %s9380
      %v9382 = vpop.permute.xlu0 %9381
      %v9383 = vlaneseq
      %v9384 = vshrl.u32 %v9383, 7
      %v9385 = vsub.s32 3, %v9384
      %v9386 = vrot.slane %v9261, %v9385
      %9388 = vbcast.lane.b32.xlu0 %v9386, 256
      %v9389 = vpop.permute.xlu0 %9388
      %s9391 = sor.u32 256, 8
      %9392 = vbcast.lane.b32.xlu0 %v9386, %s9391
      %v9393 = vpop.permute.xlu0 %9392
      %v9394 = vlaneseq
      %v9395 = vshrl.u32 %v9394, 7
      %v9396 = vsub.s32 4, %v9395
      %v9397 = vrot.slane %v9261, %v9396
      %9399 = vbcast.lane.b32.xlu0 %v9397, 256
      %v9400 = vpop.permute.xlu0 %9399
      %s9402 = sor.u32 256, 8
      %9403 = vbcast.lane.b32.xlu0 %v9397, %s9402
      %v9404 = vpop.permute.xlu0 %9403
      %v9405 = vlaneseq
      %v9406 = vshrl.u32 %v9405, 7
      %v9407 = vsub.s32 5, %v9406
      %v9408 = vrot.slane %v9261, %v9407
      %9410 = vbcast.lane.b32.xlu0 %v9408, 256
      %v9411 = vpop.permute.xlu0 %9410
      %s9413 = sor.u32 256, 8
      %9414 = vbcast.lane.b32.xlu0 %v9408, %s9413
      %v9415 = vpop.permute.xlu0 %9414
      %v9416 = vlaneseq
      %v9417 = vshrl.u32 %v9416, 7
      %v9418 = vsub.s32 6, %v9417
      %v9419 = vrot.slane %v9261, %v9418
      %9421 = vbcast.lane.b32.xlu0 %v9419, 256
      %v9422 = vpop.permute.xlu0 %9421
      %s9424 = sor.u32 256, 8
      %9425 = vbcast.lane.b32.xlu0 %v9419, %s9424
      %v9426 = vpop.permute.xlu0 %9425
      %v9427 = vlaneseq
      %v9428 = vshrl.u32 %v9427, 7
      %v9429 = vsub.s32 7, %v9428
      %v9430 = vrot.slane %v9261, %v9429
      %9432 = vbcast.lane.b32.xlu0 %v9430, 256
      %v9433 = vpop.permute.xlu0 %9432
      %s9435 = sor.u32 256, 8
      %9436 = vbcast.lane.b32.xlu0 %v9430, %s9435
      %v9437 = vpop.permute.xlu0 %9436
      %v9438 = vadd.f32 %v9101, %v9268
      %v9439 = vadd.f32 %v9106, %v9272
      %v9440 = vadd.f32 %v9111, %v9279
      %v9441 = vadd.f32 %v9116, %v9283
      %v9442 = vadd.f32 %v9121, %v9290
      %v9443 = vadd.f32 %v9126, %v9294
      %v9444 = vadd.f32 %v9131, %v9301
      %v9445 = vadd.f32 %v9136, %v9305
      %v9446 = vadd.f32 %v9141, %v9312
      %v9447 = vadd.f32 %v9146, %v9316
      %v9448 = vadd.f32 %v9151, %v9323
      %v9449 = vadd.f32 %v9156, %v9327
      %v9450 = vadd.f32 %v9161, %v9334
      %v9451 = vadd.f32 %v9166, %v9338
      %v9452 = vadd.f32 %v9171, %v9345
      %v9453 = vadd.f32 %v9176, %v9349
      %v9454 = vadd.f32 %v9181, %v9356
      %v9455 = vadd.f32 %v9186, %v9360
      %v9456 = vadd.f32 %v9191, %v9367
      %v9457 = vadd.f32 %v9196, %v9371
      %v9458 = vadd.f32 %v9201, %v9378
      %v9459 = vadd.f32 %v9206, %v9382
      %v9460 = vadd.f32 %v9211, %v9389
      %v9461 = vadd.f32 %v9216, %v9393
      %v9462 = vadd.f32 %v9221, %v9400
      %v9463 = vadd.f32 %v9226, %v9404
      %v9464 = vadd.f32 %v9231, %v9411
      %v9465 = vadd.f32 %v9236, %v9415
      %v9466 = vadd.f32 %v9241, %v9422
      %v9467 = vadd.f32 %v9246, %v9426
      %v9468 = vadd.f32 %v9251, %v9433
      %v9469 = vadd.f32 %v9256, %v9437
      %9472 = vrot.lane.b32.xlu0 %v9438, 64
      %v9473 = vpop.permute.xlu0 %9472
      %9474 = vrot.lane.b32.xlu0 %v9439, 64
      %v9475 = vpop.permute.xlu0 %9474
      %v9478 = vmul.f32 %v1797, %v9473
      %v9479 = vmul.f32 %v1797, %v9475
      %v9480 = vmul.f32 %v1801, %v9473
      %v9481 = vmul.f32 %v1801, %v9475
      %v9482 = vmul.f32 %v1805, %v9473
      %v9483 = vmul.f32 %v1805, %v9475
      %v9484 = vmul.f32 %v1809, %v9473
      %v9485 = vmul.f32 %v1809, %v9475
      %v9486 = vmul.f32 %v1813, %v9473
      %v9487 = vmul.f32 %v1813, %v9475
      %v9488 = vmul.f32 %v1817, %v9473
      %v9489 = vmul.f32 %v1817, %v9475
      %v9490 = vmul.f32 %v1821, %v9473
      %v9491 = vmul.f32 %v1821, %v9475
      %v9492 = vmul.f32 %v1825, %v9473
      %v9493 = vmul.f32 %v1825, %v9475
      %v9494 = vmul.f32 %v1829, %v9473
      %v9495 = vmul.f32 %v1829, %v9475
      %v9496 = vmul.f32 %v1833, %v9473
      %v9497 = vmul.f32 %v1833, %v9475
      %v9498 = vmul.f32 %v1837, %v9473
      %v9499 = vmul.f32 %v1837, %v9475
      %v9500 = vmul.f32 %v1841, %v9473
      %v9501 = vmul.f32 %v1841, %v9475
      %v9502 = vmul.f32 %v1845, %v9473
      %v9503 = vmul.f32 %v1845, %v9475
      %v9504 = vmul.f32 %v1849, %v9473
      %v9505 = vmul.f32 %v1849, %v9475
      %v9506 = vmul.f32 %v1853, %v9473
      %v9507 = vmul.f32 %v1853, %v9475
      %v9508 = vmul.f32 %v1857, %v9473
      %v9509 = vmul.f32 %v1857, %v9475
      %v9510 = vmul.f32 %v1861, %v9473
      %v9511 = vmul.f32 %v1861, %v9475
      %v9512 = vmul.f32 %v1865, %v9473
      %v9513 = vmul.f32 %v1865, %v9475
      %v9514 = vmul.f32 %v1869, %v9473
      %v9515 = vmul.f32 %v1869, %v9475
      %v9516 = vmul.f32 %v1873, %v9473
      %v9517 = vmul.f32 %v1873, %v9475
      %9558 = vrot.lane.b32.xlu0 %v9478, 64
      %v9559 = vpop.permute.xlu0 %9558
      %9560 = vrot.lane.b32.xlu0 %v9479, 64
      %v9561 = vpop.permute.xlu0 %9560
      %9562 = vrot.lane.b32.xlu0 %v9480, 64
      %v9563 = vpop.permute.xlu0 %9562
      %9564 = vrot.lane.b32.xlu0 %v9481, 64
      %v9565 = vpop.permute.xlu0 %9564
      %9566 = vrot.lane.b32.xlu0 %v9482, 64
      %v9567 = vpop.permute.xlu0 %9566
      %9568 = vrot.lane.b32.xlu0 %v9483, 64
      %v9569 = vpop.permute.xlu0 %9568
      %9570 = vrot.lane.b32.xlu0 %v9484, 64
      %v9571 = vpop.permute.xlu0 %9570
      %9572 = vrot.lane.b32.xlu0 %v9485, 64
      %v9573 = vpop.permute.xlu0 %9572
      %9574 = vrot.lane.b32.xlu0 %v9486, 64
      %v9575 = vpop.permute.xlu0 %9574
      %9576 = vrot.lane.b32.xlu0 %v9487, 64
      %v9577 = vpop.permute.xlu0 %9576
      %9578 = vrot.lane.b32.xlu0 %v9488, 64
      %v9579 = vpop.permute.xlu0 %9578
      %9580 = vrot.lane.b32.xlu0 %v9489, 64
      %v9581 = vpop.permute.xlu0 %9580
      %9582 = vrot.lane.b32.xlu0 %v9490, 64
      %v9583 = vpop.permute.xlu0 %9582
      %9584 = vrot.lane.b32.xlu0 %v9491, 64
      %v9585 = vpop.permute.xlu0 %9584
      %9586 = vrot.lane.b32.xlu0 %v9492, 64
      %v9587 = vpop.permute.xlu0 %9586
      %9588 = vrot.lane.b32.xlu0 %v9493, 64
      %v9589 = vpop.permute.xlu0 %9588
      %9590 = vrot.lane.b32.xlu0 %v9494, 64
      %v9591 = vpop.permute.xlu0 %9590
      %9592 = vrot.lane.b32.xlu0 %v9495, 64
      %v9593 = vpop.permute.xlu0 %9592
      %9594 = vrot.lane.b32.xlu0 %v9496, 64
      %v9595 = vpop.permute.xlu0 %9594
      %9596 = vrot.lane.b32.xlu0 %v9497, 64
      %v9597 = vpop.permute.xlu0 %9596
      %9598 = vrot.lane.b32.xlu0 %v9498, 64
      %v9599 = vpop.permute.xlu0 %9598
      %9600 = vrot.lane.b32.xlu0 %v9499, 64
      %v9601 = vpop.permute.xlu0 %9600
      %9602 = vrot.lane.b32.xlu0 %v9500, 64
      %v9603 = vpop.permute.xlu0 %9602
      %9604 = vrot.lane.b32.xlu0 %v9501, 64
      %v9605 = vpop.permute.xlu0 %9604
      %9606 = vrot.lane.b32.xlu0 %v9502, 64
      %v9607 = vpop.permute.xlu0 %9606
      %9608 = vrot.lane.b32.xlu0 %v9503, 64
      %v9609 = vpop.permute.xlu0 %9608
      %9610 = vrot.lane.b32.xlu0 %v9504, 64
      %v9611 = vpop.permute.xlu0 %9610
      %9612 = vrot.lane.b32.xlu0 %v9505, 64
      %v9613 = vpop.permute.xlu0 %9612
      %9614 = vrot.lane.b32.xlu0 %v9506, 64
      %v9615 = vpop.permute.xlu0 %9614
      %9616 = vrot.lane.b32.xlu0 %v9507, 64
      %v9617 = vpop.permute.xlu0 %9616
      %9618 = vrot.lane.b32.xlu0 %v9508, 64
      %v9619 = vpop.permute.xlu0 %9618
      %9620 = vrot.lane.b32.xlu0 %v9509, 64
      %v9621 = vpop.permute.xlu0 %9620
      %9622 = vrot.lane.b32.xlu0 %v9510, 64
      %v9623 = vpop.permute.xlu0 %9622
      %9624 = vrot.lane.b32.xlu0 %v9511, 64
      %v9625 = vpop.permute.xlu0 %9624
      %9626 = vrot.lane.b32.xlu0 %v9512, 64
      %v9627 = vpop.permute.xlu0 %9626
      %9628 = vrot.lane.b32.xlu0 %v9513, 64
      %v9629 = vpop.permute.xlu0 %9628
      %9630 = vrot.lane.b32.xlu0 %v9514, 64
      %v9631 = vpop.permute.xlu0 %9630
      %9632 = vrot.lane.b32.xlu0 %v9515, 64
      %v9633 = vpop.permute.xlu0 %9632
      %9634 = vrot.lane.b32.xlu0 %v9516, 64
      %v9635 = vpop.permute.xlu0 %9634
      %9636 = vrot.lane.b32.xlu0 %v9517, 64
      %v9637 = vpop.permute.xlu0 %9636
      %v9678 = vadd.f32 %v8856, %v9559
      %v9679 = vadd.f32 %v8857, %v9561
      %v9680 = vadd.f32 %v8858, %v9563
      %v9681 = vadd.f32 %v8859, %v9565
      %v9682 = vadd.f32 %v8860, %v9567
      %v9683 = vadd.f32 %v8861, %v9569
      %v9684 = vadd.f32 %v8862, %v9571
      %v9685 = vadd.f32 %v8863, %v9573
      %v9686 = vadd.f32 %v8864, %v9575
      %v9687 = vadd.f32 %v8865, %v9577
      %v9688 = vadd.f32 %v8866, %v9579
      %v9689 = vadd.f32 %v8867, %v9581
      %v9690 = vadd.f32 %v8868, %v9583
      %v9691 = vadd.f32 %v8869, %v9585
      %v9692 = vadd.f32 %v8870, %v9587
      %v9693 = vadd.f32 %v8871, %v9589
      %v9694 = vadd.f32 %v8872, %v9591
      %v9695 = vadd.f32 %v8873, %v9593
      %v9696 = vadd.f32 %v8874, %v9595
      %v9697 = vadd.f32 %v8875, %v9597
      %v9698 = vadd.f32 %v8876, %v9599
      %v9699 = vadd.f32 %v8877, %v9601
      %v9700 = vadd.f32 %v8878, %v9603
      %v9701 = vadd.f32 %v8879, %v9605
      %v9702 = vadd.f32 %v8880, %v9607
      %v9703 = vadd.f32 %v8881, %v9609
      %v9704 = vadd.f32 %v8882, %v9611
      %v9705 = vadd.f32 %v8883, %v9613
      %v9706 = vadd.f32 %v8884, %v9615
      %v9707 = vadd.f32 %v8885, %v9617
      %v9708 = vadd.f32 %v8886, %v9619
      %v9709 = vadd.f32 %v8887, %v9621
      %v9710 = vadd.f32 %v8888, %v9623
      %v9711 = vadd.f32 %v8889, %v9625
      %v9712 = vadd.f32 %v8890, %v9627
      %v9713 = vadd.f32 %v8891, %v9629
      %v9714 = vadd.f32 %v8892, %v9631
      %v9715 = vadd.f32 %v8893, %v9633
      %v9716 = vadd.f32 %v8894, %v9635
      %v9717 = vadd.f32 %v8895, %v9637
      %9720 = vrot.lane.b32.xlu0 %v9440, 64
      %v9721 = vpop.permute.xlu0 %9720
      %9722 = vrot.lane.b32.xlu0 %v9441, 64
      %v9723 = vpop.permute.xlu0 %9722
      %v9726 = vmul.f32 %v1957, %v9721
      %v9727 = vmul.f32 %v1957, %v9723
      %v9728 = vmul.f32 %v1961, %v9721
      %v9729 = vmul.f32 %v1961, %v9723
      %v9730 = vmul.f32 %v1965, %v9721
      %v9731 = vmul.f32 %v1965, %v9723
      %v9732 = vmul.f32 %v1969, %v9721
      %v9733 = vmul.f32 %v1969, %v9723
      %v9734 = vmul.f32 %v1973, %v9721
      %v9735 = vmul.f32 %v1973, %v9723
      %v9736 = vmul.f32 %v1977, %v9721
      %v9737 = vmul.f32 %v1977, %v9723
      %v9738 = vmul.f32 %v1981, %v9721
      %v9739 = vmul.f32 %v1981, %v9723
      %v9740 = vmul.f32 %v1985, %v9721
      %v9741 = vmul.f32 %v1985, %v9723
      %v9742 = vmul.f32 %v1989, %v9721
      %v9743 = vmul.f32 %v1989, %v9723
      %v9744 = vmul.f32 %v1993, %v9721
      %v9745 = vmul.f32 %v1993, %v9723
      %v9746 = vmul.f32 %v1997, %v9721
      %v9747 = vmul.f32 %v1997, %v9723
      %v9748 = vmul.f32 %v2001, %v9721
      %v9749 = vmul.f32 %v2001, %v9723
      %v9750 = vmul.f32 %v2005, %v9721
      %v9751 = vmul.f32 %v2005, %v9723
      %v9752 = vmul.f32 %v2009, %v9721
      %v9753 = vmul.f32 %v2009, %v9723
      %v9754 = vmul.f32 %v2013, %v9721
      %v9755 = vmul.f32 %v2013, %v9723
      %v9756 = vmul.f32 %v2017, %v9721
      %v9757 = vmul.f32 %v2017, %v9723
      %v9758 = vmul.f32 %v2021, %v9721
      %v9759 = vmul.f32 %v2021, %v9723
      %v9760 = vmul.f32 %v2025, %v9721
      %v9761 = vmul.f32 %v2025, %v9723
      %v9762 = vmul.f32 %v2029, %v9721
      %v9763 = vmul.f32 %v2029, %v9723
      %v9764 = vmul.f32 %v2033, %v9721
      %v9765 = vmul.f32 %v2033, %v9723
      %9806 = vrot.lane.b32.xlu0 %v9726, 64
      %v9807 = vpop.permute.xlu0 %9806
      %9808 = vrot.lane.b32.xlu0 %v9727, 64
      %v9809 = vpop.permute.xlu0 %9808
      %9810 = vrot.lane.b32.xlu0 %v9728, 64
      %v9811 = vpop.permute.xlu0 %9810
      %9812 = vrot.lane.b32.xlu0 %v9729, 64
      %v9813 = vpop.permute.xlu0 %9812
      %9814 = vrot.lane.b32.xlu0 %v9730, 64
      %v9815 = vpop.permute.xlu0 %9814
      %9816 = vrot.lane.b32.xlu0 %v9731, 64
      %v9817 = vpop.permute.xlu0 %9816
      %9818 = vrot.lane.b32.xlu0 %v9732, 64
      %v9819 = vpop.permute.xlu0 %9818
      %9820 = vrot.lane.b32.xlu0 %v9733, 64
      %v9821 = vpop.permute.xlu0 %9820
      %9822 = vrot.lane.b32.xlu0 %v9734, 64
      %v9823 = vpop.permute.xlu0 %9822
      %9824 = vrot.lane.b32.xlu0 %v9735, 64
      %v9825 = vpop.permute.xlu0 %9824
      %9826 = vrot.lane.b32.xlu0 %v9736, 64
      %v9827 = vpop.permute.xlu0 %9826
      %9828 = vrot.lane.b32.xlu0 %v9737, 64
      %v9829 = vpop.permute.xlu0 %9828
      %9830 = vrot.lane.b32.xlu0 %v9738, 64
      %v9831 = vpop.permute.xlu0 %9830
      %9832 = vrot.lane.b32.xlu0 %v9739, 64
      %v9833 = vpop.permute.xlu0 %9832
      %9834 = vrot.lane.b32.xlu0 %v9740, 64
      %v9835 = vpop.permute.xlu0 %9834
      %9836 = vrot.lane.b32.xlu0 %v9741, 64
      %v9837 = vpop.permute.xlu0 %9836
      %9838 = vrot.lane.b32.xlu0 %v9742, 64
      %v9839 = vpop.permute.xlu0 %9838
      %9840 = vrot.lane.b32.xlu0 %v9743, 64
      %v9841 = vpop.permute.xlu0 %9840
      %9842 = vrot.lane.b32.xlu0 %v9744, 64
      %v9843 = vpop.permute.xlu0 %9842
      %9844 = vrot.lane.b32.xlu0 %v9745, 64
      %v9845 = vpop.permute.xlu0 %9844
      %9846 = vrot.lane.b32.xlu0 %v9746, 64
      %v9847 = vpop.permute.xlu0 %9846
      %9848 = vrot.lane.b32.xlu0 %v9747, 64
      %v9849 = vpop.permute.xlu0 %9848
      %9850 = vrot.lane.b32.xlu0 %v9748, 64
      %v9851 = vpop.permute.xlu0 %9850
      %9852 = vrot.lane.b32.xlu0 %v9749, 64
      %v9853 = vpop.permute.xlu0 %9852
      %9854 = vrot.lane.b32.xlu0 %v9750, 64
      %v9855 = vpop.permute.xlu0 %9854
      %9856 = vrot.lane.b32.xlu0 %v9751, 64
      %v9857 = vpop.permute.xlu0 %9856
      %9858 = vrot.lane.b32.xlu0 %v9752, 64
      %v9859 = vpop.permute.xlu0 %9858
      %9860 = vrot.lane.b32.xlu0 %v9753, 64
      %v9861 = vpop.permute.xlu0 %9860
      %9862 = vrot.lane.b32.xlu0 %v9754, 64
      %v9863 = vpop.permute.xlu0 %9862
      %9864 = vrot.lane.b32.xlu0 %v9755, 64
      %v9865 = vpop.permute.xlu0 %9864
      %9866 = vrot.lane.b32.xlu0 %v9756, 64
      %v9867 = vpop.permute.xlu0 %9866
      %9868 = vrot.lane.b32.xlu0 %v9757, 64
      %v9869 = vpop.permute.xlu0 %9868
      %9870 = vrot.lane.b32.xlu0 %v9758, 64
      %v9871 = vpop.permute.xlu0 %9870
      %9872 = vrot.lane.b32.xlu0 %v9759, 64
      %v9873 = vpop.permute.xlu0 %9872
      %9874 = vrot.lane.b32.xlu0 %v9760, 64
      %v9875 = vpop.permute.xlu0 %9874
      %9876 = vrot.lane.b32.xlu0 %v9761, 64
      %v9877 = vpop.permute.xlu0 %9876
      %9878 = vrot.lane.b32.xlu0 %v9762, 64
      %v9879 = vpop.permute.xlu0 %9878
      %9880 = vrot.lane.b32.xlu0 %v9763, 64
      %v9881 = vpop.permute.xlu0 %9880
      %9882 = vrot.lane.b32.xlu0 %v9764, 64
      %v9883 = vpop.permute.xlu0 %9882
      %9884 = vrot.lane.b32.xlu0 %v9765, 64
      %v9885 = vpop.permute.xlu0 %9884
      %v9926 = vadd.f32 %v9678, %v9807
      %v9927 = vadd.f32 %v9679, %v9809
      %v9928 = vadd.f32 %v9680, %v9811
      %v9929 = vadd.f32 %v9681, %v9813
      %v9930 = vadd.f32 %v9682, %v9815
      %v9931 = vadd.f32 %v9683, %v9817
      %v9932 = vadd.f32 %v9684, %v9819
      %v9933 = vadd.f32 %v9685, %v9821
      %v9934 = vadd.f32 %v9686, %v9823
      %v9935 = vadd.f32 %v9687, %v9825
      %v9936 = vadd.f32 %v9688, %v9827
      %v9937 = vadd.f32 %v9689, %v9829
      %v9938 = vadd.f32 %v9690, %v9831
      %v9939 = vadd.f32 %v9691, %v9833
      %v9940 = vadd.f32 %v9692, %v9835
      %v9941 = vadd.f32 %v9693, %v9837
      %v9942 = vadd.f32 %v9694, %v9839
      %v9943 = vadd.f32 %v9695, %v9841
      %v9944 = vadd.f32 %v9696, %v9843
      %v9945 = vadd.f32 %v9697, %v9845
      %v9946 = vadd.f32 %v9698, %v9847
      %v9947 = vadd.f32 %v9699, %v9849
      %v9948 = vadd.f32 %v9700, %v9851
      %v9949 = vadd.f32 %v9701, %v9853
      %v9950 = vadd.f32 %v9702, %v9855
      %v9951 = vadd.f32 %v9703, %v9857
      %v9952 = vadd.f32 %v9704, %v9859
      %v9953 = vadd.f32 %v9705, %v9861
      %v9954 = vadd.f32 %v9706, %v9863
      %v9955 = vadd.f32 %v9707, %v9865
      %v9956 = vadd.f32 %v9708, %v9867
      %v9957 = vadd.f32 %v9709, %v9869
      %v9958 = vadd.f32 %v9710, %v9871
      %v9959 = vadd.f32 %v9711, %v9873
      %v9960 = vadd.f32 %v9712, %v9875
      %v9961 = vadd.f32 %v9713, %v9877
      %v9962 = vadd.f32 %v9714, %v9879
      %v9963 = vadd.f32 %v9715, %v9881
      %v9964 = vadd.f32 %v9716, %v9883
      %v9965 = vadd.f32 %v9717, %v9885
      %9968 = vrot.lane.b32.xlu0 %v9442, 64
      %v9969 = vpop.permute.xlu0 %9968
      %9970 = vrot.lane.b32.xlu0 %v9443, 64
      %v9971 = vpop.permute.xlu0 %9970
      %v9974 = vmul.f32 %v2117, %v9969
      %v9975 = vmul.f32 %v2117, %v9971
      %v9976 = vmul.f32 %v2121, %v9969
      %v9977 = vmul.f32 %v2121, %v9971
      %v9978 = vmul.f32 %v2125, %v9969
      %v9979 = vmul.f32 %v2125, %v9971
      %v9980 = vmul.f32 %v2129, %v9969
      %v9981 = vmul.f32 %v2129, %v9971
      %v9982 = vmul.f32 %v2133, %v9969
      %v9983 = vmul.f32 %v2133, %v9971
      %v9984 = vmul.f32 %v2137, %v9969
      %v9985 = vmul.f32 %v2137, %v9971
      %v9986 = vmul.f32 %v2141, %v9969
      %v9987 = vmul.f32 %v2141, %v9971
      %v9988 = vmul.f32 %v2145, %v9969
      %v9989 = vmul.f32 %v2145, %v9971
      %v9990 = vmul.f32 %v2149, %v9969
      %v9991 = vmul.f32 %v2149, %v9971
      %v9992 = vmul.f32 %v2153, %v9969
      %v9993 = vmul.f32 %v2153, %v9971
      %v9994 = vmul.f32 %v2157, %v9969
      %v9995 = vmul.f32 %v2157, %v9971
      %v9996 = vmul.f32 %v2161, %v9969
      %v9997 = vmul.f32 %v2161, %v9971
      %v9998 = vmul.f32 %v2165, %v9969
      %v9999 = vmul.f32 %v2165, %v9971
      %v10000 = vmul.f32 %v2169, %v9969
      %v10001 = vmul.f32 %v2169, %v9971
      %v10002 = vmul.f32 %v2173, %v9969
      %v10003 = vmul.f32 %v2173, %v9971
      %v10004 = vmul.f32 %v2177, %v9969
      %v10005 = vmul.f32 %v2177, %v9971
      %v10006 = vmul.f32 %v2181, %v9969
      %v10007 = vmul.f32 %v2181, %v9971
      %v10008 = vmul.f32 %v2185, %v9969
      %v10009 = vmul.f32 %v2185, %v9971
      %v10010 = vmul.f32 %v2189, %v9969
      %v10011 = vmul.f32 %v2189, %v9971
      %v10012 = vmul.f32 %v2193, %v9969
      %v10013 = vmul.f32 %v2193, %v9971
      %10054 = vrot.lane.b32.xlu0 %v9974, 64
      %v10055 = vpop.permute.xlu0 %10054
      %10056 = vrot.lane.b32.xlu0 %v9975, 64
      %v10057 = vpop.permute.xlu0 %10056
      %10058 = vrot.lane.b32.xlu0 %v9976, 64
      %v10059 = vpop.permute.xlu0 %10058
      %10060 = vrot.lane.b32.xlu0 %v9977, 64
      %v10061 = vpop.permute.xlu0 %10060
      %10062 = vrot.lane.b32.xlu0 %v9978, 64
      %v10063 = vpop.permute.xlu0 %10062
      %10064 = vrot.lane.b32.xlu0 %v9979, 64
      %v10065 = vpop.permute.xlu0 %10064
      %10066 = vrot.lane.b32.xlu0 %v9980, 64
      %v10067 = vpop.permute.xlu0 %10066
      %10068 = vrot.lane.b32.xlu0 %v9981, 64
      %v10069 = vpop.permute.xlu0 %10068
      %10070 = vrot.lane.b32.xlu0 %v9982, 64
      %v10071 = vpop.permute.xlu0 %10070
      %10072 = vrot.lane.b32.xlu0 %v9983, 64
      %v10073 = vpop.permute.xlu0 %10072
      %10074 = vrot.lane.b32.xlu0 %v9984, 64
      %v10075 = vpop.permute.xlu0 %10074
      %10076 = vrot.lane.b32.xlu0 %v9985, 64
      %v10077 = vpop.permute.xlu0 %10076
      %10078 = vrot.lane.b32.xlu0 %v9986, 64
      %v10079 = vpop.permute.xlu0 %10078
      %10080 = vrot.lane.b32.xlu0 %v9987, 64
      %v10081 = vpop.permute.xlu0 %10080
      %10082 = vrot.lane.b32.xlu0 %v9988, 64
      %v10083 = vpop.permute.xlu0 %10082
      %10084 = vrot.lane.b32.xlu0 %v9989, 64
      %v10085 = vpop.permute.xlu0 %10084
      %10086 = vrot.lane.b32.xlu0 %v9990, 64
      %v10087 = vpop.permute.xlu0 %10086
      %10088 = vrot.lane.b32.xlu0 %v9991, 64
      %v10089 = vpop.permute.xlu0 %10088
      %10090 = vrot.lane.b32.xlu0 %v9992, 64
      %v10091 = vpop.permute.xlu0 %10090
      %10092 = vrot.lane.b32.xlu0 %v9993, 64
      %v10093 = vpop.permute.xlu0 %10092
      %10094 = vrot.lane.b32.xlu0 %v9994, 64
      %v10095 = vpop.permute.xlu0 %10094
      %10096 = vrot.lane.b32.xlu0 %v9995, 64
      %v10097 = vpop.permute.xlu0 %10096
      %10098 = vrot.lane.b32.xlu0 %v9996, 64
      %v10099 = vpop.permute.xlu0 %10098
      %10100 = vrot.lane.b32.xlu0 %v9997, 64
      %v10101 = vpop.permute.xlu0 %10100
      %10102 = vrot.lane.b32.xlu0 %v9998, 64
      %v10103 = vpop.permute.xlu0 %10102
      %10104 = vrot.lane.b32.xlu0 %v9999, 64
      %v10105 = vpop.permute.xlu0 %10104
      %10106 = vrot.lane.b32.xlu0 %v10000, 64
      %v10107 = vpop.permute.xlu0 %10106
      %10108 = vrot.lane.b32.xlu0 %v10001, 64
      %v10109 = vpop.permute.xlu0 %10108
      %10110 = vrot.lane.b32.xlu0 %v10002, 64
      %v10111 = vpop.permute.xlu0 %10110
      %10112 = vrot.lane.b32.xlu0 %v10003, 64
      %v10113 = vpop.permute.xlu0 %10112
      %10114 = vrot.lane.b32.xlu0 %v10004, 64
      %v10115 = vpop.permute.xlu0 %10114
      %10116 = vrot.lane.b32.xlu0 %v10005, 64
      %v10117 = vpop.permute.xlu0 %10116
      %10118 = vrot.lane.b32.xlu0 %v10006, 64
      %v10119 = vpop.permute.xlu0 %10118
      %10120 = vrot.lane.b32.xlu0 %v10007, 64
      %v10121 = vpop.permute.xlu0 %10120
      %10122 = vrot.lane.b32.xlu0 %v10008, 64
      %v10123 = vpop.permute.xlu0 %10122
      %10124 = vrot.lane.b32.xlu0 %v10009, 64
      %v10125 = vpop.permute.xlu0 %10124
      %10126 = vrot.lane.b32.xlu0 %v10010, 64
      %v10127 = vpop.permute.xlu0 %10126
      %10128 = vrot.lane.b32.xlu0 %v10011, 64
      %v10129 = vpop.permute.xlu0 %10128
      %10130 = vrot.lane.b32.xlu0 %v10012, 64
      %v10131 = vpop.permute.xlu0 %10130
      %10132 = vrot.lane.b32.xlu0 %v10013, 64
      %v10133 = vpop.permute.xlu0 %10132
      %v10174 = vadd.f32 %v9926, %v10055
      %v10175 = vadd.f32 %v9927, %v10057
      %v10176 = vadd.f32 %v9928, %v10059
      %v10177 = vadd.f32 %v9929, %v10061
      %v10178 = vadd.f32 %v9930, %v10063
      %v10179 = vadd.f32 %v9931, %v10065
      %v10180 = vadd.f32 %v9932, %v10067
      %v10181 = vadd.f32 %v9933, %v10069
      %v10182 = vadd.f32 %v9934, %v10071
      %v10183 = vadd.f32 %v9935, %v10073
      %v10184 = vadd.f32 %v9936, %v10075
      %v10185 = vadd.f32 %v9937, %v10077
      %v10186 = vadd.f32 %v9938, %v10079
      %v10187 = vadd.f32 %v9939, %v10081
      %v10188 = vadd.f32 %v9940, %v10083
      %v10189 = vadd.f32 %v9941, %v10085
      %v10190 = vadd.f32 %v9942, %v10087
      %v10191 = vadd.f32 %v9943, %v10089
      %v10192 = vadd.f32 %v9944, %v10091
      %v10193 = vadd.f32 %v9945, %v10093
      %v10194 = vadd.f32 %v9946, %v10095
      %v10195 = vadd.f32 %v9947, %v10097
      %v10196 = vadd.f32 %v9948, %v10099
      %v10197 = vadd.f32 %v9949, %v10101
      %v10198 = vadd.f32 %v9950, %v10103
      %v10199 = vadd.f32 %v9951, %v10105
      %v10200 = vadd.f32 %v9952, %v10107
      %v10201 = vadd.f32 %v9953, %v10109
      %v10202 = vadd.f32 %v9954, %v10111
      %v10203 = vadd.f32 %v9955, %v10113
      %v10204 = vadd.f32 %v9956, %v10115
      %v10205 = vadd.f32 %v9957, %v10117
      %v10206 = vadd.f32 %v9958, %v10119
      %v10207 = vadd.f32 %v9959, %v10121
      %v10208 = vadd.f32 %v9960, %v10123
      %v10209 = vadd.f32 %v9961, %v10125
      %v10210 = vadd.f32 %v9962, %v10127
      %v10211 = vadd.f32 %v9963, %v10129
      %v10212 = vadd.f32 %v9964, %v10131
      %v10213 = vadd.f32 %v9965, %v10133
      %10216 = vrot.lane.b32.xlu0 %v9444, 64
      %v10217 = vpop.permute.xlu0 %10216
      %10218 = vrot.lane.b32.xlu0 %v9445, 64
      %v10219 = vpop.permute.xlu0 %10218
      %v10222 = vmul.f32 %v2277, %v10217
      %v10223 = vmul.f32 %v2277, %v10219
      %v10224 = vmul.f32 %v2281, %v10217
      %v10225 = vmul.f32 %v2281, %v10219
      %v10226 = vmul.f32 %v2285, %v10217
      %v10227 = vmul.f32 %v2285, %v10219
      %v10228 = vmul.f32 %v2289, %v10217
      %v10229 = vmul.f32 %v2289, %v10219
      %v10230 = vmul.f32 %v2293, %v10217
      %v10231 = vmul.f32 %v2293, %v10219
      %v10232 = vmul.f32 %v2297, %v10217
      %v10233 = vmul.f32 %v2297, %v10219
      %v10234 = vmul.f32 %v2301, %v10217
      %v10235 = vmul.f32 %v2301, %v10219
      %v10236 = vmul.f32 %v2305, %v10217
      %v10237 = vmul.f32 %v2305, %v10219
      %v10238 = vmul.f32 %v2309, %v10217
      %v10239 = vmul.f32 %v2309, %v10219
      %v10240 = vmul.f32 %v2313, %v10217
      %v10241 = vmul.f32 %v2313, %v10219
      %v10242 = vmul.f32 %v2317, %v10217
      %v10243 = vmul.f32 %v2317, %v10219
      %v10244 = vmul.f32 %v2321, %v10217
      %v10245 = vmul.f32 %v2321, %v10219
      %v10246 = vmul.f32 %v2325, %v10217
      %v10247 = vmul.f32 %v2325, %v10219
      %v10248 = vmul.f32 %v2329, %v10217
      %v10249 = vmul.f32 %v2329, %v10219
      %v10250 = vmul.f32 %v2333, %v10217
      %v10251 = vmul.f32 %v2333, %v10219
      %v10252 = vmul.f32 %v2337, %v10217
      %v10253 = vmul.f32 %v2337, %v10219
      %v10254 = vmul.f32 %v2341, %v10217
      %v10255 = vmul.f32 %v2341, %v10219
      %v10256 = vmul.f32 %v2345, %v10217
      %v10257 = vmul.f32 %v2345, %v10219
      %v10258 = vmul.f32 %v2349, %v10217
      %v10259 = vmul.f32 %v2349, %v10219
      %v10260 = vmul.f32 %v2353, %v10217
      %v10261 = vmul.f32 %v2353, %v10219
      %10302 = vrot.lane.b32.xlu0 %v10222, 64
      %v10303 = vpop.permute.xlu0 %10302
      %10304 = vrot.lane.b32.xlu0 %v10223, 64
      %v10305 = vpop.permute.xlu0 %10304
      %10306 = vrot.lane.b32.xlu0 %v10224, 64
      %v10307 = vpop.permute.xlu0 %10306
      %10308 = vrot.lane.b32.xlu0 %v10225, 64
      %v10309 = vpop.permute.xlu0 %10308
      %10310 = vrot.lane.b32.xlu0 %v10226, 64
      %v10311 = vpop.permute.xlu0 %10310
      %10312 = vrot.lane.b32.xlu0 %v10227, 64
      %v10313 = vpop.permute.xlu0 %10312
      %10314 = vrot.lane.b32.xlu0 %v10228, 64
      %v10315 = vpop.permute.xlu0 %10314
      %10316 = vrot.lane.b32.xlu0 %v10229, 64
      %v10317 = vpop.permute.xlu0 %10316
      %10318 = vrot.lane.b32.xlu0 %v10230, 64
      %v10319 = vpop.permute.xlu0 %10318
      %10320 = vrot.lane.b32.xlu0 %v10231, 64
      %v10321 = vpop.permute.xlu0 %10320
      %10322 = vrot.lane.b32.xlu0 %v10232, 64
      %v10323 = vpop.permute.xlu0 %10322
      %10324 = vrot.lane.b32.xlu0 %v10233, 64
      %v10325 = vpop.permute.xlu0 %10324
      %10326 = vrot.lane.b32.xlu0 %v10234, 64
      %v10327 = vpop.permute.xlu0 %10326
      %10328 = vrot.lane.b32.xlu0 %v10235, 64
      %v10329 = vpop.permute.xlu0 %10328
      %10330 = vrot.lane.b32.xlu0 %v10236, 64
      %v10331 = vpop.permute.xlu0 %10330
      %10332 = vrot.lane.b32.xlu0 %v10237, 64
      %v10333 = vpop.permute.xlu0 %10332
      %10334 = vrot.lane.b32.xlu0 %v10238, 64
      %v10335 = vpop.permute.xlu0 %10334
      %10336 = vrot.lane.b32.xlu0 %v10239, 64
      %v10337 = vpop.permute.xlu0 %10336
      %10338 = vrot.lane.b32.xlu0 %v10240, 64
      %v10339 = vpop.permute.xlu0 %10338
      %10340 = vrot.lane.b32.xlu0 %v10241, 64
      %v10341 = vpop.permute.xlu0 %10340
      %10342 = vrot.lane.b32.xlu0 %v10242, 64
      %v10343 = vpop.permute.xlu0 %10342
      %10344 = vrot.lane.b32.xlu0 %v10243, 64
      %v10345 = vpop.permute.xlu0 %10344
      %10346 = vrot.lane.b32.xlu0 %v10244, 64
      %v10347 = vpop.permute.xlu0 %10346
      %10348 = vrot.lane.b32.xlu0 %v10245, 64
      %v10349 = vpop.permute.xlu0 %10348
      %10350 = vrot.lane.b32.xlu0 %v10246, 64
      %v10351 = vpop.permute.xlu0 %10350
      %10352 = vrot.lane.b32.xlu0 %v10247, 64
      %v10353 = vpop.permute.xlu0 %10352
      %10354 = vrot.lane.b32.xlu0 %v10248, 64
      %v10355 = vpop.permute.xlu0 %10354
      %10356 = vrot.lane.b32.xlu0 %v10249, 64
      %v10357 = vpop.permute.xlu0 %10356
      %10358 = vrot.lane.b32.xlu0 %v10250, 64
      %v10359 = vpop.permute.xlu0 %10358
      %10360 = vrot.lane.b32.xlu0 %v10251, 64
      %v10361 = vpop.permute.xlu0 %10360
      %10362 = vrot.lane.b32.xlu0 %v10252, 64
      %v10363 = vpop.permute.xlu0 %10362
      %10364 = vrot.lane.b32.xlu0 %v10253, 64
      %v10365 = vpop.permute.xlu0 %10364
      %10366 = vrot.lane.b32.xlu0 %v10254, 64
      %v10367 = vpop.permute.xlu0 %10366
      %10368 = vrot.lane.b32.xlu0 %v10255, 64
      %v10369 = vpop.permute.xlu0 %10368
      %10370 = vrot.lane.b32.xlu0 %v10256, 64
      %v10371 = vpop.permute.xlu0 %10370
      %10372 = vrot.lane.b32.xlu0 %v10257, 64
      %v10373 = vpop.permute.xlu0 %10372
      %10374 = vrot.lane.b32.xlu0 %v10258, 64
      %v10375 = vpop.permute.xlu0 %10374
      %10376 = vrot.lane.b32.xlu0 %v10259, 64
      %v10377 = vpop.permute.xlu0 %10376
      %10378 = vrot.lane.b32.xlu0 %v10260, 64
      %v10379 = vpop.permute.xlu0 %10378
      %10380 = vrot.lane.b32.xlu0 %v10261, 64
      %v10381 = vpop.permute.xlu0 %10380
      %v10422 = vadd.f32 %v10174, %v10303
      %v10423 = vadd.f32 %v10175, %v10305
      %v10424 = vadd.f32 %v10176, %v10307
      %v10425 = vadd.f32 %v10177, %v10309
      %v10426 = vadd.f32 %v10178, %v10311
      %v10427 = vadd.f32 %v10179, %v10313
      %v10428 = vadd.f32 %v10180, %v10315
      %v10429 = vadd.f32 %v10181, %v10317
      %v10430 = vadd.f32 %v10182, %v10319
      %v10431 = vadd.f32 %v10183, %v10321
      %v10432 = vadd.f32 %v10184, %v10323
      %v10433 = vadd.f32 %v10185, %v10325
      %v10434 = vadd.f32 %v10186, %v10327
      %v10435 = vadd.f32 %v10187, %v10329
      %v10436 = vadd.f32 %v10188, %v10331
      %v10437 = vadd.f32 %v10189, %v10333
      %v10438 = vadd.f32 %v10190, %v10335
      %v10439 = vadd.f32 %v10191, %v10337
      %v10440 = vadd.f32 %v10192, %v10339
      %v10441 = vadd.f32 %v10193, %v10341
      %v10442 = vadd.f32 %v10194, %v10343
      %v10443 = vadd.f32 %v10195, %v10345
      %v10444 = vadd.f32 %v10196, %v10347
      %v10445 = vadd.f32 %v10197, %v10349
      %v10446 = vadd.f32 %v10198, %v10351
      %v10447 = vadd.f32 %v10199, %v10353
      %v10448 = vadd.f32 %v10200, %v10355
      %v10449 = vadd.f32 %v10201, %v10357
      %v10450 = vadd.f32 %v10202, %v10359
      %v10451 = vadd.f32 %v10203, %v10361
      %v10452 = vadd.f32 %v10204, %v10363
      %v10453 = vadd.f32 %v10205, %v10365
      %v10454 = vadd.f32 %v10206, %v10367
      %v10455 = vadd.f32 %v10207, %v10369
      %v10456 = vadd.f32 %v10208, %v10371
      %v10457 = vadd.f32 %v10209, %v10373
      %v10458 = vadd.f32 %v10210, %v10375
      %v10459 = vadd.f32 %v10211, %v10377
      %v10460 = vadd.f32 %v10212, %v10379
      %v10461 = vadd.f32 %v10213, %v10381
      %10464 = vrot.lane.b32.xlu0 %v9446, 64
      %v10465 = vpop.permute.xlu0 %10464
      %10466 = vrot.lane.b32.xlu0 %v9447, 64
      %v10467 = vpop.permute.xlu0 %10466
      %v10470 = vmul.f32 %v2437, %v10465
      %v10471 = vmul.f32 %v2437, %v10467
      %v10472 = vmul.f32 %v2441, %v10465
      %v10473 = vmul.f32 %v2441, %v10467
      %v10474 = vmul.f32 %v2445, %v10465
      %v10475 = vmul.f32 %v2445, %v10467
      %v10476 = vmul.f32 %v2449, %v10465
      %v10477 = vmul.f32 %v2449, %v10467
      %v10478 = vmul.f32 %v2453, %v10465
      %v10479 = vmul.f32 %v2453, %v10467
      %v10480 = vmul.f32 %v2457, %v10465
      %v10481 = vmul.f32 %v2457, %v10467
      %v10482 = vmul.f32 %v2461, %v10465
      %v10483 = vmul.f32 %v2461, %v10467
      %v10484 = vmul.f32 %v2465, %v10465
      %v10485 = vmul.f32 %v2465, %v10467
      %v10486 = vmul.f32 %v2469, %v10465
      %v10487 = vmul.f32 %v2469, %v10467
      %v10488 = vmul.f32 %v2473, %v10465
      %v10489 = vmul.f32 %v2473, %v10467
      %v10490 = vmul.f32 %v2477, %v10465
      %v10491 = vmul.f32 %v2477, %v10467
      %v10492 = vmul.f32 %v2481, %v10465
      %v10493 = vmul.f32 %v2481, %v10467
      %v10494 = vmul.f32 %v2485, %v10465
      %v10495 = vmul.f32 %v2485, %v10467
      %v10496 = vmul.f32 %v2489, %v10465
      %v10497 = vmul.f32 %v2489, %v10467
      %v10498 = vmul.f32 %v2493, %v10465
      %v10499 = vmul.f32 %v2493, %v10467
      %v10500 = vmul.f32 %v2497, %v10465
      %v10501 = vmul.f32 %v2497, %v10467
      %v10502 = vmul.f32 %v2501, %v10465
      %v10503 = vmul.f32 %v2501, %v10467
      %v10504 = vmul.f32 %v2505, %v10465
      %v10505 = vmul.f32 %v2505, %v10467
      %v10506 = vmul.f32 %v2509, %v10465
      %v10507 = vmul.f32 %v2509, %v10467
      %v10508 = vmul.f32 %v2513, %v10465
      %v10509 = vmul.f32 %v2513, %v10467
      %10550 = vrot.lane.b32.xlu0 %v10470, 64
      %v10551 = vpop.permute.xlu0 %10550
      %10552 = vrot.lane.b32.xlu0 %v10471, 64
      %v10553 = vpop.permute.xlu0 %10552
      %10554 = vrot.lane.b32.xlu0 %v10472, 64
      %v10555 = vpop.permute.xlu0 %10554
      %10556 = vrot.lane.b32.xlu0 %v10473, 64
      %v10557 = vpop.permute.xlu0 %10556
      %10558 = vrot.lane.b32.xlu0 %v10474, 64
      %v10559 = vpop.permute.xlu0 %10558
      %10560 = vrot.lane.b32.xlu0 %v10475, 64
      %v10561 = vpop.permute.xlu0 %10560
      %10562 = vrot.lane.b32.xlu0 %v10476, 64
      %v10563 = vpop.permute.xlu0 %10562
      %10564 = vrot.lane.b32.xlu0 %v10477, 64
      %v10565 = vpop.permute.xlu0 %10564
      %10566 = vrot.lane.b32.xlu0 %v10478, 64
      %v10567 = vpop.permute.xlu0 %10566
      %10568 = vrot.lane.b32.xlu0 %v10479, 64
      %v10569 = vpop.permute.xlu0 %10568
      %10570 = vrot.lane.b32.xlu0 %v10480, 64
      %v10571 = vpop.permute.xlu0 %10570
      %10572 = vrot.lane.b32.xlu0 %v10481, 64
      %v10573 = vpop.permute.xlu0 %10572
      %10574 = vrot.lane.b32.xlu0 %v10482, 64
      %v10575 = vpop.permute.xlu0 %10574
      %10576 = vrot.lane.b32.xlu0 %v10483, 64
      %v10577 = vpop.permute.xlu0 %10576
      %10578 = vrot.lane.b32.xlu0 %v10484, 64
      %v10579 = vpop.permute.xlu0 %10578
      %10580 = vrot.lane.b32.xlu0 %v10485, 64
      %v10581 = vpop.permute.xlu0 %10580
      %10582 = vrot.lane.b32.xlu0 %v10486, 64
      %v10583 = vpop.permute.xlu0 %10582
      %10584 = vrot.lane.b32.xlu0 %v10487, 64
      %v10585 = vpop.permute.xlu0 %10584
      %10586 = vrot.lane.b32.xlu0 %v10488, 64
      %v10587 = vpop.permute.xlu0 %10586
      %10588 = vrot.lane.b32.xlu0 %v10489, 64
      %v10589 = vpop.permute.xlu0 %10588
      %10590 = vrot.lane.b32.xlu0 %v10490, 64
      %v10591 = vpop.permute.xlu0 %10590
      %10592 = vrot.lane.b32.xlu0 %v10491, 64
      %v10593 = vpop.permute.xlu0 %10592
      %10594 = vrot.lane.b32.xlu0 %v10492, 64
      %v10595 = vpop.permute.xlu0 %10594
      %10596 = vrot.lane.b32.xlu0 %v10493, 64
      %v10597 = vpop.permute.xlu0 %10596
      %10598 = vrot.lane.b32.xlu0 %v10494, 64
      %v10599 = vpop.permute.xlu0 %10598
      %10600 = vrot.lane.b32.xlu0 %v10495, 64
      %v10601 = vpop.permute.xlu0 %10600
      %10602 = vrot.lane.b32.xlu0 %v10496, 64
      %v10603 = vpop.permute.xlu0 %10602
      %10604 = vrot.lane.b32.xlu0 %v10497, 64
      %v10605 = vpop.permute.xlu0 %10604
      %10606 = vrot.lane.b32.xlu0 %v10498, 64
      %v10607 = vpop.permute.xlu0 %10606
      %10608 = vrot.lane.b32.xlu0 %v10499, 64
      %v10609 = vpop.permute.xlu0 %10608
      %10610 = vrot.lane.b32.xlu0 %v10500, 64
      %v10611 = vpop.permute.xlu0 %10610
      %10612 = vrot.lane.b32.xlu0 %v10501, 64
      %v10613 = vpop.permute.xlu0 %10612
      %10614 = vrot.lane.b32.xlu0 %v10502, 64
      %v10615 = vpop.permute.xlu0 %10614
      %10616 = vrot.lane.b32.xlu0 %v10503, 64
      %v10617 = vpop.permute.xlu0 %10616
      %10618 = vrot.lane.b32.xlu0 %v10504, 64
      %v10619 = vpop.permute.xlu0 %10618
      %10620 = vrot.lane.b32.xlu0 %v10505, 64
      %v10621 = vpop.permute.xlu0 %10620
      %10622 = vrot.lane.b32.xlu0 %v10506, 64
      %v10623 = vpop.permute.xlu0 %10622
      %10624 = vrot.lane.b32.xlu0 %v10507, 64
      %v10625 = vpop.permute.xlu0 %10624
      %10626 = vrot.lane.b32.xlu0 %v10508, 64
      %v10627 = vpop.permute.xlu0 %10626
      %10628 = vrot.lane.b32.xlu0 %v10509, 64
      %v10629 = vpop.permute.xlu0 %10628
      %v10670 = vadd.f32 %v10422, %v10551
      %v10671 = vadd.f32 %v10423, %v10553
      %v10672 = vadd.f32 %v10424, %v10555
      %v10673 = vadd.f32 %v10425, %v10557
      %v10674 = vadd.f32 %v10426, %v10559
      %v10675 = vadd.f32 %v10427, %v10561
      %v10676 = vadd.f32 %v10428, %v10563
      %v10677 = vadd.f32 %v10429, %v10565
      %v10678 = vadd.f32 %v10430, %v10567
      %v10679 = vadd.f32 %v10431, %v10569
      %v10680 = vadd.f32 %v10432, %v10571
      %v10681 = vadd.f32 %v10433, %v10573
      %v10682 = vadd.f32 %v10434, %v10575
      %v10683 = vadd.f32 %v10435, %v10577
      %v10684 = vadd.f32 %v10436, %v10579
      %v10685 = vadd.f32 %v10437, %v10581
      %v10686 = vadd.f32 %v10438, %v10583
      %v10687 = vadd.f32 %v10439, %v10585
      %v10688 = vadd.f32 %v10440, %v10587
      %v10689 = vadd.f32 %v10441, %v10589
      %v10690 = vadd.f32 %v10442, %v10591
      %v10691 = vadd.f32 %v10443, %v10593
      %v10692 = vadd.f32 %v10444, %v10595
      %v10693 = vadd.f32 %v10445, %v10597
      %v10694 = vadd.f32 %v10446, %v10599
      %v10695 = vadd.f32 %v10447, %v10601
      %v10696 = vadd.f32 %v10448, %v10603
      %v10697 = vadd.f32 %v10449, %v10605
      %v10698 = vadd.f32 %v10450, %v10607
      %v10699 = vadd.f32 %v10451, %v10609
      %v10700 = vadd.f32 %v10452, %v10611
      %v10701 = vadd.f32 %v10453, %v10613
      %v10702 = vadd.f32 %v10454, %v10615
      %v10703 = vadd.f32 %v10455, %v10617
      %v10704 = vadd.f32 %v10456, %v10619
      %v10705 = vadd.f32 %v10457, %v10621
      %v10706 = vadd.f32 %v10458, %v10623
      %v10707 = vadd.f32 %v10459, %v10625
      %v10708 = vadd.f32 %v10460, %v10627
      %v10709 = vadd.f32 %v10461, %v10629
      %10712 = vrot.lane.b32.xlu0 %v9448, 64
      %v10713 = vpop.permute.xlu0 %10712
      %10714 = vrot.lane.b32.xlu0 %v9449, 64
      %v10715 = vpop.permute.xlu0 %10714
      %v10718 = vmul.f32 %v2597, %v10713
      %v10719 = vmul.f32 %v2597, %v10715
      %v10720 = vmul.f32 %v2601, %v10713
      %v10721 = vmul.f32 %v2601, %v10715
      %v10722 = vmul.f32 %v2605, %v10713
      %v10723 = vmul.f32 %v2605, %v10715
      %v10724 = vmul.f32 %v2609, %v10713
      %v10725 = vmul.f32 %v2609, %v10715
      %v10726 = vmul.f32 %v2613, %v10713
      %v10727 = vmul.f32 %v2613, %v10715
      %v10728 = vmul.f32 %v2617, %v10713
      %v10729 = vmul.f32 %v2617, %v10715
      %v10730 = vmul.f32 %v2621, %v10713
      %v10731 = vmul.f32 %v2621, %v10715
      %v10732 = vmul.f32 %v2625, %v10713
      %v10733 = vmul.f32 %v2625, %v10715
      %v10734 = vmul.f32 %v2629, %v10713
      %v10735 = vmul.f32 %v2629, %v10715
      %v10736 = vmul.f32 %v2633, %v10713
      %v10737 = vmul.f32 %v2633, %v10715
      %v10738 = vmul.f32 %v2637, %v10713
      %v10739 = vmul.f32 %v2637, %v10715
      %v10740 = vmul.f32 %v2641, %v10713
      %v10741 = vmul.f32 %v2641, %v10715
      %v10742 = vmul.f32 %v2645, %v10713
      %v10743 = vmul.f32 %v2645, %v10715
      %v10744 = vmul.f32 %v2649, %v10713
      %v10745 = vmul.f32 %v2649, %v10715
      %v10746 = vmul.f32 %v2653, %v10713
      %v10747 = vmul.f32 %v2653, %v10715
      %v10748 = vmul.f32 %v2657, %v10713
      %v10749 = vmul.f32 %v2657, %v10715
      %v10750 = vmul.f32 %v2661, %v10713
      %v10751 = vmul.f32 %v2661, %v10715
      %v10752 = vmul.f32 %v2665, %v10713
      %v10753 = vmul.f32 %v2665, %v10715
      %v10754 = vmul.f32 %v2669, %v10713
      %v10755 = vmul.f32 %v2669, %v10715
      %v10756 = vmul.f32 %v2673, %v10713
      %v10757 = vmul.f32 %v2673, %v10715
      %10798 = vrot.lane.b32.xlu0 %v10718, 64
      %v10799 = vpop.permute.xlu0 %10798
      %10800 = vrot.lane.b32.xlu0 %v10719, 64
      %v10801 = vpop.permute.xlu0 %10800
      %10802 = vrot.lane.b32.xlu0 %v10720, 64
      %v10803 = vpop.permute.xlu0 %10802
      %10804 = vrot.lane.b32.xlu0 %v10721, 64
      %v10805 = vpop.permute.xlu0 %10804
      %10806 = vrot.lane.b32.xlu0 %v10722, 64
      %v10807 = vpop.permute.xlu0 %10806
      %10808 = vrot.lane.b32.xlu0 %v10723, 64
      %v10809 = vpop.permute.xlu0 %10808
      %10810 = vrot.lane.b32.xlu0 %v10724, 64
      %v10811 = vpop.permute.xlu0 %10810
      %10812 = vrot.lane.b32.xlu0 %v10725, 64
      %v10813 = vpop.permute.xlu0 %10812
      %10814 = vrot.lane.b32.xlu0 %v10726, 64
      %v10815 = vpop.permute.xlu0 %10814
      %10816 = vrot.lane.b32.xlu0 %v10727, 64
      %v10817 = vpop.permute.xlu0 %10816
      %10818 = vrot.lane.b32.xlu0 %v10728, 64
      %v10819 = vpop.permute.xlu0 %10818
      %10820 = vrot.lane.b32.xlu0 %v10729, 64
      %v10821 = vpop.permute.xlu0 %10820
      %10822 = vrot.lane.b32.xlu0 %v10730, 64
      %v10823 = vpop.permute.xlu0 %10822
      %10824 = vrot.lane.b32.xlu0 %v10731, 64
      %v10825 = vpop.permute.xlu0 %10824
      %10826 = vrot.lane.b32.xlu0 %v10732, 64
      %v10827 = vpop.permute.xlu0 %10826
      %10828 = vrot.lane.b32.xlu0 %v10733, 64
      %v10829 = vpop.permute.xlu0 %10828
      %10830 = vrot.lane.b32.xlu0 %v10734, 64
      %v10831 = vpop.permute.xlu0 %10830
      %10832 = vrot.lane.b32.xlu0 %v10735, 64
      %v10833 = vpop.permute.xlu0 %10832
      %10834 = vrot.lane.b32.xlu0 %v10736, 64
      %v10835 = vpop.permute.xlu0 %10834
      %10836 = vrot.lane.b32.xlu0 %v10737, 64
      %v10837 = vpop.permute.xlu0 %10836
      %10838 = vrot.lane.b32.xlu0 %v10738, 64
      %v10839 = vpop.permute.xlu0 %10838
      %10840 = vrot.lane.b32.xlu0 %v10739, 64
      %v10841 = vpop.permute.xlu0 %10840
      %10842 = vrot.lane.b32.xlu0 %v10740, 64
      %v10843 = vpop.permute.xlu0 %10842
      %10844 = vrot.lane.b32.xlu0 %v10741, 64
      %v10845 = vpop.permute.xlu0 %10844
      %10846 = vrot.lane.b32.xlu0 %v10742, 64
      %v10847 = vpop.permute.xlu0 %10846
      %10848 = vrot.lane.b32.xlu0 %v10743, 64
      %v10849 = vpop.permute.xlu0 %10848
      %10850 = vrot.lane.b32.xlu0 %v10744, 64
      %v10851 = vpop.permute.xlu0 %10850
      %10852 = vrot.lane.b32.xlu0 %v10745, 64
      %v10853 = vpop.permute.xlu0 %10852
      %10854 = vrot.lane.b32.xlu0 %v10746, 64
      %v10855 = vpop.permute.xlu0 %10854
      %10856 = vrot.lane.b32.xlu0 %v10747, 64
      %v10857 = vpop.permute.xlu0 %10856
      %10858 = vrot.lane.b32.xlu0 %v10748, 64
      %v10859 = vpop.permute.xlu0 %10858
      %10860 = vrot.lane.b32.xlu0 %v10749, 64
      %v10861 = vpop.permute.xlu0 %10860
      %10862 = vrot.lane.b32.xlu0 %v10750, 64
      %v10863 = vpop.permute.xlu0 %10862
      %10864 = vrot.lane.b32.xlu0 %v10751, 64
      %v10865 = vpop.permute.xlu0 %10864
      %10866 = vrot.lane.b32.xlu0 %v10752, 64
      %v10867 = vpop.permute.xlu0 %10866
      %10868 = vrot.lane.b32.xlu0 %v10753, 64
      %v10869 = vpop.permute.xlu0 %10868
      %10870 = vrot.lane.b32.xlu0 %v10754, 64
      %v10871 = vpop.permute.xlu0 %10870
      %10872 = vrot.lane.b32.xlu0 %v10755, 64
      %v10873 = vpop.permute.xlu0 %10872
      %10874 = vrot.lane.b32.xlu0 %v10756, 64
      %v10875 = vpop.permute.xlu0 %10874
      %10876 = vrot.lane.b32.xlu0 %v10757, 64
      %v10877 = vpop.permute.xlu0 %10876
      %v10918 = vadd.f32 %v10670, %v10799
      %v10919 = vadd.f32 %v10671, %v10801
      %v10920 = vadd.f32 %v10672, %v10803
      %v10921 = vadd.f32 %v10673, %v10805
      %v10922 = vadd.f32 %v10674, %v10807
      %v10923 = vadd.f32 %v10675, %v10809
      %v10924 = vadd.f32 %v10676, %v10811
      %v10925 = vadd.f32 %v10677, %v10813
      %v10926 = vadd.f32 %v10678, %v10815
      %v10927 = vadd.f32 %v10679, %v10817
      %v10928 = vadd.f32 %v10680, %v10819
      %v10929 = vadd.f32 %v10681, %v10821
      %v10930 = vadd.f32 %v10682, %v10823
      %v10931 = vadd.f32 %v10683, %v10825
      %v10932 = vadd.f32 %v10684, %v10827
      %v10933 = vadd.f32 %v10685, %v10829
      %v10934 = vadd.f32 %v10686, %v10831
      %v10935 = vadd.f32 %v10687, %v10833
      %v10936 = vadd.f32 %v10688, %v10835
      %v10937 = vadd.f32 %v10689, %v10837
      %v10938 = vadd.f32 %v10690, %v10839
      %v10939 = vadd.f32 %v10691, %v10841
      %v10940 = vadd.f32 %v10692, %v10843
      %v10941 = vadd.f32 %v10693, %v10845
      %v10942 = vadd.f32 %v10694, %v10847
      %v10943 = vadd.f32 %v10695, %v10849
      %v10944 = vadd.f32 %v10696, %v10851
      %v10945 = vadd.f32 %v10697, %v10853
      %v10946 = vadd.f32 %v10698, %v10855
      %v10947 = vadd.f32 %v10699, %v10857
      %v10948 = vadd.f32 %v10700, %v10859
      %v10949 = vadd.f32 %v10701, %v10861
      %v10950 = vadd.f32 %v10702, %v10863
      %v10951 = vadd.f32 %v10703, %v10865
      %v10952 = vadd.f32 %v10704, %v10867
      %v10953 = vadd.f32 %v10705, %v10869
      %v10954 = vadd.f32 %v10706, %v10871
      %v10955 = vadd.f32 %v10707, %v10873
      %v10956 = vadd.f32 %v10708, %v10875
      %v10957 = vadd.f32 %v10709, %v10877
      %10960 = vrot.lane.b32.xlu0 %v9450, 64
      %v10961 = vpop.permute.xlu0 %10960
      %10962 = vrot.lane.b32.xlu0 %v9451, 64
      %v10963 = vpop.permute.xlu0 %10962
      %v10966 = vmul.f32 %v2757, %v10961
      %v10967 = vmul.f32 %v2757, %v10963
      %v10968 = vmul.f32 %v2761, %v10961
      %v10969 = vmul.f32 %v2761, %v10963
      %v10970 = vmul.f32 %v2765, %v10961
      %v10971 = vmul.f32 %v2765, %v10963
      %v10972 = vmul.f32 %v2769, %v10961
      %v10973 = vmul.f32 %v2769, %v10963
      %v10974 = vmul.f32 %v2773, %v10961
      %v10975 = vmul.f32 %v2773, %v10963
      %v10976 = vmul.f32 %v2777, %v10961
      %v10977 = vmul.f32 %v2777, %v10963
      %v10978 = vmul.f32 %v2781, %v10961
      %v10979 = vmul.f32 %v2781, %v10963
      %v10980 = vmul.f32 %v2785, %v10961
      %v10981 = vmul.f32 %v2785, %v10963
      %v10982 = vmul.f32 %v2789, %v10961
      %v10983 = vmul.f32 %v2789, %v10963
      %v10984 = vmul.f32 %v2793, %v10961
      %v10985 = vmul.f32 %v2793, %v10963
      %v10986 = vmul.f32 %v2797, %v10961
      %v10987 = vmul.f32 %v2797, %v10963
      %v10988 = vmul.f32 %v2801, %v10961
      %v10989 = vmul.f32 %v2801, %v10963
      %v10990 = vmul.f32 %v2805, %v10961
      %v10991 = vmul.f32 %v2805, %v10963
      %v10992 = vmul.f32 %v2809, %v10961
      %v10993 = vmul.f32 %v2809, %v10963
      %v10994 = vmul.f32 %v2813, %v10961
      %v10995 = vmul.f32 %v2813, %v10963
      %v10996 = vmul.f32 %v2817, %v10961
      %v10997 = vmul.f32 %v2817, %v10963
      %v10998 = vmul.f32 %v2821, %v10961
      %v10999 = vmul.f32 %v2821, %v10963
      %v11000 = vmul.f32 %v2825, %v10961
      %v11001 = vmul.f32 %v2825, %v10963
      %v11002 = vmul.f32 %v2829, %v10961
      %v11003 = vmul.f32 %v2829, %v10963
      %v11004 = vmul.f32 %v2833, %v10961
      %v11005 = vmul.f32 %v2833, %v10963
      %11046 = vrot.lane.b32.xlu0 %v10966, 64
      %v11047 = vpop.permute.xlu0 %11046
      %11048 = vrot.lane.b32.xlu0 %v10967, 64
      %v11049 = vpop.permute.xlu0 %11048
      %11050 = vrot.lane.b32.xlu0 %v10968, 64
      %v11051 = vpop.permute.xlu0 %11050
      %11052 = vrot.lane.b32.xlu0 %v10969, 64
      %v11053 = vpop.permute.xlu0 %11052
      %11054 = vrot.lane.b32.xlu0 %v10970, 64
      %v11055 = vpop.permute.xlu0 %11054
      %11056 = vrot.lane.b32.xlu0 %v10971, 64
      %v11057 = vpop.permute.xlu0 %11056
      %11058 = vrot.lane.b32.xlu0 %v10972, 64
      %v11059 = vpop.permute.xlu0 %11058
      %11060 = vrot.lane.b32.xlu0 %v10973, 64
      %v11061 = vpop.permute.xlu0 %11060
      %11062 = vrot.lane.b32.xlu0 %v10974, 64
      %v11063 = vpop.permute.xlu0 %11062
      %11064 = vrot.lane.b32.xlu0 %v10975, 64
      %v11065 = vpop.permute.xlu0 %11064
      %11066 = vrot.lane.b32.xlu0 %v10976, 64
      %v11067 = vpop.permute.xlu0 %11066
      %11068 = vrot.lane.b32.xlu0 %v10977, 64
      %v11069 = vpop.permute.xlu0 %11068
      %11070 = vrot.lane.b32.xlu0 %v10978, 64
      %v11071 = vpop.permute.xlu0 %11070
      %11072 = vrot.lane.b32.xlu0 %v10979, 64
      %v11073 = vpop.permute.xlu0 %11072
      %11074 = vrot.lane.b32.xlu0 %v10980, 64
      %v11075 = vpop.permute.xlu0 %11074
      %11076 = vrot.lane.b32.xlu0 %v10981, 64
      %v11077 = vpop.permute.xlu0 %11076
      %11078 = vrot.lane.b32.xlu0 %v10982, 64
      %v11079 = vpop.permute.xlu0 %11078
      %11080 = vrot.lane.b32.xlu0 %v10983, 64
      %v11081 = vpop.permute.xlu0 %11080
      %11082 = vrot.lane.b32.xlu0 %v10984, 64
      %v11083 = vpop.permute.xlu0 %11082
      %11084 = vrot.lane.b32.xlu0 %v10985, 64
      %v11085 = vpop.permute.xlu0 %11084
      %11086 = vrot.lane.b32.xlu0 %v10986, 64
      %v11087 = vpop.permute.xlu0 %11086
      %11088 = vrot.lane.b32.xlu0 %v10987, 64
      %v11089 = vpop.permute.xlu0 %11088
      %11090 = vrot.lane.b32.xlu0 %v10988, 64
      %v11091 = vpop.permute.xlu0 %11090
      %11092 = vrot.lane.b32.xlu0 %v10989, 64
      %v11093 = vpop.permute.xlu0 %11092
      %11094 = vrot.lane.b32.xlu0 %v10990, 64
      %v11095 = vpop.permute.xlu0 %11094
      %11096 = vrot.lane.b32.xlu0 %v10991, 64
      %v11097 = vpop.permute.xlu0 %11096
      %11098 = vrot.lane.b32.xlu0 %v10992, 64
      %v11099 = vpop.permute.xlu0 %11098
      %11100 = vrot.lane.b32.xlu0 %v10993, 64
      %v11101 = vpop.permute.xlu0 %11100
      %11102 = vrot.lane.b32.xlu0 %v10994, 64
      %v11103 = vpop.permute.xlu0 %11102
      %11104 = vrot.lane.b32.xlu0 %v10995, 64
      %v11105 = vpop.permute.xlu0 %11104
      %11106 = vrot.lane.b32.xlu0 %v10996, 64
      %v11107 = vpop.permute.xlu0 %11106
      %11108 = vrot.lane.b32.xlu0 %v10997, 64
      %v11109 = vpop.permute.xlu0 %11108
      %11110 = vrot.lane.b32.xlu0 %v10998, 64
      %v11111 = vpop.permute.xlu0 %11110
      %11112 = vrot.lane.b32.xlu0 %v10999, 64
      %v11113 = vpop.permute.xlu0 %11112
      %11114 = vrot.lane.b32.xlu0 %v11000, 64
      %v11115 = vpop.permute.xlu0 %11114
      %11116 = vrot.lane.b32.xlu0 %v11001, 64
      %v11117 = vpop.permute.xlu0 %11116
      %11118 = vrot.lane.b32.xlu0 %v11002, 64
      %v11119 = vpop.permute.xlu0 %11118
      %11120 = vrot.lane.b32.xlu0 %v11003, 64
      %v11121 = vpop.permute.xlu0 %11120
      %11122 = vrot.lane.b32.xlu0 %v11004, 64
      %v11123 = vpop.permute.xlu0 %11122
      %11124 = vrot.lane.b32.xlu0 %v11005, 64
      %v11125 = vpop.permute.xlu0 %11124
      %v11166 = vadd.f32 %v10918, %v11047
      %v11167 = vadd.f32 %v10919, %v11049
      %v11168 = vadd.f32 %v10920, %v11051
      %v11169 = vadd.f32 %v10921, %v11053
      %v11170 = vadd.f32 %v10922, %v11055
      %v11171 = vadd.f32 %v10923, %v11057
      %v11172 = vadd.f32 %v10924, %v11059
      %v11173 = vadd.f32 %v10925, %v11061
      %v11174 = vadd.f32 %v10926, %v11063
      %v11175 = vadd.f32 %v10927, %v11065
      %v11176 = vadd.f32 %v10928, %v11067
      %v11177 = vadd.f32 %v10929, %v11069
      %v11178 = vadd.f32 %v10930, %v11071
      %v11179 = vadd.f32 %v10931, %v11073
      %v11180 = vadd.f32 %v10932, %v11075
      %v11181 = vadd.f32 %v10933, %v11077
      %v11182 = vadd.f32 %v10934, %v11079
      %v11183 = vadd.f32 %v10935, %v11081
      %v11184 = vadd.f32 %v10936, %v11083
      %v11185 = vadd.f32 %v10937, %v11085
      %v11186 = vadd.f32 %v10938, %v11087
      %v11187 = vadd.f32 %v10939, %v11089
      %v11188 = vadd.f32 %v10940, %v11091
      %v11189 = vadd.f32 %v10941, %v11093
      %v11190 = vadd.f32 %v10942, %v11095
      %v11191 = vadd.f32 %v10943, %v11097
      %v11192 = vadd.f32 %v10944, %v11099
      %v11193 = vadd.f32 %v10945, %v11101
      %v11194 = vadd.f32 %v10946, %v11103
      %v11195 = vadd.f32 %v10947, %v11105
      %v11196 = vadd.f32 %v10948, %v11107
      %v11197 = vadd.f32 %v10949, %v11109
      %v11198 = vadd.f32 %v10950, %v11111
      %v11199 = vadd.f32 %v10951, %v11113
      %v11200 = vadd.f32 %v10952, %v11115
      %v11201 = vadd.f32 %v10953, %v11117
      %v11202 = vadd.f32 %v10954, %v11119
      %v11203 = vadd.f32 %v10955, %v11121
      %v11204 = vadd.f32 %v10956, %v11123
      %v11205 = vadd.f32 %v10957, %v11125
      %11208 = vrot.lane.b32.xlu0 %v9452, 64
      %v11209 = vpop.permute.xlu0 %11208
      %11210 = vrot.lane.b32.xlu0 %v9453, 64
      %v11211 = vpop.permute.xlu0 %11210
      %v11214 = vmul.f32 %v2917, %v11209
      %v11215 = vmul.f32 %v2917, %v11211
      %v11216 = vmul.f32 %v2921, %v11209
      %v11217 = vmul.f32 %v2921, %v11211
      %v11218 = vmul.f32 %v2925, %v11209
      %v11219 = vmul.f32 %v2925, %v11211
      %v11220 = vmul.f32 %v2929, %v11209
      %v11221 = vmul.f32 %v2929, %v11211
      %v11222 = vmul.f32 %v2933, %v11209
      %v11223 = vmul.f32 %v2933, %v11211
      %v11224 = vmul.f32 %v2937, %v11209
      %v11225 = vmul.f32 %v2937, %v11211
      %v11226 = vmul.f32 %v2941, %v11209
      %v11227 = vmul.f32 %v2941, %v11211
      %v11228 = vmul.f32 %v2945, %v11209
      %v11229 = vmul.f32 %v2945, %v11211
      %v11230 = vmul.f32 %v2949, %v11209
      %v11231 = vmul.f32 %v2949, %v11211
      %v11232 = vmul.f32 %v2953, %v11209
      %v11233 = vmul.f32 %v2953, %v11211
      %v11234 = vmul.f32 %v2957, %v11209
      %v11235 = vmul.f32 %v2957, %v11211
      %v11236 = vmul.f32 %v2961, %v11209
      %v11237 = vmul.f32 %v2961, %v11211
      %v11238 = vmul.f32 %v2965, %v11209
      %v11239 = vmul.f32 %v2965, %v11211
      %v11240 = vmul.f32 %v2969, %v11209
      %v11241 = vmul.f32 %v2969, %v11211
      %v11242 = vmul.f32 %v2973, %v11209
      %v11243 = vmul.f32 %v2973, %v11211
      %v11244 = vmul.f32 %v2977, %v11209
      %v11245 = vmul.f32 %v2977, %v11211
      %v11246 = vmul.f32 %v2981, %v11209
      %v11247 = vmul.f32 %v2981, %v11211
      %v11248 = vmul.f32 %v2985, %v11209
      %v11249 = vmul.f32 %v2985, %v11211
      %v11250 = vmul.f32 %v2989, %v11209
      %v11251 = vmul.f32 %v2989, %v11211
      %v11252 = vmul.f32 %v2993, %v11209
      %v11253 = vmul.f32 %v2993, %v11211
      %11294 = vrot.lane.b32.xlu0 %v11214, 64
      %v11295 = vpop.permute.xlu0 %11294
      %11296 = vrot.lane.b32.xlu0 %v11215, 64
      %v11297 = vpop.permute.xlu0 %11296
      %11298 = vrot.lane.b32.xlu0 %v11216, 64
      %v11299 = vpop.permute.xlu0 %11298
      %11300 = vrot.lane.b32.xlu0 %v11217, 64
      %v11301 = vpop.permute.xlu0 %11300
      %11302 = vrot.lane.b32.xlu0 %v11218, 64
      %v11303 = vpop.permute.xlu0 %11302
      %11304 = vrot.lane.b32.xlu0 %v11219, 64
      %v11305 = vpop.permute.xlu0 %11304
      %11306 = vrot.lane.b32.xlu0 %v11220, 64
      %v11307 = vpop.permute.xlu0 %11306
      %11308 = vrot.lane.b32.xlu0 %v11221, 64
      %v11309 = vpop.permute.xlu0 %11308
      %11310 = vrot.lane.b32.xlu0 %v11222, 64
      %v11311 = vpop.permute.xlu0 %11310
      %11312 = vrot.lane.b32.xlu0 %v11223, 64
      %v11313 = vpop.permute.xlu0 %11312
      %11314 = vrot.lane.b32.xlu0 %v11224, 64
      %v11315 = vpop.permute.xlu0 %11314
      %11316 = vrot.lane.b32.xlu0 %v11225, 64
      %v11317 = vpop.permute.xlu0 %11316
      %11318 = vrot.lane.b32.xlu0 %v11226, 64
      %v11319 = vpop.permute.xlu0 %11318
      %11320 = vrot.lane.b32.xlu0 %v11227, 64
      %v11321 = vpop.permute.xlu0 %11320
      %11322 = vrot.lane.b32.xlu0 %v11228, 64
      %v11323 = vpop.permute.xlu0 %11322
      %11324 = vrot.lane.b32.xlu0 %v11229, 64
      %v11325 = vpop.permute.xlu0 %11324
      %11326 = vrot.lane.b32.xlu0 %v11230, 64
      %v11327 = vpop.permute.xlu0 %11326
      %11328 = vrot.lane.b32.xlu0 %v11231, 64
      %v11329 = vpop.permute.xlu0 %11328
      %11330 = vrot.lane.b32.xlu0 %v11232, 64
      %v11331 = vpop.permute.xlu0 %11330
      %11332 = vrot.lane.b32.xlu0 %v11233, 64
      %v11333 = vpop.permute.xlu0 %11332
      %11334 = vrot.lane.b32.xlu0 %v11234, 64
      %v11335 = vpop.permute.xlu0 %11334
      %11336 = vrot.lane.b32.xlu0 %v11235, 64
      %v11337 = vpop.permute.xlu0 %11336
      %11338 = vrot.lane.b32.xlu0 %v11236, 64
      %v11339 = vpop.permute.xlu0 %11338
      %11340 = vrot.lane.b32.xlu0 %v11237, 64
      %v11341 = vpop.permute.xlu0 %11340
      %11342 = vrot.lane.b32.xlu0 %v11238, 64
      %v11343 = vpop.permute.xlu0 %11342
      %11344 = vrot.lane.b32.xlu0 %v11239, 64
      %v11345 = vpop.permute.xlu0 %11344
      %11346 = vrot.lane.b32.xlu0 %v11240, 64
      %v11347 = vpop.permute.xlu0 %11346
      %11348 = vrot.lane.b32.xlu0 %v11241, 64
      %v11349 = vpop.permute.xlu0 %11348
      %11350 = vrot.lane.b32.xlu0 %v11242, 64
      %v11351 = vpop.permute.xlu0 %11350
      %11352 = vrot.lane.b32.xlu0 %v11243, 64
      %v11353 = vpop.permute.xlu0 %11352
      %11354 = vrot.lane.b32.xlu0 %v11244, 64
      %v11355 = vpop.permute.xlu0 %11354
      %11356 = vrot.lane.b32.xlu0 %v11245, 64
      %v11357 = vpop.permute.xlu0 %11356
      %11358 = vrot.lane.b32.xlu0 %v11246, 64
      %v11359 = vpop.permute.xlu0 %11358
      %11360 = vrot.lane.b32.xlu0 %v11247, 64
      %v11361 = vpop.permute.xlu0 %11360
      %11362 = vrot.lane.b32.xlu0 %v11248, 64
      %v11363 = vpop.permute.xlu0 %11362
      %11364 = vrot.lane.b32.xlu0 %v11249, 64
      %v11365 = vpop.permute.xlu0 %11364
      %11366 = vrot.lane.b32.xlu0 %v11250, 64
      %v11367 = vpop.permute.xlu0 %11366
      %11368 = vrot.lane.b32.xlu0 %v11251, 64
      %v11369 = vpop.permute.xlu0 %11368
      %11370 = vrot.lane.b32.xlu0 %v11252, 64
      %v11371 = vpop.permute.xlu0 %11370
      %11372 = vrot.lane.b32.xlu0 %v11253, 64
      %v11373 = vpop.permute.xlu0 %11372
      %v11414 = vadd.f32 %v11166, %v11295
      %v11415 = vadd.f32 %v11167, %v11297
      %v11416 = vadd.f32 %v11168, %v11299
      %v11417 = vadd.f32 %v11169, %v11301
      %v11418 = vadd.f32 %v11170, %v11303
      %v11419 = vadd.f32 %v11171, %v11305
      %v11420 = vadd.f32 %v11172, %v11307
      %v11421 = vadd.f32 %v11173, %v11309
      %v11422 = vadd.f32 %v11174, %v11311
      %v11423 = vadd.f32 %v11175, %v11313
      %v11424 = vadd.f32 %v11176, %v11315
      %v11425 = vadd.f32 %v11177, %v11317
      %v11426 = vadd.f32 %v11178, %v11319
      %v11427 = vadd.f32 %v11179, %v11321
      %v11428 = vadd.f32 %v11180, %v11323
      %v11429 = vadd.f32 %v11181, %v11325
      %v11430 = vadd.f32 %v11182, %v11327
      %v11431 = vadd.f32 %v11183, %v11329
      %v11432 = vadd.f32 %v11184, %v11331
      %v11433 = vadd.f32 %v11185, %v11333
      %v11434 = vadd.f32 %v11186, %v11335
      %v11435 = vadd.f32 %v11187, %v11337
      %v11436 = vadd.f32 %v11188, %v11339
      %v11437 = vadd.f32 %v11189, %v11341
      %v11438 = vadd.f32 %v11190, %v11343
      %v11439 = vadd.f32 %v11191, %v11345
      %v11440 = vadd.f32 %v11192, %v11347
      %v11441 = vadd.f32 %v11193, %v11349
      %v11442 = vadd.f32 %v11194, %v11351
      %v11443 = vadd.f32 %v11195, %v11353
      %v11444 = vadd.f32 %v11196, %v11355
      %v11445 = vadd.f32 %v11197, %v11357
      %v11446 = vadd.f32 %v11198, %v11359
      %v11447 = vadd.f32 %v11199, %v11361
      %v11448 = vadd.f32 %v11200, %v11363
      %v11449 = vadd.f32 %v11201, %v11365
      %v11450 = vadd.f32 %v11202, %v11367
      %v11451 = vadd.f32 %v11203, %v11369
      %v11452 = vadd.f32 %v11204, %v11371
      %v11453 = vadd.f32 %v11205, %v11373
      %11456 = vrot.lane.b32.xlu0 %v9454, 64
      %v11457 = vpop.permute.xlu0 %11456
      %11458 = vrot.lane.b32.xlu0 %v9455, 64
      %v11459 = vpop.permute.xlu0 %11458
      %v11462 = vmul.f32 %v3077, %v11457
      %v11463 = vmul.f32 %v3077, %v11459
      %v11464 = vmul.f32 %v3081, %v11457
      %v11465 = vmul.f32 %v3081, %v11459
      %v11466 = vmul.f32 %v3085, %v11457
      %v11467 = vmul.f32 %v3085, %v11459
      %v11468 = vmul.f32 %v3089, %v11457
      %v11469 = vmul.f32 %v3089, %v11459
      %v11470 = vmul.f32 %v3093, %v11457
      %v11471 = vmul.f32 %v3093, %v11459
      %v11472 = vmul.f32 %v3097, %v11457
      %v11473 = vmul.f32 %v3097, %v11459
      %v11474 = vmul.f32 %v3101, %v11457
      %v11475 = vmul.f32 %v3101, %v11459
      %v11476 = vmul.f32 %v3105, %v11457
      %v11477 = vmul.f32 %v3105, %v11459
      %v11478 = vmul.f32 %v3109, %v11457
      %v11479 = vmul.f32 %v3109, %v11459
      %v11480 = vmul.f32 %v3113, %v11457
      %v11481 = vmul.f32 %v3113, %v11459
      %v11482 = vmul.f32 %v3117, %v11457
      %v11483 = vmul.f32 %v3117, %v11459
      %v11484 = vmul.f32 %v3121, %v11457
      %v11485 = vmul.f32 %v3121, %v11459
      %v11486 = vmul.f32 %v3125, %v11457
      %v11487 = vmul.f32 %v3125, %v11459
      %v11488 = vmul.f32 %v3129, %v11457
      %v11489 = vmul.f32 %v3129, %v11459
      %v11490 = vmul.f32 %v3133, %v11457
      %v11491 = vmul.f32 %v3133, %v11459
      %v11492 = vmul.f32 %v3137, %v11457
      %v11493 = vmul.f32 %v3137, %v11459
      %v11494 = vmul.f32 %v3141, %v11457
      %v11495 = vmul.f32 %v3141, %v11459
      %v11496 = vmul.f32 %v3145, %v11457
      %v11497 = vmul.f32 %v3145, %v11459
      %v11498 = vmul.f32 %v3149, %v11457
      %v11499 = vmul.f32 %v3149, %v11459
      %v11500 = vmul.f32 %v3153, %v11457
      %v11501 = vmul.f32 %v3153, %v11459
      %11542 = vrot.lane.b32.xlu0 %v11462, 64
      %v11543 = vpop.permute.xlu0 %11542
      %11544 = vrot.lane.b32.xlu0 %v11463, 64
      %v11545 = vpop.permute.xlu0 %11544
      %11546 = vrot.lane.b32.xlu0 %v11464, 64
      %v11547 = vpop.permute.xlu0 %11546
      %11548 = vrot.lane.b32.xlu0 %v11465, 64
      %v11549 = vpop.permute.xlu0 %11548
      %11550 = vrot.lane.b32.xlu0 %v11466, 64
      %v11551 = vpop.permute.xlu0 %11550
      %11552 = vrot.lane.b32.xlu0 %v11467, 64
      %v11553 = vpop.permute.xlu0 %11552
      %11554 = vrot.lane.b32.xlu0 %v11468, 64
      %v11555 = vpop.permute.xlu0 %11554
      %11556 = vrot.lane.b32.xlu0 %v11469, 64
      %v11557 = vpop.permute.xlu0 %11556
      %11558 = vrot.lane.b32.xlu0 %v11470, 64
      %v11559 = vpop.permute.xlu0 %11558
      %11560 = vrot.lane.b32.xlu0 %v11471, 64
      %v11561 = vpop.permute.xlu0 %11560
      %11562 = vrot.lane.b32.xlu0 %v11472, 64
      %v11563 = vpop.permute.xlu0 %11562
      %11564 = vrot.lane.b32.xlu0 %v11473, 64
      %v11565 = vpop.permute.xlu0 %11564
      %11566 = vrot.lane.b32.xlu0 %v11474, 64
      %v11567 = vpop.permute.xlu0 %11566
      %11568 = vrot.lane.b32.xlu0 %v11475, 64
      %v11569 = vpop.permute.xlu0 %11568
      %11570 = vrot.lane.b32.xlu0 %v11476, 64
      %v11571 = vpop.permute.xlu0 %11570
      %11572 = vrot.lane.b32.xlu0 %v11477, 64
      %v11573 = vpop.permute.xlu0 %11572
      %11574 = vrot.lane.b32.xlu0 %v11478, 64
      %v11575 = vpop.permute.xlu0 %11574
      %11576 = vrot.lane.b32.xlu0 %v11479, 64
      %v11577 = vpop.permute.xlu0 %11576
      %11578 = vrot.lane.b32.xlu0 %v11480, 64
      %v11579 = vpop.permute.xlu0 %11578
      %11580 = vrot.lane.b32.xlu0 %v11481, 64
      %v11581 = vpop.permute.xlu0 %11580
      %11582 = vrot.lane.b32.xlu0 %v11482, 64
      %v11583 = vpop.permute.xlu0 %11582
      %11584 = vrot.lane.b32.xlu0 %v11483, 64
      %v11585 = vpop.permute.xlu0 %11584
      %11586 = vrot.lane.b32.xlu0 %v11484, 64
      %v11587 = vpop.permute.xlu0 %11586
      %11588 = vrot.lane.b32.xlu0 %v11485, 64
      %v11589 = vpop.permute.xlu0 %11588
      %11590 = vrot.lane.b32.xlu0 %v11486, 64
      %v11591 = vpop.permute.xlu0 %11590
      %11592 = vrot.lane.b32.xlu0 %v11487, 64
      %v11593 = vpop.permute.xlu0 %11592
      %11594 = vrot.lane.b32.xlu0 %v11488, 64
      %v11595 = vpop.permute.xlu0 %11594
      %11596 = vrot.lane.b32.xlu0 %v11489, 64
      %v11597 = vpop.permute.xlu0 %11596
      %11598 = vrot.lane.b32.xlu0 %v11490, 64
      %v11599 = vpop.permute.xlu0 %11598
      %11600 = vrot.lane.b32.xlu0 %v11491, 64
      %v11601 = vpop.permute.xlu0 %11600
      %11602 = vrot.lane.b32.xlu0 %v11492, 64
      %v11603 = vpop.permute.xlu0 %11602
      %11604 = vrot.lane.b32.xlu0 %v11493, 64
      %v11605 = vpop.permute.xlu0 %11604
      %11606 = vrot.lane.b32.xlu0 %v11494, 64
      %v11607 = vpop.permute.xlu0 %11606
      %11608 = vrot.lane.b32.xlu0 %v11495, 64
      %v11609 = vpop.permute.xlu0 %11608
      %11610 = vrot.lane.b32.xlu0 %v11496, 64
      %v11611 = vpop.permute.xlu0 %11610
      %11612 = vrot.lane.b32.xlu0 %v11497, 64
      %v11613 = vpop.permute.xlu0 %11612
      %11614 = vrot.lane.b32.xlu0 %v11498, 64
      %v11615 = vpop.permute.xlu0 %11614
      %11616 = vrot.lane.b32.xlu0 %v11499, 64
      %v11617 = vpop.permute.xlu0 %11616
      %11618 = vrot.lane.b32.xlu0 %v11500, 64
      %v11619 = vpop.permute.xlu0 %11618
      %11620 = vrot.lane.b32.xlu0 %v11501, 64
      %v11621 = vpop.permute.xlu0 %11620
      %v11662 = vadd.f32 %v11414, %v11543
      %v11663 = vadd.f32 %v11415, %v11545
      %v11664 = vadd.f32 %v11416, %v11547
      %v11665 = vadd.f32 %v11417, %v11549
      %v11666 = vadd.f32 %v11418, %v11551
      %v11667 = vadd.f32 %v11419, %v11553
      %v11668 = vadd.f32 %v11420, %v11555
      %v11669 = vadd.f32 %v11421, %v11557
      %v11670 = vadd.f32 %v11422, %v11559
      %v11671 = vadd.f32 %v11423, %v11561
      %v11672 = vadd.f32 %v11424, %v11563
      %v11673 = vadd.f32 %v11425, %v11565
      %v11674 = vadd.f32 %v11426, %v11567
      %v11675 = vadd.f32 %v11427, %v11569
      %v11676 = vadd.f32 %v11428, %v11571
      %v11677 = vadd.f32 %v11429, %v11573
      %v11678 = vadd.f32 %v11430, %v11575
      %v11679 = vadd.f32 %v11431, %v11577
      %v11680 = vadd.f32 %v11432, %v11579
      %v11681 = vadd.f32 %v11433, %v11581
      %v11682 = vadd.f32 %v11434, %v11583
      %v11683 = vadd.f32 %v11435, %v11585
      %v11684 = vadd.f32 %v11436, %v11587
      %v11685 = vadd.f32 %v11437, %v11589
      %v11686 = vadd.f32 %v11438, %v11591
      %v11687 = vadd.f32 %v11439, %v11593
      %v11688 = vadd.f32 %v11440, %v11595
      %v11689 = vadd.f32 %v11441, %v11597
      %v11690 = vadd.f32 %v11442, %v11599
      %v11691 = vadd.f32 %v11443, %v11601
      %v11692 = vadd.f32 %v11444, %v11603
      %v11693 = vadd.f32 %v11445, %v11605
      %v11694 = vadd.f32 %v11446, %v11607
      %v11695 = vadd.f32 %v11447, %v11609
      %v11696 = vadd.f32 %v11448, %v11611
      %v11697 = vadd.f32 %v11449, %v11613
      %v11698 = vadd.f32 %v11450, %v11615
      %v11699 = vadd.f32 %v11451, %v11617
      %v11700 = vadd.f32 %v11452, %v11619
      %v11701 = vadd.f32 %v11453, %v11621
      %11704 = vrot.lane.b32.xlu0 %v9456, 64
      %v11705 = vpop.permute.xlu0 %11704
      %11706 = vrot.lane.b32.xlu0 %v9457, 64
      %v11707 = vpop.permute.xlu0 %11706
      %v11710 = vmul.f32 %v3237, %v11705
      %v11711 = vmul.f32 %v3237, %v11707
      %v11712 = vmul.f32 %v3241, %v11705
      %v11713 = vmul.f32 %v3241, %v11707
      %v11714 = vmul.f32 %v3245, %v11705
      %v11715 = vmul.f32 %v3245, %v11707
      %v11716 = vmul.f32 %v3249, %v11705
      %v11717 = vmul.f32 %v3249, %v11707
      %v11718 = vmul.f32 %v3253, %v11705
      %v11719 = vmul.f32 %v3253, %v11707
      %v11720 = vmul.f32 %v3257, %v11705
      %v11721 = vmul.f32 %v3257, %v11707
      %v11722 = vmul.f32 %v3261, %v11705
      %v11723 = vmul.f32 %v3261, %v11707
      %v11724 = vmul.f32 %v3265, %v11705
      %v11725 = vmul.f32 %v3265, %v11707
      %v11726 = vmul.f32 %v3269, %v11705
      %v11727 = vmul.f32 %v3269, %v11707
      %v11728 = vmul.f32 %v3273, %v11705
      %v11729 = vmul.f32 %v3273, %v11707
      %v11730 = vmul.f32 %v3277, %v11705
      %v11731 = vmul.f32 %v3277, %v11707
      %v11732 = vmul.f32 %v3281, %v11705
      %v11733 = vmul.f32 %v3281, %v11707
      %v11734 = vmul.f32 %v3285, %v11705
      %v11735 = vmul.f32 %v3285, %v11707
      %v11736 = vmul.f32 %v3289, %v11705
      %v11737 = vmul.f32 %v3289, %v11707
      %v11738 = vmul.f32 %v3293, %v11705
      %v11739 = vmul.f32 %v3293, %v11707
      %v11740 = vmul.f32 %v3297, %v11705
      %v11741 = vmul.f32 %v3297, %v11707
      %v11742 = vmul.f32 %v3301, %v11705
      %v11743 = vmul.f32 %v3301, %v11707
      %v11744 = vmul.f32 %v3305, %v11705
      %v11745 = vmul.f32 %v3305, %v11707
      %v11746 = vmul.f32 %v3309, %v11705
      %v11747 = vmul.f32 %v3309, %v11707
      %v11748 = vmul.f32 %v3313, %v11705
      %v11749 = vmul.f32 %v3313, %v11707
      %11790 = vrot.lane.b32.xlu0 %v11710, 64
      %v11791 = vpop.permute.xlu0 %11790
      %11792 = vrot.lane.b32.xlu0 %v11711, 64
      %v11793 = vpop.permute.xlu0 %11792
      %11794 = vrot.lane.b32.xlu0 %v11712, 64
      %v11795 = vpop.permute.xlu0 %11794
      %11796 = vrot.lane.b32.xlu0 %v11713, 64
      %v11797 = vpop.permute.xlu0 %11796
      %11798 = vrot.lane.b32.xlu0 %v11714, 64
      %v11799 = vpop.permute.xlu0 %11798
      %11800 = vrot.lane.b32.xlu0 %v11715, 64
      %v11801 = vpop.permute.xlu0 %11800
      %11802 = vrot.lane.b32.xlu0 %v11716, 64
      %v11803 = vpop.permute.xlu0 %11802
      %11804 = vrot.lane.b32.xlu0 %v11717, 64
      %v11805 = vpop.permute.xlu0 %11804
      %11806 = vrot.lane.b32.xlu0 %v11718, 64
      %v11807 = vpop.permute.xlu0 %11806
      %11808 = vrot.lane.b32.xlu0 %v11719, 64
      %v11809 = vpop.permute.xlu0 %11808
      %11810 = vrot.lane.b32.xlu0 %v11720, 64
      %v11811 = vpop.permute.xlu0 %11810
      %11812 = vrot.lane.b32.xlu0 %v11721, 64
      %v11813 = vpop.permute.xlu0 %11812
      %11814 = vrot.lane.b32.xlu0 %v11722, 64
      %v11815 = vpop.permute.xlu0 %11814
      %11816 = vrot.lane.b32.xlu0 %v11723, 64
      %v11817 = vpop.permute.xlu0 %11816
      %11818 = vrot.lane.b32.xlu0 %v11724, 64
      %v11819 = vpop.permute.xlu0 %11818
      %11820 = vrot.lane.b32.xlu0 %v11725, 64
      %v11821 = vpop.permute.xlu0 %11820
      %11822 = vrot.lane.b32.xlu0 %v11726, 64
      %v11823 = vpop.permute.xlu0 %11822
      %11824 = vrot.lane.b32.xlu0 %v11727, 64
      %v11825 = vpop.permute.xlu0 %11824
      %11826 = vrot.lane.b32.xlu0 %v11728, 64
      %v11827 = vpop.permute.xlu0 %11826
      %11828 = vrot.lane.b32.xlu0 %v11729, 64
      %v11829 = vpop.permute.xlu0 %11828
      %11830 = vrot.lane.b32.xlu0 %v11730, 64
      %v11831 = vpop.permute.xlu0 %11830
      %11832 = vrot.lane.b32.xlu0 %v11731, 64
      %v11833 = vpop.permute.xlu0 %11832
      %11834 = vrot.lane.b32.xlu0 %v11732, 64
      %v11835 = vpop.permute.xlu0 %11834
      %11836 = vrot.lane.b32.xlu0 %v11733, 64
      %v11837 = vpop.permute.xlu0 %11836
      %11838 = vrot.lane.b32.xlu0 %v11734, 64
      %v11839 = vpop.permute.xlu0 %11838
      %11840 = vrot.lane.b32.xlu0 %v11735, 64
      %v11841 = vpop.permute.xlu0 %11840
      %11842 = vrot.lane.b32.xlu0 %v11736, 64
      %v11843 = vpop.permute.xlu0 %11842
      %11844 = vrot.lane.b32.xlu0 %v11737, 64
      %v11845 = vpop.permute.xlu0 %11844
      %11846 = vrot.lane.b32.xlu0 %v11738, 64
      %v11847 = vpop.permute.xlu0 %11846
      %11848 = vrot.lane.b32.xlu0 %v11739, 64
      %v11849 = vpop.permute.xlu0 %11848
      %11850 = vrot.lane.b32.xlu0 %v11740, 64
      %v11851 = vpop.permute.xlu0 %11850
      %11852 = vrot.lane.b32.xlu0 %v11741, 64
      %v11853 = vpop.permute.xlu0 %11852
      %11854 = vrot.lane.b32.xlu0 %v11742, 64
      %v11855 = vpop.permute.xlu0 %11854
      %11856 = vrot.lane.b32.xlu0 %v11743, 64
      %v11857 = vpop.permute.xlu0 %11856
      %11858 = vrot.lane.b32.xlu0 %v11744, 64
      %v11859 = vpop.permute.xlu0 %11858
      %11860 = vrot.lane.b32.xlu0 %v11745, 64
      %v11861 = vpop.permute.xlu0 %11860
      %11862 = vrot.lane.b32.xlu0 %v11746, 64
      %v11863 = vpop.permute.xlu0 %11862
      %11864 = vrot.lane.b32.xlu0 %v11747, 64
      %v11865 = vpop.permute.xlu0 %11864
      %11866 = vrot.lane.b32.xlu0 %v11748, 64
      %v11867 = vpop.permute.xlu0 %11866
      %11868 = vrot.lane.b32.xlu0 %v11749, 64
      %v11869 = vpop.permute.xlu0 %11868
      %v11910 = vadd.f32 %v11662, %v11791
      %v11911 = vadd.f32 %v11663, %v11793
      %v11912 = vadd.f32 %v11664, %v11795
      %v11913 = vadd.f32 %v11665, %v11797
      %v11914 = vadd.f32 %v11666, %v11799
      %v11915 = vadd.f32 %v11667, %v11801
      %v11916 = vadd.f32 %v11668, %v11803
      %v11917 = vadd.f32 %v11669, %v11805
      %v11918 = vadd.f32 %v11670, %v11807
      %v11919 = vadd.f32 %v11671, %v11809
      %v11920 = vadd.f32 %v11672, %v11811
      %v11921 = vadd.f32 %v11673, %v11813
      %v11922 = vadd.f32 %v11674, %v11815
      %v11923 = vadd.f32 %v11675, %v11817
      %v11924 = vadd.f32 %v11676, %v11819
      %v11925 = vadd.f32 %v11677, %v11821
      %v11926 = vadd.f32 %v11678, %v11823
      %v11927 = vadd.f32 %v11679, %v11825
      %v11928 = vadd.f32 %v11680, %v11827
      %v11929 = vadd.f32 %v11681, %v11829
      %v11930 = vadd.f32 %v11682, %v11831
      %v11931 = vadd.f32 %v11683, %v11833
      %v11932 = vadd.f32 %v11684, %v11835
      %v11933 = vadd.f32 %v11685, %v11837
      %v11934 = vadd.f32 %v11686, %v11839
      %v11935 = vadd.f32 %v11687, %v11841
      %v11936 = vadd.f32 %v11688, %v11843
      %v11937 = vadd.f32 %v11689, %v11845
      %v11938 = vadd.f32 %v11690, %v11847
      %v11939 = vadd.f32 %v11691, %v11849
      %v11940 = vadd.f32 %v11692, %v11851
      %v11941 = vadd.f32 %v11693, %v11853
      %v11942 = vadd.f32 %v11694, %v11855
      %v11943 = vadd.f32 %v11695, %v11857
      %v11944 = vadd.f32 %v11696, %v11859
      %v11945 = vadd.f32 %v11697, %v11861
      %v11946 = vadd.f32 %v11698, %v11863
      %v11947 = vadd.f32 %v11699, %v11865
      %v11948 = vadd.f32 %v11700, %v11867
      %v11949 = vadd.f32 %v11701, %v11869
      %11952 = vrot.lane.b32.xlu0 %v9458, 64
      %v11953 = vpop.permute.xlu0 %11952
      %11954 = vrot.lane.b32.xlu0 %v9459, 64
      %v11955 = vpop.permute.xlu0 %11954
      %v11958 = vmul.f32 %v3397, %v11953
      %v11959 = vmul.f32 %v3397, %v11955
      %v11960 = vmul.f32 %v3401, %v11953
      %v11961 = vmul.f32 %v3401, %v11955
      %v11962 = vmul.f32 %v3405, %v11953
      %v11963 = vmul.f32 %v3405, %v11955
      %v11964 = vmul.f32 %v3409, %v11953
      %v11965 = vmul.f32 %v3409, %v11955
      %v11966 = vmul.f32 %v3413, %v11953
      %v11967 = vmul.f32 %v3413, %v11955
      %v11968 = vmul.f32 %v3417, %v11953
      %v11969 = vmul.f32 %v3417, %v11955
      %v11970 = vmul.f32 %v3421, %v11953
      %v11971 = vmul.f32 %v3421, %v11955
      %v11972 = vmul.f32 %v3425, %v11953
      %v11973 = vmul.f32 %v3425, %v11955
      %v11974 = vmul.f32 %v3429, %v11953
      %v11975 = vmul.f32 %v3429, %v11955
      %v11976 = vmul.f32 %v3433, %v11953
      %v11977 = vmul.f32 %v3433, %v11955
      %v11978 = vmul.f32 %v3437, %v11953
      %v11979 = vmul.f32 %v3437, %v11955
      %v11980 = vmul.f32 %v3441, %v11953
      %v11981 = vmul.f32 %v3441, %v11955
      %v11982 = vmul.f32 %v3445, %v11953
      %v11983 = vmul.f32 %v3445, %v11955
      %v11984 = vmul.f32 %v3449, %v11953
      %v11985 = vmul.f32 %v3449, %v11955
      %v11986 = vmul.f32 %v3453, %v11953
      %v11987 = vmul.f32 %v3453, %v11955
      %v11988 = vmul.f32 %v3457, %v11953
      %v11989 = vmul.f32 %v3457, %v11955
      %v11990 = vmul.f32 %v3461, %v11953
      %v11991 = vmul.f32 %v3461, %v11955
      %v11992 = vmul.f32 %v3465, %v11953
      %v11993 = vmul.f32 %v3465, %v11955
      %v11994 = vmul.f32 %v3469, %v11953
      %v11995 = vmul.f32 %v3469, %v11955
      %v11996 = vmul.f32 %v3473, %v11953
      %v11997 = vmul.f32 %v3473, %v11955
      %12038 = vrot.lane.b32.xlu0 %v11958, 64
      %v12039 = vpop.permute.xlu0 %12038
      %12040 = vrot.lane.b32.xlu0 %v11959, 64
      %v12041 = vpop.permute.xlu0 %12040
      %12042 = vrot.lane.b32.xlu0 %v11960, 64
      %v12043 = vpop.permute.xlu0 %12042
      %12044 = vrot.lane.b32.xlu0 %v11961, 64
      %v12045 = vpop.permute.xlu0 %12044
      %12046 = vrot.lane.b32.xlu0 %v11962, 64
      %v12047 = vpop.permute.xlu0 %12046
      %12048 = vrot.lane.b32.xlu0 %v11963, 64
      %v12049 = vpop.permute.xlu0 %12048
      %12050 = vrot.lane.b32.xlu0 %v11964, 64
      %v12051 = vpop.permute.xlu0 %12050
      %12052 = vrot.lane.b32.xlu0 %v11965, 64
      %v12053 = vpop.permute.xlu0 %12052
      %12054 = vrot.lane.b32.xlu0 %v11966, 64
      %v12055 = vpop.permute.xlu0 %12054
      %12056 = vrot.lane.b32.xlu0 %v11967, 64
      %v12057 = vpop.permute.xlu0 %12056
      %12058 = vrot.lane.b32.xlu0 %v11968, 64
      %v12059 = vpop.permute.xlu0 %12058
      %12060 = vrot.lane.b32.xlu0 %v11969, 64
      %v12061 = vpop.permute.xlu0 %12060
      %12062 = vrot.lane.b32.xlu0 %v11970, 64
      %v12063 = vpop.permute.xlu0 %12062
      %12064 = vrot.lane.b32.xlu0 %v11971, 64
      %v12065 = vpop.permute.xlu0 %12064
      %12066 = vrot.lane.b32.xlu0 %v11972, 64
      %v12067 = vpop.permute.xlu0 %12066
      %12068 = vrot.lane.b32.xlu0 %v11973, 64
      %v12069 = vpop.permute.xlu0 %12068
      %12070 = vrot.lane.b32.xlu0 %v11974, 64
      %v12071 = vpop.permute.xlu0 %12070
      %12072 = vrot.lane.b32.xlu0 %v11975, 64
      %v12073 = vpop.permute.xlu0 %12072
      %12074 = vrot.lane.b32.xlu0 %v11976, 64
      %v12075 = vpop.permute.xlu0 %12074
      %12076 = vrot.lane.b32.xlu0 %v11977, 64
      %v12077 = vpop.permute.xlu0 %12076
      %12078 = vrot.lane.b32.xlu0 %v11978, 64
      %v12079 = vpop.permute.xlu0 %12078
      %12080 = vrot.lane.b32.xlu0 %v11979, 64
      %v12081 = vpop.permute.xlu0 %12080
      %12082 = vrot.lane.b32.xlu0 %v11980, 64
      %v12083 = vpop.permute.xlu0 %12082
      %12084 = vrot.lane.b32.xlu0 %v11981, 64
      %v12085 = vpop.permute.xlu0 %12084
      %12086 = vrot.lane.b32.xlu0 %v11982, 64
      %v12087 = vpop.permute.xlu0 %12086
      %12088 = vrot.lane.b32.xlu0 %v11983, 64
      %v12089 = vpop.permute.xlu0 %12088
      %12090 = vrot.lane.b32.xlu0 %v11984, 64
      %v12091 = vpop.permute.xlu0 %12090
      %12092 = vrot.lane.b32.xlu0 %v11985, 64
      %v12093 = vpop.permute.xlu0 %12092
      %12094 = vrot.lane.b32.xlu0 %v11986, 64
      %v12095 = vpop.permute.xlu0 %12094
      %12096 = vrot.lane.b32.xlu0 %v11987, 64
      %v12097 = vpop.permute.xlu0 %12096
      %12098 = vrot.lane.b32.xlu0 %v11988, 64
      %v12099 = vpop.permute.xlu0 %12098
      %12100 = vrot.lane.b32.xlu0 %v11989, 64
      %v12101 = vpop.permute.xlu0 %12100
      %12102 = vrot.lane.b32.xlu0 %v11990, 64
      %v12103 = vpop.permute.xlu0 %12102
      %12104 = vrot.lane.b32.xlu0 %v11991, 64
      %v12105 = vpop.permute.xlu0 %12104
      %12106 = vrot.lane.b32.xlu0 %v11992, 64
      %v12107 = vpop.permute.xlu0 %12106
      %12108 = vrot.lane.b32.xlu0 %v11993, 64
      %v12109 = vpop.permute.xlu0 %12108
      %12110 = vrot.lane.b32.xlu0 %v11994, 64
      %v12111 = vpop.permute.xlu0 %12110
      %12112 = vrot.lane.b32.xlu0 %v11995, 64
      %v12113 = vpop.permute.xlu0 %12112
      %12114 = vrot.lane.b32.xlu0 %v11996, 64
      %v12115 = vpop.permute.xlu0 %12114
      %12116 = vrot.lane.b32.xlu0 %v11997, 64
      %v12117 = vpop.permute.xlu0 %12116
      %v12158 = vadd.f32 %v11910, %v12039
      %v12159 = vadd.f32 %v11911, %v12041
      %v12160 = vadd.f32 %v11912, %v12043
      %v12161 = vadd.f32 %v11913, %v12045
      %v12162 = vadd.f32 %v11914, %v12047
      %v12163 = vadd.f32 %v11915, %v12049
      %v12164 = vadd.f32 %v11916, %v12051
      %v12165 = vadd.f32 %v11917, %v12053
      %v12166 = vadd.f32 %v11918, %v12055
      %v12167 = vadd.f32 %v11919, %v12057
      %v12168 = vadd.f32 %v11920, %v12059
      %v12169 = vadd.f32 %v11921, %v12061
      %v12170 = vadd.f32 %v11922, %v12063
      %v12171 = vadd.f32 %v11923, %v12065
      %v12172 = vadd.f32 %v11924, %v12067
      %v12173 = vadd.f32 %v11925, %v12069
      %v12174 = vadd.f32 %v11926, %v12071
      %v12175 = vadd.f32 %v11927, %v12073
      %v12176 = vadd.f32 %v11928, %v12075
      %v12177 = vadd.f32 %v11929, %v12077
      %v12178 = vadd.f32 %v11930, %v12079
      %v12179 = vadd.f32 %v11931, %v12081
      %v12180 = vadd.f32 %v11932, %v12083
      %v12181 = vadd.f32 %v11933, %v12085
      %v12182 = vadd.f32 %v11934, %v12087
      %v12183 = vadd.f32 %v11935, %v12089
      %v12184 = vadd.f32 %v11936, %v12091
      %v12185 = vadd.f32 %v11937, %v12093
      %v12186 = vadd.f32 %v11938, %v12095
      %v12187 = vadd.f32 %v11939, %v12097
      %v12188 = vadd.f32 %v11940, %v12099
      %v12189 = vadd.f32 %v11941, %v12101
      %v12190 = vadd.f32 %v11942, %v12103
      %v12191 = vadd.f32 %v11943, %v12105
      %v12192 = vadd.f32 %v11944, %v12107
      %v12193 = vadd.f32 %v11945, %v12109
      %v12194 = vadd.f32 %v11946, %v12111
      %v12195 = vadd.f32 %v11947, %v12113
      %v12196 = vadd.f32 %v11948, %v12115
      %v12197 = vadd.f32 %v11949, %v12117
      %12200 = vrot.lane.b32.xlu0 %v9460, 64
      %v12201 = vpop.permute.xlu0 %12200
      %12202 = vrot.lane.b32.xlu0 %v9461, 64
      %v12203 = vpop.permute.xlu0 %12202
      %v12206 = vmul.f32 %v3557, %v12201
      %v12207 = vmul.f32 %v3557, %v12203
      %v12208 = vmul.f32 %v3561, %v12201
      %v12209 = vmul.f32 %v3561, %v12203
      %v12210 = vmul.f32 %v3565, %v12201
      %v12211 = vmul.f32 %v3565, %v12203
      %v12212 = vmul.f32 %v3569, %v12201
      %v12213 = vmul.f32 %v3569, %v12203
      %v12214 = vmul.f32 %v3573, %v12201
      %v12215 = vmul.f32 %v3573, %v12203
      %v12216 = vmul.f32 %v3577, %v12201
      %v12217 = vmul.f32 %v3577, %v12203
      %v12218 = vmul.f32 %v3581, %v12201
      %v12219 = vmul.f32 %v3581, %v12203
      %v12220 = vmul.f32 %v3585, %v12201
      %v12221 = vmul.f32 %v3585, %v12203
      %v12222 = vmul.f32 %v3589, %v12201
      %v12223 = vmul.f32 %v3589, %v12203
      %v12224 = vmul.f32 %v3593, %v12201
      %v12225 = vmul.f32 %v3593, %v12203
      %v12226 = vmul.f32 %v3597, %v12201
      %v12227 = vmul.f32 %v3597, %v12203
      %v12228 = vmul.f32 %v3601, %v12201
      %v12229 = vmul.f32 %v3601, %v12203
      %v12230 = vmul.f32 %v3605, %v12201
      %v12231 = vmul.f32 %v3605, %v12203
      %v12232 = vmul.f32 %v3609, %v12201
      %v12233 = vmul.f32 %v3609, %v12203
      %v12234 = vmul.f32 %v3613, %v12201
      %v12235 = vmul.f32 %v3613, %v12203
      %v12236 = vmul.f32 %v3617, %v12201
      %v12237 = vmul.f32 %v3617, %v12203
      %v12238 = vmul.f32 %v3621, %v12201
      %v12239 = vmul.f32 %v3621, %v12203
      %v12240 = vmul.f32 %v3625, %v12201
      %v12241 = vmul.f32 %v3625, %v12203
      %v12242 = vmul.f32 %v3629, %v12201
      %v12243 = vmul.f32 %v3629, %v12203
      %v12244 = vmul.f32 %v3633, %v12201
      %v12245 = vmul.f32 %v3633, %v12203
      %12286 = vrot.lane.b32.xlu0 %v12206, 64
      %v12287 = vpop.permute.xlu0 %12286
      %12288 = vrot.lane.b32.xlu0 %v12207, 64
      %v12289 = vpop.permute.xlu0 %12288
      %12290 = vrot.lane.b32.xlu0 %v12208, 64
      %v12291 = vpop.permute.xlu0 %12290
      %12292 = vrot.lane.b32.xlu0 %v12209, 64
      %v12293 = vpop.permute.xlu0 %12292
      %12294 = vrot.lane.b32.xlu0 %v12210, 64
      %v12295 = vpop.permute.xlu0 %12294
      %12296 = vrot.lane.b32.xlu0 %v12211, 64
      %v12297 = vpop.permute.xlu0 %12296
      %12298 = vrot.lane.b32.xlu0 %v12212, 64
      %v12299 = vpop.permute.xlu0 %12298
      %12300 = vrot.lane.b32.xlu0 %v12213, 64
      %v12301 = vpop.permute.xlu0 %12300
      %12302 = vrot.lane.b32.xlu0 %v12214, 64
      %v12303 = vpop.permute.xlu0 %12302
      %12304 = vrot.lane.b32.xlu0 %v12215, 64
      %v12305 = vpop.permute.xlu0 %12304
      %12306 = vrot.lane.b32.xlu0 %v12216, 64
      %v12307 = vpop.permute.xlu0 %12306
      %12308 = vrot.lane.b32.xlu0 %v12217, 64
      %v12309 = vpop.permute.xlu0 %12308
      %12310 = vrot.lane.b32.xlu0 %v12218, 64
      %v12311 = vpop.permute.xlu0 %12310
      %12312 = vrot.lane.b32.xlu0 %v12219, 64
      %v12313 = vpop.permute.xlu0 %12312
      %12314 = vrot.lane.b32.xlu0 %v12220, 64
      %v12315 = vpop.permute.xlu0 %12314
      %12316 = vrot.lane.b32.xlu0 %v12221, 64
      %v12317 = vpop.permute.xlu0 %12316
      %12318 = vrot.lane.b32.xlu0 %v12222, 64
      %v12319 = vpop.permute.xlu0 %12318
      %12320 = vrot.lane.b32.xlu0 %v12223, 64
      %v12321 = vpop.permute.xlu0 %12320
      %12322 = vrot.lane.b32.xlu0 %v12224, 64
      %v12323 = vpop.permute.xlu0 %12322
      %12324 = vrot.lane.b32.xlu0 %v12225, 64
      %v12325 = vpop.permute.xlu0 %12324
      %12326 = vrot.lane.b32.xlu0 %v12226, 64
      %v12327 = vpop.permute.xlu0 %12326
      %12328 = vrot.lane.b32.xlu0 %v12227, 64
      %v12329 = vpop.permute.xlu0 %12328
      %12330 = vrot.lane.b32.xlu0 %v12228, 64
      %v12331 = vpop.permute.xlu0 %12330
      %12332 = vrot.lane.b32.xlu0 %v12229, 64
      %v12333 = vpop.permute.xlu0 %12332
      %12334 = vrot.lane.b32.xlu0 %v12230, 64
      %v12335 = vpop.permute.xlu0 %12334
      %12336 = vrot.lane.b32.xlu0 %v12231, 64
      %v12337 = vpop.permute.xlu0 %12336
      %12338 = vrot.lane.b32.xlu0 %v12232, 64
      %v12339 = vpop.permute.xlu0 %12338
      %12340 = vrot.lane.b32.xlu0 %v12233, 64
      %v12341 = vpop.permute.xlu0 %12340
      %12342 = vrot.lane.b32.xlu0 %v12234, 64
      %v12343 = vpop.permute.xlu0 %12342
      %12344 = vrot.lane.b32.xlu0 %v12235, 64
      %v12345 = vpop.permute.xlu0 %12344
      %12346 = vrot.lane.b32.xlu0 %v12236, 64
      %v12347 = vpop.permute.xlu0 %12346
      %12348 = vrot.lane.b32.xlu0 %v12237, 64
      %v12349 = vpop.permute.xlu0 %12348
      %12350 = vrot.lane.b32.xlu0 %v12238, 64
      %v12351 = vpop.permute.xlu0 %12350
      %12352 = vrot.lane.b32.xlu0 %v12239, 64
      %v12353 = vpop.permute.xlu0 %12352
      %12354 = vrot.lane.b32.xlu0 %v12240, 64
      %v12355 = vpop.permute.xlu0 %12354
      %12356 = vrot.lane.b32.xlu0 %v12241, 64
      %v12357 = vpop.permute.xlu0 %12356
      %12358 = vrot.lane.b32.xlu0 %v12242, 64
      %v12359 = vpop.permute.xlu0 %12358
      %12360 = vrot.lane.b32.xlu0 %v12243, 64
      %v12361 = vpop.permute.xlu0 %12360
      %12362 = vrot.lane.b32.xlu0 %v12244, 64
      %v12363 = vpop.permute.xlu0 %12362
      %12364 = vrot.lane.b32.xlu0 %v12245, 64
      %v12365 = vpop.permute.xlu0 %12364
      %v12406 = vadd.f32 %v12158, %v12287
      %v12407 = vadd.f32 %v12159, %v12289
      %v12408 = vadd.f32 %v12160, %v12291
      %v12409 = vadd.f32 %v12161, %v12293
      %v12410 = vadd.f32 %v12162, %v12295
      %v12411 = vadd.f32 %v12163, %v12297
      %v12412 = vadd.f32 %v12164, %v12299
      %v12413 = vadd.f32 %v12165, %v12301
      %v12414 = vadd.f32 %v12166, %v12303
      %v12415 = vadd.f32 %v12167, %v12305
      %v12416 = vadd.f32 %v12168, %v12307
      %v12417 = vadd.f32 %v12169, %v12309
      %v12418 = vadd.f32 %v12170, %v12311
      %v12419 = vadd.f32 %v12171, %v12313
      %v12420 = vadd.f32 %v12172, %v12315
      %v12421 = vadd.f32 %v12173, %v12317
      %v12422 = vadd.f32 %v12174, %v12319
      %v12423 = vadd.f32 %v12175, %v12321
      %v12424 = vadd.f32 %v12176, %v12323
      %v12425 = vadd.f32 %v12177, %v12325
      %v12426 = vadd.f32 %v12178, %v12327
      %v12427 = vadd.f32 %v12179, %v12329
      %v12428 = vadd.f32 %v12180, %v12331
      %v12429 = vadd.f32 %v12181, %v12333
      %v12430 = vadd.f32 %v12182, %v12335
      %v12431 = vadd.f32 %v12183, %v12337
      %v12432 = vadd.f32 %v12184, %v12339
      %v12433 = vadd.f32 %v12185, %v12341
      %v12434 = vadd.f32 %v12186, %v12343
      %v12435 = vadd.f32 %v12187, %v12345
      %v12436 = vadd.f32 %v12188, %v12347
      %v12437 = vadd.f32 %v12189, %v12349
      %v12438 = vadd.f32 %v12190, %v12351
      %v12439 = vadd.f32 %v12191, %v12353
      %v12440 = vadd.f32 %v12192, %v12355
      %v12441 = vadd.f32 %v12193, %v12357
      %v12442 = vadd.f32 %v12194, %v12359
      %v12443 = vadd.f32 %v12195, %v12361
      %v12444 = vadd.f32 %v12196, %v12363
      %v12445 = vadd.f32 %v12197, %v12365
      %12448 = vrot.lane.b32.xlu0 %v9462, 64
      %v12449 = vpop.permute.xlu0 %12448
      %12450 = vrot.lane.b32.xlu0 %v9463, 64
      %v12451 = vpop.permute.xlu0 %12450
      %v12454 = vmul.f32 %v3717, %v12449
      %v12455 = vmul.f32 %v3717, %v12451
      %v12456 = vmul.f32 %v3721, %v12449
      %v12457 = vmul.f32 %v3721, %v12451
      %v12458 = vmul.f32 %v3725, %v12449
      %v12459 = vmul.f32 %v3725, %v12451
      %v12460 = vmul.f32 %v3729, %v12449
      %v12461 = vmul.f32 %v3729, %v12451
      %v12462 = vmul.f32 %v3733, %v12449
      %v12463 = vmul.f32 %v3733, %v12451
      %v12464 = vmul.f32 %v3737, %v12449
      %v12465 = vmul.f32 %v3737, %v12451
      %v12466 = vmul.f32 %v3741, %v12449
      %v12467 = vmul.f32 %v3741, %v12451
      %v12468 = vmul.f32 %v3745, %v12449
      %v12469 = vmul.f32 %v3745, %v12451
      %v12470 = vmul.f32 %v3749, %v12449
      %v12471 = vmul.f32 %v3749, %v12451
      %v12472 = vmul.f32 %v3753, %v12449
      %v12473 = vmul.f32 %v3753, %v12451
      %v12474 = vmul.f32 %v3757, %v12449
      %v12475 = vmul.f32 %v3757, %v12451
      %v12476 = vmul.f32 %v3761, %v12449
      %v12477 = vmul.f32 %v3761, %v12451
      %v12478 = vmul.f32 %v3765, %v12449
      %v12479 = vmul.f32 %v3765, %v12451
      %v12480 = vmul.f32 %v3769, %v12449
      %v12481 = vmul.f32 %v3769, %v12451
      %v12482 = vmul.f32 %v3773, %v12449
      %v12483 = vmul.f32 %v3773, %v12451
      %v12484 = vmul.f32 %v3777, %v12449
      %v12485 = vmul.f32 %v3777, %v12451
      %v12486 = vmul.f32 %v3781, %v12449
      %v12487 = vmul.f32 %v3781, %v12451
      %v12488 = vmul.f32 %v3785, %v12449
      %v12489 = vmul.f32 %v3785, %v12451
      %v12490 = vmul.f32 %v3789, %v12449
      %v12491 = vmul.f32 %v3789, %v12451
      %v12492 = vmul.f32 %v3793, %v12449
      %v12493 = vmul.f32 %v3793, %v12451
      %12534 = vrot.lane.b32.xlu0 %v12454, 64
      %v12535 = vpop.permute.xlu0 %12534
      %12536 = vrot.lane.b32.xlu0 %v12455, 64
      %v12537 = vpop.permute.xlu0 %12536
      %12538 = vrot.lane.b32.xlu0 %v12456, 64
      %v12539 = vpop.permute.xlu0 %12538
      %12540 = vrot.lane.b32.xlu0 %v12457, 64
      %v12541 = vpop.permute.xlu0 %12540
      %12542 = vrot.lane.b32.xlu0 %v12458, 64
      %v12543 = vpop.permute.xlu0 %12542
      %12544 = vrot.lane.b32.xlu0 %v12459, 64
      %v12545 = vpop.permute.xlu0 %12544
      %12546 = vrot.lane.b32.xlu0 %v12460, 64
      %v12547 = vpop.permute.xlu0 %12546
      %12548 = vrot.lane.b32.xlu0 %v12461, 64
      %v12549 = vpop.permute.xlu0 %12548
      %12550 = vrot.lane.b32.xlu0 %v12462, 64
      %v12551 = vpop.permute.xlu0 %12550
      %12552 = vrot.lane.b32.xlu0 %v12463, 64
      %v12553 = vpop.permute.xlu0 %12552
      %12554 = vrot.lane.b32.xlu0 %v12464, 64
      %v12555 = vpop.permute.xlu0 %12554
      %12556 = vrot.lane.b32.xlu0 %v12465, 64
      %v12557 = vpop.permute.xlu0 %12556
      %12558 = vrot.lane.b32.xlu0 %v12466, 64
      %v12559 = vpop.permute.xlu0 %12558
      %12560 = vrot.lane.b32.xlu0 %v12467, 64
      %v12561 = vpop.permute.xlu0 %12560
      %12562 = vrot.lane.b32.xlu0 %v12468, 64
      %v12563 = vpop.permute.xlu0 %12562
      %12564 = vrot.lane.b32.xlu0 %v12469, 64
      %v12565 = vpop.permute.xlu0 %12564
      %12566 = vrot.lane.b32.xlu0 %v12470, 64
      %v12567 = vpop.permute.xlu0 %12566
      %12568 = vrot.lane.b32.xlu0 %v12471, 64
      %v12569 = vpop.permute.xlu0 %12568
      %12570 = vrot.lane.b32.xlu0 %v12472, 64
      %v12571 = vpop.permute.xlu0 %12570
      %12572 = vrot.lane.b32.xlu0 %v12473, 64
      %v12573 = vpop.permute.xlu0 %12572
      %12574 = vrot.lane.b32.xlu0 %v12474, 64
      %v12575 = vpop.permute.xlu0 %12574
      %12576 = vrot.lane.b32.xlu0 %v12475, 64
      %v12577 = vpop.permute.xlu0 %12576
      %12578 = vrot.lane.b32.xlu0 %v12476, 64
      %v12579 = vpop.permute.xlu0 %12578
      %12580 = vrot.lane.b32.xlu0 %v12477, 64
      %v12581 = vpop.permute.xlu0 %12580
      %12582 = vrot.lane.b32.xlu0 %v12478, 64
      %v12583 = vpop.permute.xlu0 %12582
      %12584 = vrot.lane.b32.xlu0 %v12479, 64
      %v12585 = vpop.permute.xlu0 %12584
      %12586 = vrot.lane.b32.xlu0 %v12480, 64
      %v12587 = vpop.permute.xlu0 %12586
      %12588 = vrot.lane.b32.xlu0 %v12481, 64
      %v12589 = vpop.permute.xlu0 %12588
      %12590 = vrot.lane.b32.xlu0 %v12482, 64
      %v12591 = vpop.permute.xlu0 %12590
      %12592 = vrot.lane.b32.xlu0 %v12483, 64
      %v12593 = vpop.permute.xlu0 %12592
      %12594 = vrot.lane.b32.xlu0 %v12484, 64
      %v12595 = vpop.permute.xlu0 %12594
      %12596 = vrot.lane.b32.xlu0 %v12485, 64
      %v12597 = vpop.permute.xlu0 %12596
      %12598 = vrot.lane.b32.xlu0 %v12486, 64
      %v12599 = vpop.permute.xlu0 %12598
      %12600 = vrot.lane.b32.xlu0 %v12487, 64
      %v12601 = vpop.permute.xlu0 %12600
      %12602 = vrot.lane.b32.xlu0 %v12488, 64
      %v12603 = vpop.permute.xlu0 %12602
      %12604 = vrot.lane.b32.xlu0 %v12489, 64
      %v12605 = vpop.permute.xlu0 %12604
      %12606 = vrot.lane.b32.xlu0 %v12490, 64
      %v12607 = vpop.permute.xlu0 %12606
      %12608 = vrot.lane.b32.xlu0 %v12491, 64
      %v12609 = vpop.permute.xlu0 %12608
      %12610 = vrot.lane.b32.xlu0 %v12492, 64
      %v12611 = vpop.permute.xlu0 %12610
      %12612 = vrot.lane.b32.xlu0 %v12493, 64
      %v12613 = vpop.permute.xlu0 %12612
      %v12654 = vadd.f32 %v12406, %v12535
      %v12655 = vadd.f32 %v12407, %v12537
      %v12656 = vadd.f32 %v12408, %v12539
      %v12657 = vadd.f32 %v12409, %v12541
      %v12658 = vadd.f32 %v12410, %v12543
      %v12659 = vadd.f32 %v12411, %v12545
      %v12660 = vadd.f32 %v12412, %v12547
      %v12661 = vadd.f32 %v12413, %v12549
      %v12662 = vadd.f32 %v12414, %v12551
      %v12663 = vadd.f32 %v12415, %v12553
      %v12664 = vadd.f32 %v12416, %v12555
      %v12665 = vadd.f32 %v12417, %v12557
      %v12666 = vadd.f32 %v12418, %v12559
      %v12667 = vadd.f32 %v12419, %v12561
      %v12668 = vadd.f32 %v12420, %v12563
      %v12669 = vadd.f32 %v12421, %v12565
      %v12670 = vadd.f32 %v12422, %v12567
      %v12671 = vadd.f32 %v12423, %v12569
      %v12672 = vadd.f32 %v12424, %v12571
      %v12673 = vadd.f32 %v12425, %v12573
      %v12674 = vadd.f32 %v12426, %v12575
      %v12675 = vadd.f32 %v12427, %v12577
      %v12676 = vadd.f32 %v12428, %v12579
      %v12677 = vadd.f32 %v12429, %v12581
      %v12678 = vadd.f32 %v12430, %v12583
      %v12679 = vadd.f32 %v12431, %v12585
      %v12680 = vadd.f32 %v12432, %v12587
      %v12681 = vadd.f32 %v12433, %v12589
      %v12682 = vadd.f32 %v12434, %v12591
      %v12683 = vadd.f32 %v12435, %v12593
      %v12684 = vadd.f32 %v12436, %v12595
      %v12685 = vadd.f32 %v12437, %v12597
      %v12686 = vadd.f32 %v12438, %v12599
      %v12687 = vadd.f32 %v12439, %v12601
      %v12688 = vadd.f32 %v12440, %v12603
      %v12689 = vadd.f32 %v12441, %v12605
      %v12690 = vadd.f32 %v12442, %v12607
      %v12691 = vadd.f32 %v12443, %v12609
      %v12692 = vadd.f32 %v12444, %v12611
      %v12693 = vadd.f32 %v12445, %v12613
      %12696 = vrot.lane.b32.xlu0 %v9464, 64
      %v12697 = vpop.permute.xlu0 %12696
      %12698 = vrot.lane.b32.xlu0 %v9465, 64
      %v12699 = vpop.permute.xlu0 %12698
      %v12702 = vmul.f32 %v3877, %v12697
      %v12703 = vmul.f32 %v3877, %v12699
      %v12704 = vmul.f32 %v3881, %v12697
      %v12705 = vmul.f32 %v3881, %v12699
      %v12706 = vmul.f32 %v3885, %v12697
      %v12707 = vmul.f32 %v3885, %v12699
      %v12708 = vmul.f32 %v3889, %v12697
      %v12709 = vmul.f32 %v3889, %v12699
      %v12710 = vmul.f32 %v3893, %v12697
      %v12711 = vmul.f32 %v3893, %v12699
      %v12712 = vmul.f32 %v3897, %v12697
      %v12713 = vmul.f32 %v3897, %v12699
      %v12714 = vmul.f32 %v3901, %v12697
      %v12715 = vmul.f32 %v3901, %v12699
      %v12716 = vmul.f32 %v3905, %v12697
      %v12717 = vmul.f32 %v3905, %v12699
      %v12718 = vmul.f32 %v3909, %v12697
      %v12719 = vmul.f32 %v3909, %v12699
      %v12720 = vmul.f32 %v3913, %v12697
      %v12721 = vmul.f32 %v3913, %v12699
      %v12722 = vmul.f32 %v3917, %v12697
      %v12723 = vmul.f32 %v3917, %v12699
      %v12724 = vmul.f32 %v3921, %v12697
      %v12725 = vmul.f32 %v3921, %v12699
      %v12726 = vmul.f32 %v3925, %v12697
      %v12727 = vmul.f32 %v3925, %v12699
      %v12728 = vmul.f32 %v3929, %v12697
      %v12729 = vmul.f32 %v3929, %v12699
      %v12730 = vmul.f32 %v3933, %v12697
      %v12731 = vmul.f32 %v3933, %v12699
      %v12732 = vmul.f32 %v3937, %v12697
      %v12733 = vmul.f32 %v3937, %v12699
      %v12734 = vmul.f32 %v3941, %v12697
      %v12735 = vmul.f32 %v3941, %v12699
      %v12736 = vmul.f32 %v3945, %v12697
      %v12737 = vmul.f32 %v3945, %v12699
      %v12738 = vmul.f32 %v3949, %v12697
      %v12739 = vmul.f32 %v3949, %v12699
      %v12740 = vmul.f32 %v3953, %v12697
      %v12741 = vmul.f32 %v3953, %v12699
      %12782 = vrot.lane.b32.xlu0 %v12702, 64
      %v12783 = vpop.permute.xlu0 %12782
      %12784 = vrot.lane.b32.xlu0 %v12703, 64
      %v12785 = vpop.permute.xlu0 %12784
      %12786 = vrot.lane.b32.xlu0 %v12704, 64
      %v12787 = vpop.permute.xlu0 %12786
      %12788 = vrot.lane.b32.xlu0 %v12705, 64
      %v12789 = vpop.permute.xlu0 %12788
      %12790 = vrot.lane.b32.xlu0 %v12706, 64
      %v12791 = vpop.permute.xlu0 %12790
      %12792 = vrot.lane.b32.xlu0 %v12707, 64
      %v12793 = vpop.permute.xlu0 %12792
      %12794 = vrot.lane.b32.xlu0 %v12708, 64
      %v12795 = vpop.permute.xlu0 %12794
      %12796 = vrot.lane.b32.xlu0 %v12709, 64
      %v12797 = vpop.permute.xlu0 %12796
      %12798 = vrot.lane.b32.xlu0 %v12710, 64
      %v12799 = vpop.permute.xlu0 %12798
      %12800 = vrot.lane.b32.xlu0 %v12711, 64
      %v12801 = vpop.permute.xlu0 %12800
      %12802 = vrot.lane.b32.xlu0 %v12712, 64
      %v12803 = vpop.permute.xlu0 %12802
      %12804 = vrot.lane.b32.xlu0 %v12713, 64
      %v12805 = vpop.permute.xlu0 %12804
      %12806 = vrot.lane.b32.xlu0 %v12714, 64
      %v12807 = vpop.permute.xlu0 %12806
      %12808 = vrot.lane.b32.xlu0 %v12715, 64
      %v12809 = vpop.permute.xlu0 %12808
      %12810 = vrot.lane.b32.xlu0 %v12716, 64
      %v12811 = vpop.permute.xlu0 %12810
      %12812 = vrot.lane.b32.xlu0 %v12717, 64
      %v12813 = vpop.permute.xlu0 %12812
      %12814 = vrot.lane.b32.xlu0 %v12718, 64
      %v12815 = vpop.permute.xlu0 %12814
      %12816 = vrot.lane.b32.xlu0 %v12719, 64
      %v12817 = vpop.permute.xlu0 %12816
      %12818 = vrot.lane.b32.xlu0 %v12720, 64
      %v12819 = vpop.permute.xlu0 %12818
      %12820 = vrot.lane.b32.xlu0 %v12721, 64
      %v12821 = vpop.permute.xlu0 %12820
      %12822 = vrot.lane.b32.xlu0 %v12722, 64
      %v12823 = vpop.permute.xlu0 %12822
      %12824 = vrot.lane.b32.xlu0 %v12723, 64
      %v12825 = vpop.permute.xlu0 %12824
      %12826 = vrot.lane.b32.xlu0 %v12724, 64
      %v12827 = vpop.permute.xlu0 %12826
      %12828 = vrot.lane.b32.xlu0 %v12725, 64
      %v12829 = vpop.permute.xlu0 %12828
      %12830 = vrot.lane.b32.xlu0 %v12726, 64
      %v12831 = vpop.permute.xlu0 %12830
      %12832 = vrot.lane.b32.xlu0 %v12727, 64
      %v12833 = vpop.permute.xlu0 %12832
      %12834 = vrot.lane.b32.xlu0 %v12728, 64
      %v12835 = vpop.permute.xlu0 %12834
      %12836 = vrot.lane.b32.xlu0 %v12729, 64
      %v12837 = vpop.permute.xlu0 %12836
      %12838 = vrot.lane.b32.xlu0 %v12730, 64
      %v12839 = vpop.permute.xlu0 %12838
      %12840 = vrot.lane.b32.xlu0 %v12731, 64
      %v12841 = vpop.permute.xlu0 %12840
      %12842 = vrot.lane.b32.xlu0 %v12732, 64
      %v12843 = vpop.permute.xlu0 %12842
      %12844 = vrot.lane.b32.xlu0 %v12733, 64
      %v12845 = vpop.permute.xlu0 %12844
      %12846 = vrot.lane.b32.xlu0 %v12734, 64
      %v12847 = vpop.permute.xlu0 %12846
      %12848 = vrot.lane.b32.xlu0 %v12735, 64
      %v12849 = vpop.permute.xlu0 %12848
      %12850 = vrot.lane.b32.xlu0 %v12736, 64
      %v12851 = vpop.permute.xlu0 %12850
      %12852 = vrot.lane.b32.xlu0 %v12737, 64
      %v12853 = vpop.permute.xlu0 %12852
      %12854 = vrot.lane.b32.xlu0 %v12738, 64
      %v12855 = vpop.permute.xlu0 %12854
      %12856 = vrot.lane.b32.xlu0 %v12739, 64
      %v12857 = vpop.permute.xlu0 %12856
      %12858 = vrot.lane.b32.xlu0 %v12740, 64
      %v12859 = vpop.permute.xlu0 %12858
      %12860 = vrot.lane.b32.xlu0 %v12741, 64
      %v12861 = vpop.permute.xlu0 %12860
      %v12902 = vadd.f32 %v12654, %v12783
      %v12903 = vadd.f32 %v12655, %v12785
      %v12904 = vadd.f32 %v12656, %v12787
      %v12905 = vadd.f32 %v12657, %v12789
      %v12906 = vadd.f32 %v12658, %v12791
      %v12907 = vadd.f32 %v12659, %v12793
      %v12908 = vadd.f32 %v12660, %v12795
      %v12909 = vadd.f32 %v12661, %v12797
      %v12910 = vadd.f32 %v12662, %v12799
      %v12911 = vadd.f32 %v12663, %v12801
      %v12912 = vadd.f32 %v12664, %v12803
      %v12913 = vadd.f32 %v12665, %v12805
      %v12914 = vadd.f32 %v12666, %v12807
      %v12915 = vadd.f32 %v12667, %v12809
      %v12916 = vadd.f32 %v12668, %v12811
      %v12917 = vadd.f32 %v12669, %v12813
      %v12918 = vadd.f32 %v12670, %v12815
      %v12919 = vadd.f32 %v12671, %v12817
      %v12920 = vadd.f32 %v12672, %v12819
      %v12921 = vadd.f32 %v12673, %v12821
      %v12922 = vadd.f32 %v12674, %v12823
      %v12923 = vadd.f32 %v12675, %v12825
      %v12924 = vadd.f32 %v12676, %v12827
      %v12925 = vadd.f32 %v12677, %v12829
      %v12926 = vadd.f32 %v12678, %v12831
      %v12927 = vadd.f32 %v12679, %v12833
      %v12928 = vadd.f32 %v12680, %v12835
      %v12929 = vadd.f32 %v12681, %v12837
      %v12930 = vadd.f32 %v12682, %v12839
      %v12931 = vadd.f32 %v12683, %v12841
      %v12932 = vadd.f32 %v12684, %v12843
      %v12933 = vadd.f32 %v12685, %v12845
      %v12934 = vadd.f32 %v12686, %v12847
      %v12935 = vadd.f32 %v12687, %v12849
      %v12936 = vadd.f32 %v12688, %v12851
      %v12937 = vadd.f32 %v12689, %v12853
      %v12938 = vadd.f32 %v12690, %v12855
      %v12939 = vadd.f32 %v12691, %v12857
      %v12940 = vadd.f32 %v12692, %v12859
      %v12941 = vadd.f32 %v12693, %v12861
      %12944 = vrot.lane.b32.xlu0 %v9466, 64
      %v12945 = vpop.permute.xlu0 %12944
      %12946 = vrot.lane.b32.xlu0 %v9467, 64
      %v12947 = vpop.permute.xlu0 %12946
      %v12950 = vmul.f32 %v4037, %v12945
      %v12951 = vmul.f32 %v4037, %v12947
      %v12952 = vmul.f32 %v4041, %v12945
      %v12953 = vmul.f32 %v4041, %v12947
      %v12954 = vmul.f32 %v4045, %v12945
      %v12955 = vmul.f32 %v4045, %v12947
      %v12956 = vmul.f32 %v4049, %v12945
      %v12957 = vmul.f32 %v4049, %v12947
      %v12958 = vmul.f32 %v4053, %v12945
      %v12959 = vmul.f32 %v4053, %v12947
      %v12960 = vmul.f32 %v4057, %v12945
      %v12961 = vmul.f32 %v4057, %v12947
      %v12962 = vmul.f32 %v4061, %v12945
      %v12963 = vmul.f32 %v4061, %v12947
      %v12964 = vmul.f32 %v4065, %v12945
      %v12965 = vmul.f32 %v4065, %v12947
      %v12966 = vmul.f32 %v4069, %v12945
      %v12967 = vmul.f32 %v4069, %v12947
      %v12968 = vmul.f32 %v4073, %v12945
      %v12969 = vmul.f32 %v4073, %v12947
      %v12970 = vmul.f32 %v4077, %v12945
      %v12971 = vmul.f32 %v4077, %v12947
      %v12972 = vmul.f32 %v4081, %v12945
      %v12973 = vmul.f32 %v4081, %v12947
      %v12974 = vmul.f32 %v4085, %v12945
      %v12975 = vmul.f32 %v4085, %v12947
      %v12976 = vmul.f32 %v4089, %v12945
      %v12977 = vmul.f32 %v4089, %v12947
      %v12978 = vmul.f32 %v4093, %v12945
      %v12979 = vmul.f32 %v4093, %v12947
      %v12980 = vmul.f32 %v4097, %v12945
      %v12981 = vmul.f32 %v4097, %v12947
      %v12982 = vmul.f32 %v4101, %v12945
      %v12983 = vmul.f32 %v4101, %v12947
      %v12984 = vmul.f32 %v4105, %v12945
      %v12985 = vmul.f32 %v4105, %v12947
      %v12986 = vmul.f32 %v4109, %v12945
      %v12987 = vmul.f32 %v4109, %v12947
      %v12988 = vmul.f32 %v4113, %v12945
      %v12989 = vmul.f32 %v4113, %v12947
      %13030 = vrot.lane.b32.xlu0 %v12950, 64
      %v13031 = vpop.permute.xlu0 %13030
      %13032 = vrot.lane.b32.xlu0 %v12951, 64
      %v13033 = vpop.permute.xlu0 %13032
      %13034 = vrot.lane.b32.xlu0 %v12952, 64
      %v13035 = vpop.permute.xlu0 %13034
      %13036 = vrot.lane.b32.xlu0 %v12953, 64
      %v13037 = vpop.permute.xlu0 %13036
      %13038 = vrot.lane.b32.xlu0 %v12954, 64
      %v13039 = vpop.permute.xlu0 %13038
      %13040 = vrot.lane.b32.xlu0 %v12955, 64
      %v13041 = vpop.permute.xlu0 %13040
      %13042 = vrot.lane.b32.xlu0 %v12956, 64
      %v13043 = vpop.permute.xlu0 %13042
      %13044 = vrot.lane.b32.xlu0 %v12957, 64
      %v13045 = vpop.permute.xlu0 %13044
      %13046 = vrot.lane.b32.xlu0 %v12958, 64
      %v13047 = vpop.permute.xlu0 %13046
      %13048 = vrot.lane.b32.xlu0 %v12959, 64
      %v13049 = vpop.permute.xlu0 %13048
      %13050 = vrot.lane.b32.xlu0 %v12960, 64
      %v13051 = vpop.permute.xlu0 %13050
      %13052 = vrot.lane.b32.xlu0 %v12961, 64
      %v13053 = vpop.permute.xlu0 %13052
      %13054 = vrot.lane.b32.xlu0 %v12962, 64
      %v13055 = vpop.permute.xlu0 %13054
      %13056 = vrot.lane.b32.xlu0 %v12963, 64
      %v13057 = vpop.permute.xlu0 %13056
      %13058 = vrot.lane.b32.xlu0 %v12964, 64
      %v13059 = vpop.permute.xlu0 %13058
      %13060 = vrot.lane.b32.xlu0 %v12965, 64
      %v13061 = vpop.permute.xlu0 %13060
      %13062 = vrot.lane.b32.xlu0 %v12966, 64
      %v13063 = vpop.permute.xlu0 %13062
      %13064 = vrot.lane.b32.xlu0 %v12967, 64
      %v13065 = vpop.permute.xlu0 %13064
      %13066 = vrot.lane.b32.xlu0 %v12968, 64
      %v13067 = vpop.permute.xlu0 %13066
      %13068 = vrot.lane.b32.xlu0 %v12969, 64
      %v13069 = vpop.permute.xlu0 %13068
      %13070 = vrot.lane.b32.xlu0 %v12970, 64
      %v13071 = vpop.permute.xlu0 %13070
      %13072 = vrot.lane.b32.xlu0 %v12971, 64
      %v13073 = vpop.permute.xlu0 %13072
      %13074 = vrot.lane.b32.xlu0 %v12972, 64
      %v13075 = vpop.permute.xlu0 %13074
      %13076 = vrot.lane.b32.xlu0 %v12973, 64
      %v13077 = vpop.permute.xlu0 %13076
      %13078 = vrot.lane.b32.xlu0 %v12974, 64
      %v13079 = vpop.permute.xlu0 %13078
      %13080 = vrot.lane.b32.xlu0 %v12975, 64
      %v13081 = vpop.permute.xlu0 %13080
      %13082 = vrot.lane.b32.xlu0 %v12976, 64
      %v13083 = vpop.permute.xlu0 %13082
      %13084 = vrot.lane.b32.xlu0 %v12977, 64
      %v13085 = vpop.permute.xlu0 %13084
      %13086 = vrot.lane.b32.xlu0 %v12978, 64
      %v13087 = vpop.permute.xlu0 %13086
      %13088 = vrot.lane.b32.xlu0 %v12979, 64
      %v13089 = vpop.permute.xlu0 %13088
      %13090 = vrot.lane.b32.xlu0 %v12980, 64
      %v13091 = vpop.permute.xlu0 %13090
      %13092 = vrot.lane.b32.xlu0 %v12981, 64
      %v13093 = vpop.permute.xlu0 %13092
      %13094 = vrot.lane.b32.xlu0 %v12982, 64
      %v13095 = vpop.permute.xlu0 %13094
      %13096 = vrot.lane.b32.xlu0 %v12983, 64
      %v13097 = vpop.permute.xlu0 %13096
      %13098 = vrot.lane.b32.xlu0 %v12984, 64
      %v13099 = vpop.permute.xlu0 %13098
      %13100 = vrot.lane.b32.xlu0 %v12985, 64
      %v13101 = vpop.permute.xlu0 %13100
      %13102 = vrot.lane.b32.xlu0 %v12986, 64
      %v13103 = vpop.permute.xlu0 %13102
      %13104 = vrot.lane.b32.xlu0 %v12987, 64
      %v13105 = vpop.permute.xlu0 %13104
      %13106 = vrot.lane.b32.xlu0 %v12988, 64
      %v13107 = vpop.permute.xlu0 %13106
      %13108 = vrot.lane.b32.xlu0 %v12989, 64
      %v13109 = vpop.permute.xlu0 %13108
      %v13150 = vadd.f32 %v12902, %v13031
      %v13151 = vadd.f32 %v12903, %v13033
      %v13152 = vadd.f32 %v12904, %v13035
      %v13153 = vadd.f32 %v12905, %v13037
      %v13154 = vadd.f32 %v12906, %v13039
      %v13155 = vadd.f32 %v12907, %v13041
      %v13156 = vadd.f32 %v12908, %v13043
      %v13157 = vadd.f32 %v12909, %v13045
      %v13158 = vadd.f32 %v12910, %v13047
      %v13159 = vadd.f32 %v12911, %v13049
      %v13160 = vadd.f32 %v12912, %v13051
      %v13161 = vadd.f32 %v12913, %v13053
      %v13162 = vadd.f32 %v12914, %v13055
      %v13163 = vadd.f32 %v12915, %v13057
      %v13164 = vadd.f32 %v12916, %v13059
      %v13165 = vadd.f32 %v12917, %v13061
      %v13166 = vadd.f32 %v12918, %v13063
      %v13167 = vadd.f32 %v12919, %v13065
      %v13168 = vadd.f32 %v12920, %v13067
      %v13169 = vadd.f32 %v12921, %v13069
      %v13170 = vadd.f32 %v12922, %v13071
      %v13171 = vadd.f32 %v12923, %v13073
      %v13172 = vadd.f32 %v12924, %v13075
      %v13173 = vadd.f32 %v12925, %v13077
      %v13174 = vadd.f32 %v12926, %v13079
      %v13175 = vadd.f32 %v12927, %v13081
      %v13176 = vadd.f32 %v12928, %v13083
      %v13177 = vadd.f32 %v12929, %v13085
      %v13178 = vadd.f32 %v12930, %v13087
      %v13179 = vadd.f32 %v12931, %v13089
      %v13180 = vadd.f32 %v12932, %v13091
      %v13181 = vadd.f32 %v12933, %v13093
      %v13182 = vadd.f32 %v12934, %v13095
      %v13183 = vadd.f32 %v12935, %v13097
      %v13184 = vadd.f32 %v12936, %v13099
      %v13185 = vadd.f32 %v12937, %v13101
      %v13186 = vadd.f32 %v12938, %v13103
      %v13187 = vadd.f32 %v12939, %v13105
      %v13188 = vadd.f32 %v12940, %v13107
      %v13189 = vadd.f32 %v12941, %v13109
      %13192 = vrot.lane.b32.xlu0 %v9468, 64
      %v13193 = vpop.permute.xlu0 %13192
      %13194 = vrot.lane.b32.xlu0 %v9469, 64
      %v13195 = vpop.permute.xlu0 %13194
      %v13198 = vmul.f32 %v4197, %v13193
      %v13199 = vmul.f32 %v4197, %v13195
      %v13200 = vmul.f32 %v4201, %v13193
      %v13201 = vmul.f32 %v4201, %v13195
      %v13202 = vmul.f32 %v4205, %v13193
      %v13203 = vmul.f32 %v4205, %v13195
      %v13204 = vmul.f32 %v4209, %v13193
      %v13205 = vmul.f32 %v4209, %v13195
      %v13206 = vmul.f32 %v4213, %v13193
      %v13207 = vmul.f32 %v4213, %v13195
      %v13208 = vmul.f32 %v4217, %v13193
      %v13209 = vmul.f32 %v4217, %v13195
      %v13210 = vmul.f32 %v4221, %v13193
      %v13211 = vmul.f32 %v4221, %v13195
      %v13212 = vmul.f32 %v4225, %v13193
      %v13213 = vmul.f32 %v4225, %v13195
      %v13214 = vmul.f32 %v4229, %v13193
      %v13215 = vmul.f32 %v4229, %v13195
      %v13216 = vmul.f32 %v4233, %v13193
      %v13217 = vmul.f32 %v4233, %v13195
      %v13218 = vmul.f32 %v4237, %v13193
      %v13219 = vmul.f32 %v4237, %v13195
      %v13220 = vmul.f32 %v4241, %v13193
      %v13221 = vmul.f32 %v4241, %v13195
      %v13222 = vmul.f32 %v4245, %v13193
      %v13223 = vmul.f32 %v4245, %v13195
      %v13224 = vmul.f32 %v4249, %v13193
      %v13225 = vmul.f32 %v4249, %v13195
      %v13226 = vmul.f32 %v4253, %v13193
      %v13227 = vmul.f32 %v4253, %v13195
      %v13228 = vmul.f32 %v4257, %v13193
      %v13229 = vmul.f32 %v4257, %v13195
      %v13230 = vmul.f32 %v4261, %v13193
      %v13231 = vmul.f32 %v4261, %v13195
      %v13232 = vmul.f32 %v4265, %v13193
      %v13233 = vmul.f32 %v4265, %v13195
      %v13234 = vmul.f32 %v4269, %v13193
      %v13235 = vmul.f32 %v4269, %v13195
      %v13236 = vmul.f32 %v4273, %v13193
      %v13237 = vmul.f32 %v4273, %v13195
      %13278 = vrot.lane.b32.xlu0 %v13198, 64
      %v13279 = vpop.permute.xlu0 %13278
      %13280 = vrot.lane.b32.xlu0 %v13199, 64
      %v13281 = vpop.permute.xlu0 %13280
      %13282 = vrot.lane.b32.xlu0 %v13200, 64
      %v13283 = vpop.permute.xlu0 %13282
      %13284 = vrot.lane.b32.xlu0 %v13201, 64
      %v13285 = vpop.permute.xlu0 %13284
      %13286 = vrot.lane.b32.xlu0 %v13202, 64
      %v13287 = vpop.permute.xlu0 %13286
      %13288 = vrot.lane.b32.xlu0 %v13203, 64
      %v13289 = vpop.permute.xlu0 %13288
      %13290 = vrot.lane.b32.xlu0 %v13204, 64
      %v13291 = vpop.permute.xlu0 %13290
      %13292 = vrot.lane.b32.xlu0 %v13205, 64
      %v13293 = vpop.permute.xlu0 %13292
      %13294 = vrot.lane.b32.xlu0 %v13206, 64
      %v13295 = vpop.permute.xlu0 %13294
      %13296 = vrot.lane.b32.xlu0 %v13207, 64
      %v13297 = vpop.permute.xlu0 %13296
      %13298 = vrot.lane.b32.xlu0 %v13208, 64
      %v13299 = vpop.permute.xlu0 %13298
      %13300 = vrot.lane.b32.xlu0 %v13209, 64
      %v13301 = vpop.permute.xlu0 %13300
      %13302 = vrot.lane.b32.xlu0 %v13210, 64
      %v13303 = vpop.permute.xlu0 %13302
      %13304 = vrot.lane.b32.xlu0 %v13211, 64
      %v13305 = vpop.permute.xlu0 %13304
      %13306 = vrot.lane.b32.xlu0 %v13212, 64
      %v13307 = vpop.permute.xlu0 %13306
      %13308 = vrot.lane.b32.xlu0 %v13213, 64
      %v13309 = vpop.permute.xlu0 %13308
      %13310 = vrot.lane.b32.xlu0 %v13214, 64
      %v13311 = vpop.permute.xlu0 %13310
      %13312 = vrot.lane.b32.xlu0 %v13215, 64
      %v13313 = vpop.permute.xlu0 %13312
      %13314 = vrot.lane.b32.xlu0 %v13216, 64
      %v13315 = vpop.permute.xlu0 %13314
      %13316 = vrot.lane.b32.xlu0 %v13217, 64
      %v13317 = vpop.permute.xlu0 %13316
      %13318 = vrot.lane.b32.xlu0 %v13218, 64
      %v13319 = vpop.permute.xlu0 %13318
      %13320 = vrot.lane.b32.xlu0 %v13219, 64
      %v13321 = vpop.permute.xlu0 %13320
      %13322 = vrot.lane.b32.xlu0 %v13220, 64
      %v13323 = vpop.permute.xlu0 %13322
      %13324 = vrot.lane.b32.xlu0 %v13221, 64
      %v13325 = vpop.permute.xlu0 %13324
      %13326 = vrot.lane.b32.xlu0 %v13222, 64
      %v13327 = vpop.permute.xlu0 %13326
      %13328 = vrot.lane.b32.xlu0 %v13223, 64
      %v13329 = vpop.permute.xlu0 %13328
      %13330 = vrot.lane.b32.xlu0 %v13224, 64
      %v13331 = vpop.permute.xlu0 %13330
      %13332 = vrot.lane.b32.xlu0 %v13225, 64
      %v13333 = vpop.permute.xlu0 %13332
      %13334 = vrot.lane.b32.xlu0 %v13226, 64
      %v13335 = vpop.permute.xlu0 %13334
      %13336 = vrot.lane.b32.xlu0 %v13227, 64
      %v13337 = vpop.permute.xlu0 %13336
      %13338 = vrot.lane.b32.xlu0 %v13228, 64
      %v13339 = vpop.permute.xlu0 %13338
      %13340 = vrot.lane.b32.xlu0 %v13229, 64
      %v13341 = vpop.permute.xlu0 %13340
      %13342 = vrot.lane.b32.xlu0 %v13230, 64
      %v13343 = vpop.permute.xlu0 %13342
      %13344 = vrot.lane.b32.xlu0 %v13231, 64
      %v13345 = vpop.permute.xlu0 %13344
      %13346 = vrot.lane.b32.xlu0 %v13232, 64
      %v13347 = vpop.permute.xlu0 %13346
      %13348 = vrot.lane.b32.xlu0 %v13233, 64
      %v13349 = vpop.permute.xlu0 %13348
      %13350 = vrot.lane.b32.xlu0 %v13234, 64
      %v13351 = vpop.permute.xlu0 %13350
      %13352 = vrot.lane.b32.xlu0 %v13235, 64
      %v13353 = vpop.permute.xlu0 %13352
      %13354 = vrot.lane.b32.xlu0 %v13236, 64
      %v13355 = vpop.permute.xlu0 %13354
      %13356 = vrot.lane.b32.xlu0 %v13237, 64
      %v13357 = vpop.permute.xlu0 %13356
      %v13398 = vadd.f32 %v13150, %v13279
      %v13399 = vadd.f32 %v13151, %v13281
      %v13400 = vadd.f32 %v13152, %v13283
      %v13401 = vadd.f32 %v13153, %v13285
      %v13402 = vadd.f32 %v13154, %v13287
      %v13403 = vadd.f32 %v13155, %v13289
      %v13404 = vadd.f32 %v13156, %v13291
      %v13405 = vadd.f32 %v13157, %v13293
      %v13406 = vadd.f32 %v13158, %v13295
      %v13407 = vadd.f32 %v13159, %v13297
      %v13408 = vadd.f32 %v13160, %v13299
      %v13409 = vadd.f32 %v13161, %v13301
      %v13410 = vadd.f32 %v13162, %v13303
      %v13411 = vadd.f32 %v13163, %v13305
      %v13412 = vadd.f32 %v13164, %v13307
      %v13413 = vadd.f32 %v13165, %v13309
      %v13414 = vadd.f32 %v13166, %v13311
      %v13415 = vadd.f32 %v13167, %v13313
      %v13416 = vadd.f32 %v13168, %v13315
      %v13417 = vadd.f32 %v13169, %v13317
      %v13418 = vadd.f32 %v13170, %v13319
      %v13419 = vadd.f32 %v13171, %v13321
      %v13420 = vadd.f32 %v13172, %v13323
      %v13421 = vadd.f32 %v13173, %v13325
      %v13422 = vadd.f32 %v13174, %v13327
      %v13423 = vadd.f32 %v13175, %v13329
      %v13424 = vadd.f32 %v13176, %v13331
      %v13425 = vadd.f32 %v13177, %v13333
      %v13426 = vadd.f32 %v13178, %v13335
      %v13427 = vadd.f32 %v13179, %v13337
      %v13428 = vadd.f32 %v13180, %v13339
      %v13429 = vadd.f32 %v13181, %v13341
      %v13430 = vadd.f32 %v13182, %v13343
      %v13431 = vadd.f32 %v13183, %v13345
      %v13432 = vadd.f32 %v13184, %v13347
      %v13433 = vadd.f32 %v13185, %v13349
      %v13434 = vadd.f32 %v13186, %v13351
      %v13435 = vadd.f32 %v13187, %v13353
      %v13436 = vadd.f32 %v13188, %v13355
      %v13437 = vadd.f32 %v13189, %v13357
      %v13438 = vld [vmem:[%s8] sm:$0x1]
      %v13440 = vlaneseq
      %v13441 = vshrl.u32 %v13440, 7
      %v13442 = vsub.s32 0, %v13441
      %v13443 = vrot.slane %v13438, %v13442
      %v13445 = vmul.f32 %v13398, %v13443
      %v13446 = vmul.f32 %v13399, %v13443
      %v13447 = vmul.f32 %v13400, %v13443
      %v13448 = vmul.f32 %v13401, %v13443
      %v13449 = vmul.f32 %v13402, %v13443
      %v13450 = vmul.f32 %v13403, %v13443
      %v13451 = vmul.f32 %v13404, %v13443
      %v13452 = vmul.f32 %v13405, %v13443
      %v13453 = vmul.f32 %v13406, %v13443
      %v13454 = vmul.f32 %v13407, %v13443
      %v13455 = vmul.f32 %v13408, %v13443
      %v13456 = vmul.f32 %v13409, %v13443
      %v13457 = vmul.f32 %v13410, %v13443
      %v13458 = vmul.f32 %v13411, %v13443
      %v13459 = vmul.f32 %v13412, %v13443
      %v13460 = vmul.f32 %v13413, %v13443
      %v13461 = vmul.f32 %v13414, %v13443
      %v13462 = vmul.f32 %v13415, %v13443
      %v13463 = vmul.f32 %v13416, %v13443
      %v13464 = vmul.f32 %v13417, %v13443
      %v13465 = vmul.f32 %v13418, %v13443
      %v13466 = vmul.f32 %v13419, %v13443
      %v13467 = vmul.f32 %v13420, %v13443
      %v13468 = vmul.f32 %v13421, %v13443
      %v13469 = vmul.f32 %v13422, %v13443
      %v13470 = vmul.f32 %v13423, %v13443
      %v13471 = vmul.f32 %v13424, %v13443
      %v13472 = vmul.f32 %v13425, %v13443
      %v13473 = vmul.f32 %v13426, %v13443
      %v13474 = vmul.f32 %v13427, %v13443
      %v13475 = vmul.f32 %v13428, %v13443
      %v13476 = vmul.f32 %v13429, %v13443
      %v13477 = vmul.f32 %v13430, %v13443
      %v13478 = vmul.f32 %v13431, %v13443
      %v13479 = vmul.f32 %v13432, %v13443
      %v13480 = vmul.f32 %v13433, %v13443
      %v13481 = vmul.f32 %v13434, %v13443
      %v13482 = vmul.f32 %v13435, %v13443
      %v13483 = vmul.f32 %v13436, %v13443
      %v13484 = vmul.f32 %v13437, %v13443
      %v13485 = vld [vmem:[%s9] sm:$0x1]
      %v13487 = vlaneseq
      %v13488 = vshrl.u32 %v13487, 7
      %v13489 = vsub.s32 0, %v13488
      %v13490 = vrot.slane %v13485, %v13489
      %v13492 = vadd.f32 %v13445, %v13490
      %v13493 = vadd.f32 %v13446, %v13490
      %v13494 = vadd.f32 %v13447, %v13490
      %v13495 = vadd.f32 %v13448, %v13490
      %v13496 = vadd.f32 %v13449, %v13490
      %v13497 = vadd.f32 %v13450, %v13490
      %v13498 = vadd.f32 %v13451, %v13490
      %v13499 = vadd.f32 %v13452, %v13490
      %v13500 = vadd.f32 %v13453, %v13490
      %v13501 = vadd.f32 %v13454, %v13490
      %v13502 = vadd.f32 %v13455, %v13490
      %v13503 = vadd.f32 %v13456, %v13490
      %v13504 = vadd.f32 %v13457, %v13490
      %v13505 = vadd.f32 %v13458, %v13490
      %v13506 = vadd.f32 %v13459, %v13490
      %v13507 = vadd.f32 %v13460, %v13490
      %v13508 = vadd.f32 %v13461, %v13490
      %v13509 = vadd.f32 %v13462, %v13490
      %v13510 = vadd.f32 %v13463, %v13490
      %v13511 = vadd.f32 %v13464, %v13490
      %v13512 = vadd.f32 %v13465, %v13490
      %v13513 = vadd.f32 %v13466, %v13490
      %v13514 = vadd.f32 %v13467, %v13490
      %v13515 = vadd.f32 %v13468, %v13490
      %v13516 = vadd.f32 %v13469, %v13490
      %v13517 = vadd.f32 %v13470, %v13490
      %v13518 = vadd.f32 %v13471, %v13490
      %v13519 = vadd.f32 %v13472, %v13490
      %v13520 = vadd.f32 %v13473, %v13490
      %v13521 = vadd.f32 %v13474, %v13490
      %v13522 = vadd.f32 %v13475, %v13490
      %v13523 = vadd.f32 %v13476, %v13490
      %v13524 = vadd.f32 %v13477, %v13490
      %v13525 = vadd.f32 %v13478, %v13490
      %v13526 = vadd.f32 %v13479, %v13490
      %v13527 = vadd.f32 %v13480, %v13490
      %v13528 = vadd.f32 %v13481, %v13490
      %v13529 = vadd.f32 %v13482, %v13490
      %v13530 = vadd.f32 %v13483, %v13490
      %v13531 = vadd.f32 %v13484, %v13490
      %13532 = vxpose.xlu0.b32.start [1/16] %v13492, 128
      %13533 = vxpose.xlu0.b32.cont [2/16] %v13493, 128
      %13534 = vxpose.xlu0.b32.cont [3/16] %v13494, 128
      %13535 = vxpose.xlu0.b32.cont [4/16] %v13495, 128
      %13536 = vxpose.xlu0.b32.cont [5/16] %v13496, 128
      %13537 = vxpose.xlu0.b32.cont [6/16] %v13497, 128
      %13538 = vxpose.xlu0.b32.cont [7/16] %v13498, 128
      %13539 = vxpose.xlu0.b32.cont [8/16] %v13499, 128
      %13540 = vxpose.xlu0.b32.cont [9/16] %v13500, 128
      %13541 = vxpose.xlu0.b32.cont [10/16] %v13501, 128
      %13542 = vxpose.xlu0.b32.cont [11/16] %v13502, 128
      %13543 = vxpose.xlu0.b32.cont [12/16] %v13503, 128
      %13544 = vxpose.xlu0.b32.cont [13/16] %v13504, 128
      %13545 = vxpose.xlu0.b32.cont [14/16] %v13505, 128
      %13546 = vxpose.xlu0.b32.cont [15/16] %v13506, 128
      %13547 = vxpose.xlu0.b32.end [16/16] %v13507, 128
      %v13548 = vpop.trf.xlu0
      %v13549 = vpop.trf.xlu0
      %v13550 = vpop.trf.xlu0
      %v13551 = vpop.trf.xlu0
      %v13552 = vpop.trf.xlu0
      %v13553 = vpop.trf.xlu0
      %v13554 = vpop.trf.xlu0
      %v13555 = vpop.trf.xlu0
      %v13556 = vpop.trf.xlu0
      %v13557 = vpop.trf.xlu0
      %v13558 = vpop.trf.xlu0
      %v13559 = vpop.trf.xlu0
      %v13560 = vpop.trf.xlu0
      %v13561 = vpop.trf.xlu0
      %v13562 = vpop.trf.xlu0
      %v13563 = vpop.trf.xlu0
      %13564 = vxpose.xlu0.b32.start [1/16] %v13508, 128
      %13565 = vxpose.xlu0.b32.cont [2/16] %v13509, 128
      %13566 = vxpose.xlu0.b32.cont [3/16] %v13510, 128
      %13567 = vxpose.xlu0.b32.cont [4/16] %v13511, 128
      %13568 = vxpose.xlu0.b32.cont [5/16] %v13512, 128
      %13569 = vxpose.xlu0.b32.cont [6/16] %v13513, 128
      %13570 = vxpose.xlu0.b32.cont [7/16] %v13514, 128
      %13571 = vxpose.xlu0.b32.cont [8/16] %v13515, 128
      %13572 = vxpose.xlu0.b32.cont [9/16] %v13516, 128
      %13573 = vxpose.xlu0.b32.cont [10/16] %v13517, 128
      %13574 = vxpose.xlu0.b32.cont [11/16] %v13518, 128
      %13575 = vxpose.xlu0.b32.cont [12/16] %v13519, 128
      %13576 = vxpose.xlu0.b32.cont [13/16] %v13520, 128
      %13577 = vxpose.xlu0.b32.cont [14/16] %v13521, 128
      %13578 = vxpose.xlu0.b32.cont [15/16] %v13522, 128
      %13579 = vxpose.xlu0.b32.end [16/16] %v13523, 128
      %v13580 = vpop.trf.xlu0
      %v13581 = vpop.trf.xlu0
      %v13582 = vpop.trf.xlu0
      %v13583 = vpop.trf.xlu0
      %v13584 = vpop.trf.xlu0
      %v13585 = vpop.trf.xlu0
      %v13586 = vpop.trf.xlu0
      %v13587 = vpop.trf.xlu0
      %v13588 = vpop.trf.xlu0
      %v13589 = vpop.trf.xlu0
      %v13590 = vpop.trf.xlu0
      %v13591 = vpop.trf.xlu0
      %v13592 = vpop.trf.xlu0
      %v13593 = vpop.trf.xlu0
      %v13594 = vpop.trf.xlu0
      %v13595 = vpop.trf.xlu0
      %13596 = vxpose.xlu0.b32.start [1/16] %v13524, 128
      %13597 = vxpose.xlu0.b32.cont [2/16] %v13525, 128
      %13598 = vxpose.xlu0.b32.cont [3/16] %v13526, 128
      %13599 = vxpose.xlu0.b32.cont [4/16] %v13527, 128
      %13600 = vxpose.xlu0.b32.cont [5/16] %v13528, 128
      %13601 = vxpose.xlu0.b32.cont [6/16] %v13529, 128
      %13602 = vxpose.xlu0.b32.cont [7/16] %v13530, 128
      %13603 = vxpose.xlu0.b32.cont [8/16] %v13531, 128
      %13604 = vxpose.xlu0.b32.cont [9/16] 0.0, 128
      %13605 = vxpose.xlu0.b32.cont [10/16] 0.0, 128
      %13606 = vxpose.xlu0.b32.cont [11/16] 0.0, 128
      %13607 = vxpose.xlu0.b32.cont [12/16] 0.0, 128
      %13608 = vxpose.xlu0.b32.cont [13/16] 0.0, 128
      %13609 = vxpose.xlu0.b32.cont [14/16] 0.0, 128
      %13610 = vxpose.xlu0.b32.cont [15/16] 0.0, 128
      %13611 = vxpose.xlu0.b32.end [16/16] 0.0, 128
      %v13612 = vpop.trf.xlu0
      %v13613 = vpop.trf.xlu0
      %v13614 = vpop.trf.xlu0
      %v13615 = vpop.trf.xlu0
      %v13616 = vpop.trf.xlu0
      %v13617 = vpop.trf.xlu0
      %v13618 = vpop.trf.xlu0
      %v13619 = vpop.trf.xlu0
      %v13620 = vpop.trf.xlu0
      %v13621 = vpop.trf.xlu0
      %v13622 = vpop.trf.xlu0
      %v13623 = vpop.trf.xlu0
      %v13624 = vpop.trf.xlu0
      %v13625 = vpop.trf.xlu0
      %v13626 = vpop.trf.xlu0
      %v13627 = vpop.trf.xlu0
      %13628 = vst [vmem:[%s359] sm:$0xff] %v13548
      %13629 = vst [vmem:[%s359 + $0x8] sm:$0xff] %v13580
      %13630 = vst.msk [vmem:[%s359 + $0x10] sm:$0xff] %vm415, %v13612
      %13631 = vst [vmem:[%s359 + $0x18] sm:$0xff] %v13549
      %13632 = vst [vmem:[%s359 + $0x20] sm:$0xff] %v13581
      %13633 = vst.msk [vmem:[%s359 + $0x28] sm:$0xff] %vm415, %v13613
      %13634 = vst [vmem:[%s359 + $0x30] sm:$0xff] %v13550
      %13635 = vst [vmem:[%s359 + $0x38] sm:$0xff] %v13582
      %13636 = vst.msk [vmem:[%s359 + $0x40] sm:$0xff] %vm415, %v13614
      %13637 = vst [vmem:[%s359 + $0x48] sm:$0xff] %v13551
      %13638 = vst [vmem:[%s359 + $0x50] sm:$0xff] %v13583
      %13639 = vst.msk [vmem:[%s359 + $0x58] sm:$0xff] %vm415, %v13615
      %p13640 = scmp.lt.s32.totalorder %s21, 1
      %s13641 = scalar_select %p13640, %s21, 1
      %s13642 = smul.addr %s13641, 12
      %s13643 = smul.addr %s13642, 8
      %s13644 = scalar_lea.vmem %s10, %s13643
      // Predicated region
      $region61: #{ctr_gc_forward.1} parent=59 // pred_check
        %p13645 = pneg %p254
      $region62: #{ctr_gc_forward.1} parent=59 // pred_check_branch
        %13647 = sbr.rel (%p13645) target = $region64
      $region63: #{ctr_gc_forward.1} parent=59 // pred_region
        _
      $region64: #{ctr_gc_forward.1} parent=59 // pred_fallthru
        _
    $region60: #{ctr_gc_forward.1} parent=5 // pred_fallthru
      _
    %p13648 = scmp.le.s32.totalorder 2, %s16
    // Predicated region
    $region65: #{ctr_gc_forward.1} parent=5 // pred_check
      %p13649 = pneg %p13648
    $region66: #{ctr_gc_forward.1} parent=5 // pred_check_branch
      %13651 = sbr.rel (%p13649) target = $region68
    $region67: #{ctr_gc_forward.1} parent=5 // pred_region
      %s13652 = ssub.s32 %s16, 2
      // Predicated region
      $region69: #{ctr_gc_forward.1} parent=67 // pred_check
        %p13653 = pneg %p260
      $region70: #{ctr_gc_forward.1} parent=67 // pred_check_branch
        %13655 = sbr.rel (%p13653) target = $region72
      $region71: #{ctr_gc_forward.1} parent=67 // pred_region
        %p13656 = scmp.lt.s32.totalorder %s22, 1
        %s13657 = scalar_select %p13656, %s22, 1
        %s13658 = smul.addr %s13657, 12
        %s13659 = smul.addr %s13658, 8
        %s13660 = scalar_lea.vmem %s10, %s13659
      $region72: #{ctr_gc_forward.1} parent=67 // pred_fallthru
        _
    $region68: #{ctr_gc_forward.1} parent=5 // pred_fallthru
      _
  $region6: #{ctr_gc_forward.1} parent=0 // loop_footer
    %s20 = sadd.s32 1, %s16
  $region7: #{ctr_gc_forward.1} parent=0 // loop_footer_branch
    %15 = sbr.rel target = $region3
  $region8: #{ctr_gc_forward.1} parent=0 // loop_exit
    _

</llo_original>
